<compile_context>
chip_gen: v7x
topology: tpu7x:2x2x1
jax: 0.10.0
libtpu: 0.0.40
codegen_flags: <defaults>
</compile_context>

<pallas_src>
import math
import jax
import jax.numpy as jnp
from jax.experimental import pallas as pl
from jax.experimental.pallas import tpu as pltpu


def _round_up(x, m):
    return (x + m - 1) // m * m


# ----------------------------- tiled GEMM kernel ---------------------------- #

def _make_gemm_kernel(act):
    """Tiled GEMM + bias + optional fused activation. act in {None,'leaky_relu','tanh'}."""
    def kernel(a_ref, w_ref, b_ref, o_ref, acc_ref):
        k = pl.program_id(2)

        @pl.when(k == 0)
        def _init():
            acc_ref[...] = jnp.zeros_like(acc_ref)

        acc_ref[...] += jnp.dot(a_ref[...], w_ref[...],
                                preferred_element_type=jnp.float32)

        @pl.when(k == pl.num_programs(2) - 1)
        def _finalize():
            y = acc_ref[...] + b_ref[...]
            if act == "leaky_relu":
                y = jnp.where(y >= 0, y, 0.2 * y)
            elif act == "tanh":
                y = jnp.tanh(y)
            o_ref[...] = y.astype(o_ref.dtype)

    return kernel


def pallas_gemm(a, w, bias, act=None, out_dtype=jnp.bfloat16):
    """a: (M, K), w: (K, N), bias: (N,) -> (M, N) in out_dtype.

    Operands are cast to bf16 (f32 accumulate). N/K are zero-padded to 128
    multiples (lane-dense, unmasked stores even for Cout=1 / K=9); M is only
    padded to a 16-row multiple so small-M layers don't waste MXU cycles.
    """
    M, K = a.shape
    K2, N = w.shape
    assert K == K2

    a = a.astype(jnp.bfloat16)
    w = w.astype(jnp.bfloat16)

    tm = min(256, _round_up(M, 16))      # sublane-pair multiple (bf16 packing)
    tn = min(256, _round_up(N, 128))     # lane-dense output tiles
    tk = min(512, _round_up(K, 128))
    Mp, Np, Kp = _round_up(M, tm), _round_up(N, tn), _round_up(K, tk)

    if (Mp, Kp) != (M, K):
        a = jnp.pad(a, ((0, Mp - M), (0, Kp - K)))
    if (Kp, Np) != (K, N):
        w = jnp.pad(w, ((0, Kp - K), (0, Np - N)))
    b2 = jnp.pad(bias.astype(jnp.float32), (0, Np - N)).reshape(1, Np)

    grid = (Mp // tm, Np // tn, Kp // tk)
    out = pl.pallas_call(
        _make_gemm_kernel(act),
        out_shape=jax.ShapeDtypeStruct((Mp, Np), out_dtype),
        grid_spec=pltpu.PrefetchScalarGridSpec(
            num_scalar_prefetch=0,
            grid=grid,
            in_specs=[pl.BlockSpec((tm, tk), lambda i, j, k: (i, k)),
                      pl.BlockSpec((tk, tn), lambda i, j, k: (k, j)),
                      pl.BlockSpec((1, tn), lambda i, j, k: (0, j))],
            out_specs=pl.BlockSpec((tm, tn), lambda i, j, k: (i, j)),
            scratch_shapes=[pltpu.VMEM((tm, tn), jnp.float32)]),
        compiler_params=pltpu.CompilerParams(
            dimension_semantics=("parallel", "parallel", "arbitrary")),
    )(a, w, b2)

    if (Mp, Np) != (M, N):
        out = out[:M, :N]
    return out


# ------------------------- fused BatchNorm + LeakyReLU ----------------------- #

def _make_bn_kernel(act):
    def kernel(x_ref, g_ref, b_ref, o_ref):
        # BatchNorm2d training mode: biased batch stats over N*H*W, eps=1e-5.
        # One-pass sum / sum-of-squares, var = E[x^2] - mean^2 (per channel block).
        x = x_ref[...].astype(jnp.float32)
        n = x.shape[0]
        s1 = jnp.sum(x, axis=0, keepdims=True)
        s2 = jnp.sum(x * x, axis=0, keepdims=True)
        mean = s1 * (1.0 / n)
        var = s2 * (1.0 / n) - mean * mean
        y = (x - mean) * jax.lax.rsqrt(var + 1e-5) * g_ref[...] + b_ref[...]
        if act:
            y = jnp.where(y >= 0, y, 0.2 * y)
        o_ref[...] = y.astype(o_ref.dtype)
    return kernel


def pallas_bn_leakyrelu(x2d, gamma, beta, act=True, out_dtype=jnp.bfloat16):
    """x2d: (N*H*W, C). Tiled over the channel (lane) axis; full M resident per
    channel tile so per-channel stats are exact in one pass."""
    # TODO(synk): very large N*H*W would need a two-pass tiled-M stats design;
    # here the full M axis per channel tile comfortably fits VMEM.
    M, C = x2d.shape
    tc = min(C, 512) if C % 128 == 0 else C
    grid = (C // tc,)
    return pl.pallas_call(
        _make_bn_kernel(act),
        out_shape=jax.ShapeDtypeStruct((M, C), out_dtype),
        grid=grid,
        in_specs=[pl.BlockSpec((M, tc), lambda c: (0, c)),
                  pl.BlockSpec((1, tc), lambda c: (0, c)),
                  pl.BlockSpec((1, tc), lambda c: (0, c))],
        out_specs=pl.BlockSpec((M, tc), lambda c: (0, c)),
        compiler_params=pltpu.CompilerParams(
            dimension_semantics=("parallel",)),
    )(x2d, gamma.reshape(1, C).astype(jnp.float32),
      beta.reshape(1, C).astype(jnp.float32))


# ------------------------------ fused loss kernel ---------------------------- #

def _loss_kernel(fp_ref, rp_ref, fc_ref, ab_ref, df_ref, dr_ref, gg_ref, l1_ref):
    fp = fp_ref[...].astype(jnp.float32)
    rp = rp_ref[...].astype(jnp.float32)
    fc = fc_ref[...].astype(jnp.float32)
    ab = ab_ref[...].astype(jnp.float32)
    df_ref[...] = jnp.mean(fp * fp, keepdims=True)            # MSE(fake_preds, 0)
    dr_ref[...] = jnp.mean((rp - 1.0) ** 2, keepdims=True)    # MSE(real_preds, 1)
    gg_ref[...] = jnp.mean((fp - 1.0) ** 2, keepdims=True)    # MSE(fake_preds, 1)
    l1_ref[...] = jnp.mean(jnp.abs(fc - ab), keepdims=True)   # L1(fake_color, ab)


def pallas_losses(fp2, rp2, fc2, ab2):
    one = jax.ShapeDtypeStruct((1, 1), jnp.float32)
    vspec = pl.BlockSpec(memory_space=pltpu.MemorySpace.VMEM)
    outs = pl.pallas_call(
        _loss_kernel,
        out_shape=(one, one, one, one),
        in_specs=[vspec] * 4,
        out_specs=(vspec,) * 4,
    )(fp2, rp2, fc2, ab2)
    return tuple(o[0, 0] for o in outs)


def _flatten_lanes(x):
    flat = x.reshape(-1)
    n = flat.shape[0]
    if n % 128 == 0:
        return flat.reshape(-1, 128)   # lane-dense layout for the reduction
    return flat.reshape(1, n)


# ----------------------------- conv via im2col ------------------------------ #

def _im2col(x, k, s, p):
    """x: (B,H,W,C) -> patches (B*Ho*Wo, k*k*C) ordered (kh, kw, cin)."""
    B, H, W, C = x.shape
    xp = jnp.pad(x, ((0, 0), (p, p), (p, p), (0, 0)))
    Ho = (H + 2 * p - k) // s + 1
    Wo = (W + 2 * p - k) // s + 1
    cols = []
    for kh in range(k):
        for kw in range(k):
            cols.append(xp[:, kh:kh + s * (Ho - 1) + 1:s,
                           kw:kw + s * (Wo - 1) + 1:s, :])
    patches = jnp.concatenate(cols, axis=-1)
    return patches.reshape(B * Ho * Wo, k * k * C), Ho, Wo


def conv2d(x_nhwc, w_kkio, bias, stride, pad, act=None, out_dtype=jnp.bfloat16):
    """w_kkio: (k, k, Cin, Cout) (matches PyTorch Conv2d weight semantics)."""
    B = x_nhwc.shape[0]
    k, _, cin, cout = w_kkio.shape
    a, Ho, Wo = _im2col(x_nhwc.astype(jnp.bfloat16), k, stride, pad)
    y = pallas_gemm(a, w_kkio.reshape(k * k * cin, cout), bias,
                    act=act, out_dtype=out_dtype)
    return y.reshape(B, Ho, Wo, cout)


# ------------------------ static config & parameters ------------------------ #

def make_disc_cfgs(input_c=3, num_filters=64, n_down=3):
    # PatchDiscriminator(input_c=3, num_filters=64, n_down=3) layer layout.
    cfgs = [dict(cin=input_c, cout=num_filters, s=2, norm=False, act=True)]
    for i in range(n_down):
        cfgs.append(dict(cin=num_filters * 2 ** i, cout=num_filters * 2 ** (i + 1),
                         s=1 if i == n_down - 1 else 2, norm=True, act=True))
    cfgs.append(dict(cin=num_filters * 2 ** n_down, cout=1, s=1, norm=False, act=False))
    return cfgs


# Python-level static config: never passed through jit (no tracer bool conversion).
DISC_CFGS = make_disc_cfgs()


def _kaiming(key, k, cin, cout):
    # kaiming_normal_(a=0, mode='fan_in') on Conv weights, as in init_weights().
    std = math.sqrt(2.0 / (cin * k * k))
    return std * jax.random.normal(key, (k, k, cin, cout), jnp.float32)


def init_discriminator_params(key):
    layers = []
    for cfg in DISC_CFGS:
        key, kw, kg = jax.random.split(key, 3)
        layer = {
            "w": _kaiming(kw, 4, cfg["cin"], cfg["cout"]),
            "b": jnp.zeros((cfg["cout"],), jnp.float32),  # bias=0 (or bias=False layers)
        }
        if cfg["norm"]:
            layer["gamma"] = 1.0 + 0.02 * jax.random.normal(kg, (cfg["cout"],), jnp.float32)
            layer["beta"] = jnp.zeros((cfg["cout"],), jnp.float32)
        layers.append(layer)
    return layers


def init_generator_params(key):
    # TODO(synk): net_G is an external constructor argument of MainModel with no
    # definition in this file; substitute a minimal synthetic 3x3-conv L->ab
    # generator (tanh output) so MainModel.forward() has concrete compute.
    return dict(w=_kaiming(key, 3, 1, 2), b=jnp.zeros((2,), jnp.float32))


# ------------------------------- forward passes ----------------------------- #

def generator_forward(gparams, L_nhwc):
    return conv2d(L_nhwc, gparams["w"], gparams["b"], stride=1, pad=1,
                  act="tanh", out_dtype=jnp.float32)


def discriminator_forward(dparams, x_nhwc):
    h = x_nhwc
    n_layers = len(DISC_CFGS)
    for idx, (cfg, layer) in enumerate(zip(DISC_CFGS, dparams)):
        last = idx == n_layers - 1
        fused_act = "leaky_relu" if (cfg["act"] and not cfg["norm"]) else None
        out_dtype = jnp.float32 if last else jnp.bfloat16
        h = conv2d(h, layer["w"], layer["b"], stride=cfg["s"], pad=1,
                   act=fused_act, out_dtype=out_dtype)
        if cfg["norm"]:
            B, Ho, Wo, C = h.shape
            h = pallas_bn_leakyrelu(h.reshape(B * Ho * Wo, C),
                                    layer["gamma"], layer["beta"],
                                    act=cfg["act"]).reshape(B, Ho, Wo, C)
    return h


def main_model_step(gparams, dparams, L_nchw, ab_nchw, lambda_L1=100.0):
    """MainModel.forward() plus the forward computations of backward_D / backward_G
    (loss values only; no autograd / optimizer step)."""
    L = jnp.transpose(L_nchw, (0, 2, 3, 1))
    ab = jnp.transpose(ab_nchw, (0, 2, 3, 1))

    # forward(): fake_color = net_G(L)
    fake_color = generator_forward(gparams, L)

    # backward_D / backward_G forward passes; fake & real batched through D once.
    fake_image = jnp.concatenate([L, fake_color], axis=-1)   # cat([L, fake_color], dim=1)
    real_image = jnp.concatenate([L, ab], axis=-1)            # cat([L, ab], dim=1)
    both = jnp.concatenate([fake_image, real_image], axis=0)
    preds = discriminator_forward(dparams, both)
    B = L.shape[0]
    fake_preds, real_preds = preds[:B], preds[B:]

    fp2 = fake_preds.reshape(1, -1)
    rp2 = real_preds.reshape(1, -1)
    loss_D_fake, loss_D_real, loss_G_GAN, l1 = pallas_losses(
        fp2, rp2, _flatten_lanes(fake_color), _flatten_lanes(ab))

    loss_D = 0.5 * (loss_D_fake + loss_D_real)
    loss_G_L1 = lambda_L1 * l1
    loss_G = loss_G_GAN + loss_G_L1

    fake_color_nchw = jnp.transpose(fake_color, (0, 3, 1, 2))  # back to PyTorch NCHW
    return fake_color_nchw, (loss_D_fake, loss_D_real, loss_D), (loss_G_GAN, loss_G_L1, loss_G)


# ----------------------------------- main ----------------------------------- #

if __name__ == "__main__":
    key = jax.random.PRNGKey(0)
    kL, kab, kg, kd = jax.random.split(key, 4)

    # Small shapes: batch=2, L=1 channel, ab=2 channels, spatial=32 (minimum so
    # the 5-layer k=4 discriminator stack stays valid).
    B, H, W = 2, 32, 32
    L = jax.random.normal(kL, (B, 1, H, W), jnp.float32)    # NCHW, like PyTorch data['L']
    ab = jax.random.normal(kab, (B, 2, H, W), jnp.float32)  # NCHW, like data['ab']

    gparams = init_generator_params(kg)
    dparams = init_discriminator_params(kd)

    step = jax.jit(main_model_step)
    fake_color, d_losses, g_losses = step(gparams, dparams, L, ab)
    jax.block_until_ready((fake_color, d_losses, g_losses))

    assert fake_color.shape == (B, 2, H, W)
    for v in (*d_losses, *g_losses):
        assert jnp.isfinite(v)
    print("KERNEL_OK")
</pallas_src>

<mosaic_0001>
module attributes {stable_mosaic.version = 11 : i64} {
  func.func @kernel(%arg0: i32, %arg1: i32, %arg2: i32, %arg3: memref<256x128xbf16, #tpu.memory_space<vmem>>, %arg4: memref<128x128xbf16, #tpu.memory_space<vmem>>, %arg5: memref<1x128xf32, #tpu.memory_space<vmem>>, %arg6: memref<256x128xf32, #tpu.memory_space<vmem>>, %arg7: memref<256x128xf32, #tpu.memory_space<vmem>>) attributes {dimension_semantics = [#tpu.dimension_semantics<parallel>, #tpu.dimension_semantics<parallel>, #tpu.dimension_semantics<arbitrary>], iteration_bounds = array<i64: 8, 1, 1>, scalar_prefetch = 0 : i64, scratch_operands = 1 : i64, tpu.core_type = #tpu.core_type<tc>, window_params = [{transform_indices = @transform_0, window_bounds = array<i64: 256, 128>}, {transform_indices = @transform_1, window_bounds = array<i64: 128, 128>}, {transform_indices = @transform_2, window_bounds = array<i64: 1, 128>}, {transform_indices = @transform_3, window_bounds = array<i64: 256, 128>}]} {
    %c0_i32 = arith.constant 0 : i32
    %0 = arith.cmpi eq, %arg2, %c0_i32 : i32
    %1 = arith.extui %0 : i1 to i32
    %c0_i32_0 = arith.constant 0 : i32
    %2 = arith.cmpi ne, %1, %c0_i32_0 : i32
    scf.if %2 {
      %cst_10 = arith.constant 0.000000e+00 : f32
      %12 = vector.broadcast %cst_10 : f32 to vector<256x128xf32>
      %c0_11 = arith.constant 0 : index
      %c0_12 = arith.constant 0 : index
      %13 = vector.load %arg7[%c0_11, %c0_12] : memref<256x128xf32, #tpu.memory_space<vmem>>, vector<256x128xf32>
      tpu.vector_store %arg7[%c0_11, %c0_12], %12 {strides = array<i32>} : memref<256x128xf32, #tpu.memory_space<vmem>>, vector<256x128xf32>,
    } else {
    }
    %c0 = arith.constant 0 : index
    %c0_1 = arith.constant 0 : index
    %3 = vector.load %arg7[%c0, %c0_1] : memref<256x128xf32, #tpu.memory_space<vmem>>, vector<256x128xf32>
    %c0_2 = arith.constant 0 : index
    %c0_3 = arith.constant 0 : index
    %4 = vector.load %arg3[%c0_2, %c0_3] : memref<256x128xbf16, #tpu.memory_space<vmem>>, vector<256x128xbf16>
    %c0_4 = arith.constant 0 : index
    %c0_5 = arith.constant 0 : index
    %5 = vector.load %arg4[%c0_4, %c0_5] : memref<128x128xbf16, #tpu.memory_space<vmem>>, vector<128x128xbf16>
    %cst = arith.constant dense<0.000000e+00> : vector<256x128xf32>
    %6 = tpu.matmul %4, %5, %cst {dimension_numbers = #tpu.dot_dimension_numbers<[1], [0], [0], [1], [0, 0, 1, 1], [], []>} : vector<256x128xbf16>, vector<128x128xbf16>, vector<256x128xf32> -> vector<256x128xf32>
    %7 = arith.addf %3, %6 : vector<256x128xf32>
    %c0_6 = arith.constant 0 : index
    %c0_7 = arith.constant 0 : index
    %8 = vector.load %arg7[%c0_6, %c0_7] : memref<256x128xf32, #tpu.memory_space<vmem>>, vector<256x128xf32>
    tpu.vector_store %arg7[%c0_6, %c0_7], %7 {strides = array<i32>} : memref<256x128xf32, #tpu.memory_space<vmem>>, vector<256x128xf32>,
    %c0_i32_8 = arith.constant 0 : i32
    %9 = arith.cmpi eq, %arg2, %c0_i32_8 : i32
    %10 = arith.extui %9 : i1 to i32
    %c0_i32_9 = arith.constant 0 : i32
    %11 = arith.cmpi ne, %10, %c0_i32_9 : i32
    scf.if %11 {
      %c0_10 = arith.constant 0 : index
      %c0_11 = arith.constant 0 : index
      %12 = vector.load %arg7[%c0_10, %c0_11] : memref<256x128xf32, #tpu.memory_space<vmem>>, vector<256x128xf32>
      %c0_12 = arith.constant 0 : index
      %c0_13 = arith.constant 0 : index
      %13 = vector.load %arg5[%c0_12, %c0_13] : memref<1x128xf32, #tpu.memory_space<vmem>>, vector<1x128xf32>
      %14 = vector.broadcast %13 : vector<1x128xf32> to vector<256x128xf32>
      %15 = arith.addf %12, %14 : vector<256x128xf32>
      %16 = math.tanh %15 : vector<256x128xf32>
      %c0_14 = arith.constant 0 : index
      %c0_15 = arith.constant 0 : index
      %17 = vector.load %arg6[%c0_14, %c0_15] : memref<256x128xf32, #tpu.memory_space<vmem>>, vector<256x128xf32>
      tpu.vector_store %arg6[%c0_14, %c0_15], %16 {strides = array<i32>} : memref<256x128xf32, #tpu.memory_space<vmem>>, vector<256x128xf32>,
    } else {
    }
    return
  }
  func.func @transform_0(%arg0: i32, %arg1: i32, %arg2: i32) -> (i32, i32) {
    %c0_i32 = arith.constant 0 : i32
    return %arg0, %arg2 : i32, i32
  }
  func.func @transform_1(%arg0: i32, %arg1: i32, %arg2: i32) -> (i32, i32) {
    %c0_i32 = arith.constant 0 : i32
    return %arg2, %arg1 : i32, i32
  }
  func.func @transform_2(%arg0: i32, %arg1: i32, %arg2: i32) -> (i32, i32) {
    %c0_i32 = arith.constant 0 : i32
    %c0_i32_0 = arith.constant 0 : i32
    return %c0_i32, %arg1 : i32, i32
  }
  func.func @transform_3(%arg0: i32, %arg1: i32, %arg2: i32) -> (i32, i32) {
    %c0_i32 = arith.constant 0 : i32
    return %arg0, %arg1 : i32, i32
  }
}

module attributes {stable_mosaic.version = 11 : i64} {
  func.func @kernel(%arg0: i32, %arg1: i32, %arg2: i32, %arg3: memref<256x128xbf16, #tpu.memory_space<vmem>>, %arg4: memref<128x128xbf16, #tpu.memory_space<vmem>>, %arg5: memref<1x128xf32, #tpu.memory_space<vmem>>, %arg6: memref<256x128xbf16, #tpu.memory_space<vmem>>, %arg7: memref<256x128xf32, #tpu.memory_space<vmem>>) attributes {dimension_semantics = [#tpu.dimension_semantics<parallel>, #tpu.dimension_semantics<parallel>, #tpu.dimension_semantics<arbitrary>], iteration_bounds = array<i64: 4, 1, 1>, scalar_prefetch = 0 : i64, scratch_operands = 1 : i64, tpu.core_type = #tpu.core_type<tc>, window_params = [{transform_indices = @transform_0, window_bounds = array<i64: 256, 128>}, {transform_indices = @transform_1, window_bounds = array<i64: 128, 128>}, {transform_indices = @transform_2, window_bounds = array<i64: 1, 128>}, {transform_indices = @transform_3, window_bounds = array<i64: 256, 128>}]} {
    %c0_i32 = arith.constant 0 : i32
    %0 = arith.cmpi eq, %arg2, %c0_i32 : i32
    %1 = arith.extui %0 : i1 to i32
    %c0_i32_0 = arith.constant 0 : i32
    %2 = arith.cmpi ne, %1, %c0_i32_0 : i32
    scf.if %2 {
      %cst_10 = arith.constant 0.000000e+00 : f32
      %12 = vector.broadcast %cst_10 : f32 to vector<256x128xf32>
      %c0_11 = arith.constant 0 : index
      %c0_12 = arith.constant 0 : index
      %13 = vector.load %arg7[%c0_11, %c0_12] : memref<256x128xf32, #tpu.memory_space<vmem>>, vector<256x128xf32>
      tpu.vector_store %arg7[%c0_11, %c0_12], %12 {strides = array<i32>} : memref<256x128xf32, #tpu.memory_space<vmem>>, vector<256x128xf32>,
    } else {
    }
    %c0 = arith.constant 0 : index
    %c0_1 = arith.constant 0 : index
    %3 = vector.load %arg7[%c0, %c0_1] : memref<256x128xf32, #tpu.memory_space<vmem>>, vector<256x128xf32>
    %c0_2 = arith.constant 0 : index
    %c0_3 = arith.constant 0 : index
    %4 = vector.load %arg3[%c0_2, %c0_3] : memref<256x128xbf16, #tpu.memory_space<vmem>>, vector<256x128xbf16>
    %c0_4 = arith.constant 0 : index
    %c0_5 = arith.constant 0 : index
    %5 = vector.load %arg4[%c0_4, %c0_5] : memref<128x128xbf16, #tpu.memory_space<vmem>>, vector<128x128xbf16>
    %cst = arith.constant dense<0.000000e+00> : vector<256x128xf32>
    %6 = tpu.matmul %4, %5, %cst {dimension_numbers = #tpu.dot_dimension_numbers<[1], [0], [0], [1], [0, 0, 1, 1], [], []>} : vector<256x128xbf16>, vector<128x128xbf16>, vector<256x128xf32> -> vector<256x128xf32>
    %7 = arith.addf %3, %6 : vector<256x128xf32>
    %c0_6 = arith.constant 0 : index
    %c0_7 = arith.constant 0 : index
    %8 = vector.load %arg7[%c0_6, %c0_7] : memref<256x128xf32, #tpu.memory_space<vmem>>, vector<256x128xf32>
    tpu.vector_store %arg7[%c0_6, %c0_7], %7 {strides = array<i32>} : memref<256x128xf32, #tpu.memory_space<vmem>>, vector<256x128xf32>,
    %c0_i32_8 = arith.constant 0 : i32
    %9 = arith.cmpi eq, %arg2, %c0_i32_8 : i32
    %10 = arith.extui %9 : i1 to i32
    %c0_i32_9 = arith.constant 0 : i32
    %11 = arith.cmpi ne, %10, %c0_i32_9 : i32
    scf.if %11 {
      %c0_10 = arith.constant 0 : index
      %c0_11 = arith.constant 0 : index
      %12 = vector.load %arg7[%c0_10, %c0_11] : memref<256x128xf32, #tpu.memory_space<vmem>>, vector<256x128xf32>
      %c0_12 = arith.constant 0 : index
      %c0_13 = arith.constant 0 : index
      %13 = vector.load %arg5[%c0_12, %c0_13] : memref<1x128xf32, #tpu.memory_space<vmem>>, vector<1x128xf32>
      %14 = vector.broadcast %13 : vector<1x128xf32> to vector<256x128xf32>
      %15 = arith.addf %12, %14 : vector<256x128xf32>
      %cst_14 = arith.constant 0.000000e+00 : f32
      %16 = vector.broadcast %cst_14 : f32 to vector<256x128xf32>
      %17 = arith.cmpf oge, %15, %16 : vector<256x128xf32>
      %cst_15 = arith.constant 2.000000e-01 : f32
      %18 = vector.broadcast %cst_15 : f32 to vector<256x128xf32>
      %19 = arith.mulf %18, %15 : vector<256x128xf32>
      %20 = arith.select %17, %15, %19 : vector<256x128xi1>, vector<256x128xf32>
      %21 = arith.truncf %20 : vector<256x128xf32> to vector<256x128xbf16>
      %c0_16 = arith.constant 0 : index
      %c0_17 = arith.constant 0 : index
      %22 = vector.load %arg6[%c0_16, %c0_17] : memref<256x128xbf16, #tpu.memory_space<vmem>>, vector<256x128xbf16>
      tpu.vector_store %arg6[%c0_16, %c0_17], %21 {strides = array<i32>} : memref<256x128xbf16, #tpu.memory_space<vmem>>, vector<256x128xbf16>,
    } else {
    }
    return
  }
  func.func @transform_0(%arg0: i32, %arg1: i32, %arg2: i32) -> (i32, i32) {
    %c0_i32 = arith.constant 0 : i32
    return %arg0, %arg2 : i32, i32
  }
  func.func @transform_1(%arg0: i32, %arg1: i32, %arg2: i32) -> (i32, i32) {
    %c0_i32 = arith.constant 0 : i32
    return %arg2, %arg1 : i32, i32
  }
  func.func @transform_2(%arg0: i32, %arg1: i32, %arg2: i32) -> (i32, i32) {
    %c0_i32 = arith.constant 0 : i32
    %c0_i32_0 = arith.constant 0 : i32
    return %c0_i32, %arg1 : i32, i32
  }
  func.func @transform_3(%arg0: i32, %arg1: i32, %arg2: i32) -> (i32, i32) {
    %c0_i32 = arith.constant 0 : i32
    return %arg0, %arg1 : i32, i32
  }
}

module attributes {stable_mosaic.version = 11 : i64} {
  func.func @kernel(%arg0: i32, %arg1: i32, %arg2: i32, %arg3: memref<256x512xbf16, #tpu.memory_space<vmem>>, %arg4: memref<512x128xbf16, #tpu.memory_space<vmem>>, %arg5: memref<1x128xf32, #tpu.memory_space<vmem>>, %arg6: memref<256x128xbf16, #tpu.memory_space<vmem>>, %arg7: memref<256x128xf32, #tpu.memory_space<vmem>>) attributes {dimension_semantics = [#tpu.dimension_semantics<parallel>, #tpu.dimension_semantics<parallel>, #tpu.dimension_semantics<arbitrary>], iteration_bounds = array<i64: 1, 1, 2>, scalar_prefetch = 0 : i64, scratch_operands = 1 : i64, tpu.core_type = #tpu.core_type<tc>, window_params = [{transform_indices = @transform_0, window_bounds = array<i64: 256, 512>}, {transform_indices = @transform_1, window_bounds = array<i64: 512, 128>}, {transform_indices = @transform_2, window_bounds = array<i64: 1, 128>}, {transform_indices = @transform_3, window_bounds = array<i64: 256, 128>}]} {
    %c0_i32 = arith.constant 0 : i32
    %0 = arith.cmpi eq, %arg2, %c0_i32 : i32
    %1 = arith.extui %0 : i1 to i32
    %c0_i32_0 = arith.constant 0 : i32
    %2 = arith.cmpi ne, %1, %c0_i32_0 : i32
    scf.if %2 {
      %cst_9 = arith.constant 0.000000e+00 : f32
      %12 = vector.broadcast %cst_9 : f32 to vector<256x128xf32>
      %c0_10 = arith.constant 0 : index
      %c0_11 = arith.constant 0 : index
      %13 = vector.load %arg7[%c0_10, %c0_11] : memref<256x128xf32, #tpu.memory_space<vmem>>, vector<256x128xf32>
      tpu.vector_store %arg7[%c0_10, %c0_11], %12 {strides = array<i32>} : memref<256x128xf32, #tpu.memory_space<vmem>>, vector<256x128xf32>,
    } else {
    }
    %c0 = arith.constant 0 : index
    %c0_1 = arith.constant 0 : index
    %3 = vector.load %arg7[%c0, %c0_1] : memref<256x128xf32, #tpu.memory_space<vmem>>, vector<256x128xf32>
    %c0_2 = arith.constant 0 : index
    %c0_3 = arith.constant 0 : index
    %4 = vector.load %arg3[%c0_2, %c0_3] : memref<256x512xbf16, #tpu.memory_space<vmem>>, vector<256x512xbf16>
    %c0_4 = arith.constant 0 : index
    %c0_5 = arith.constant 0 : index
    %5 = vector.load %arg4[%c0_4, %c0_5] : memref<512x128xbf16, #tpu.memory_space<vmem>>, vector<512x128xbf16>
    %cst = arith.constant dense<0.000000e+00> : vector<256x128xf32>
    %6 = tpu.matmul %4, %5, %cst {dimension_numbers = #tpu.dot_dimension_numbers<[1], [0], [0], [1], [0, 0, 1, 1], [], []>} : vector<256x512xbf16>, vector<512x128xbf16>, vector<256x128xf32> -> vector<256x128xf32>
    %7 = arith.addf %3, %6 : vector<256x128xf32>
    %c0_6 = arith.constant 0 : index
    %c0_7 = arith.constant 0 : index
    %8 = vector.load %arg7[%c0_6, %c0_7] : memref<256x128xf32, #tpu.memory_space<vmem>>, vector<256x128xf32>
    tpu.vector_store %arg7[%c0_6, %c0_7], %7 {strides = array<i32>} : memref<256x128xf32, #tpu.memory_space<vmem>>, vector<256x128xf32>,
    %c1_i32 = arith.constant 1 : i32
    %9 = arith.cmpi eq, %arg2, %c1_i32 : i32
    %10 = arith.extui %9 : i1 to i32
    %c0_i32_8 = arith.constant 0 : i32
    %11 = arith.cmpi ne, %10, %c0_i32_8 : i32
    scf.if %11 {
      %c0_9 = arith.constant 0 : index
      %c0_10 = arith.constant 0 : index
      %12 = vector.load %arg7[%c0_9, %c0_10] : memref<256x128xf32, #tpu.memory_space<vmem>>, vector<256x128xf32>
      %c0_11 = arith.constant 0 : index
      %c0_12 = arith.constant 0 : index
      %13 = vector.load %arg5[%c0_11, %c0_12] : memref<1x128xf32, #tpu.memory_space<vmem>>, vector<1x128xf32>
      %14 = vector.broadcast %13 : vector<1x128xf32> to vector<256x128xf32>
      %15 = arith.addf %12, %14 : vector<256x128xf32>
      %16 = arith.truncf %15 : vector<256x128xf32> to vector<256x128xbf16>
      %c0_13 = arith.constant 0 : index
      %c0_14 = arith.constant 0 : index
      %17 = vector.load %arg6[%c0_13, %c0_14] : memref<256x128xbf16, #tpu.memory_space<vmem>>, vector<256x128xbf16>
      tpu.vector_store %arg6[%c0_13, %c0_14], %16 {strides = array<i32>} : memref<256x128xbf16, #tpu.memory_space<vmem>>, vector<256x128xbf16>,
    } else {
    }
    return
  }
  func.func @transform_0(%arg0: i32, %arg1: i32, %arg2: i32) -> (i32, i32) {
    %c0_i32 = arith.constant 0 : i32
    return %arg0, %arg2 : i32, i32
  }
  func.func @transform_1(%arg0: i32, %arg1: i32, %arg2: i32) -> (i32, i32) {
    %c0_i32 = arith.constant 0 : i32
    return %arg2, %arg1 : i32, i32
  }
  func.func @transform_2(%arg0: i32, %arg1: i32, %arg2: i32) -> (i32, i32) {
    %c0_i32 = arith.constant 0 : i32
    %c0_i32_0 = arith.constant 0 : i32
    return %c0_i32, %arg1 : i32, i32
  }
  func.func @transform_3(%arg0: i32, %arg1: i32, %arg2: i32) -> (i32, i32) {
    %c0_i32 = arith.constant 0 : i32
    return %arg0, %arg1 : i32, i32
  }
}

module attributes {stable_mosaic.version = 11 : i64} {
  func.func @kernel(%arg0: i32, %arg1: memref<256x128xbf16, #tpu.memory_space<vmem>>, %arg2: memref<1x128xf32, #tpu.memory_space<vmem>>, %arg3: memref<1x128xf32, #tpu.memory_space<vmem>>, %arg4: memref<256x128xbf16, #tpu.memory_space<vmem>>) attributes {dimension_semantics = [#tpu.dimension_semantics<parallel>], iteration_bounds = array<i64: 1>, scalar_prefetch = 0 : i64, scratch_operands = 0 : i64, tpu.core_type = #tpu.core_type<tc>, window_params = [{transform_indices = @transform_0, window_bounds = array<i64: 256, 128>}, {transform_indices = @transform_1, window_bounds = array<i64: 1, 128>}, {transform_indices = @transform_2, window_bounds = array<i64: 1, 128>}, {transform_indices = @transform_3, window_bounds = array<i64: 256, 128>}]} {
    %c0 = arith.constant 0 : index
    %c0_0 = arith.constant 0 : index
    %0 = vector.load %arg1[%c0, %c0_0] : memref<256x128xbf16, #tpu.memory_space<vmem>>, vector<256x128xbf16>
    %1 = arith.extf %0 : vector<256x128xbf16> to vector<256x128xf32>
    %cst = arith.constant dense<0.000000e+00> : vector<128xf32>
    %2 = vector.multi_reduction <add>, %1, %cst [0] : vector<256x128xf32> to vector<128xf32>
    %3 = vector.shape_cast %2 : vector<128xf32> to vector<1x128xf32>
    %4 = arith.mulf %1, %1 : vector<256x128xf32>
    %cst_1 = arith.constant dense<0.000000e+00> : vector<128xf32>
    %5 = vector.multi_reduction <add>, %4, %cst_1 [0] : vector<256x128xf32> to vector<128xf32>
    %6 = vector.shape_cast %5 : vector<128xf32> to vector<1x128xf32>
    %cst_2 = arith.constant 3.906250e-03 : f32
    %7 = vector.broadcast %cst_2 : f32 to vector<1x128xf32>
    %8 = arith.mulf %3, %7 : vector<1x128xf32>
    %cst_3 = arith.constant 3.906250e-03 : f32
    %9 = vector.broadcast %cst_3 : f32 to vector<1x128xf32>
    %10 = arith.mulf %6, %9 : vector<1x128xf32>
    %11 = arith.mulf %8, %8 : vector<1x128xf32>
    %12 = arith.subf %10, %11 : vector<1x128xf32>
    %13 = vector.broadcast %8 : vector<1x128xf32> to vector<256x128xf32>
    %14 = arith.subf %1, %13 : vector<256x128xf32>
    %cst_4 = arith.constant 9.99999974E-6 : f32
    %15 = vector.broadcast %cst_4 : f32 to vector<1x128xf32>
    %16 = arith.addf %12, %15 : vector<1x128xf32>
    %17 = math.rsqrt %16 : vector<1x128xf32>
    %18 = vector.broadcast %17 : vector<1x128xf32> to vector<256x128xf32>
    %19 = arith.mulf %14, %18 : vector<256x128xf32>
    %c0_5 = arith.constant 0 : index
    %c0_6 = arith.constant 0 : index
    %20 = vector.load %arg2[%c0_5, %c0_6] : memref<1x128xf32, #tpu.memory_space<vmem>>, vector<1x128xf32>
    %21 = vector.broadcast %20 : vector<1x128xf32> to vector<256x128xf32>
    %22 = arith.mulf %19, %21 : vector<256x128xf32>
    %c0_7 = arith.constant 0 : index
    %c0_8 = arith.constant 0 : index
    %23 = vector.load %arg3[%c0_7, %c0_8] : memref<1x128xf32, #tpu.memory_space<vmem>>, vector<1x128xf32>
    %24 = vector.broadcast %23 : vector<1x128xf32> to vector<256x128xf32>
    %25 = arith.addf %22, %24 : vector<256x128xf32>
    %cst_9 = arith.constant 0.000000e+00 : f32
    %26 = vector.broadcast %cst_9 : f32 to vector<256x128xf32>
    %27 = arith.cmpf oge, %25, %26 : vector<256x128xf32>
    %cst_10 = arith.constant 2.000000e-01 : f32
    %28 = vector.broadcast %cst_10 : f32 to vector<256x128xf32>
    %29 = arith.mulf %28, %25 : vector<256x128xf32>
    %30 = arith.select %27, %25, %29 : vector<256x128xi1>, vector<256x128xf32>
    %31 = arith.truncf %30 : vector<256x128xf32> to vector<256x128xbf16>
    %c0_11 = arith.constant 0 : index
    %c0_12 = arith.constant 0 : index
    %32 = vector.load %arg4[%c0_11, %c0_12] : memref<256x128xbf16, #tpu.memory_space<vmem>>, vector<256x128xbf16>
    tpu.vector_store %arg4[%c0_11, %c0_12], %31 {strides = array<i32>} : memref<256x128xbf16, #tpu.memory_space<vmem>>, vector<256x128xbf16>,
    return
  }
  func.func @transform_0(%arg0: i32) -> (i32, i32) {
    %c0_i32 = arith.constant 0 : i32
    %c0_i32_0 = arith.constant 0 : i32
    return %c0_i32, %arg0 : i32, i32
  }
  func.func @transform_1(%arg0: i32) -> (i32, i32) {
    %c0_i32 = arith.constant 0 : i32
    %c0_i32_0 = arith.constant 0 : i32
    return %c0_i32, %arg0 : i32, i32
  }
  func.func @transform_2(%arg0: i32) -> (i32, i32) {
    %c0_i32 = arith.constant 0 : i32
    %c0_i32_0 = arith.constant 0 : i32
    return %c0_i32, %arg0 : i32, i32
  }
  func.func @transform_3(%arg0: i32) -> (i32, i32) {
    %c0_i32 = arith.constant 0 : i32
    %c0_i32_0 = arith.constant 0 : i32
    return %c0_i32, %arg0 : i32, i32
  }
}

module attributes {stable_mosaic.version = 11 : i64} {
  func.func @kernel(%arg0: i32, %arg1: memref<64x256xbf16, #tpu.memory_space<vmem>>, %arg2: memref<1x256xf32, #tpu.memory_space<vmem>>, %arg3: memref<1x256xf32, #tpu.memory_space<vmem>>, %arg4: memref<64x256xbf16, #tpu.memory_space<vmem>>) attributes {dimension_semantics = [#tpu.dimension_semantics<parallel>], iteration_bounds = array<i64: 1>, scalar_prefetch = 0 : i64, scratch_operands = 0 : i64, tpu.core_type = #tpu.core_type<tc>, window_params = [{transform_indices = @transform_0, window_bounds = array<i64: 64, 256>}, {transform_indices = @transform_1, window_bounds = array<i64: 1, 256>}, {transform_indices = @transform_2, window_bounds = array<i64: 1, 256>}, {transform_indices = @transform_3, window_bounds = array<i64: 64, 256>}]} {
    %c0 = arith.constant 0 : index
    %c0_0 = arith.constant 0 : index
    %0 = vector.load %arg1[%c0, %c0_0] : memref<64x256xbf16, #tpu.memory_space<vmem>>, vector<64x256xbf16>
    %1 = arith.extf %0 : vector<64x256xbf16> to vector<64x256xf32>
    %cst = arith.constant dense<0.000000e+00> : vector<256xf32>
    %2 = vector.multi_reduction <add>, %1, %cst [0] : vector<64x256xf32> to vector<256xf32>
    %3 = vector.shape_cast %2 : vector<256xf32> to vector<1x256xf32>
    %4 = arith.mulf %1, %1 : vector<64x256xf32>
    %cst_1 = arith.constant dense<0.000000e+00> : vector<256xf32>
    %5 = vector.multi_reduction <add>, %4, %cst_1 [0] : vector<64x256xf32> to vector<256xf32>
    %6 = vector.shape_cast %5 : vector<256xf32> to vector<1x256xf32>
    %cst_2 = arith.constant 1.562500e-02 : f32
    %7 = vector.broadcast %cst_2 : f32 to vector<1x256xf32>
    %8 = arith.mulf %3, %7 : vector<1x256xf32>
    %cst_3 = arith.constant 1.562500e-02 : f32
    %9 = vector.broadcast %cst_3 : f32 to vector<1x256xf32>
    %10 = arith.mulf %6, %9 : vector<1x256xf32>
    %11 = arith.mulf %8, %8 : vector<1x256xf32>
    %12 = arith.subf %10, %11 : vector<1x256xf32>
    %13 = vector.broadcast %8 : vector<1x256xf32> to vector<64x256xf32>
    %14 = arith.subf %1, %13 : vector<64x256xf32>
    %cst_4 = arith.constant 9.99999974E-6 : f32
    %15 = vector.broadcast %cst_4 : f32 to vector<1x256xf32>
    %16 = arith.addf %12, %15 : vector<1x256xf32>
    %17 = math.rsqrt %16 : vector<1x256xf32>
    %18 = vector.broadcast %17 : vector<1x256xf32> to vector<64x256xf32>
    %19 = arith.mulf %14, %18 : vector<64x256xf32>
    %c0_5 = arith.constant 0 : index
    %c0_6 = arith.constant 0 : index
    %20 = vector.load %arg2[%c0_5, %c0_6] : memref<1x256xf32, #tpu.memory_space<vmem>>, vector<1x256xf32>
    %21 = vector.broadcast %20 : vector<1x256xf32> to vector<64x256xf32>
    %22 = arith.mulf %19, %21 : vector<64x256xf32>
    %c0_7 = arith.constant 0 : index
    %c0_8 = arith.constant 0 : index
    %23 = vector.load %arg3[%c0_7, %c0_8] : memref<1x256xf32, #tpu.memory_space<vmem>>, vector<1x256xf32>
    %24 = vector.broadcast %23 : vector<1x256xf32> to vector<64x256xf32>
    %25 = arith.addf %22, %24 : vector<64x256xf32>
    %cst_9 = arith.constant 0.000000e+00 : f32
    %26 = vector.broadcast %cst_9 : f32 to vector<64x256xf32>
    %27 = arith.cmpf oge, %25, %26 : vector<64x256xf32>
    %cst_10 = arith.constant 2.000000e-01 : f32
    %28 = vector.broadcast %cst_10 : f32 to vector<64x256xf32>
    %29 = arith.mulf %28, %25 : vector<64x256xf32>
    %30 = arith.select %27, %25, %29 : vector<64x256xi1>, vector<64x256xf32>
    %31 = arith.truncf %30 : vector<64x256xf32> to vector<64x256xbf16>
    %c0_11 = arith.constant 0 : index
    %c0_12 = arith.constant 0 : index
    %32 = vector.load %arg4[%c0_11, %c0_12] : memref<64x256xbf16, #tpu.memory_space<vmem>>, vector<64x256xbf16>
    tpu.vector_store %arg4[%c0_11, %c0_12], %31 {strides = array<i32>} : memref<64x256xbf16, #tpu.memory_space<vmem>>, vector<64x256xbf16>,
    return
  }
  func.func @transform_0(%arg0: i32) -> (i32, i32) {
    %c0_i32 = arith.constant 0 : i32
    %c0_i32_0 = arith.constant 0 : i32
    return %c0_i32, %arg0 : i32, i32
  }
  func.func @transform_1(%arg0: i32) -> (i32, i32) {
    %c0_i32 = arith.constant 0 : i32
    %c0_i32_0 = arith.constant 0 : i32
    return %c0_i32, %arg0 : i32, i32
  }
  func.func @transform_2(%arg0: i32) -> (i32, i32) {
    %c0_i32 = arith.constant 0 : i32
    %c0_i32_0 = arith.constant 0 : i32
    return %c0_i32, %arg0 : i32, i32
  }
  func.func @transform_3(%arg0: i32) -> (i32, i32) {
    %c0_i32 = arith.constant 0 : i32
    %c0_i32_0 = arith.constant 0 : i32
    return %c0_i32, %arg0 : i32, i32
  }
}

module attributes {stable_mosaic.version = 11 : i64} {
  func.func @kernel(%arg0: i32, %arg1: i32, %arg2: i32, %arg3: memref<64x512xbf16, #tpu.memory_space<vmem>>, %arg4: memref<512x256xbf16, #tpu.memory_space<vmem>>, %arg5: memref<1x256xf32, #tpu.memory_space<vmem>>, %arg6: memref<64x256xbf16, #tpu.memory_space<vmem>>, %arg7: memref<64x256xf32, #tpu.memory_space<vmem>>) attributes {dimension_semantics = [#tpu.dimension_semantics<parallel>, #tpu.dimension_semantics<parallel>, #tpu.dimension_semantics<arbitrary>], iteration_bounds = array<i64: 1, 1, 4>, scalar_prefetch = 0 : i64, scratch_operands = 1 : i64, tpu.core_type = #tpu.core_type<tc>, window_params = [{transform_indices = @transform_0, window_bounds = array<i64: 64, 512>}, {transform_indices = @transform_1, window_bounds = array<i64: 512, 256>}, {transform_indices = @transform_2, window_bounds = array<i64: 1, 256>}, {transform_indices = @transform_3, window_bounds = array<i64: 64, 256>}]} {
    %c0_i32 = arith.constant 0 : i32
    %0 = arith.cmpi eq, %arg2, %c0_i32 : i32
    %1 = arith.extui %0 : i1 to i32
    %c0_i32_0 = arith.constant 0 : i32
    %2 = arith.cmpi ne, %1, %c0_i32_0 : i32
    scf.if %2 {
      %cst_9 = arith.constant 0.000000e+00 : f32
      %12 = vector.broadcast %cst_9 : f32 to vector<64x256xf32>
      %c0_10 = arith.constant 0 : index
      %c0_11 = arith.constant 0 : index
      %13 = vector.load %arg7[%c0_10, %c0_11] : memref<64x256xf32, #tpu.memory_space<vmem>>, vector<64x256xf32>
      tpu.vector_store %arg7[%c0_10, %c0_11], %12 {strides = array<i32>} : memref<64x256xf32, #tpu.memory_space<vmem>>, vector<64x256xf32>,
    } else {
    }
    %c0 = arith.constant 0 : index
    %c0_1 = arith.constant 0 : index
    %3 = vector.load %arg7[%c0, %c0_1] : memref<64x256xf32, #tpu.memory_space<vmem>>, vector<64x256xf32>
    %c0_2 = arith.constant 0 : index
    %c0_3 = arith.constant 0 : index
    %4 = vector.load %arg3[%c0_2, %c0_3] : memref<64x512xbf16, #tpu.memory_space<vmem>>, vector<64x512xbf16>
    %c0_4 = arith.constant 0 : index
    %c0_5 = arith.constant 0 : index
    %5 = vector.load %arg4[%c0_4, %c0_5] : memref<512x256xbf16, #tpu.memory_space<vmem>>, vector<512x256xbf16>
    %cst = arith.constant dense<0.000000e+00> : vector<64x256xf32>
    %6 = tpu.matmul %4, %5, %cst {dimension_numbers = #tpu.dot_dimension_numbers<[1], [0], [0], [1], [0, 0, 1, 1], [], []>} : vector<64x512xbf16>, vector<512x256xbf16>, vector<64x256xf32> -> vector<64x256xf32>
    %7 = arith.addf %3, %6 : vector<64x256xf32>
    %c0_6 = arith.constant 0 : index
    %c0_7 = arith.constant 0 : index
    %8 = vector.load %arg7[%c0_6, %c0_7] : memref<64x256xf32, #tpu.memory_space<vmem>>, vector<64x256xf32>
    tpu.vector_store %arg7[%c0_6, %c0_7], %7 {strides = array<i32>} : memref<64x256xf32, #tpu.memory_space<vmem>>, vector<64x256xf32>,
    %c3_i32 = arith.constant 3 : i32
    %9 = arith.cmpi eq, %arg2, %c3_i32 : i32
    %10 = arith.extui %9 : i1 to i32
    %c0_i32_8 = arith.constant 0 : i32
    %11 = arith.cmpi ne, %10, %c0_i32_8 : i32
    scf.if %11 {
      %c0_9 = arith.constant 0 : index
      %c0_10 = arith.constant 0 : index
      %12 = vector.load %arg7[%c0_9, %c0_10] : memref<64x256xf32, #tpu.memory_space<vmem>>, vector<64x256xf32>
      %c0_11 = arith.constant 0 : index
      %c0_12 = arith.constant 0 : index
      %13 = vector.load %arg5[%c0_11, %c0_12] : memref<1x256xf32, #tpu.memory_space<vmem>>, vector<1x256xf32>
      %14 = vector.broadcast %13 : vector<1x256xf32> to vector<64x256xf32>
      %15 = arith.addf %12, %14 : vector<64x256xf32>
      %16 = arith.truncf %15 : vector<64x256xf32> to vector<64x256xbf16>
      %c0_13 = arith.constant 0 : index
      %c0_14 = arith.constant 0 : index
      %17 = vector.load %arg6[%c0_13, %c0_14] : memref<64x256xbf16, #tpu.memory_space<vmem>>, vector<64x256xbf16>
      tpu.vector_store %arg6[%c0_13, %c0_14], %16 {strides = array<i32>} : memref<64x256xbf16, #tpu.memory_space<vmem>>, vector<64x256xbf16>,
    } else {
    }
    return
  }
  func.func @transform_0(%arg0: i32, %arg1: i32, %arg2: i32) -> (i32, i32) {
    %c0_i32 = arith.constant 0 : i32
    return %arg0, %arg2 : i32, i32
  }
  func.func @transform_1(%arg0: i32, %arg1: i32, %arg2: i32) -> (i32, i32) {
    %c0_i32 = arith.constant 0 : i32
    return %arg2, %arg1 : i32, i32
  }
  func.func @transform_2(%arg0: i32, %arg1: i32, %arg2: i32) -> (i32, i32) {
    %c0_i32 = arith.constant 0 : i32
    %c0_i32_0 = arith.constant 0 : i32
    return %c0_i32, %arg1 : i32, i32
  }
  func.func @transform_3(%arg0: i32, %arg1: i32, %arg2: i32) -> (i32, i32) {
    %c0_i32 = arith.constant 0 : i32
    return %arg0, %arg1 : i32, i32
  }
}

module attributes {stable_mosaic.version = 11 : i64} {
  func.func @kernel(%arg0: i32, %arg1: i32, %arg2: i32, %arg3: memref<48x512xbf16, #tpu.memory_space<vmem>>, %arg4: memref<512x256xbf16, #tpu.memory_space<vmem>>, %arg5: memref<1x256xf32, #tpu.memory_space<vmem>>, %arg6: memref<48x256xbf16, #tpu.memory_space<vmem>>, %arg7: memref<48x256xf32, #tpu.memory_space<vmem>>) attributes {dimension_semantics = [#tpu.dimension_semantics<parallel>, #tpu.dimension_semantics<parallel>, #tpu.dimension_semantics<arbitrary>], iteration_bounds = array<i64: 1, 2, 8>, scalar_prefetch = 0 : i64, scratch_operands = 1 : i64, tpu.core_type = #tpu.core_type<tc>, window_params = [{transform_indices = @transform_0, window_bounds = array<i64: 48, 512>}, {transform_indices = @transform_1, window_bounds = array<i64: 512, 256>}, {transform_indices = @transform_2, window_bounds = array<i64: 1, 256>}, {transform_indices = @transform_3, window_bounds = array<i64: 48, 256>}]} {
    %c0_i32 = arith.constant 0 : i32
    %0 = arith.cmpi eq, %arg2, %c0_i32 : i32
    %1 = arith.extui %0 : i1 to i32
    %c0_i32_0 = arith.constant 0 : i32
    %2 = arith.cmpi ne, %1, %c0_i32_0 : i32
    scf.if %2 {
      %cst_9 = arith.constant 0.000000e+00 : f32
      %12 = vector.broadcast %cst_9 : f32 to vector<48x256xf32>
      %c0_10 = arith.constant 0 : index
      %c0_11 = arith.constant 0 : index
      %13 = vector.load %arg7[%c0_10, %c0_11] : memref<48x256xf32, #tpu.memory_space<vmem>>, vector<48x256xf32>
      tpu.vector_store %arg7[%c0_10, %c0_11], %12 {strides = array<i32>} : memref<48x256xf32, #tpu.memory_space<vmem>>, vector<48x256xf32>,
    } else {
    }
    %c0 = arith.constant 0 : index
    %c0_1 = arith.constant 0 : index
    %3 = vector.load %arg7[%c0, %c0_1] : memref<48x256xf32, #tpu.memory_space<vmem>>, vector<48x256xf32>
    %c0_2 = arith.constant 0 : index
    %c0_3 = arith.constant 0 : index
    %4 = vector.load %arg3[%c0_2, %c0_3] : memref<48x512xbf16, #tpu.memory_space<vmem>>, vector<48x512xbf16>
    %c0_4 = arith.constant 0 : index
    %c0_5 = arith.constant 0 : index
    %5 = vector.load %arg4[%c0_4, %c0_5] : memref<512x256xbf16, #tpu.memory_space<vmem>>, vector<512x256xbf16>
    %cst = arith.constant dense<0.000000e+00> : vector<48x256xf32>
    %6 = tpu.matmul %4, %5, %cst {dimension_numbers = #tpu.dot_dimension_numbers<[1], [0], [0], [1], [0, 0, 1, 1], [], []>} : vector<48x512xbf16>, vector<512x256xbf16>, vector<48x256xf32> -> vector<48x256xf32>
    %7 = arith.addf %3, %6 : vector<48x256xf32>
    %c0_6 = arith.constant 0 : index
    %c0_7 = arith.constant 0 : index
    %8 = vector.load %arg7[%c0_6, %c0_7] : memref<48x256xf32, #tpu.memory_space<vmem>>, vector<48x256xf32>
    tpu.vector_store %arg7[%c0_6, %c0_7], %7 {strides = array<i32>} : memref<48x256xf32, #tpu.memory_space<vmem>>, vector<48x256xf32>,
    %c7_i32 = arith.constant 7 : i32
    %9 = arith.cmpi eq, %arg2, %c7_i32 : i32
    %10 = arith.extui %9 : i1 to i32
    %c0_i32_8 = arith.constant 0 : i32
    %11 = arith.cmpi ne, %10, %c0_i32_8 : i32
    scf.if %11 {
      %c0_9 = arith.constant 0 : index
      %c0_10 = arith.constant 0 : index
      %12 = vector.load %arg7[%c0_9, %c0_10] : memref<48x256xf32, #tpu.memory_space<vmem>>, vector<48x256xf32>
      %c0_11 = arith.constant 0 : index
      %c0_12 = arith.constant 0 : index
      %13 = vector.load %arg5[%c0_11, %c0_12] : memref<1x256xf32, #tpu.memory_space<vmem>>, vector<1x256xf32>
      %14 = vector.broadcast %13 : vector<1x256xf32> to vector<48x256xf32>
      %15 = arith.addf %12, %14 : vector<48x256xf32>
      %16 = arith.truncf %15 : vector<48x256xf32> to vector<48x256xbf16>
      %c0_13 = arith.constant 0 : index
      %c0_14 = arith.constant 0 : index
      %17 = vector.load %arg6[%c0_13, %c0_14] : memref<48x256xbf16, #tpu.memory_space<vmem>>, vector<48x256xbf16>
      tpu.vector_store %arg6[%c0_13, %c0_14], %16 {strides = array<i32>} : memref<48x256xbf16, #tpu.memory_space<vmem>>, vector<48x256xbf16>,
    } else {
    }
    return
  }
  func.func @transform_0(%arg0: i32, %arg1: i32, %arg2: i32) -> (i32, i32) {
    %c0_i32 = arith.constant 0 : i32
    return %arg0, %arg2 : i32, i32
  }
  func.func @transform_1(%arg0: i32, %arg1: i32, %arg2: i32) -> (i32, i32) {
    %c0_i32 = arith.constant 0 : i32
    return %arg2, %arg1 : i32, i32
  }
  func.func @transform_2(%arg0: i32, %arg1: i32, %arg2: i32) -> (i32, i32) {
    %c0_i32 = arith.constant 0 : i32
    %c0_i32_0 = arith.constant 0 : i32
    return %c0_i32, %arg1 : i32, i32
  }
  func.func @transform_3(%arg0: i32, %arg1: i32, %arg2: i32) -> (i32, i32) {
    %c0_i32 = arith.constant 0 : i32
    return %arg0, %arg1 : i32, i32
  }
}

module attributes {stable_mosaic.version = 11 : i64} {
  func.func @kernel(%arg0: i32, %arg1: memref<36x512xbf16, #tpu.memory_space<vmem>>, %arg2: memref<1x512xf32, #tpu.memory_space<vmem>>, %arg3: memref<1x512xf32, #tpu.memory_space<vmem>>, %arg4: memref<36x512xbf16, #tpu.memory_space<vmem>>) attributes {dimension_semantics = [#tpu.dimension_semantics<parallel>], iteration_bounds = array<i64: 1>, scalar_prefetch = 0 : i64, scratch_operands = 0 : i64, tpu.core_type = #tpu.core_type<tc>, window_params = [{transform_indices = @transform_0, window_bounds = array<i64: 36, 512>}, {transform_indices = @transform_1, window_bounds = array<i64: 1, 512>}, {transform_indices = @transform_2, window_bounds = array<i64: 1, 512>}, {transform_indices = @transform_3, window_bounds = array<i64: 36, 512>}]} {
    %c0 = arith.constant 0 : index
    %c0_0 = arith.constant 0 : index
    %0 = vector.load %arg1[%c0, %c0_0] : memref<36x512xbf16, #tpu.memory_space<vmem>>, vector<36x512xbf16>
    %1 = arith.extf %0 : vector<36x512xbf16> to vector<36x512xf32>
    %cst = arith.constant dense<0.000000e+00> : vector<512xf32>
    %2 = vector.multi_reduction <add>, %1, %cst [0] : vector<36x512xf32> to vector<512xf32>
    %3 = vector.shape_cast %2 : vector<512xf32> to vector<1x512xf32>
    %4 = arith.mulf %1, %1 : vector<36x512xf32>
    %cst_1 = arith.constant dense<0.000000e+00> : vector<512xf32>
    %5 = vector.multi_reduction <add>, %4, %cst_1 [0] : vector<36x512xf32> to vector<512xf32>
    %6 = vector.shape_cast %5 : vector<512xf32> to vector<1x512xf32>
    %cst_2 = arith.constant 0.027777778 : f32
    %7 = vector.broadcast %cst_2 : f32 to vector<1x512xf32>
    %8 = arith.mulf %3, %7 : vector<1x512xf32>
    %cst_3 = arith.constant 0.027777778 : f32
    %9 = vector.broadcast %cst_3 : f32 to vector<1x512xf32>
    %10 = arith.mulf %6, %9 : vector<1x512xf32>
    %11 = arith.mulf %8, %8 : vector<1x512xf32>
    %12 = arith.subf %10, %11 : vector<1x512xf32>
    %13 = vector.broadcast %8 : vector<1x512xf32> to vector<36x512xf32>
    %14 = arith.subf %1, %13 : vector<36x512xf32>
    %cst_4 = arith.constant 9.99999974E-6 : f32
    %15 = vector.broadcast %cst_4 : f32 to vector<1x512xf32>
    %16 = arith.addf %12, %15 : vector<1x512xf32>
    %17 = math.rsqrt %16 : vector<1x512xf32>
    %18 = vector.broadcast %17 : vector<1x512xf32> to vector<36x512xf32>
    %19 = arith.mulf %14, %18 : vector<36x512xf32>
    %c0_5 = arith.constant 0 : index
    %c0_6 = arith.constant 0 : index
    %20 = vector.load %arg2[%c0_5, %c0_6] : memref<1x512xf32, #tpu.memory_space<vmem>>, vector<1x512xf32>
    %21 = vector.broadcast %20 : vector<1x512xf32> to vector<36x512xf32>
    %22 = arith.mulf %19, %21 : vector<36x512xf32>
    %c0_7 = arith.constant 0 : index
    %c0_8 = arith.constant 0 : index
    %23 = vector.load %arg3[%c0_7, %c0_8] : memref<1x512xf32, #tpu.memory_space<vmem>>, vector<1x512xf32>
    %24 = vector.broadcast %23 : vector<1x512xf32> to vector<36x512xf32>
    %25 = arith.addf %22, %24 : vector<36x512xf32>
    %cst_9 = arith.constant 0.000000e+00 : f32
    %26 = vector.broadcast %cst_9 : f32 to vector<36x512xf32>
    %27 = arith.cmpf oge, %25, %26 : vector<36x512xf32>
    %cst_10 = arith.constant 2.000000e-01 : f32
    %28 = vector.broadcast %cst_10 : f32 to vector<36x512xf32>
    %29 = arith.mulf %28, %25 : vector<36x512xf32>
    %30 = arith.select %27, %25, %29 : vector<36x512xi1>, vector<36x512xf32>
    %31 = arith.truncf %30 : vector<36x512xf32> to vector<36x512xbf16>
    %c0_11 = arith.constant 0 : index
    %c0_12 = arith.constant 0 : index
    %32 = vector.load %arg4[%c0_11, %c0_12] : memref<36x512xbf16, #tpu.memory_space<vmem>>, vector<36x512xbf16>
    tpu.vector_store %arg4[%c0_11, %c0_12], %31 {strides = array<i32>} : memref<36x512xbf16, #tpu.memory_space<vmem>>, vector<36x512xbf16>,
    return
  }
  func.func @transform_0(%arg0: i32) -> (i32, i32) {
    %c0_i32 = arith.constant 0 : i32
    %c0_i32_0 = arith.constant 0 : i32
    return %c0_i32, %arg0 : i32, i32
  }
  func.func @transform_1(%arg0: i32) -> (i32, i32) {
    %c0_i32 = arith.constant 0 : i32
    %c0_i32_0 = arith.constant 0 : i32
    return %c0_i32, %arg0 : i32, i32
  }
  func.func @transform_2(%arg0: i32) -> (i32, i32) {
    %c0_i32 = arith.constant 0 : i32
    %c0_i32_0 = arith.constant 0 : i32
    return %c0_i32, %arg0 : i32, i32
  }
  func.func @transform_3(%arg0: i32) -> (i32, i32) {
    %c0_i32 = arith.constant 0 : i32
    %c0_i32_0 = arith.constant 0 : i32
    return %c0_i32, %arg0 : i32, i32
  }
}

module attributes {stable_mosaic.version = 11 : i64} {
  func.func @kernel(%arg0: i32, %arg1: i32, %arg2: i32, %arg3: memref<16x512xbf16, #tpu.memory_space<vmem>>, %arg4: memref<512x128xbf16, #tpu.memory_space<vmem>>, %arg5: memref<1x128xf32, #tpu.memory_space<vmem>>, %arg6: memref<16x128xf32, #tpu.memory_space<vmem>>, %arg7: memref<16x128xf32, #tpu.memory_space<vmem>>) attributes {dimension_semantics = [#tpu.dimension_semantics<parallel>, #tpu.dimension_semantics<parallel>, #tpu.dimension_semantics<arbitrary>], iteration_bounds = array<i64: 1, 1, 16>, scalar_prefetch = 0 : i64, scratch_operands = 1 : i64, tpu.core_type = #tpu.core_type<tc>, window_params = [{transform_indices = @transform_0, window_bounds = array<i64: 16, 512>}, {transform_indices = @transform_1, window_bounds = array<i64: 512, 128>}, {transform_indices = @transform_2, window_bounds = array<i64: 1, 128>}, {transform_indices = @transform_3, window_bounds = array<i64: 16, 128>}]} {
    %c0_i32 = arith.constant 0 : i32
    %0 = arith.cmpi eq, %arg2, %c0_i32 : i32
    %1 = arith.extui %0 : i1 to i32
    %c0_i32_0 = arith.constant 0 : i32
    %2 = arith.cmpi ne, %1, %c0_i32_0 : i32
    scf.if %2 {
      %cst_9 = arith.constant 0.000000e+00 : f32
      %12 = vector.broadcast %cst_9 : f32 to vector<16x128xf32>
      %c0_10 = arith.constant 0 : index
      %c0_11 = arith.constant 0 : index
      %13 = vector.load %arg7[%c0_10, %c0_11] : memref<16x128xf32, #tpu.memory_space<vmem>>, vector<16x128xf32>
      tpu.vector_store %arg7[%c0_10, %c0_11], %12 {strides = array<i32>} : memref<16x128xf32, #tpu.memory_space<vmem>>, vector<16x128xf32>,
    } else {
    }
    %c0 = arith.constant 0 : index
    %c0_1 = arith.constant 0 : index
    %3 = vector.load %arg7[%c0, %c0_1] : memref<16x128xf32, #tpu.memory_space<vmem>>, vector<16x128xf32>
    %c0_2 = arith.constant 0 : index
    %c0_3 = arith.constant 0 : index
    %4 = vector.load %arg3[%c0_2, %c0_3] : memref<16x512xbf16, #tpu.memory_space<vmem>>, vector<16x512xbf16>
    %c0_4 = arith.constant 0 : index
    %c0_5 = arith.constant 0 : index
    %5 = vector.load %arg4[%c0_4, %c0_5] : memref<512x128xbf16, #tpu.memory_space<vmem>>, vector<512x128xbf16>
    %cst = arith.constant dense<0.000000e+00> : vector<16x128xf32>
    %6 = tpu.matmul %4, %5, %cst {dimension_numbers = #tpu.dot_dimension_numbers<[1], [0], [0], [1], [0, 0, 1, 1], [], []>} : vector<16x512xbf16>, vector<512x128xbf16>, vector<16x128xf32> -> vector<16x128xf32>
    %7 = arith.addf %3, %6 : vector<16x128xf32>
    %c0_6 = arith.constant 0 : index
    %c0_7 = arith.constant 0 : index
    %8 = vector.load %arg7[%c0_6, %c0_7] : memref<16x128xf32, #tpu.memory_space<vmem>>, vector<16x128xf32>
    tpu.vector_store %arg7[%c0_6, %c0_7], %7 {strides = array<i32>} : memref<16x128xf32, #tpu.memory_space<vmem>>, vector<16x128xf32>,
    %c15_i32 = arith.constant 15 : i32
    %9 = arith.cmpi eq, %arg2, %c15_i32 : i32
    %10 = arith.extui %9 : i1 to i32
    %c0_i32_8 = arith.constant 0 : i32
    %11 = arith.cmpi ne, %10, %c0_i32_8 : i32
    scf.if %11 {
      %c0_9 = arith.constant 0 : index
      %c0_10 = arith.constant 0 : index
      %12 = vector.load %arg7[%c0_9, %c0_10] : memref<16x128xf32, #tpu.memory_space<vmem>>, vector<16x128xf32>
      %c0_11 = arith.constant 0 : index
      %c0_12 = arith.constant 0 : index
      %13 = vector.load %arg5[%c0_11, %c0_12] : memref<1x128xf32, #tpu.memory_space<vmem>>, vector<1x128xf32>
      %14 = vector.broadcast %13 : vector<1x128xf32> to vector<16x128xf32>
      %15 = arith.addf %12, %14 : vector<16x128xf32>
      %c0_13 = arith.constant 0 : index
      %c0_14 = arith.constant 0 : index
      %16 = vector.load %arg6[%c0_13, %c0_14] : memref<16x128xf32, #tpu.memory_space<vmem>>, vector<16x128xf32>
      tpu.vector_store %arg6[%c0_13, %c0_14], %15 {strides = array<i32>} : memref<16x128xf32, #tpu.memory_space<vmem>>, vector<16x128xf32>,
    } else {
    }
    return
  }
  func.func @transform_0(%arg0: i32, %arg1: i32, %arg2: i32) -> (i32, i32) {
    %c0_i32 = arith.constant 0 : i32
    return %arg0, %arg2 : i32, i32
  }
  func.func @transform_1(%arg0: i32, %arg1: i32, %arg2: i32) -> (i32, i32) {
    %c0_i32 = arith.constant 0 : i32
    return %arg2, %arg1 : i32, i32
  }
  func.func @transform_2(%arg0: i32, %arg1: i32, %arg2: i32) -> (i32, i32) {
    %c0_i32 = arith.constant 0 : i32
    %c0_i32_0 = arith.constant 0 : i32
    return %c0_i32, %arg1 : i32, i32
  }
  func.func @transform_3(%arg0: i32, %arg1: i32, %arg2: i32) -> (i32, i32) {
    %c0_i32 = arith.constant 0 : i32
    return %arg0, %arg1 : i32, i32
  }
}

module attributes {stable_mosaic.version = 11 : i64} {
  func.func @_loss_kernel(%arg0: memref<1x8xf32, #tpu.memory_space<vmem>>, %arg1: memref<1x8xf32, #tpu.memory_space<vmem>>, %arg2: memref<32x128xf32, #tpu.memory_space<vmem>>, %arg3: memref<32x128xf32, #tpu.memory_space<vmem>>, %arg4: memref<1x1xf32, #tpu.memory_space<vmem>>, %arg5: memref<1x1xf32, #tpu.memory_space<vmem>>, %arg6: memref<1x1xf32, #tpu.memory_space<vmem>>, %arg7: memref<1x1xf32, #tpu.memory_space<vmem>>) attributes {dimension_semantics = [], scalar_prefetch = 0 : i64, scratch_operands = 0 : i64, tpu.core_type = #tpu.core_type<tc>} {
    %c0 = arith.constant 0 : index
    %c0_0 = arith.constant 0 : index
    %0 = vector.load %arg0[%c0, %c0_0] : memref<1x8xf32, #tpu.memory_space<vmem>>, vector<1x8xf32>
    %c0_1 = arith.constant 0 : index
    %c0_2 = arith.constant 0 : index
    %1 = vector.load %arg1[%c0_1, %c0_2] : memref<1x8xf32, #tpu.memory_space<vmem>>, vector<1x8xf32>
    %c0_3 = arith.constant 0 : index
    %c0_4 = arith.constant 0 : index
    %2 = vector.load %arg2[%c0_3, %c0_4] : memref<32x128xf32, #tpu.memory_space<vmem>>, vector<32x128xf32>
    %c0_5 = arith.constant 0 : index
    %c0_6 = arith.constant 0 : index
    %3 = vector.load %arg3[%c0_5, %c0_6] : memref<32x128xf32, #tpu.memory_space<vmem>>, vector<32x128xf32>
    %4 = arith.mulf %0, %0 : vector<1x8xf32>
    %5 = vector.shape_cast %4 : vector<1x8xf32> to vector<1x1x8xf32>
    %cst = arith.constant dense<0.000000e+00> : vector<1xf32>
    %6 = vector.multi_reduction <add>, %5, %cst [1, 2] : vector<1x1x8xf32> to vector<1xf32>
    %7 = vector.shape_cast %6 : vector<1xf32> to vector<1x1x1xf32>
    %8 = vector.extract %7[0, 0, 0] : f32 from vector<1x1x1xf32>
    %9 = vector.broadcast %8 : f32 to vector<1x1xf32>
    %cst_7 = arith.constant 8.000000e+00 : f32
    %10 = vector.broadcast %cst_7 : f32 to vector<1x1xf32>
    %11 = arith.divf %9, %10 : vector<1x1xf32>
    %c0_8 = arith.constant 0 : index
    %c0_9 = arith.constant 0 : index
    %12 = vector.load %arg4[%c0_8, %c0_9] : memref<1x1xf32, #tpu.memory_space<vmem>>, vector<1x1xf32>
    tpu.vector_store %arg4[%c0_8, %c0_9], %11 {strides = array<i32>} : memref<1x1xf32, #tpu.memory_space<vmem>>, vector<1x1xf32>,
    %cst_10 = arith.constant 1.000000e+00 : f32
    %13 = vector.broadcast %cst_10 : f32 to vector<1x8xf32>
    %14 = arith.subf %1, %13 : vector<1x8xf32>
    %15 = arith.mulf %14, %14 : vector<1x8xf32>
    %16 = vector.shape_cast %15 : vector<1x8xf32> to vector<1x1x8xf32>
    %cst_11 = arith.constant dense<0.000000e+00> : vector<1xf32>
    %17 = vector.multi_reduction <add>, %16, %cst_11 [1, 2] : vector<1x1x8xf32> to vector<1xf32>
    %18 = vector.shape_cast %17 : vector<1xf32> to vector<1x1x1xf32>
    %19 = vector.extract %18[0, 0, 0] : f32 from vector<1x1x1xf32>
    %20 = vector.broadcast %19 : f32 to vector<1x1xf32>
    %cst_12 = arith.constant 8.000000e+00 : f32
    %21 = vector.broadcast %cst_12 : f32 to vector<1x1xf32>
    %22 = arith.divf %20, %21 : vector<1x1xf32>
    %c0_13 = arith.constant 0 : index
    %c0_14 = arith.constant 0 : index
    %23 = vector.load %arg5[%c0_13, %c0_14] : memref<1x1xf32, #tpu.memory_space<vmem>>, vector<1x1xf32>
    tpu.vector_store %arg5[%c0_13, %c0_14], %22 {strides = array<i32>} : memref<1x1xf32, #tpu.memory_space<vmem>>, vector<1x1xf32>,
    %cst_15 = arith.constant 1.000000e+00 : f32
    %24 = vector.broadcast %cst_15 : f32 to vector<1x8xf32>
    %25 = arith.subf %0, %24 : vector<1x8xf32>
    %26 = arith.mulf %25, %25 : vector<1x8xf32>
    %27 = vector.shape_cast %26 : vector<1x8xf32> to vector<1x1x8xf32>
    %cst_16 = arith.constant dense<0.000000e+00> : vector<1xf32>
    %28 = vector.multi_reduction <add>, %27, %cst_16 [1, 2] : vector<1x1x8xf32> to vector<1xf32>
    %29 = vector.shape_cast %28 : vector<1xf32> to vector<1x1x1xf32>
    %30 = vector.extract %29[0, 0, 0] : f32 from vector<1x1x1xf32>
    %31 = vector.broadcast %30 : f32 to vector<1x1xf32>
    %cst_17 = arith.constant 8.000000e+00 : f32
    %32 = vector.broadcast %cst_17 : f32 to vector<1x1xf32>
    %33 = arith.divf %31, %32 : vector<1x1xf32>
    %c0_18 = arith.constant 0 : index
    %c0_19 = arith.constant 0 : index
    %34 = vector.load %arg6[%c0_18, %c0_19] : memref<1x1xf32, #tpu.memory_space<vmem>>, vector<1x1xf32>
    tpu.vector_store %arg6[%c0_18, %c0_19], %33 {strides = array<i32>} : memref<1x1xf32, #tpu.memory_space<vmem>>, vector<1x1xf32>,
    %35 = arith.subf %2, %3 : vector<32x128xf32>
    %36 = math.absf %35 : vector<32x128xf32>
    %37 = vector.shape_cast %36 : vector<32x128xf32> to vector<1x32x128xf32>
    %cst_20 = arith.constant dense<0.000000e+00> : vector<1xf32>
    %38 = vector.multi_reduction <add>, %37, %cst_20 [1, 2] : vector<1x32x128xf32> to vector<1xf32>
    %39 = vector.shape_cast %38 : vector<1xf32> to vector<1x1x1xf32>
    %40 = vector.extract %39[0, 0, 0] : f32 from vector<1x1x1xf32>
    %41 = vector.broadcast %40 : f32 to vector<1x1xf32>
    %cst_21 = arith.constant 4.096000e+03 : f32
    %42 = vector.broadcast %cst_21 : f32 to vector<1x1xf32>
    %43 = arith.divf %41, %42 : vector<1x1xf32>
    %c0_22 = arith.constant 0 : index
    %c0_23 = arith.constant 0 : index
    %44 = vector.load %arg7[%c0_22, %c0_23] : memref<1x1xf32, #tpu.memory_space<vmem>>, vector<1x1xf32>
    tpu.vector_store %arg7[%c0_22, %c0_23], %43 {strides = array<i32>} : memref<1x1xf32, #tpu.memory_space<vmem>>, vector<1x1xf32>,
    return
  }
}

</mosaic_0001>

<llo_original>
// kernel: main_model_step.10
$region0: #{main_model_step.10}
  #allocation0 [shape = 'u32[]', space=smem, size = 0x4, offset = 0x4, fixed_abs, tag = 'smem constant byte address 0x4 - core index']
  #allocation1 [shape = 'u32[144,128]{1,0:T(1,128)}', space=vmem, size = 0x12000, scoped, tag = 'internal scratch']
  #allocation2 [shape = 'f32[256,128]{1,0:T(8,128)}', space=vmem, size = 0x20000, scoped, tag = 'scratch operand']
  %s0 = inlined_call_operand.vmem [shape: bf16[2048,128], index: 0, kind: input, shape index: {}]
  %s1 = inlined_call_operand.vmem [shape: bf16[128,128], index: 1, kind: input, shape index: {}]
  %s2 = inlined_call_operand.vmem [shape: f32[1,128], index: 2, kind: input, shape index: {}]
  %s3 = inlined_call_operand.vmem [shape: f32[2048,128], index: 3, kind: output, shape index: {}]
  %s4 = sld [smem:[#allocation0]]
  $region53: #{main_model_step.10} parent=0
    _
  %s6 = ssub.s32 1, %s4
  %s7 = scalar_select 0, %s6, %s4
  loop: start=0, step=1, limit=10
  $region2: #{main_model_step.10} parent=0 // loop_pre_header
    _
  $region3: #{main_model_step.10} parent=0 // loop_header
    %s9 = sphi 0, %s13
    %p10 = scmp.ge.s32.totalorder %s9, 10
    %s16 = sphi 0, %s35
    %s17 = sphi 0, %s31
    %s18 = sphi 0, %s27
    %s19 = sphi 0, %s16
    %s20 = sphi 0, %s17
    %s21 = sphi 0, %s18
    %s22 = sphi 0, %s19
    %s23 = sphi 0, %s20
    %s24 = sphi 0, %s21
    %s40 = sphi 0, %s42
    %s43 = sphi 0, %s40
    %s44 = sphi 0, %s43
    %s60 = sphi 0, %s44
    %s68 = sphi 0, %s70
    %s71 = sphi 0, %s68
    %s72 = sphi 0, %s71
    %s88 = sphi 0, %s72
    %s94 = sphi 0, %s96
    %s97 = sphi 0, %s94
    %s98 = sphi 0, %s97
    %s114 = sphi 0, %s98
    %s122 = sphi 0, %s124
    %s125 = sphi 0, %s122
    %s126 = sphi 0, %s125
    %s142 = sphi 0, %s126
  $region4: #{main_model_step.10} parent=0 // loop_header_branch
    %12 = sbr.rel (%p10) target = $region8
  $region5: #{main_model_step.10} parent=0 // loop_body
    %s14 = ssub.s32 %s9, 1
    %s15 = ssub.s32 %s9, 2
    %s25 = sadd.s32 1, %s18
    %p26 = scmp.ge.s32.totalorder %s25, 1
    %s27 = scalar_select %p26, 0, %s25
    %s28 = sadd.s32 1, %s17
    %s29 = scalar_select %p26, %s28, %s17
    %p30 = scmp.ge.s32.totalorder %s29, 1
    %s31 = scalar_select %p30, 0, %s29
    %s32 = sadd.s32 1, %s16
    %s33 = scalar_select %p30, %s32, %s16
    %p34 = scmp.ge.s32.totalorder %s33, 8
    %s35 = scalar_select %p34, 0, %s33
    %s36 = ssub.s32 %s16, %s35
    %s37 = ssub.s32 %s18, %s27
    %s38 = sor.u32 %s36, %s37
    %p39 = scmp.eq.s32.totalorder %s38, 0
    %s41 = sadd.s32 %s40, 1
    %s42 = scalar_select %p39, %s40, %s41
    %p45 = pneg %p39
    %p46 = scmp.eq.s32.totalorder %s9, 7
    %p47 = por %p45, %p46
    %p48 = scmp.ne.s32.totalorder %s40, %s43
    %p49 = scmp.eq.s32.totalorder %s9, 0
    %p50 = por %p48, %p49
    %p51 = scmp.ne.s32.totalorder %s40, %s43
    %p52 = scmp.eq.s32.totalorder %s14, 7
    %p53 = por %p51, %p52
    %p54 = scmp.ne.s32.totalorder %s43, %s44
    %p55 = scmp.eq.s32.totalorder %s14, 0
    %p56 = por %p54, %p55
    %p57 = scmp.ne.s32.totalorder %s43, %s44
    %p58 = scmp.eq.s32.totalorder %s15, 7
    %p59 = por %p57, %p58
    %p61 = scmp.ne.s32.totalorder %s44, %s60
    %p62 = scmp.eq.s32.totalorder %s15, 0
    %p63 = por %p61, %p62
    %s64 = ssub.s32 %s18, %s27
    %s65 = ssub.s32 %s17, %s31
    %s66 = sor.u32 %s64, %s65
    %p67 = scmp.eq.s32.totalorder %s66, 0
    %s69 = sadd.s32 %s68, 1
    %s70 = scalar_select %p67, %s68, %s69
    %p73 = pneg %p67
    %p74 = scmp.eq.s32.totalorder %s9, 7
    %p75 = por %p73, %p74
    %p76 = scmp.ne.s32.totalorder %s68, %s71
    %p77 = scmp.eq.s32.totalorder %s9, 0
    %p78 = por %p76, %p77
    %p79 = scmp.ne.s32.totalorder %s68, %s71
    %p80 = scmp.eq.s32.totalorder %s14, 7
    %p81 = por %p79, %p80
    %p82 = scmp.ne.s32.totalorder %s71, %s72
    %p83 = scmp.eq.s32.totalorder %s14, 0
    %p84 = por %p82, %p83
    %p85 = scmp.ne.s32.totalorder %s71, %s72
    %p86 = scmp.eq.s32.totalorder %s15, 7
    %p87 = por %p85, %p86
    %p89 = scmp.ne.s32.totalorder %s72, %s88
    %p90 = scmp.eq.s32.totalorder %s15, 0
    %p91 = por %p89, %p90
    %s92 = ssub.s32 %s17, %s31
    %p93 = scmp.eq.s32.totalorder %s92, 0
    %s95 = sadd.s32 %s94, 1
    %s96 = scalar_select %p93, %s94, %s95
    %p99 = pneg %p93
    %p100 = scmp.eq.s32.totalorder %s9, 7
    %p101 = por %p99, %p100
    %p102 = scmp.ne.s32.totalorder %s94, %s97
    %p103 = scmp.eq.s32.totalorder %s9, 0
    %p104 = por %p102, %p103
    %p105 = scmp.ne.s32.totalorder %s94, %s97
    %p106 = scmp.eq.s32.totalorder %s14, 7
    %p107 = por %p105, %p106
    %p108 = scmp.ne.s32.totalorder %s97, %s98
    %p109 = scmp.eq.s32.totalorder %s14, 0
    %p110 = por %p108, %p109
    %p111 = scmp.ne.s32.totalorder %s97, %s98
    %p112 = scmp.eq.s32.totalorder %s15, 7
    %p113 = por %p111, %p112
    %p115 = scmp.ne.s32.totalorder %s98, %s114
    %p116 = scmp.eq.s32.totalorder %s15, 0
    %p117 = por %p115, %p116
    %s118 = ssub.s32 %s16, %s35
    %s119 = ssub.s32 %s17, %s31
    %s120 = sor.u32 %s118, %s119
    %p121 = scmp.eq.s32.totalorder %s120, 0
    %s123 = sadd.s32 %s122, 1
    %s124 = scalar_select %p121, %s122, %s123
    %p127 = pneg %p121
    %p128 = scmp.eq.s32.totalorder %s9, 7
    %p129 = por %p127, %p128
    %p130 = scmp.ne.s32.totalorder %s122, %s125
    %p131 = scmp.eq.s32.totalorder %s9, 0
    %p132 = por %p130, %p131
    %p133 = scmp.ne.s32.totalorder %s122, %s125
    %p134 = scmp.eq.s32.totalorder %s14, 7
    %p135 = por %p133, %p134
    %p136 = scmp.ne.s32.totalorder %s125, %s126
    %p137 = scmp.eq.s32.totalorder %s14, 0
    %p138 = por %p136, %p137
    %p139 = scmp.ne.s32.totalorder %s125, %s126
    %p140 = scmp.eq.s32.totalorder %s15, 7
    %p141 = por %p139, %p140
    %p143 = scmp.ne.s32.totalorder %s126, %s142
    %p144 = scmp.eq.s32.totalorder %s15, 0
    %p145 = por %p143, %p144
    %p146 = scmp.le.s32.totalorder 1, %s9
    %p147 = scmp.lt.s32.totalorder %s9, 9
    %p148 = pnand %p146, %p147
    %p149 = pneg %p148
    // Predicated region
    $region9: #{main_model_step.10} parent=5 // pred_check
      _
    $region10: #{main_model_step.10} parent=5 // pred_check_branch
      %151 = sbr.rel (%p148) target = $region12
    $region11: #{main_model_step.10} parent=5 // pred_region
      %s152 = ssub.s32 %s9, 1
      // Predicated region
      $region13: #{main_model_step.10} parent=11 // pred_check
        %p153 = pneg %p84
      $region14: #{main_model_step.10} parent=11 // pred_check_branch
        %155 = sbr.rel (%p153) target = $region16
      $region15: #{main_model_step.10} parent=11 // pred_region
        %s156 = smul.u32 16, %s21
        %p157 = scmp.lt.s32.totalorder %s156, 15
        %s158 = scalar_select %p157, %s156, 15
        %p159 = scmp.lt.s32.totalorder %s20, 0
        %s160 = scalar_select %p159, %s20, 0
        %s161 = sadd.s32 %s160, %s158
        %s162 = smul.addr %s161, 4
        %s163 = scalar_lea.vmem %s1, %s162
        %s164 = smul.u32 16, %s21
      $region16: #{main_model_step.10} parent=11 // pred_fallthru
        _
      // Predicated region
      $region17: #{main_model_step.10} parent=11 // pred_check
        %p165 = pneg %p110
      $region18: #{main_model_step.10} parent=11 // pred_check_branch
        %167 = sbr.rel (%p165) target = $region20
      $region19: #{main_model_step.10} parent=11 // pred_region
        %p168 = scmp.lt.s32.totalorder %s20, 0
        %s169 = scalar_select %p168, %s20, 0
        %s170 = scalar_lea.vmem %s2, %s169
      $region20: #{main_model_step.10} parent=11 // pred_fallthru
        _
    $region12: #{main_model_step.10} parent=5 // pred_fallthru
      _
    %p171 = scmp.lt.s32.totalorder %s9, 8
    // Predicated region
    $region21: #{main_model_step.10} parent=5 // pred_check
      %p172 = pneg %p171
    $region22: #{main_model_step.10} parent=5 // pred_check_branch
      %174 = sbr.rel (%p172) target = $region24
    $region23: #{main_model_step.10} parent=5 // pred_region
      // Predicated region
      $region25: #{main_model_step.10} parent=23 // pred_check
        %p175 = pneg %p50
      $region26: #{main_model_step.10} parent=23 // pred_check_branch
        %177 = sbr.rel (%p175) target = $region28
      $region27: #{main_model_step.10} parent=23 // pred_region
        %s178 = smul.u32 32, %s16
        %p179 = scmp.lt.s32.totalorder %s178, 255
        %s180 = scalar_select %p179, %s178, 255
        %p181 = scmp.lt.s32.totalorder %s18, 0
        %s182 = scalar_select %p181, %s18, 0
        %s183 = sadd.s32 %s182, %s180
        %s184 = smul.addr %s183, 4
        %s185 = scalar_lea.vmem %s0, %s184
        %s186 = smul.u32 32, %s16
      $region28: #{main_model_step.10} parent=23 // pred_fallthru
        _
    $region24: #{main_model_step.10} parent=5 // pred_fallthru
      _
    %p187 = scmp.le.s32.totalorder 1, %s9
    %p188 = scmp.lt.s32.totalorder %s9, 9
    %p189 = pnand %p187, %p188
    %p190 = pneg %p189
    // Predicated region
    $region29: #{main_model_step.10} parent=5 // pred_check
      _
    $region30: #{main_model_step.10} parent=5 // pred_check_branch
      %192 = sbr.rel (%p189) target = $region32
    $region31: #{main_model_step.10} parent=5 // pred_region
      %s193 = ssub.s32 %s9, 1
      %s194 = smul.u32 32, %s19
      %p195 = scmp.lt.s32.totalorder %s194, 255
      %s196 = scalar_select %p195, %s194, 255
      %p197 = scmp.lt.s32.totalorder %s21, 0
      %s198 = scalar_select %p197, %s21, 0
      %s199 = sadd.s32 %s198, %s196
      %s200 = smul.addr %s199, 4
      %s201 = scalar_lea.vmem %s0, %s200
      %p202 = pneg %p56
      %p203 = pneg %p53
      %s204 = smul.u32 16, %s21
      %p205 = scmp.lt.s32.totalorder %s204, 15
      %s206 = scalar_select %p205, %s204, 15
      %p207 = scmp.lt.s32.totalorder %s20, 0
      %s208 = scalar_select %p207, %s20, 0
      %s209 = sadd.s32 %s208, %s206
      %s210 = smul.addr %s209, 4
      %s211 = scalar_lea.vmem %s1, %s210
      %p212 = pneg %p84
      %p213 = pneg %p81
      %p214 = scmp.lt.s32.totalorder %s20, 0
      %s215 = scalar_select %p214, %s20, 0
      %s216 = scalar_lea.vmem %s2, %s215
      %p217 = pneg %p110
      %p218 = pneg %p107
      %p219 = pneg %p138
      %p220 = pneg %p135
      %s221 = smul.u32 32, %s19
      %p222 = scmp.lt.s32.totalorder %s221, 255
      %s223 = scalar_select %p222, %s221, 255
      %p224 = scmp.lt.s32.totalorder %s20, 0
      %s225 = scalar_select %p224, %s20, 0
      %s226 = sadd.s32 %s225, %s223
      %s227 = smul.addr %s226, 8
      %s228 = scalar_lea.vmem %s3, %s227
      %s229 = smul.u32 32, %s19
      %p230 = scmp.lt.s32.totalorder %s229, 255
      %s231 = scalar_select %p230, %s229, 255
      %p232 = scmp.lt.s32.totalorder %s21, 0
      %s233 = scalar_select %p232, %s21, 0
      %s234 = sadd.s32 %s233, %s231
      %s235 = smul.addr %s234, 4
      %s236 = scalar_lea.vmem %s0, %s235
      %s237 = smul.u32 32, %s19
      %s238 = smul.u32 16, %s21
      %p239 = scmp.lt.s32.totalorder %s238, 15
      %s240 = scalar_select %p239, %s238, 15
      %p241 = scmp.lt.s32.totalorder %s20, 0
      %s242 = scalar_select %p241, %s20, 0
      %s243 = sadd.s32 %s242, %s240
      %s244 = smul.addr %s243, 4
      %s245 = scalar_lea.vmem %s1, %s244
      %s246 = smul.u32 16, %s21
      %p247 = scmp.lt.s32.totalorder %s20, 0
      %s248 = scalar_select %p247, %s20, 0
      %s249 = scalar_lea.vmem %s2, %s248
      %s250 = smul.u32 32, %s19
      %p251 = scmp.lt.s32.totalorder %s250, 255
      %s252 = scalar_select %p251, %s250, 255
      %p253 = scmp.lt.s32.totalorder %s20, 0
      %s254 = scalar_select %p253, %s20, 0
      %s255 = sadd.s32 %s254, %s252
      %s256 = smul.addr %s255, 8
      %s257 = scalar_lea.vmem %s3, %s256
      %s258 = smul.u32 32, %s19
      %p260 = scmp.eq.s32.totalorder %s21, 0
      // Predicated region
      $region33: #{main_model_step.10} parent=31 // pred_check
        %p261 = pneg %p260
      $region34: #{main_model_step.10} parent=31 // pred_check_branch
        %263 = sbr.rel (%p261) target = $region36
      $region35: #{main_model_step.10} parent=31 // pred_region
        %264 = vst [vmem:[#allocation2] sm:$0xff] 0.0
        %265 = vst [vmem:[#allocation2 + $0x8] sm:$0xff] 0.0
        %266 = vst [vmem:[#allocation2 + $0x10] sm:$0xff] 0.0
        %267 = vst [vmem:[#allocation2 + $0x18] sm:$0xff] 0.0
        %268 = vst [vmem:[#allocation2 + $0x20] sm:$0xff] 0.0
        %269 = vst [vmem:[#allocation2 + $0x28] sm:$0xff] 0.0
        %270 = vst [vmem:[#allocation2 + $0x30] sm:$0xff] 0.0
        %271 = vst [vmem:[#allocation2 + $0x38] sm:$0xff] 0.0
        %272 = vst [vmem:[#allocation2 + $0x40] sm:$0xff] 0.0
        %273 = vst [vmem:[#allocation2 + $0x48] sm:$0xff] 0.0
        %274 = vst [vmem:[#allocation2 + $0x50] sm:$0xff] 0.0
        %275 = vst [vmem:[#allocation2 + $0x58] sm:$0xff] 0.0
        %276 = vst [vmem:[#allocation2 + $0x60] sm:$0xff] 0.0
        %277 = vst [vmem:[#allocation2 + $0x68] sm:$0xff] 0.0
        %278 = vst [vmem:[#allocation2 + $0x70] sm:$0xff] 0.0
        %279 = vst [vmem:[#allocation2 + $0x78] sm:$0xff] 0.0
        %280 = vst [vmem:[#allocation2 + $0x80] sm:$0xff] 0.0
        %281 = vst [vmem:[#allocation2 + $0x88] sm:$0xff] 0.0
        %282 = vst [vmem:[#allocation2 + $0x90] sm:$0xff] 0.0
        %283 = vst [vmem:[#allocation2 + $0x98] sm:$0xff] 0.0
        %284 = vst [vmem:[#allocation2 + $0xa0] sm:$0xff] 0.0
        %285 = vst [vmem:[#allocation2 + $0xa8] sm:$0xff] 0.0
        %286 = vst [vmem:[#allocation2 + $0xb0] sm:$0xff] 0.0
        %287 = vst [vmem:[#allocation2 + $0xb8] sm:$0xff] 0.0
        %288 = vst [vmem:[#allocation2 + $0xc0] sm:$0xff] 0.0
        %289 = vst [vmem:[#allocation2 + $0xc8] sm:$0xff] 0.0
        %290 = vst [vmem:[#allocation2 + $0xd0] sm:$0xff] 0.0
        %291 = vst [vmem:[#allocation2 + $0xd8] sm:$0xff] 0.0
        %292 = vst [vmem:[#allocation2 + $0xe0] sm:$0xff] 0.0
        %293 = vst [vmem:[#allocation2 + $0xe8] sm:$0xff] 0.0
        %294 = vst [vmem:[#allocation2 + $0xf0] sm:$0xff] 0.0
        %295 = vst [vmem:[#allocation2 + $0xf8] sm:$0xff] 0.0
      $region36: #{main_model_step.10} parent=31 // pred_fallthru
        _
      %v296 = vld [vmem:[#allocation2] sm:$0xff]
      %v297 = vld [vmem:[#allocation2 + $0x8] sm:$0xff]
      %v298 = vld [vmem:[#allocation2 + $0x10] sm:$0xff]
      %v299 = vld [vmem:[#allocation2 + $0x18] sm:$0xff]
      %v300 = vld [vmem:[#allocation2 + $0x20] sm:$0xff]
      %v301 = vld [vmem:[#allocation2 + $0x28] sm:$0xff]
      %v302 = vld [vmem:[#allocation2 + $0x30] sm:$0xff]
      %v303 = vld [vmem:[#allocation2 + $0x38] sm:$0xff]
      %v304 = vld [vmem:[#allocation2 + $0x40] sm:$0xff]
      %v305 = vld [vmem:[#allocation2 + $0x48] sm:$0xff]
      %v306 = vld [vmem:[#allocation2 + $0x50] sm:$0xff]
      %v307 = vld [vmem:[#allocation2 + $0x58] sm:$0xff]
      %v308 = vld [vmem:[#allocation2 + $0x60] sm:$0xff]
      %v309 = vld [vmem:[#allocation2 + $0x68] sm:$0xff]
      %v310 = vld [vmem:[#allocation2 + $0x70] sm:$0xff]
      %v311 = vld [vmem:[#allocation2 + $0x78] sm:$0xff]
      %v312 = vld [vmem:[#allocation2 + $0x80] sm:$0xff]
      %v313 = vld [vmem:[#allocation2 + $0x88] sm:$0xff]
      %v314 = vld [vmem:[#allocation2 + $0x90] sm:$0xff]
      %v315 = vld [vmem:[#allocation2 + $0x98] sm:$0xff]
      %v316 = vld [vmem:[#allocation2 + $0xa0] sm:$0xff]
      %v317 = vld [vmem:[#allocation2 + $0xa8] sm:$0xff]
      %v318 = vld [vmem:[#allocation2 + $0xb0] sm:$0xff]
      %v319 = vld [vmem:[#allocation2 + $0xb8] sm:$0xff]
      %v320 = vld [vmem:[#allocation2 + $0xc0] sm:$0xff]
      %v321 = vld [vmem:[#allocation2 + $0xc8] sm:$0xff]
      %v322 = vld [vmem:[#allocation2 + $0xd0] sm:$0xff]
      %v323 = vld [vmem:[#allocation2 + $0xd8] sm:$0xff]
      %v324 = vld [vmem:[#allocation2 + $0xe0] sm:$0xff]
      %v325 = vld [vmem:[#allocation2 + $0xe8] sm:$0xff]
      %v326 = vld [vmem:[#allocation2 + $0xf0] sm:$0xff]
      %v327 = vld [vmem:[#allocation2 + $0xf8] sm:$0xff]
      %v328 = vld [vmem:[%s236] sm:$0xf]
      %v329 = vld [vmem:[%s236 + $0x4] sm:$0xf]
      %v330 = vld [vmem:[%s236 + $0x8] sm:$0xf]
      %v331 = vld [vmem:[%s236 + $0xc] sm:$0xf]
      %v332 = vld [vmem:[%s236 + $0x10] sm:$0xf]
      %v333 = vld [vmem:[%s236 + $0x14] sm:$0xf]
      %v334 = vld [vmem:[%s236 + $0x18] sm:$0xf]
      %v335 = vld [vmem:[%s236 + $0x1c] sm:$0xf]
      %v336 = vld [vmem:[%s236 + $0x20] sm:$0xf]
      %v337 = vld [vmem:[%s236 + $0x24] sm:$0xf]
      %v338 = vld [vmem:[%s236 + $0x28] sm:$0xf]
      %v339 = vld [vmem:[%s236 + $0x2c] sm:$0xf]
      %v340 = vld [vmem:[%s236 + $0x30] sm:$0xf]
      %v341 = vld [vmem:[%s236 + $0x34] sm:$0xf]
      %v342 = vld [vmem:[%s236 + $0x38] sm:$0xf]
      %v343 = vld [vmem:[%s236 + $0x3c] sm:$0xf]
      %v344 = vld [vmem:[%s236 + $0x40] sm:$0xf]
      %v345 = vld [vmem:[%s236 + $0x44] sm:$0xf]
      %v346 = vld [vmem:[%s236 + $0x48] sm:$0xf]
      %v347 = vld [vmem:[%s236 + $0x4c] sm:$0xf]
      %v348 = vld [vmem:[%s236 + $0x50] sm:$0xf]
      %v349 = vld [vmem:[%s236 + $0x54] sm:$0xf]
      %v350 = vld [vmem:[%s236 + $0x58] sm:$0xf]
      %v351 = vld [vmem:[%s236 + $0x5c] sm:$0xf]
      %v352 = vld [vmem:[%s236 + $0x60] sm:$0xf]
      %v353 = vld [vmem:[%s236 + $0x64] sm:$0xf]
      %v354 = vld [vmem:[%s236 + $0x68] sm:$0xf]
      %v355 = vld [vmem:[%s236 + $0x6c] sm:$0xf]
      %v356 = vld [vmem:[%s236 + $0x70] sm:$0xf]
      %v357 = vld [vmem:[%s236 + $0x74] sm:$0xf]
      %v358 = vld [vmem:[%s236 + $0x78] sm:$0xf]
      %v359 = vld [vmem:[%s236 + $0x7c] sm:$0xf]
      %v360 = vld [vmem:[%s245] sm:$0xf]
      %v361 = vld [vmem:[%s245 + $0x4] sm:$0xf]
      %v362 = vld [vmem:[%s245 + $0x8] sm:$0xf]
      %v363 = vld [vmem:[%s245 + $0xc] sm:$0xf]
      %v364 = vld [vmem:[%s245 + $0x10] sm:$0xf]
      %v365 = vld [vmem:[%s245 + $0x14] sm:$0xf]
      %v366 = vld [vmem:[%s245 + $0x18] sm:$0xf]
      %v367 = vld [vmem:[%s245 + $0x1c] sm:$0xf]
      %v368 = vld [vmem:[%s245 + $0x20] sm:$0xf]
      %v369 = vld [vmem:[%s245 + $0x24] sm:$0xf]
      %v370 = vld [vmem:[%s245 + $0x28] sm:$0xf]
      %v371 = vld [vmem:[%s245 + $0x2c] sm:$0xf]
      %v372 = vld [vmem:[%s245 + $0x30] sm:$0xf]
      %v373 = vld [vmem:[%s245 + $0x34] sm:$0xf]
      %v374 = vld [vmem:[%s245 + $0x38] sm:$0xf]
      %v375 = vld [vmem:[%s245 + $0x3c] sm:$0xf]
      %v408 = vunpack.c.l.b16 %v328
      %v409 = vunpack.c.l.b16 %v329
      %v410 = vunpack.c.l.b16 %v330
      %v411 = vunpack.c.l.b16 %v331
      %v412 = vunpack.c.l.b16 %v332
      %v413 = vunpack.c.l.b16 %v333
      %v414 = vunpack.c.l.b16 %v334
      %v415 = vunpack.c.l.b16 %v335
      %v416 = vunpack.c.l.b16 %v336
      %v417 = vunpack.c.l.b16 %v337
      %v418 = vunpack.c.l.b16 %v338
      %v419 = vunpack.c.l.b16 %v339
      %v420 = vunpack.c.l.b16 %v340
      %v421 = vunpack.c.l.b16 %v341
      %v422 = vunpack.c.l.b16 %v342
      %v423 = vunpack.c.l.b16 %v343
      %v424 = vunpack.c.l.b16 %v344
      %v425 = vunpack.c.l.b16 %v345
      %v426 = vunpack.c.l.b16 %v346
      %v427 = vunpack.c.l.b16 %v347
      %v428 = vunpack.c.l.b16 %v348
      %v429 = vunpack.c.l.b16 %v349
      %v430 = vunpack.c.l.b16 %v350
      %v431 = vunpack.c.l.b16 %v351
      %v432 = vunpack.c.l.b16 %v352
      %v433 = vunpack.c.l.b16 %v353
      %v434 = vunpack.c.l.b16 %v354
      %v435 = vunpack.c.l.b16 %v355
      %v436 = vunpack.c.l.b16 %v356
      %v437 = vunpack.c.l.b16 %v357
      %v438 = vunpack.c.l.b16 %v358
      %v439 = vunpack.c.l.b16 %v359
      %v440 = vpack.c.b16 %v409, %v408
      %v441 = vpack.c.b16 %v411, %v410
      %v442 = vpack.c.b16 %v413, %v412
      %v443 = vpack.c.b16 %v415, %v414
      %v444 = vpack.c.b16 %v417, %v416
      %v445 = vpack.c.b16 %v419, %v418
      %v446 = vpack.c.b16 %v421, %v420
      %v447 = vpack.c.b16 %v423, %v422
      %v448 = vpack.c.b16 %v425, %v424
      %v449 = vpack.c.b16 %v427, %v426
      %v450 = vpack.c.b16 %v429, %v428
      %v451 = vpack.c.b16 %v431, %v430
      %v452 = vpack.c.b16 %v433, %v432
      %v453 = vpack.c.b16 %v435, %v434
      %v454 = vpack.c.b16 %v437, %v436
      %v455 = vpack.c.b16 %v439, %v438
      %v488 = vunpack.c.l.b16 %v360
      %v489 = vunpack.c.l.b16 %v361
      %v490 = vunpack.c.l.b16 %v362
      %v491 = vunpack.c.l.b16 %v363
      %v492 = vunpack.c.l.b16 %v364
      %v493 = vunpack.c.l.b16 %v365
      %v494 = vunpack.c.l.b16 %v366
      %v495 = vunpack.c.l.b16 %v367
      %v496 = vunpack.c.l.b16 %v368
      %v497 = vunpack.c.l.b16 %v369
      %v498 = vunpack.c.l.b16 %v370
      %v499 = vunpack.c.l.b16 %v371
      %v500 = vunpack.c.l.b16 %v372
      %v501 = vunpack.c.l.b16 %v373
      %v502 = vunpack.c.l.b16 %v374
      %v503 = vunpack.c.l.b16 %v375
      %v504 = vpack.c.b16 %v489, %v488
      %v505 = vpack.c.b16 %v491, %v490
      %v506 = vpack.c.b16 %v493, %v492
      %v507 = vpack.c.b16 %v495, %v494
      %v508 = vpack.c.b16 %v497, %v496
      %v509 = vpack.c.b16 %v499, %v498
      %v510 = vpack.c.b16 %v501, %v500
      %v511 = vpack.c.b16 %v503, %v502
      %520 = vmatprep.subr.bf16.mxu0 0
      %521 = vmatpush1.bf16.msra.mxu0 %v504
      %522 = vmatprep.subr.bf16.mxu0 0
      %523 = vmatpush1.bf16.msra.mxu0 %v505
      %524 = vmatprep.subr.bf16.mxu0 0
      %525 = vmatpush1.bf16.msra.mxu0 %v506
      %526 = vmatprep.subr.bf16.mxu0 0
      %527 = vmatpush1.bf16.msra.mxu0 %v507
      %528 = vmatprep.subr.bf16.mxu0 0
      %529 = vmatpush1.bf16.msra.mxu0 %v508
      %530 = vmatprep.subr.bf16.mxu0 0
      %531 = vmatpush1.bf16.msra.mxu0 %v509
      %532 = vmatprep.subr.bf16.mxu0 0
      %533 = vmatpush1.bf16.msra.mxu0 %v510
      %534 = vmatprep.subr.bf16.mxu0 0
      %535 = vmatpush1.bf16.msra.mxu0 %v511
      %536 = vmatprep.subr.bf16.mxu0 0
      %537 = vmatpush1.bf16.msra.mxu0 0
      %538 = vmatprep.subr.bf16.mxu0 0
      %539 = vmatpush1.bf16.msra.mxu0 0
      %540 = vmatprep.subr.bf16.mxu0 0
      %541 = vmatpush1.bf16.msra.mxu0 0
      %542 = vmatprep.subr.bf16.mxu0 0
      %543 = vmatpush1.bf16.msra.mxu0 0
      %544 = vmatprep.subr.bf16.mxu0 0
      %545 = vmatpush1.bf16.msra.mxu0 0
      %546 = vmatprep.subr.bf16.mxu0 0
      %547 = vmatpush1.bf16.msra.mxu0 0
      %548 = vmatprep.subr.bf16.mxu0 0
      %549 = vmatpush1.bf16.msra.mxu0 0
      %550 = vmatprep.subr.bf16.mxu0 0
      %551 = vmatpush1.bf16.msra.mxu0 0
      %552 = vmatprep.mubr.bf16.mxu0 0
      %553 = vmatmul.mubr.bf16.gmra.mrb[0].mxu0 %v440
      %v554 = vpop.f32.mrb[0].mxu0
      %v555 = vadd.f32 0.0, %v554
      %v556 = vpop.f32.mrb[0].mxu0
      %v557 = vpop.f32.mrb[0].mxu0
      %v558 = vadd.f32 0.0, %v557
      %v559 = vpop.f32.mrb[0].mxu0
      %560 = vmatprep.mubr.bf16.mxu0 0
      %561 = vmatmul.mubr.bf16.gmra.mrb[0].mxu0 %v441
      %v562 = vpop.f32.mrb[0].mxu0
      %v563 = vadd.f32 0.0, %v562
      %v564 = vpop.f32.mrb[0].mxu0
      %v565 = vpop.f32.mrb[0].mxu0
      %v566 = vadd.f32 0.0, %v565
      %v567 = vpop.f32.mrb[0].mxu0
      %568 = vmatprep.mubr.bf16.mxu0 0
      %569 = vmatmul.mubr.bf16.gmra.mrb[0].mxu0 %v442
      %v570 = vpop.f32.mrb[0].mxu0
      %v571 = vadd.f32 0.0, %v570
      %v572 = vpop.f32.mrb[0].mxu0
      %v573 = vpop.f32.mrb[0].mxu0
      %v574 = vadd.f32 0.0, %v573
      %v575 = vpop.f32.mrb[0].mxu0
      %576 = vmatprep.mubr.bf16.mxu0 0
      %577 = vmatmul.mubr.bf16.gmra.mrb[0].mxu0 %v443
      %v578 = vpop.f32.mrb[0].mxu0
      %v579 = vadd.f32 0.0, %v578
      %v580 = vpop.f32.mrb[0].mxu0
      %v581 = vpop.f32.mrb[0].mxu0
      %v582 = vadd.f32 0.0, %v581
      %v583 = vpop.f32.mrb[0].mxu0
      %584 = vmatprep.mubr.bf16.mxu0 0
      %585 = vmatmul.mubr.bf16.gmra.mrb[0].mxu0 %v444
      %v586 = vpop.f32.mrb[0].mxu0
      %v587 = vadd.f32 0.0, %v586
      %v588 = vpop.f32.mrb[0].mxu0
      %v589 = vpop.f32.mrb[0].mxu0
      %v590 = vadd.f32 0.0, %v589
      %v591 = vpop.f32.mrb[0].mxu0
      %592 = vmatprep.mubr.bf16.mxu0 0
      %593 = vmatmul.mubr.bf16.gmra.mrb[0].mxu0 %v445
      %v594 = vpop.f32.mrb[0].mxu0
      %v595 = vadd.f32 0.0, %v594
      %v596 = vpop.f32.mrb[0].mxu0
      %v597 = vpop.f32.mrb[0].mxu0
      %v598 = vadd.f32 0.0, %v597
      %v599 = vpop.f32.mrb[0].mxu0
      %600 = vmatprep.mubr.bf16.mxu0 0
      %601 = vmatmul.mubr.bf16.gmra.mrb[0].mxu0 %v446
      %v602 = vpop.f32.mrb[0].mxu0
      %v603 = vadd.f32 0.0, %v602
      %v604 = vpop.f32.mrb[0].mxu0
      %v605 = vpop.f32.mrb[0].mxu0
      %v606 = vadd.f32 0.0, %v605
      %v607 = vpop.f32.mrb[0].mxu0
      %608 = vmatprep.mubr.bf16.mxu0 0
      %609 = vmatmul.mubr.bf16.gmra.mrb[0].mxu0 %v447
      %v610 = vpop.f32.mrb[0].mxu0
      %v611 = vadd.f32 0.0, %v610
      %v612 = vpop.f32.mrb[0].mxu0
      %v613 = vpop.f32.mrb[0].mxu0
      %v614 = vadd.f32 0.0, %v613
      %v615 = vpop.f32.mrb[0].mxu0
      %616 = vmatprep.mubr.bf16.mxu0 0
      %617 = vmatmul.mubr.bf16.gmra.mrb[0].mxu0 %v448
      %v618 = vpop.f32.mrb[0].mxu0
      %v619 = vadd.f32 0.0, %v618
      %v620 = vpop.f32.mrb[0].mxu0
      %v621 = vpop.f32.mrb[0].mxu0
      %v622 = vadd.f32 0.0, %v621
      %v623 = vpop.f32.mrb[0].mxu0
      %624 = vmatprep.mubr.bf16.mxu0 0
      %625 = vmatmul.mubr.bf16.gmra.mrb[0].mxu0 %v449
      %v626 = vpop.f32.mrb[0].mxu0
      %v627 = vadd.f32 0.0, %v626
      %v628 = vpop.f32.mrb[0].mxu0
      %v629 = vpop.f32.mrb[0].mxu0
      %v630 = vadd.f32 0.0, %v629
      %v631 = vpop.f32.mrb[0].mxu0
      %632 = vmatprep.mubr.bf16.mxu0 0
      %633 = vmatmul.mubr.bf16.gmra.mrb[0].mxu0 %v450
      %v634 = vpop.f32.mrb[0].mxu0
      %v635 = vadd.f32 0.0, %v634
      %v636 = vpop.f32.mrb[0].mxu0
      %v637 = vpop.f32.mrb[0].mxu0
      %v638 = vadd.f32 0.0, %v637
      %v639 = vpop.f32.mrb[0].mxu0
      %640 = vmatprep.mubr.bf16.mxu0 0
      %641 = vmatmul.mubr.bf16.gmra.mrb[0].mxu0 %v451
      %v642 = vpop.f32.mrb[0].mxu0
      %v643 = vadd.f32 0.0, %v642
      %v644 = vpop.f32.mrb[0].mxu0
      %v645 = vpop.f32.mrb[0].mxu0
      %v646 = vadd.f32 0.0, %v645
      %v647 = vpop.f32.mrb[0].mxu0
      %648 = vmatprep.mubr.bf16.mxu0 0
      %649 = vmatmul.mubr.bf16.gmra.mrb[0].mxu0 %v452
      %v650 = vpop.f32.mrb[0].mxu0
      %v651 = vadd.f32 0.0, %v650
      %v652 = vpop.f32.mrb[0].mxu0
      %v653 = vpop.f32.mrb[0].mxu0
      %v654 = vadd.f32 0.0, %v653
      %v655 = vpop.f32.mrb[0].mxu0
      %656 = vmatprep.mubr.bf16.mxu0 0
      %657 = vmatmul.mubr.bf16.gmra.mrb[0].mxu0 %v453
      %v658 = vpop.f32.mrb[0].mxu0
      %v659 = vadd.f32 0.0, %v658
      %v660 = vpop.f32.mrb[0].mxu0
      %v661 = vpop.f32.mrb[0].mxu0
      %v662 = vadd.f32 0.0, %v661
      %v663 = vpop.f32.mrb[0].mxu0
      %664 = vmatprep.mubr.bf16.mxu0 0
      %665 = vmatmul.mubr.bf16.gmra.mrb[0].mxu0 %v454
      %v666 = vpop.f32.mrb[0].mxu0
      %v667 = vadd.f32 0.0, %v666
      %v668 = vpop.f32.mrb[0].mxu0
      %v669 = vpop.f32.mrb[0].mxu0
      %v670 = vadd.f32 0.0, %v669
      %v671 = vpop.f32.mrb[0].mxu0
      %672 = vmatprep.mubr.bf16.mxu0 0
      %673 = vmatmul.mubr.bf16.gmra.mrb[0].mxu0 %v455
      %v674 = vpop.f32.mrb[0].mxu0
      %v675 = vadd.f32 0.0, %v674
      %v676 = vpop.f32.mrb[0].mxu0
      %v677 = vpop.f32.mrb[0].mxu0
      %v678 = vadd.f32 0.0, %v677
      %v679 = vpop.f32.mrb[0].mxu0
      %680 = vdwg.mxu0
      %v681 = vadd.f32 %v296, %v555
      %v682 = vadd.f32 %v297, %v558
      %v683 = vadd.f32 %v298, %v563
      %v684 = vadd.f32 %v299, %v566
      %v685 = vadd.f32 %v300, %v571
      %v686 = vadd.f32 %v301, %v574
      %v687 = vadd.f32 %v302, %v579
      %v688 = vadd.f32 %v303, %v582
      %v689 = vadd.f32 %v304, %v587
      %v690 = vadd.f32 %v305, %v590
      %v691 = vadd.f32 %v306, %v595
      %v692 = vadd.f32 %v307, %v598
      %v693 = vadd.f32 %v308, %v603
      %v694 = vadd.f32 %v309, %v606
      %v695 = vadd.f32 %v310, %v611
      %v696 = vadd.f32 %v311, %v614
      %v697 = vadd.f32 %v312, %v619
      %v698 = vadd.f32 %v313, %v622
      %v699 = vadd.f32 %v314, %v627
      %v700 = vadd.f32 %v315, %v630
      %v701 = vadd.f32 %v316, %v635
      %v702 = vadd.f32 %v317, %v638
      %v703 = vadd.f32 %v318, %v643
      %v704 = vadd.f32 %v319, %v646
      %v705 = vadd.f32 %v320, %v651
      %v706 = vadd.f32 %v321, %v654
      %v707 = vadd.f32 %v322, %v659
      %v708 = vadd.f32 %v323, %v662
      %v709 = vadd.f32 %v324, %v667
      %v710 = vadd.f32 %v325, %v670
      %v711 = vadd.f32 %v326, %v675
      %v712 = vadd.f32 %v327, %v678
      %713 = vst [vmem:[#allocation2] sm:$0xff] %v681
      %714 = vst [vmem:[#allocation2 + $0x8] sm:$0xff] %v682
      %715 = vst [vmem:[#allocation2 + $0x10] sm:$0xff] %v683
      %716 = vst [vmem:[#allocation2 + $0x18] sm:$0xff] %v684
      %717 = vst [vmem:[#allocation2 + $0x20] sm:$0xff] %v685
      %718 = vst [vmem:[#allocation2 + $0x28] sm:$0xff] %v686
      %719 = vst [vmem:[#allocation2 + $0x30] sm:$0xff] %v687
      %720 = vst [vmem:[#allocation2 + $0x38] sm:$0xff] %v688
      %721 = vst [vmem:[#allocation2 + $0x40] sm:$0xff] %v689
      %722 = vst [vmem:[#allocation2 + $0x48] sm:$0xff] %v690
      %723 = vst [vmem:[#allocation2 + $0x50] sm:$0xff] %v691
      %724 = vst [vmem:[#allocation2 + $0x58] sm:$0xff] %v692
      %725 = vst [vmem:[#allocation2 + $0x60] sm:$0xff] %v693
      %726 = vst [vmem:[#allocation2 + $0x68] sm:$0xff] %v694
      %727 = vst [vmem:[#allocation2 + $0x70] sm:$0xff] %v695
      %728 = vst [vmem:[#allocation2 + $0x78] sm:$0xff] %v696
      %729 = vst [vmem:[#allocation2 + $0x80] sm:$0xff] %v697
      %730 = vst [vmem:[#allocation2 + $0x88] sm:$0xff] %v698
      %731 = vst [vmem:[#allocation2 + $0x90] sm:$0xff] %v699
      %732 = vst [vmem:[#allocation2 + $0x98] sm:$0xff] %v700
      %733 = vst [vmem:[#allocation2 + $0xa0] sm:$0xff] %v701
      %734 = vst [vmem:[#allocation2 + $0xa8] sm:$0xff] %v702
      %735 = vst [vmem:[#allocation2 + $0xb0] sm:$0xff] %v703
      %736 = vst [vmem:[#allocation2 + $0xb8] sm:$0xff] %v704
      %737 = vst [vmem:[#allocation2 + $0xc0] sm:$0xff] %v705
      %738 = vst [vmem:[#allocation2 + $0xc8] sm:$0xff] %v706
      %739 = vst [vmem:[#allocation2 + $0xd0] sm:$0xff] %v707
      %740 = vst [vmem:[#allocation2 + $0xd8] sm:$0xff] %v708
      %741 = vst [vmem:[#allocation2 + $0xe0] sm:$0xff] %v709
      %742 = vst [vmem:[#allocation2 + $0xe8] sm:$0xff] %v710
      %743 = vst [vmem:[#allocation2 + $0xf0] sm:$0xff] %v711
      %744 = vst [vmem:[#allocation2 + $0xf8] sm:$0xff] %v712
      // Predicated region
      $region37: #{main_model_step.10} parent=31 // pred_check
        %p745 = pneg %p260
      $region38: #{main_model_step.10} parent=31 // pred_check_branch
        %747 = sbr.rel (%p745) target = $region40
      $region39: #{main_model_step.10} parent=31 // pred_region
        %v748 = vld [vmem:[#allocation2] sm:$0xff]
        %v749 = vld [vmem:[#allocation2 + $0x8] sm:$0xff]
        %v750 = vld [vmem:[#allocation2 + $0x10] sm:$0xff]
        %v751 = vld [vmem:[#allocation2 + $0x18] sm:$0xff]
        %v752 = vld [vmem:[#allocation2 + $0x20] sm:$0xff]
        %v753 = vld [vmem:[#allocation2 + $0x28] sm:$0xff]
        %v754 = vld [vmem:[#allocation2 + $0x30] sm:$0xff]
        %v755 = vld [vmem:[#allocation2 + $0x38] sm:$0xff]
        %v756 = vld [vmem:[#allocation2 + $0x40] sm:$0xff]
        %v757 = vld [vmem:[#allocation2 + $0x48] sm:$0xff]
        %v758 = vld [vmem:[#allocation2 + $0x50] sm:$0xff]
        %v759 = vld [vmem:[#allocation2 + $0x58] sm:$0xff]
        %v760 = vld [vmem:[#allocation2 + $0x60] sm:$0xff]
        %v761 = vld [vmem:[#allocation2 + $0x68] sm:$0xff]
        %v762 = vld [vmem:[#allocation2 + $0x70] sm:$0xff]
        %v763 = vld [vmem:[#allocation2 + $0x78] sm:$0xff]
        %v764 = vld [vmem:[#allocation2 + $0x80] sm:$0xff]
        %v765 = vld [vmem:[#allocation2 + $0x88] sm:$0xff]
        %v766 = vld [vmem:[#allocation2 + $0x90] sm:$0xff]
        %v767 = vld [vmem:[#allocation2 + $0x98] sm:$0xff]
        %v768 = vld [vmem:[#allocation2 + $0xa0] sm:$0xff]
        %v769 = vld [vmem:[#allocation2 + $0xa8] sm:$0xff]
        %v770 = vld [vmem:[#allocation2 + $0xb0] sm:$0xff]
        %v771 = vld [vmem:[#allocation2 + $0xb8] sm:$0xff]
        %v772 = vld [vmem:[#allocation2 + $0xc0] sm:$0xff]
        %v773 = vld [vmem:[#allocation2 + $0xc8] sm:$0xff]
        %v774 = vld [vmem:[#allocation2 + $0xd0] sm:$0xff]
        %v775 = vld [vmem:[#allocation2 + $0xd8] sm:$0xff]
        %v776 = vld [vmem:[#allocation2 + $0xe0] sm:$0xff]
        %v777 = vld [vmem:[#allocation2 + $0xe8] sm:$0xff]
        %v778 = vld [vmem:[#allocation2 + $0xf0] sm:$0xff]
        %v779 = vld [vmem:[#allocation2 + $0xf8] sm:$0xff]
        %v780 = vld [vmem:[%s249] sm:$0x1]
        %v782 = vlaneseq
        %v783 = vshrl.u32 %v782, 7
        %v784 = vsub.s32 0, %v783
        %v785 = vrot.slane %v780, %v784
        %v787 = vadd.f32 %v748, %v785
        %v788 = vadd.f32 %v749, %v785
        %v789 = vadd.f32 %v750, %v785
        %v790 = vadd.f32 %v751, %v785
        %v791 = vadd.f32 %v752, %v785
        %v792 = vadd.f32 %v753, %v785
        %v793 = vadd.f32 %v754, %v785
        %v794 = vadd.f32 %v755, %v785
        %v795 = vadd.f32 %v756, %v785
        %v796 = vadd.f32 %v757, %v785
        %v797 = vadd.f32 %v758, %v785
        %v798 = vadd.f32 %v759, %v785
        %v799 = vadd.f32 %v760, %v785
        %v800 = vadd.f32 %v761, %v785
        %v801 = vadd.f32 %v762, %v785
        %v802 = vadd.f32 %v763, %v785
        %v803 = vadd.f32 %v764, %v785
        %v804 = vadd.f32 %v765, %v785
        %v805 = vadd.f32 %v766, %v785
        %v806 = vadd.f32 %v767, %v785
        %v807 = vadd.f32 %v768, %v785
        %v808 = vadd.f32 %v769, %v785
        %v809 = vadd.f32 %v770, %v785
        %v810 = vadd.f32 %v771, %v785
        %v811 = vadd.f32 %v772, %v785
        %v812 = vadd.f32 %v773, %v785
        %v813 = vadd.f32 %v774, %v785
        %v814 = vadd.f32 %v775, %v785
        %v815 = vadd.f32 %v776, %v785
        %v816 = vadd.f32 %v777, %v785
        %v817 = vadd.f32 %v778, %v785
        %v818 = vadd.f32 %v779, %v785
        %v819 = vtanh.pop %v787
        %v820 = vtanh.pop %v788
        %v821 = vtanh.pop %v789
        %v822 = vtanh.pop %v790
        %v823 = vtanh.pop %v791
        %v824 = vtanh.pop %v792
        %v825 = vtanh.pop %v793
        %v826 = vtanh.pop %v794
        %v827 = vtanh.pop %v795
        %v828 = vtanh.pop %v796
        %v829 = vtanh.pop %v797
        %v830 = vtanh.pop %v798
        %v831 = vtanh.pop %v799
        %v832 = vtanh.pop %v800
        %v833 = vtanh.pop %v801
        %v834 = vtanh.pop %v802
        %v835 = vtanh.pop %v803
        %v836 = vtanh.pop %v804
        %v837 = vtanh.pop %v805
        %v838 = vtanh.pop %v806
        %v839 = vtanh.pop %v807
        %v840 = vtanh.pop %v808
        %v841 = vtanh.pop %v809
        %v842 = vtanh.pop %v810
        %v843 = vtanh.pop %v811
        %v844 = vtanh.pop %v812
        %v845 = vtanh.pop %v813
        %v846 = vtanh.pop %v814
        %v847 = vtanh.pop %v815
        %v848 = vtanh.pop %v816
        %v849 = vtanh.pop %v817
        %v850 = vtanh.pop %v818
        %851 = vst [vmem:[%s257] sm:$0xff] %v819
        %852 = vst [vmem:[%s257 + $0x8] sm:$0xff] %v820
        %853 = vst [vmem:[%s257 + $0x10] sm:$0xff] %v821
        %854 = vst [vmem:[%s257 + $0x18] sm:$0xff] %v822
        %855 = vst [vmem:[%s257 + $0x20] sm:$0xff] %v823
        %856 = vst [vmem:[%s257 + $0x28] sm:$0xff] %v824
        %857 = vst [vmem:[%s257 + $0x30] sm:$0xff] %v825
        %858 = vst [vmem:[%s257 + $0x38] sm:$0xff] %v826
        %859 = vst [vmem:[%s257 + $0x40] sm:$0xff] %v827
        %860 = vst [vmem:[%s257 + $0x48] sm:$0xff] %v828
        %861 = vst [vmem:[%s257 + $0x50] sm:$0xff] %v829
        %862 = vst [vmem:[%s257 + $0x58] sm:$0xff] %v830
        %863 = vst [vmem:[%s257 + $0x60] sm:$0xff] %v831
        %864 = vst [vmem:[%s257 + $0x68] sm:$0xff] %v832
        %865 = vst [vmem:[%s257 + $0x70] sm:$0xff] %v833
        %866 = vst [vmem:[%s257 + $0x78] sm:$0xff] %v834
        %867 = vst [vmem:[%s257 + $0x80] sm:$0xff] %v835
        %868 = vst [vmem:[%s257 + $0x88] sm:$0xff] %v836
        %869 = vst [vmem:[%s257 + $0x90] sm:$0xff] %v837
        %870 = vst [vmem:[%s257 + $0x98] sm:$0xff] %v838
        %871 = vst [vmem:[%s257 + $0xa0] sm:$0xff] %v839
        %872 = vst [vmem:[%s257 + $0xa8] sm:$0xff] %v840
        %873 = vst [vmem:[%s257 + $0xb0] sm:$0xff] %v841
        %874 = vst [vmem:[%s257 + $0xb8] sm:$0xff] %v842
        %875 = vst [vmem:[%s257 + $0xc0] sm:$0xff] %v843
        %876 = vst [vmem:[%s257 + $0xc8] sm:$0xff] %v844
        %877 = vst [vmem:[%s257 + $0xd0] sm:$0xff] %v845
        %878 = vst [vmem:[%s257 + $0xd8] sm:$0xff] %v846
        %879 = vst [vmem:[%s257 + $0xe0] sm:$0xff] %v847
        %880 = vst [vmem:[%s257 + $0xe8] sm:$0xff] %v848
        %881 = vst [vmem:[%s257 + $0xf0] sm:$0xff] %v849
        %882 = vst [vmem:[%s257 + $0xf8] sm:$0xff] %v850
      $region40: #{main_model_step.10} parent=31 // pred_fallthru
        _
      %s883 = smul.u32 32, %s19
      %p884 = scmp.lt.s32.totalorder %s883, 255
      %s885 = scalar_select %p884, %s883, 255
      %p886 = scmp.lt.s32.totalorder %s20, 0
      %s887 = scalar_select %p886, %s20, 0
      %s888 = sadd.s32 %s887, %s885
      %s889 = smul.addr %s888, 8
      %s890 = scalar_lea.vmem %s3, %s889
      // Predicated region
      $region41: #{main_model_step.10} parent=31 // pred_check
        %p891 = pneg %p135
      $region42: #{main_model_step.10} parent=31 // pred_check_branch
        %893 = sbr.rel (%p891) target = $region44
      $region43: #{main_model_step.10} parent=31 // pred_region
        %s894 = smul.u32 32, %s19
      $region44: #{main_model_step.10} parent=31 // pred_fallthru
        _
    $region32: #{main_model_step.10} parent=5 // pred_fallthru
      _
    %p895 = scmp.le.s32.totalorder 2, %s9
    // Predicated region
    $region45: #{main_model_step.10} parent=5 // pred_check
      %p896 = pneg %p895
    $region46: #{main_model_step.10} parent=5 // pred_check_branch
      %898 = sbr.rel (%p896) target = $region48
    $region47: #{main_model_step.10} parent=5 // pred_region
      %s899 = ssub.s32 %s9, 2
      // Predicated region
      $region49: #{main_model_step.10} parent=47 // pred_check
        %p900 = pneg %p141
      $region50: #{main_model_step.10} parent=47 // pred_check_branch
        %902 = sbr.rel (%p900) target = $region52
      $region51: #{main_model_step.10} parent=47 // pred_region
        %s903 = smul.u32 32, %s22
        %p904 = scmp.lt.s32.totalorder %s903, 255
        %s905 = scalar_select %p904, %s903, 255
        %p906 = scmp.lt.s32.totalorder %s23, 0
        %s907 = scalar_select %p906, %s23, 0
        %s908 = sadd.s32 %s907, %s905
        %s909 = smul.addr %s908, 8
        %s910 = scalar_lea.vmem %s3, %s909
      $region52: #{main_model_step.10} parent=47 // pred_fallthru
        _
    $region48: #{main_model_step.10} parent=5 // pred_fallthru
      _
  $region6: #{main_model_step.10} parent=0 // loop_footer
    %s13 = sadd.s32 1, %s9
  $region7: #{main_model_step.10} parent=0 // loop_footer_branch
    %8 = sbr.rel target = $region3
  $region8: #{main_model_step.10} parent=0 // loop_exit
    _

// kernel: main_model_step.11
$region0: #{main_model_step.11}
  #allocation0 [shape = 'u32[]', space=smem, size = 0x4, offset = 0x4, fixed_abs, tag = 'smem constant byte address 0x4 - core index']
  #allocation1 [shape = 'u32[144,128]{1,0:T(1,128)}', space=vmem, size = 0x12000, scoped, tag = 'internal scratch']
  #allocation2 [shape = 'f32[256,128]{1,0:T(8,128)}', space=vmem, size = 0x20000, scoped, tag = 'scratch operand']
  %s0 = inlined_call_operand.vmem [shape: bf16[1024,128], index: 0, kind: input, shape index: {}]
  %s1 = inlined_call_operand.vmem [shape: bf16[128,128], index: 1, kind: input, shape index: {}]
  %s2 = inlined_call_operand.vmem [shape: f32[1,128], index: 2, kind: input, shape index: {}]
  %s3 = inlined_call_operand.vmem [shape: bf16[1024,128], index: 3, kind: output, shape index: {}]
  %s4 = sld [smem:[#allocation0]]
  $region53: #{main_model_step.11} parent=0
    _
  %s6 = ssub.s32 1, %s4
  %s7 = scalar_select 0, %s6, %s4
  loop: start=0, step=1, limit=6
  $region2: #{main_model_step.11} parent=0 // loop_pre_header
    _
  $region3: #{main_model_step.11} parent=0 // loop_header
    %s9 = sphi 0, %s13
    %p10 = scmp.ge.s32.totalorder %s9, 6
    %s16 = sphi 0, %s35
    %s17 = sphi 0, %s31
    %s18 = sphi 0, %s27
    %s19 = sphi 0, %s16
    %s20 = sphi 0, %s17
    %s21 = sphi 0, %s18
    %s22 = sphi 0, %s19
    %s23 = sphi 0, %s20
    %s24 = sphi 0, %s21
    %s40 = sphi 0, %s42
    %s43 = sphi 0, %s40
    %s44 = sphi 0, %s43
    %s60 = sphi 0, %s44
    %s68 = sphi 0, %s70
    %s71 = sphi 0, %s68
    %s72 = sphi 0, %s71
    %s88 = sphi 0, %s72
    %s94 = sphi 0, %s96
    %s97 = sphi 0, %s94
    %s98 = sphi 0, %s97
    %s114 = sphi 0, %s98
    %s122 = sphi 0, %s124
    %s125 = sphi 0, %s122
    %s126 = sphi 0, %s125
    %s142 = sphi 0, %s126
  $region4: #{main_model_step.11} parent=0 // loop_header_branch
    %12 = sbr.rel (%p10) target = $region8
  $region5: #{main_model_step.11} parent=0 // loop_body
    %s14 = ssub.s32 %s9, 1
    %s15 = ssub.s32 %s9, 2
    %s25 = sadd.s32 1, %s18
    %p26 = scmp.ge.s32.totalorder %s25, 1
    %s27 = scalar_select %p26, 0, %s25
    %s28 = sadd.s32 1, %s17
    %s29 = scalar_select %p26, %s28, %s17
    %p30 = scmp.ge.s32.totalorder %s29, 1
    %s31 = scalar_select %p30, 0, %s29
    %s32 = sadd.s32 1, %s16
    %s33 = scalar_select %p30, %s32, %s16
    %p34 = scmp.ge.s32.totalorder %s33, 4
    %s35 = scalar_select %p34, 0, %s33
    %s36 = ssub.s32 %s16, %s35
    %s37 = ssub.s32 %s18, %s27
    %s38 = sor.u32 %s36, %s37
    %p39 = scmp.eq.s32.totalorder %s38, 0
    %s41 = sadd.s32 %s40, 1
    %s42 = scalar_select %p39, %s40, %s41
    %p45 = pneg %p39
    %p46 = scmp.eq.s32.totalorder %s9, 3
    %p47 = por %p45, %p46
    %p48 = scmp.ne.s32.totalorder %s40, %s43
    %p49 = scmp.eq.s32.totalorder %s9, 0
    %p50 = por %p48, %p49
    %p51 = scmp.ne.s32.totalorder %s40, %s43
    %p52 = scmp.eq.s32.totalorder %s14, 3
    %p53 = por %p51, %p52
    %p54 = scmp.ne.s32.totalorder %s43, %s44
    %p55 = scmp.eq.s32.totalorder %s14, 0
    %p56 = por %p54, %p55
    %p57 = scmp.ne.s32.totalorder %s43, %s44
    %p58 = scmp.eq.s32.totalorder %s15, 3
    %p59 = por %p57, %p58
    %p61 = scmp.ne.s32.totalorder %s44, %s60
    %p62 = scmp.eq.s32.totalorder %s15, 0
    %p63 = por %p61, %p62
    %s64 = ssub.s32 %s18, %s27
    %s65 = ssub.s32 %s17, %s31
    %s66 = sor.u32 %s64, %s65
    %p67 = scmp.eq.s32.totalorder %s66, 0
    %s69 = sadd.s32 %s68, 1
    %s70 = scalar_select %p67, %s68, %s69
    %p73 = pneg %p67
    %p74 = scmp.eq.s32.totalorder %s9, 3
    %p75 = por %p73, %p74
    %p76 = scmp.ne.s32.totalorder %s68, %s71
    %p77 = scmp.eq.s32.totalorder %s9, 0
    %p78 = por %p76, %p77
    %p79 = scmp.ne.s32.totalorder %s68, %s71
    %p80 = scmp.eq.s32.totalorder %s14, 3
    %p81 = por %p79, %p80
    %p82 = scmp.ne.s32.totalorder %s71, %s72
    %p83 = scmp.eq.s32.totalorder %s14, 0
    %p84 = por %p82, %p83
    %p85 = scmp.ne.s32.totalorder %s71, %s72
    %p86 = scmp.eq.s32.totalorder %s15, 3
    %p87 = por %p85, %p86
    %p89 = scmp.ne.s32.totalorder %s72, %s88
    %p90 = scmp.eq.s32.totalorder %s15, 0
    %p91 = por %p89, %p90
    %s92 = ssub.s32 %s17, %s31
    %p93 = scmp.eq.s32.totalorder %s92, 0
    %s95 = sadd.s32 %s94, 1
    %s96 = scalar_select %p93, %s94, %s95
    %p99 = pneg %p93
    %p100 = scmp.eq.s32.totalorder %s9, 3
    %p101 = por %p99, %p100
    %p102 = scmp.ne.s32.totalorder %s94, %s97
    %p103 = scmp.eq.s32.totalorder %s9, 0
    %p104 = por %p102, %p103
    %p105 = scmp.ne.s32.totalorder %s94, %s97
    %p106 = scmp.eq.s32.totalorder %s14, 3
    %p107 = por %p105, %p106
    %p108 = scmp.ne.s32.totalorder %s97, %s98
    %p109 = scmp.eq.s32.totalorder %s14, 0
    %p110 = por %p108, %p109
    %p111 = scmp.ne.s32.totalorder %s97, %s98
    %p112 = scmp.eq.s32.totalorder %s15, 3
    %p113 = por %p111, %p112
    %p115 = scmp.ne.s32.totalorder %s98, %s114
    %p116 = scmp.eq.s32.totalorder %s15, 0
    %p117 = por %p115, %p116
    %s118 = ssub.s32 %s16, %s35
    %s119 = ssub.s32 %s17, %s31
    %s120 = sor.u32 %s118, %s119
    %p121 = scmp.eq.s32.totalorder %s120, 0
    %s123 = sadd.s32 %s122, 1
    %s124 = scalar_select %p121, %s122, %s123
    %p127 = pneg %p121
    %p128 = scmp.eq.s32.totalorder %s9, 3
    %p129 = por %p127, %p128
    %p130 = scmp.ne.s32.totalorder %s122, %s125
    %p131 = scmp.eq.s32.totalorder %s9, 0
    %p132 = por %p130, %p131
    %p133 = scmp.ne.s32.totalorder %s122, %s125
    %p134 = scmp.eq.s32.totalorder %s14, 3
    %p135 = por %p133, %p134
    %p136 = scmp.ne.s32.totalorder %s125, %s126
    %p137 = scmp.eq.s32.totalorder %s14, 0
    %p138 = por %p136, %p137
    %p139 = scmp.ne.s32.totalorder %s125, %s126
    %p140 = scmp.eq.s32.totalorder %s15, 3
    %p141 = por %p139, %p140
    %p143 = scmp.ne.s32.totalorder %s126, %s142
    %p144 = scmp.eq.s32.totalorder %s15, 0
    %p145 = por %p143, %p144
    %p146 = scmp.le.s32.totalorder 1, %s9
    %p147 = scmp.lt.s32.totalorder %s9, 5
    %p148 = pnand %p146, %p147
    %p149 = pneg %p148
    // Predicated region
    $region9: #{main_model_step.11} parent=5 // pred_check
      _
    $region10: #{main_model_step.11} parent=5 // pred_check_branch
      %151 = sbr.rel (%p148) target = $region12
    $region11: #{main_model_step.11} parent=5 // pred_region
      %s152 = ssub.s32 %s9, 1
      // Predicated region
      $region13: #{main_model_step.11} parent=11 // pred_check
        %p153 = pneg %p84
      $region14: #{main_model_step.11} parent=11 // pred_check_branch
        %155 = sbr.rel (%p153) target = $region16
      $region15: #{main_model_step.11} parent=11 // pred_region
        %s156 = smul.u32 16, %s21
        %p157 = scmp.lt.s32.totalorder %s156, 15
        %s158 = scalar_select %p157, %s156, 15
        %p159 = scmp.lt.s32.totalorder %s20, 0
        %s160 = scalar_select %p159, %s20, 0
        %s161 = sadd.s32 %s160, %s158
        %s162 = smul.addr %s161, 4
        %s163 = scalar_lea.vmem %s1, %s162
        %s164 = smul.u32 16, %s21
      $region16: #{main_model_step.11} parent=11 // pred_fallthru
        _
      // Predicated region
      $region17: #{main_model_step.11} parent=11 // pred_check
        %p165 = pneg %p110
      $region18: #{main_model_step.11} parent=11 // pred_check_branch
        %167 = sbr.rel (%p165) target = $region20
      $region19: #{main_model_step.11} parent=11 // pred_region
        %p168 = scmp.lt.s32.totalorder %s20, 0
        %s169 = scalar_select %p168, %s20, 0
        %s170 = scalar_lea.vmem %s2, %s169
      $region20: #{main_model_step.11} parent=11 // pred_fallthru
        _
    $region12: #{main_model_step.11} parent=5 // pred_fallthru
      _
    %p171 = scmp.lt.s32.totalorder %s9, 4
    // Predicated region
    $region21: #{main_model_step.11} parent=5 // pred_check
      %p172 = pneg %p171
    $region22: #{main_model_step.11} parent=5 // pred_check_branch
      %174 = sbr.rel (%p172) target = $region24
    $region23: #{main_model_step.11} parent=5 // pred_region
      // Predicated region
      $region25: #{main_model_step.11} parent=23 // pred_check
        %p175 = pneg %p50
      $region26: #{main_model_step.11} parent=23 // pred_check_branch
        %177 = sbr.rel (%p175) target = $region28
      $region27: #{main_model_step.11} parent=23 // pred_region
        %s178 = smul.u32 32, %s16
        %p179 = scmp.lt.s32.totalorder %s178, 127
        %s180 = scalar_select %p179, %s178, 127
        %p181 = scmp.lt.s32.totalorder %s18, 0
        %s182 = scalar_select %p181, %s18, 0
        %s183 = sadd.s32 %s182, %s180
        %s184 = smul.addr %s183, 4
        %s185 = scalar_lea.vmem %s0, %s184
        %s186 = smul.u32 32, %s16
      $region28: #{main_model_step.11} parent=23 // pred_fallthru
        _
    $region24: #{main_model_step.11} parent=5 // pred_fallthru
      _
    %p187 = scmp.le.s32.totalorder 1, %s9
    %p188 = scmp.lt.s32.totalorder %s9, 5
    %p189 = pnand %p187, %p188
    %p190 = pneg %p189
    // Predicated region
    $region29: #{main_model_step.11} parent=5 // pred_check
      _
    $region30: #{main_model_step.11} parent=5 // pred_check_branch
      %192 = sbr.rel (%p189) target = $region32
    $region31: #{main_model_step.11} parent=5 // pred_region
      %s193 = ssub.s32 %s9, 1
      %s194 = smul.u32 32, %s19
      %p195 = scmp.lt.s32.totalorder %s194, 127
      %s196 = scalar_select %p195, %s194, 127
      %p197 = scmp.lt.s32.totalorder %s21, 0
      %s198 = scalar_select %p197, %s21, 0
      %s199 = sadd.s32 %s198, %s196
      %s200 = smul.addr %s199, 4
      %s201 = scalar_lea.vmem %s0, %s200
      %p202 = pneg %p56
      %p203 = pneg %p53
      %s204 = smul.u32 16, %s21
      %p205 = scmp.lt.s32.totalorder %s204, 15
      %s206 = scalar_select %p205, %s204, 15
      %p207 = scmp.lt.s32.totalorder %s20, 0
      %s208 = scalar_select %p207, %s20, 0
      %s209 = sadd.s32 %s208, %s206
      %s210 = smul.addr %s209, 4
      %s211 = scalar_lea.vmem %s1, %s210
      %p212 = pneg %p84
      %p213 = pneg %p81
      %p214 = scmp.lt.s32.totalorder %s20, 0
      %s215 = scalar_select %p214, %s20, 0
      %s216 = scalar_lea.vmem %s2, %s215
      %p217 = pneg %p110
      %p218 = pneg %p107
      %p219 = pneg %p138
      %p220 = pneg %p135
      %s221 = smul.u32 32, %s19
      %p222 = scmp.lt.s32.totalorder %s221, 127
      %s223 = scalar_select %p222, %s221, 127
      %p224 = scmp.lt.s32.totalorder %s20, 0
      %s225 = scalar_select %p224, %s20, 0
      %s226 = sadd.s32 %s225, %s223
      %s227 = smul.addr %s226, 4
      %s228 = scalar_lea.vmem %s3, %s227
      %s229 = smul.u32 32, %s19
      %p230 = scmp.lt.s32.totalorder %s229, 127
      %s231 = scalar_select %p230, %s229, 127
      %p232 = scmp.lt.s32.totalorder %s21, 0
      %s233 = scalar_select %p232, %s21, 0
      %s234 = sadd.s32 %s233, %s231
      %s235 = smul.addr %s234, 4
      %s236 = scalar_lea.vmem %s0, %s235
      %s237 = smul.u32 32, %s19
      %s238 = smul.u32 16, %s21
      %p239 = scmp.lt.s32.totalorder %s238, 15
      %s240 = scalar_select %p239, %s238, 15
      %p241 = scmp.lt.s32.totalorder %s20, 0
      %s242 = scalar_select %p241, %s20, 0
      %s243 = sadd.s32 %s242, %s240
      %s244 = smul.addr %s243, 4
      %s245 = scalar_lea.vmem %s1, %s244
      %s246 = smul.u32 16, %s21
      %p247 = scmp.lt.s32.totalorder %s20, 0
      %s248 = scalar_select %p247, %s20, 0
      %s249 = scalar_lea.vmem %s2, %s248
      %s250 = smul.u32 32, %s19
      %p251 = scmp.lt.s32.totalorder %s250, 127
      %s252 = scalar_select %p251, %s250, 127
      %p253 = scmp.lt.s32.totalorder %s20, 0
      %s254 = scalar_select %p253, %s20, 0
      %s255 = sadd.s32 %s254, %s252
      %s256 = smul.addr %s255, 4
      %s257 = scalar_lea.vmem %s3, %s256
      %s258 = smul.u32 32, %s19
      %p260 = scmp.eq.s32.totalorder %s21, 0
      // Predicated region
      $region33: #{main_model_step.11} parent=31 // pred_check
        %p261 = pneg %p260
      $region34: #{main_model_step.11} parent=31 // pred_check_branch
        %263 = sbr.rel (%p261) target = $region36
      $region35: #{main_model_step.11} parent=31 // pred_region
        %264 = vst [vmem:[#allocation2] sm:$0xff] 0.0
        %265 = vst [vmem:[#allocation2 + $0x8] sm:$0xff] 0.0
        %266 = vst [vmem:[#allocation2 + $0x10] sm:$0xff] 0.0
        %267 = vst [vmem:[#allocation2 + $0x18] sm:$0xff] 0.0
        %268 = vst [vmem:[#allocation2 + $0x20] sm:$0xff] 0.0
        %269 = vst [vmem:[#allocation2 + $0x28] sm:$0xff] 0.0
        %270 = vst [vmem:[#allocation2 + $0x30] sm:$0xff] 0.0
        %271 = vst [vmem:[#allocation2 + $0x38] sm:$0xff] 0.0
        %272 = vst [vmem:[#allocation2 + $0x40] sm:$0xff] 0.0
        %273 = vst [vmem:[#allocation2 + $0x48] sm:$0xff] 0.0
        %274 = vst [vmem:[#allocation2 + $0x50] sm:$0xff] 0.0
        %275 = vst [vmem:[#allocation2 + $0x58] sm:$0xff] 0.0
        %276 = vst [vmem:[#allocation2 + $0x60] sm:$0xff] 0.0
        %277 = vst [vmem:[#allocation2 + $0x68] sm:$0xff] 0.0
        %278 = vst [vmem:[#allocation2 + $0x70] sm:$0xff] 0.0
        %279 = vst [vmem:[#allocation2 + $0x78] sm:$0xff] 0.0
        %280 = vst [vmem:[#allocation2 + $0x80] sm:$0xff] 0.0
        %281 = vst [vmem:[#allocation2 + $0x88] sm:$0xff] 0.0
        %282 = vst [vmem:[#allocation2 + $0x90] sm:$0xff] 0.0
        %283 = vst [vmem:[#allocation2 + $0x98] sm:$0xff] 0.0
        %284 = vst [vmem:[#allocation2 + $0xa0] sm:$0xff] 0.0
        %285 = vst [vmem:[#allocation2 + $0xa8] sm:$0xff] 0.0
        %286 = vst [vmem:[#allocation2 + $0xb0] sm:$0xff] 0.0
        %287 = vst [vmem:[#allocation2 + $0xb8] sm:$0xff] 0.0
        %288 = vst [vmem:[#allocation2 + $0xc0] sm:$0xff] 0.0
        %289 = vst [vmem:[#allocation2 + $0xc8] sm:$0xff] 0.0
        %290 = vst [vmem:[#allocation2 + $0xd0] sm:$0xff] 0.0
        %291 = vst [vmem:[#allocation2 + $0xd8] sm:$0xff] 0.0
        %292 = vst [vmem:[#allocation2 + $0xe0] sm:$0xff] 0.0
        %293 = vst [vmem:[#allocation2 + $0xe8] sm:$0xff] 0.0
        %294 = vst [vmem:[#allocation2 + $0xf0] sm:$0xff] 0.0
        %295 = vst [vmem:[#allocation2 + $0xf8] sm:$0xff] 0.0
      $region36: #{main_model_step.11} parent=31 // pred_fallthru
        _
      %v296 = vld [vmem:[#allocation2] sm:$0xff]
      %v297 = vld [vmem:[#allocation2 + $0x8] sm:$0xff]
      %v298 = vld [vmem:[#allocation2 + $0x10] sm:$0xff]
      %v299 = vld [vmem:[#allocation2 + $0x18] sm:$0xff]
      %v300 = vld [vmem:[#allocation2 + $0x20] sm:$0xff]
      %v301 = vld [vmem:[#allocation2 + $0x28] sm:$0xff]
      %v302 = vld [vmem:[#allocation2 + $0x30] sm:$0xff]
      %v303 = vld [vmem:[#allocation2 + $0x38] sm:$0xff]
      %v304 = vld [vmem:[#allocation2 + $0x40] sm:$0xff]
      %v305 = vld [vmem:[#allocation2 + $0x48] sm:$0xff]
      %v306 = vld [vmem:[#allocation2 + $0x50] sm:$0xff]
      %v307 = vld [vmem:[#allocation2 + $0x58] sm:$0xff]
      %v308 = vld [vmem:[#allocation2 + $0x60] sm:$0xff]
      %v309 = vld [vmem:[#allocation2 + $0x68] sm:$0xff]
      %v310 = vld [vmem:[#allocation2 + $0x70] sm:$0xff]
      %v311 = vld [vmem:[#allocation2 + $0x78] sm:$0xff]
      %v312 = vld [vmem:[#allocation2 + $0x80] sm:$0xff]
      %v313 = vld [vmem:[#allocation2 + $0x88] sm:$0xff]
      %v314 = vld [vmem:[#allocation2 + $0x90] sm:$0xff]
      %v315 = vld [vmem:[#allocation2 + $0x98] sm:$0xff]
      %v316 = vld [vmem:[#allocation2 + $0xa0] sm:$0xff]
      %v317 = vld [vmem:[#allocation2 + $0xa8] sm:$0xff]
      %v318 = vld [vmem:[#allocation2 + $0xb0] sm:$0xff]
      %v319 = vld [vmem:[#allocation2 + $0xb8] sm:$0xff]
      %v320 = vld [vmem:[#allocation2 + $0xc0] sm:$0xff]
      %v321 = vld [vmem:[#allocation2 + $0xc8] sm:$0xff]
      %v322 = vld [vmem:[#allocation2 + $0xd0] sm:$0xff]
      %v323 = vld [vmem:[#allocation2 + $0xd8] sm:$0xff]
      %v324 = vld [vmem:[#allocation2 + $0xe0] sm:$0xff]
      %v325 = vld [vmem:[#allocation2 + $0xe8] sm:$0xff]
      %v326 = vld [vmem:[#allocation2 + $0xf0] sm:$0xff]
      %v327 = vld [vmem:[#allocation2 + $0xf8] sm:$0xff]
      %v328 = vld [vmem:[%s236] sm:$0xf]
      %v329 = vld [vmem:[%s236 + $0x4] sm:$0xf]
      %v330 = vld [vmem:[%s236 + $0x8] sm:$0xf]
      %v331 = vld [vmem:[%s236 + $0xc] sm:$0xf]
      %v332 = vld [vmem:[%s236 + $0x10] sm:$0xf]
      %v333 = vld [vmem:[%s236 + $0x14] sm:$0xf]
      %v334 = vld [vmem:[%s236 + $0x18] sm:$0xf]
      %v335 = vld [vmem:[%s236 + $0x1c] sm:$0xf]
      %v336 = vld [vmem:[%s236 + $0x20] sm:$0xf]
      %v337 = vld [vmem:[%s236 + $0x24] sm:$0xf]
      %v338 = vld [vmem:[%s236 + $0x28] sm:$0xf]
      %v339 = vld [vmem:[%s236 + $0x2c] sm:$0xf]
      %v340 = vld [vmem:[%s236 + $0x30] sm:$0xf]
      %v341 = vld [vmem:[%s236 + $0x34] sm:$0xf]
      %v342 = vld [vmem:[%s236 + $0x38] sm:$0xf]
      %v343 = vld [vmem:[%s236 + $0x3c] sm:$0xf]
      %v344 = vld [vmem:[%s236 + $0x40] sm:$0xf]
      %v345 = vld [vmem:[%s236 + $0x44] sm:$0xf]
      %v346 = vld [vmem:[%s236 + $0x48] sm:$0xf]
      %v347 = vld [vmem:[%s236 + $0x4c] sm:$0xf]
      %v348 = vld [vmem:[%s236 + $0x50] sm:$0xf]
      %v349 = vld [vmem:[%s236 + $0x54] sm:$0xf]
      %v350 = vld [vmem:[%s236 + $0x58] sm:$0xf]
      %v351 = vld [vmem:[%s236 + $0x5c] sm:$0xf]
      %v352 = vld [vmem:[%s236 + $0x60] sm:$0xf]
      %v353 = vld [vmem:[%s236 + $0x64] sm:$0xf]
      %v354 = vld [vmem:[%s236 + $0x68] sm:$0xf]
      %v355 = vld [vmem:[%s236 + $0x6c] sm:$0xf]
      %v356 = vld [vmem:[%s236 + $0x70] sm:$0xf]
      %v357 = vld [vmem:[%s236 + $0x74] sm:$0xf]
      %v358 = vld [vmem:[%s236 + $0x78] sm:$0xf]
      %v359 = vld [vmem:[%s236 + $0x7c] sm:$0xf]
      %v360 = vld [vmem:[%s245] sm:$0xf]
      %v361 = vld [vmem:[%s245 + $0x4] sm:$0xf]
      %v362 = vld [vmem:[%s245 + $0x8] sm:$0xf]
      %v363 = vld [vmem:[%s245 + $0xc] sm:$0xf]
      %v364 = vld [vmem:[%s245 + $0x10] sm:$0xf]
      %v365 = vld [vmem:[%s245 + $0x14] sm:$0xf]
      %v366 = vld [vmem:[%s245 + $0x18] sm:$0xf]
      %v367 = vld [vmem:[%s245 + $0x1c] sm:$0xf]
      %v368 = vld [vmem:[%s245 + $0x20] sm:$0xf]
      %v369 = vld [vmem:[%s245 + $0x24] sm:$0xf]
      %v370 = vld [vmem:[%s245 + $0x28] sm:$0xf]
      %v371 = vld [vmem:[%s245 + $0x2c] sm:$0xf]
      %v372 = vld [vmem:[%s245 + $0x30] sm:$0xf]
      %v373 = vld [vmem:[%s245 + $0x34] sm:$0xf]
      %v374 = vld [vmem:[%s245 + $0x38] sm:$0xf]
      %v375 = vld [vmem:[%s245 + $0x3c] sm:$0xf]
      %v408 = vunpack.c.l.b16 %v328
      %v409 = vunpack.c.l.b16 %v329
      %v410 = vunpack.c.l.b16 %v330
      %v411 = vunpack.c.l.b16 %v331
      %v412 = vunpack.c.l.b16 %v332
      %v413 = vunpack.c.l.b16 %v333
      %v414 = vunpack.c.l.b16 %v334
      %v415 = vunpack.c.l.b16 %v335
      %v416 = vunpack.c.l.b16 %v336
      %v417 = vunpack.c.l.b16 %v337
      %v418 = vunpack.c.l.b16 %v338
      %v419 = vunpack.c.l.b16 %v339
      %v420 = vunpack.c.l.b16 %v340
      %v421 = vunpack.c.l.b16 %v341
      %v422 = vunpack.c.l.b16 %v342
      %v423 = vunpack.c.l.b16 %v343
      %v424 = vunpack.c.l.b16 %v344
      %v425 = vunpack.c.l.b16 %v345
      %v426 = vunpack.c.l.b16 %v346
      %v427 = vunpack.c.l.b16 %v347
      %v428 = vunpack.c.l.b16 %v348
      %v429 = vunpack.c.l.b16 %v349
      %v430 = vunpack.c.l.b16 %v350
      %v431 = vunpack.c.l.b16 %v351
      %v432 = vunpack.c.l.b16 %v352
      %v433 = vunpack.c.l.b16 %v353
      %v434 = vunpack.c.l.b16 %v354
      %v435 = vunpack.c.l.b16 %v355
      %v436 = vunpack.c.l.b16 %v356
      %v437 = vunpack.c.l.b16 %v357
      %v438 = vunpack.c.l.b16 %v358
      %v439 = vunpack.c.l.b16 %v359
      %v440 = vpack.c.b16 %v409, %v408
      %v441 = vpack.c.b16 %v411, %v410
      %v442 = vpack.c.b16 %v413, %v412
      %v443 = vpack.c.b16 %v415, %v414
      %v444 = vpack.c.b16 %v417, %v416
      %v445 = vpack.c.b16 %v419, %v418
      %v446 = vpack.c.b16 %v421, %v420
      %v447 = vpack.c.b16 %v423, %v422
      %v448 = vpack.c.b16 %v425, %v424
      %v449 = vpack.c.b16 %v427, %v426
      %v450 = vpack.c.b16 %v429, %v428
      %v451 = vpack.c.b16 %v431, %v430
      %v452 = vpack.c.b16 %v433, %v432
      %v453 = vpack.c.b16 %v435, %v434
      %v454 = vpack.c.b16 %v437, %v436
      %v455 = vpack.c.b16 %v439, %v438
      %v488 = vunpack.c.l.b16 %v360
      %v489 = vunpack.c.l.b16 %v361
      %v490 = vunpack.c.l.b16 %v362
      %v491 = vunpack.c.l.b16 %v363
      %v492 = vunpack.c.l.b16 %v364
      %v493 = vunpack.c.l.b16 %v365
      %v494 = vunpack.c.l.b16 %v366
      %v495 = vunpack.c.l.b16 %v367
      %v496 = vunpack.c.l.b16 %v368
      %v497 = vunpack.c.l.b16 %v369
      %v498 = vunpack.c.l.b16 %v370
      %v499 = vunpack.c.l.b16 %v371
      %v500 = vunpack.c.l.b16 %v372
      %v501 = vunpack.c.l.b16 %v373
      %v502 = vunpack.c.l.b16 %v374
      %v503 = vunpack.c.l.b16 %v375
      %v504 = vpack.c.b16 %v489, %v488
      %v505 = vpack.c.b16 %v491, %v490
      %v506 = vpack.c.b16 %v493, %v492
      %v507 = vpack.c.b16 %v495, %v494
      %v508 = vpack.c.b16 %v497, %v496
      %v509 = vpack.c.b16 %v499, %v498
      %v510 = vpack.c.b16 %v501, %v500
      %v511 = vpack.c.b16 %v503, %v502
      %520 = vmatprep.subr.bf16.mxu0 0
      %521 = vmatpush1.bf16.msra.mxu0 %v504
      %522 = vmatprep.subr.bf16.mxu0 0
      %523 = vmatpush1.bf16.msra.mxu0 %v505
      %524 = vmatprep.subr.bf16.mxu0 0
      %525 = vmatpush1.bf16.msra.mxu0 %v506
      %526 = vmatprep.subr.bf16.mxu0 0
      %527 = vmatpush1.bf16.msra.mxu0 %v507
      %528 = vmatprep.subr.bf16.mxu0 0
      %529 = vmatpush1.bf16.msra.mxu0 %v508
      %530 = vmatprep.subr.bf16.mxu0 0
      %531 = vmatpush1.bf16.msra.mxu0 %v509
      %532 = vmatprep.subr.bf16.mxu0 0
      %533 = vmatpush1.bf16.msra.mxu0 %v510
      %534 = vmatprep.subr.bf16.mxu0 0
      %535 = vmatpush1.bf16.msra.mxu0 %v511
      %536 = vmatprep.subr.bf16.mxu0 0
      %537 = vmatpush1.bf16.msra.mxu0 0
      %538 = vmatprep.subr.bf16.mxu0 0
      %539 = vmatpush1.bf16.msra.mxu0 0
      %540 = vmatprep.subr.bf16.mxu0 0
      %541 = vmatpush1.bf16.msra.mxu0 0
      %542 = vmatprep.subr.bf16.mxu0 0
      %543 = vmatpush1.bf16.msra.mxu0 0
      %544 = vmatprep.subr.bf16.mxu0 0
      %545 = vmatpush1.bf16.msra.mxu0 0
      %546 = vmatprep.subr.bf16.mxu0 0
      %547 = vmatpush1.bf16.msra.mxu0 0
      %548 = vmatprep.subr.bf16.mxu0 0
      %549 = vmatpush1.bf16.msra.mxu0 0
      %550 = vmatprep.subr.bf16.mxu0 0
      %551 = vmatpush1.bf16.msra.mxu0 0
      %552 = vmatprep.mubr.bf16.mxu0 0
      %553 = vmatmul.mubr.bf16.gmra.mrb[0].mxu0 %v440
      %v554 = vpop.f32.mrb[0].mxu0
      %v555 = vadd.f32 0.0, %v554
      %v556 = vpop.f32.mrb[0].mxu0
      %v557 = vpop.f32.mrb[0].mxu0
      %v558 = vadd.f32 0.0, %v557
      %v559 = vpop.f32.mrb[0].mxu0
      %560 = vmatprep.mubr.bf16.mxu0 0
      %561 = vmatmul.mubr.bf16.gmra.mrb[0].mxu0 %v441
      %v562 = vpop.f32.mrb[0].mxu0
      %v563 = vadd.f32 0.0, %v562
      %v564 = vpop.f32.mrb[0].mxu0
      %v565 = vpop.f32.mrb[0].mxu0
      %v566 = vadd.f32 0.0, %v565
      %v567 = vpop.f32.mrb[0].mxu0
      %568 = vmatprep.mubr.bf16.mxu0 0
      %569 = vmatmul.mubr.bf16.gmra.mrb[0].mxu0 %v442
      %v570 = vpop.f32.mrb[0].mxu0
      %v571 = vadd.f32 0.0, %v570
      %v572 = vpop.f32.mrb[0].mxu0
      %v573 = vpop.f32.mrb[0].mxu0
      %v574 = vadd.f32 0.0, %v573
      %v575 = vpop.f32.mrb[0].mxu0
      %576 = vmatprep.mubr.bf16.mxu0 0
      %577 = vmatmul.mubr.bf16.gmra.mrb[0].mxu0 %v443
      %v578 = vpop.f32.mrb[0].mxu0
      %v579 = vadd.f32 0.0, %v578
      %v580 = vpop.f32.mrb[0].mxu0
      %v581 = vpop.f32.mrb[0].mxu0
      %v582 = vadd.f32 0.0, %v581
      %v583 = vpop.f32.mrb[0].mxu0
      %584 = vmatprep.mubr.bf16.mxu0 0
      %585 = vmatmul.mubr.bf16.gmra.mrb[0].mxu0 %v444
      %v586 = vpop.f32.mrb[0].mxu0
      %v587 = vadd.f32 0.0, %v586
      %v588 = vpop.f32.mrb[0].mxu0
      %v589 = vpop.f32.mrb[0].mxu0
      %v590 = vadd.f32 0.0, %v589
      %v591 = vpop.f32.mrb[0].mxu0
      %592 = vmatprep.mubr.bf16.mxu0 0
      %593 = vmatmul.mubr.bf16.gmra.mrb[0].mxu0 %v445
      %v594 = vpop.f32.mrb[0].mxu0
      %v595 = vadd.f32 0.0, %v594
      %v596 = vpop.f32.mrb[0].mxu0
      %v597 = vpop.f32.mrb[0].mxu0
      %v598 = vadd.f32 0.0, %v597
      %v599 = vpop.f32.mrb[0].mxu0
      %600 = vmatprep.mubr.bf16.mxu0 0
      %601 = vmatmul.mubr.bf16.gmra.mrb[0].mxu0 %v446
      %v602 = vpop.f32.mrb[0].mxu0
      %v603 = vadd.f32 0.0, %v602
      %v604 = vpop.f32.mrb[0].mxu0
      %v605 = vpop.f32.mrb[0].mxu0
      %v606 = vadd.f32 0.0, %v605
      %v607 = vpop.f32.mrb[0].mxu0
      %608 = vmatprep.mubr.bf16.mxu0 0
      %609 = vmatmul.mubr.bf16.gmra.mrb[0].mxu0 %v447
      %v610 = vpop.f32.mrb[0].mxu0
      %v611 = vadd.f32 0.0, %v610
      %v612 = vpop.f32.mrb[0].mxu0
      %v613 = vpop.f32.mrb[0].mxu0
      %v614 = vadd.f32 0.0, %v613
      %v615 = vpop.f32.mrb[0].mxu0
      %616 = vmatprep.mubr.bf16.mxu0 0
      %617 = vmatmul.mubr.bf16.gmra.mrb[0].mxu0 %v448
      %v618 = vpop.f32.mrb[0].mxu0
      %v619 = vadd.f32 0.0, %v618
      %v620 = vpop.f32.mrb[0].mxu0
      %v621 = vpop.f32.mrb[0].mxu0
      %v622 = vadd.f32 0.0, %v621
      %v623 = vpop.f32.mrb[0].mxu0
      %624 = vmatprep.mubr.bf16.mxu0 0
      %625 = vmatmul.mubr.bf16.gmra.mrb[0].mxu0 %v449
      %v626 = vpop.f32.mrb[0].mxu0
      %v627 = vadd.f32 0.0, %v626
      %v628 = vpop.f32.mrb[0].mxu0
      %v629 = vpop.f32.mrb[0].mxu0
      %v630 = vadd.f32 0.0, %v629
      %v631 = vpop.f32.mrb[0].mxu0
      %632 = vmatprep.mubr.bf16.mxu0 0
      %633 = vmatmul.mubr.bf16.gmra.mrb[0].mxu0 %v450
      %v634 = vpop.f32.mrb[0].mxu0
      %v635 = vadd.f32 0.0, %v634
      %v636 = vpop.f32.mrb[0].mxu0
      %v637 = vpop.f32.mrb[0].mxu0
      %v638 = vadd.f32 0.0, %v637
      %v639 = vpop.f32.mrb[0].mxu0
      %640 = vmatprep.mubr.bf16.mxu0 0
      %641 = vmatmul.mubr.bf16.gmra.mrb[0].mxu0 %v451
      %v642 = vpop.f32.mrb[0].mxu0
      %v643 = vadd.f32 0.0, %v642
      %v644 = vpop.f32.mrb[0].mxu0
      %v645 = vpop.f32.mrb[0].mxu0
      %v646 = vadd.f32 0.0, %v645
      %v647 = vpop.f32.mrb[0].mxu0
      %648 = vmatprep.mubr.bf16.mxu0 0
      %649 = vmatmul.mubr.bf16.gmra.mrb[0].mxu0 %v452
      %v650 = vpop.f32.mrb[0].mxu0
      %v651 = vadd.f32 0.0, %v650
      %v652 = vpop.f32.mrb[0].mxu0
      %v653 = vpop.f32.mrb[0].mxu0
      %v654 = vadd.f32 0.0, %v653
      %v655 = vpop.f32.mrb[0].mxu0
      %656 = vmatprep.mubr.bf16.mxu0 0
      %657 = vmatmul.mubr.bf16.gmra.mrb[0].mxu0 %v453
      %v658 = vpop.f32.mrb[0].mxu0
      %v659 = vadd.f32 0.0, %v658
      %v660 = vpop.f32.mrb[0].mxu0
      %v661 = vpop.f32.mrb[0].mxu0
      %v662 = vadd.f32 0.0, %v661
      %v663 = vpop.f32.mrb[0].mxu0
      %664 = vmatprep.mubr.bf16.mxu0 0
      %665 = vmatmul.mubr.bf16.gmra.mrb[0].mxu0 %v454
      %v666 = vpop.f32.mrb[0].mxu0
      %v667 = vadd.f32 0.0, %v666
      %v668 = vpop.f32.mrb[0].mxu0
      %v669 = vpop.f32.mrb[0].mxu0
      %v670 = vadd.f32 0.0, %v669
      %v671 = vpop.f32.mrb[0].mxu0
      %672 = vmatprep.mubr.bf16.mxu0 0
      %673 = vmatmul.mubr.bf16.gmra.mrb[0].mxu0 %v455
      %v674 = vpop.f32.mrb[0].mxu0
      %v675 = vadd.f32 0.0, %v674
      %v676 = vpop.f32.mrb[0].mxu0
      %v677 = vpop.f32.mrb[0].mxu0
      %v678 = vadd.f32 0.0, %v677
      %v679 = vpop.f32.mrb[0].mxu0
      %680 = vdwg.mxu0
      %v681 = vadd.f32 %v296, %v555
      %v682 = vadd.f32 %v297, %v558
      %v683 = vadd.f32 %v298, %v563
      %v684 = vadd.f32 %v299, %v566
      %v685 = vadd.f32 %v300, %v571
      %v686 = vadd.f32 %v301, %v574
      %v687 = vadd.f32 %v302, %v579
      %v688 = vadd.f32 %v303, %v582
      %v689 = vadd.f32 %v304, %v587
      %v690 = vadd.f32 %v305, %v590
      %v691 = vadd.f32 %v306, %v595
      %v692 = vadd.f32 %v307, %v598
      %v693 = vadd.f32 %v308, %v603
      %v694 = vadd.f32 %v309, %v606
      %v695 = vadd.f32 %v310, %v611
      %v696 = vadd.f32 %v311, %v614
      %v697 = vadd.f32 %v312, %v619
      %v698 = vadd.f32 %v313, %v622
      %v699 = vadd.f32 %v314, %v627
      %v700 = vadd.f32 %v315, %v630
      %v701 = vadd.f32 %v316, %v635
      %v702 = vadd.f32 %v317, %v638
      %v703 = vadd.f32 %v318, %v643
      %v704 = vadd.f32 %v319, %v646
      %v705 = vadd.f32 %v320, %v651
      %v706 = vadd.f32 %v321, %v654
      %v707 = vadd.f32 %v322, %v659
      %v708 = vadd.f32 %v323, %v662
      %v709 = vadd.f32 %v324, %v667
      %v710 = vadd.f32 %v325, %v670
      %v711 = vadd.f32 %v326, %v675
      %v712 = vadd.f32 %v327, %v678
      %713 = vst [vmem:[#allocation2] sm:$0xff] %v681
      %714 = vst [vmem:[#allocation2 + $0x8] sm:$0xff] %v682
      %715 = vst [vmem:[#allocation2 + $0x10] sm:$0xff] %v683
      %716 = vst [vmem:[#allocation2 + $0x18] sm:$0xff] %v684
      %717 = vst [vmem:[#allocation2 + $0x20] sm:$0xff] %v685
      %718 = vst [vmem:[#allocation2 + $0x28] sm:$0xff] %v686
      %719 = vst [vmem:[#allocation2 + $0x30] sm:$0xff] %v687
      %720 = vst [vmem:[#allocation2 + $0x38] sm:$0xff] %v688
      %721 = vst [vmem:[#allocation2 + $0x40] sm:$0xff] %v689
      %722 = vst [vmem:[#allocation2 + $0x48] sm:$0xff] %v690
      %723 = vst [vmem:[#allocation2 + $0x50] sm:$0xff] %v691
      %724 = vst [vmem:[#allocation2 + $0x58] sm:$0xff] %v692
      %725 = vst [vmem:[#allocation2 + $0x60] sm:$0xff] %v693
      %726 = vst [vmem:[#allocation2 + $0x68] sm:$0xff] %v694
      %727 = vst [vmem:[#allocation2 + $0x70] sm:$0xff] %v695
      %728 = vst [vmem:[#allocation2 + $0x78] sm:$0xff] %v696
      %729 = vst [vmem:[#allocation2 + $0x80] sm:$0xff] %v697
      %730 = vst [vmem:[#allocation2 + $0x88] sm:$0xff] %v698
      %731 = vst [vmem:[#allocation2 + $0x90] sm:$0xff] %v699
      %732 = vst [vmem:[#allocation2 + $0x98] sm:$0xff] %v700
      %733 = vst [vmem:[#allocation2 + $0xa0] sm:$0xff] %v701
      %734 = vst [vmem:[#allocation2 + $0xa8] sm:$0xff] %v702
      %735 = vst [vmem:[#allocation2 + $0xb0] sm:$0xff] %v703
      %736 = vst [vmem:[#allocation2 + $0xb8] sm:$0xff] %v704
      %737 = vst [vmem:[#allocation2 + $0xc0] sm:$0xff] %v705
      %738 = vst [vmem:[#allocation2 + $0xc8] sm:$0xff] %v706
      %739 = vst [vmem:[#allocation2 + $0xd0] sm:$0xff] %v707
      %740 = vst [vmem:[#allocation2 + $0xd8] sm:$0xff] %v708
      %741 = vst [vmem:[#allocation2 + $0xe0] sm:$0xff] %v709
      %742 = vst [vmem:[#allocation2 + $0xe8] sm:$0xff] %v710
      %743 = vst [vmem:[#allocation2 + $0xf0] sm:$0xff] %v711
      %744 = vst [vmem:[#allocation2 + $0xf8] sm:$0xff] %v712
      // Predicated region
      $region37: #{main_model_step.11} parent=31 // pred_check
        %p745 = pneg %p260
      $region38: #{main_model_step.11} parent=31 // pred_check_branch
        %747 = sbr.rel (%p745) target = $region40
      $region39: #{main_model_step.11} parent=31 // pred_region
        %v748 = vld [vmem:[#allocation2] sm:$0xff]
        %v749 = vld [vmem:[#allocation2 + $0x8] sm:$0xff]
        %v750 = vld [vmem:[#allocation2 + $0x10] sm:$0xff]
        %v751 = vld [vmem:[#allocation2 + $0x18] sm:$0xff]
        %v752 = vld [vmem:[#allocation2 + $0x20] sm:$0xff]
        %v753 = vld [vmem:[#allocation2 + $0x28] sm:$0xff]
        %v754 = vld [vmem:[#allocation2 + $0x30] sm:$0xff]
        %v755 = vld [vmem:[#allocation2 + $0x38] sm:$0xff]
        %v756 = vld [vmem:[#allocation2 + $0x40] sm:$0xff]
        %v757 = vld [vmem:[#allocation2 + $0x48] sm:$0xff]
        %v758 = vld [vmem:[#allocation2 + $0x50] sm:$0xff]
        %v759 = vld [vmem:[#allocation2 + $0x58] sm:$0xff]
        %v760 = vld [vmem:[#allocation2 + $0x60] sm:$0xff]
        %v761 = vld [vmem:[#allocation2 + $0x68] sm:$0xff]
        %v762 = vld [vmem:[#allocation2 + $0x70] sm:$0xff]
        %v763 = vld [vmem:[#allocation2 + $0x78] sm:$0xff]
        %v764 = vld [vmem:[#allocation2 + $0x80] sm:$0xff]
        %v765 = vld [vmem:[#allocation2 + $0x88] sm:$0xff]
        %v766 = vld [vmem:[#allocation2 + $0x90] sm:$0xff]
        %v767 = vld [vmem:[#allocation2 + $0x98] sm:$0xff]
        %v768 = vld [vmem:[#allocation2 + $0xa0] sm:$0xff]
        %v769 = vld [vmem:[#allocation2 + $0xa8] sm:$0xff]
        %v770 = vld [vmem:[#allocation2 + $0xb0] sm:$0xff]
        %v771 = vld [vmem:[#allocation2 + $0xb8] sm:$0xff]
        %v772 = vld [vmem:[#allocation2 + $0xc0] sm:$0xff]
        %v773 = vld [vmem:[#allocation2 + $0xc8] sm:$0xff]
        %v774 = vld [vmem:[#allocation2 + $0xd0] sm:$0xff]
        %v775 = vld [vmem:[#allocation2 + $0xd8] sm:$0xff]
        %v776 = vld [vmem:[#allocation2 + $0xe0] sm:$0xff]
        %v777 = vld [vmem:[#allocation2 + $0xe8] sm:$0xff]
        %v778 = vld [vmem:[#allocation2 + $0xf0] sm:$0xff]
        %v779 = vld [vmem:[#allocation2 + $0xf8] sm:$0xff]
        %v780 = vld [vmem:[%s249] sm:$0x1]
        %v782 = vlaneseq
        %v783 = vshrl.u32 %v782, 7
        %v784 = vsub.s32 0, %v783
        %v785 = vrot.slane %v780, %v784
        %v787 = vadd.f32 %v748, %v785
        %v788 = vadd.f32 %v749, %v785
        %v789 = vadd.f32 %v750, %v785
        %v790 = vadd.f32 %v751, %v785
        %v791 = vadd.f32 %v752, %v785
        %v792 = vadd.f32 %v753, %v785
        %v793 = vadd.f32 %v754, %v785
        %v794 = vadd.f32 %v755, %v785
        %v795 = vadd.f32 %v756, %v785
        %v796 = vadd.f32 %v757, %v785
        %v797 = vadd.f32 %v758, %v785
        %v798 = vadd.f32 %v759, %v785
        %v799 = vadd.f32 %v760, %v785
        %v800 = vadd.f32 %v761, %v785
        %v801 = vadd.f32 %v762, %v785
        %v802 = vadd.f32 %v763, %v785
        %v803 = vadd.f32 %v764, %v785
        %v804 = vadd.f32 %v765, %v785
        %v805 = vadd.f32 %v766, %v785
        %v806 = vadd.f32 %v767, %v785
        %v807 = vadd.f32 %v768, %v785
        %v808 = vadd.f32 %v769, %v785
        %v809 = vadd.f32 %v770, %v785
        %v810 = vadd.f32 %v771, %v785
        %v811 = vadd.f32 %v772, %v785
        %v812 = vadd.f32 %v773, %v785
        %v813 = vadd.f32 %v774, %v785
        %v814 = vadd.f32 %v775, %v785
        %v815 = vadd.f32 %v776, %v785
        %v816 = vadd.f32 %v777, %v785
        %v817 = vadd.f32 %v778, %v785
        %v818 = vadd.f32 %v779, %v785
        %vm819 = vcmp.ge.f32.partialorder %v787, 0.0
        %vm820 = vcmp.ge.f32.partialorder %v788, 0.0
        %vm821 = vcmp.ge.f32.partialorder %v789, 0.0
        %vm822 = vcmp.ge.f32.partialorder %v790, 0.0
        %vm823 = vcmp.ge.f32.partialorder %v791, 0.0
        %vm824 = vcmp.ge.f32.partialorder %v792, 0.0
        %vm825 = vcmp.ge.f32.partialorder %v793, 0.0
        %vm826 = vcmp.ge.f32.partialorder %v794, 0.0
        %vm827 = vcmp.ge.f32.partialorder %v795, 0.0
        %vm828 = vcmp.ge.f32.partialorder %v796, 0.0
        %vm829 = vcmp.ge.f32.partialorder %v797, 0.0
        %vm830 = vcmp.ge.f32.partialorder %v798, 0.0
        %vm831 = vcmp.ge.f32.partialorder %v799, 0.0
        %vm832 = vcmp.ge.f32.partialorder %v800, 0.0
        %vm833 = vcmp.ge.f32.partialorder %v801, 0.0
        %vm834 = vcmp.ge.f32.partialorder %v802, 0.0
        %vm835 = vcmp.ge.f32.partialorder %v803, 0.0
        %vm836 = vcmp.ge.f32.partialorder %v804, 0.0
        %vm837 = vcmp.ge.f32.partialorder %v805, 0.0
        %vm838 = vcmp.ge.f32.partialorder %v806, 0.0
        %vm839 = vcmp.ge.f32.partialorder %v807, 0.0
        %vm840 = vcmp.ge.f32.partialorder %v808, 0.0
        %vm841 = vcmp.ge.f32.partialorder %v809, 0.0
        %vm842 = vcmp.ge.f32.partialorder %v810, 0.0
        %vm843 = vcmp.ge.f32.partialorder %v811, 0.0
        %vm844 = vcmp.ge.f32.partialorder %v812, 0.0
        %vm845 = vcmp.ge.f32.partialorder %v813, 0.0
        %vm846 = vcmp.ge.f32.partialorder %v814, 0.0
        %vm847 = vcmp.ge.f32.partialorder %v815, 0.0
        %vm848 = vcmp.ge.f32.partialorder %v816, 0.0
        %vm849 = vcmp.ge.f32.partialorder %v817, 0.0
        %vm850 = vcmp.ge.f32.partialorder %v818, 0.0
        %v851 = vmul.f32 %v787, 0.2
        %v852 = vmul.f32 %v788, 0.2
        %v853 = vmul.f32 %v789, 0.2
        %v854 = vmul.f32 %v790, 0.2
        %v855 = vmul.f32 %v791, 0.2
        %v856 = vmul.f32 %v792, 0.2
        %v857 = vmul.f32 %v793, 0.2
        %v858 = vmul.f32 %v794, 0.2
        %v859 = vmul.f32 %v795, 0.2
        %v860 = vmul.f32 %v796, 0.2
        %v861 = vmul.f32 %v797, 0.2
        %v862 = vmul.f32 %v798, 0.2
        %v863 = vmul.f32 %v799, 0.2
        %v864 = vmul.f32 %v800, 0.2
        %v865 = vmul.f32 %v801, 0.2
        %v866 = vmul.f32 %v802, 0.2
        %v867 = vmul.f32 %v803, 0.2
        %v868 = vmul.f32 %v804, 0.2
        %v869 = vmul.f32 %v805, 0.2
        %v870 = vmul.f32 %v806, 0.2
        %v871 = vmul.f32 %v807, 0.2
        %v872 = vmul.f32 %v808, 0.2
        %v873 = vmul.f32 %v809, 0.2
        %v874 = vmul.f32 %v810, 0.2
        %v875 = vmul.f32 %v811, 0.2
        %v876 = vmul.f32 %v812, 0.2
        %v877 = vmul.f32 %v813, 0.2
        %v878 = vmul.f32 %v814, 0.2
        %v879 = vmul.f32 %v815, 0.2
        %v880 = vmul.f32 %v816, 0.2
        %v881 = vmul.f32 %v817, 0.2
        %v882 = vmul.f32 %v818, 0.2
        %v883 = vsel %vm819, %v787, %v851
        %v884 = vsel %vm820, %v788, %v852
        %v885 = vsel %vm821, %v789, %v853
        %v886 = vsel %vm822, %v790, %v854
        %v887 = vsel %vm823, %v791, %v855
        %v888 = vsel %vm824, %v792, %v856
        %v889 = vsel %vm825, %v793, %v857
        %v890 = vsel %vm826, %v794, %v858
        %v891 = vsel %vm827, %v795, %v859
        %v892 = vsel %vm828, %v796, %v860
        %v893 = vsel %vm829, %v797, %v861
        %v894 = vsel %vm830, %v798, %v862
        %v895 = vsel %vm831, %v799, %v863
        %v896 = vsel %vm832, %v800, %v864
        %v897 = vsel %vm833, %v801, %v865
        %v898 = vsel %vm834, %v802, %v866
        %v899 = vsel %vm835, %v803, %v867
        %v900 = vsel %vm836, %v804, %v868
        %v901 = vsel %vm837, %v805, %v869
        %v902 = vsel %vm838, %v806, %v870
        %v903 = vsel %vm839, %v807, %v871
        %v904 = vsel %vm840, %v808, %v872
        %v905 = vsel %vm841, %v809, %v873
        %v906 = vsel %vm842, %v810, %v874
        %v907 = vsel %vm843, %v811, %v875
        %v908 = vsel %vm844, %v812, %v876
        %v909 = vsel %vm845, %v813, %v877
        %v910 = vsel %vm846, %v814, %v878
        %v911 = vsel %vm847, %v815, %v879
        %v912 = vsel %vm848, %v816, %v880
        %v913 = vsel %vm849, %v817, %v881
        %v914 = vsel %vm850, %v818, %v882
        %v915 = vpack.c.bf16 %v884, %v883
        %v916 = vpack.c.bf16 %v886, %v885
        %v917 = vpack.c.bf16 %v888, %v887
        %v918 = vpack.c.bf16 %v890, %v889
        %v919 = vpack.c.bf16 %v892, %v891
        %v920 = vpack.c.bf16 %v894, %v893
        %v921 = vpack.c.bf16 %v896, %v895
        %v922 = vpack.c.bf16 %v898, %v897
        %v923 = vpack.c.bf16 %v900, %v899
        %v924 = vpack.c.bf16 %v902, %v901
        %v925 = vpack.c.bf16 %v904, %v903
        %v926 = vpack.c.bf16 %v906, %v905
        %v927 = vpack.c.bf16 %v908, %v907
        %v928 = vpack.c.bf16 %v910, %v909
        %v929 = vpack.c.bf16 %v912, %v911
        %v930 = vpack.c.bf16 %v914, %v913
        %v947 = vunpack.c.l.b16 %v915
        %v948 = vunpack.c.h.b16 %v915
        %v949 = vunpack.c.l.b16 %v916
        %v950 = vunpack.c.h.b16 %v916
        %v951 = vunpack.c.l.b16 %v917
        %v952 = vunpack.c.h.b16 %v917
        %v953 = vunpack.c.l.b16 %v918
        %v954 = vunpack.c.h.b16 %v918
        %v955 = vunpack.c.l.b16 %v919
        %v956 = vunpack.c.h.b16 %v919
        %v957 = vunpack.c.l.b16 %v920
        %v958 = vunpack.c.h.b16 %v920
        %v959 = vunpack.c.l.b16 %v921
        %v960 = vunpack.c.h.b16 %v921
        %v961 = vunpack.c.l.b16 %v922
        %v962 = vunpack.c.h.b16 %v922
        %v963 = vunpack.c.l.b16 %v923
        %v964 = vunpack.c.h.b16 %v923
        %v965 = vunpack.c.l.b16 %v924
        %v966 = vunpack.c.h.b16 %v924
        %v967 = vunpack.c.l.b16 %v925
        %v968 = vunpack.c.h.b16 %v925
        %v969 = vunpack.c.l.b16 %v926
        %v970 = vunpack.c.h.b16 %v926
        %v971 = vunpack.c.l.b16 %v927
        %v972 = vunpack.c.h.b16 %v927
        %v973 = vunpack.c.l.b16 %v928
        %v974 = vunpack.c.h.b16 %v928
        %v975 = vunpack.c.l.b16 %v929
        %v976 = vunpack.c.h.b16 %v929
        %v977 = vunpack.c.l.b16 %v930
        %v978 = vunpack.c.h.b16 %v930
        %v979 = vpack.c.b16 %v947, %v947
        %v980 = vpack.c.b16 %v948, %v948
        %v981 = vpack.c.b16 %v949, %v949
        %v982 = vpack.c.b16 %v950, %v950
        %v983 = vpack.c.b16 %v951, %v951
        %v984 = vpack.c.b16 %v952, %v952
        %v985 = vpack.c.b16 %v953, %v953
        %v986 = vpack.c.b16 %v954, %v954
        %v987 = vpack.c.b16 %v955, %v955
        %v988 = vpack.c.b16 %v956, %v956
        %v989 = vpack.c.b16 %v957, %v957
        %v990 = vpack.c.b16 %v958, %v958
        %v991 = vpack.c.b16 %v959, %v959
        %v992 = vpack.c.b16 %v960, %v960
        %v993 = vpack.c.b16 %v961, %v961
        %v994 = vpack.c.b16 %v962, %v962
        %v995 = vpack.c.b16 %v963, %v963
        %v996 = vpack.c.b16 %v964, %v964
        %v997 = vpack.c.b16 %v965, %v965
        %v998 = vpack.c.b16 %v966, %v966
        %v999 = vpack.c.b16 %v967, %v967
        %v1000 = vpack.c.b16 %v968, %v968
        %v1001 = vpack.c.b16 %v969, %v969
        %v1002 = vpack.c.b16 %v970, %v970
        %v1003 = vpack.c.b16 %v971, %v971
        %v1004 = vpack.c.b16 %v972, %v972
        %v1005 = vpack.c.b16 %v973, %v973
        %v1006 = vpack.c.b16 %v974, %v974
        %v1007 = vpack.c.b16 %v975, %v975
        %v1008 = vpack.c.b16 %v976, %v976
        %v1009 = vpack.c.b16 %v977, %v977
        %v1010 = vpack.c.b16 %v978, %v978
        %1043 = vst [vmem:[%s257] sm:$0xf] %v979
        %1044 = vst [vmem:[%s257 + $0x4] sm:$0xf] %v980
        %1045 = vst [vmem:[%s257 + $0x8] sm:$0xf] %v981
        %1046 = vst [vmem:[%s257 + $0xc] sm:$0xf] %v982
        %1047 = vst [vmem:[%s257 + $0x10] sm:$0xf] %v983
        %1048 = vst [vmem:[%s257 + $0x14] sm:$0xf] %v984
        %1049 = vst [vmem:[%s257 + $0x18] sm:$0xf] %v985
        %1050 = vst [vmem:[%s257 + $0x1c] sm:$0xf] %v986
        %1051 = vst [vmem:[%s257 + $0x20] sm:$0xf] %v987
        %1052 = vst [vmem:[%s257 + $0x24] sm:$0xf] %v988
        %1053 = vst [vmem:[%s257 + $0x28] sm:$0xf] %v989
        %1054 = vst [vmem:[%s257 + $0x2c] sm:$0xf] %v990
        %1055 = vst [vmem:[%s257 + $0x30] sm:$0xf] %v991
        %1056 = vst [vmem:[%s257 + $0x34] sm:$0xf] %v992
        %1057 = vst [vmem:[%s257 + $0x38] sm:$0xf] %v993
        %1058 = vst [vmem:[%s257 + $0x3c] sm:$0xf] %v994
        %1059 = vst [vmem:[%s257 + $0x40] sm:$0xf] %v995
        %1060 = vst [vmem:[%s257 + $0x44] sm:$0xf] %v996
        %1061 = vst [vmem:[%s257 + $0x48] sm:$0xf] %v997
        %1062 = vst [vmem:[%s257 + $0x4c] sm:$0xf] %v998
        %1063 = vst [vmem:[%s257 + $0x50] sm:$0xf] %v999
        %1064 = vst [vmem:[%s257 + $0x54] sm:$0xf] %v1000
        %1065 = vst [vmem:[%s257 + $0x58] sm:$0xf] %v1001
        %1066 = vst [vmem:[%s257 + $0x5c] sm:$0xf] %v1002
        %1067 = vst [vmem:[%s257 + $0x60] sm:$0xf] %v1003
        %1068 = vst [vmem:[%s257 + $0x64] sm:$0xf] %v1004
        %1069 = vst [vmem:[%s257 + $0x68] sm:$0xf] %v1005
        %1070 = vst [vmem:[%s257 + $0x6c] sm:$0xf] %v1006
        %1071 = vst [vmem:[%s257 + $0x70] sm:$0xf] %v1007
        %1072 = vst [vmem:[%s257 + $0x74] sm:$0xf] %v1008
        %1073 = vst [vmem:[%s257 + $0x78] sm:$0xf] %v1009
        %1074 = vst [vmem:[%s257 + $0x7c] sm:$0xf] %v1010
      $region40: #{main_model_step.11} parent=31 // pred_fallthru
        _
      %s1075 = smul.u32 32, %s19
      %p1076 = scmp.lt.s32.totalorder %s1075, 127
      %s1077 = scalar_select %p1076, %s1075, 127
      %p1078 = scmp.lt.s32.totalorder %s20, 0
      %s1079 = scalar_select %p1078, %s20, 0
      %s1080 = sadd.s32 %s1079, %s1077
      %s1081 = smul.addr %s1080, 4
      %s1082 = scalar_lea.vmem %s3, %s1081
      // Predicated region
      $region41: #{main_model_step.11} parent=31 // pred_check
        %p1083 = pneg %p135
      $region42: #{main_model_step.11} parent=31 // pred_check_branch
        %1085 = sbr.rel (%p1083) target = $region44
      $region43: #{main_model_step.11} parent=31 // pred_region
        %s1086 = smul.u32 32, %s19
      $region44: #{main_model_step.11} parent=31 // pred_fallthru
        _
    $region32: #{main_model_step.11} parent=5 // pred_fallthru
      _
    %p1087 = scmp.le.s32.totalorder 2, %s9
    // Predicated region
    $region45: #{main_model_step.11} parent=5 // pred_check
      %p1088 = pneg %p1087
    $region46: #{main_model_step.11} parent=5 // pred_check_branch
      %1090 = sbr.rel (%p1088) target = $region48
    $region47: #{main_model_step.11} parent=5 // pred_region
      %s1091 = ssub.s32 %s9, 2
      // Predicated region
      $region49: #{main_model_step.11} parent=47 // pred_check
        %p1092 = pneg %p141
      $region50: #{main_model_step.11} parent=47 // pred_check_branch
        %1094 = sbr.rel (%p1092) target = $region52
      $region51: #{main_model_step.11} parent=47 // pred_region
        %s1095 = smul.u32 32, %s22
        %p1096 = scmp.lt.s32.totalorder %s1095, 127
        %s1097 = scalar_select %p1096, %s1095, 127
        %p1098 = scmp.lt.s32.totalorder %s23, 0
        %s1099 = scalar_select %p1098, %s23, 0
        %s1100 = sadd.s32 %s1099, %s1097
        %s1101 = smul.addr %s1100, 4
        %s1102 = scalar_lea.vmem %s3, %s1101
      $region52: #{main_model_step.11} parent=47 // pred_fallthru
        _
    $region48: #{main_model_step.11} parent=5 // pred_fallthru
      _
  $region6: #{main_model_step.11} parent=0 // loop_footer
    %s13 = sadd.s32 1, %s9
  $region7: #{main_model_step.11} parent=0 // loop_footer_branch
    %8 = sbr.rel target = $region3
  $region8: #{main_model_step.11} parent=0 // loop_exit
    _

// kernel: main_model_step.13
$region0: #{main_model_step.13}
  #allocation0 [shape = 'u32[]', space=smem, size = 0x4, offset = 0x4, fixed_abs, tag = 'smem constant byte address 0x4 - core index']
  #allocation1 [shape = 'u32[144,128]{1,0:T(1,128)}', space=vmem, size = 0x12000, scoped, tag = 'internal scratch']
  %s0 = inlined_call_operand.vmem [shape: bf16[256,128], index: 0, kind: input, shape index: {}]
  %s1 = inlined_call_operand.vmem [shape: f32[1,128], index: 1, kind: input, shape index: {}]
  %s2 = inlined_call_operand.vmem [shape: f32[1,128], index: 2, kind: input, shape index: {}]
  %s3 = inlined_call_operand.vmem [shape: bf16[256,128], index: 3, kind: output, shape index: {}]
  %s4 = sld [smem:[#allocation0]]
  $region22: #{main_model_step.13} parent=0
    _
  %s6 = ssub.s32 1, %s4
  %s7 = scalar_select 0, %s6, %s4
  // Predicated region
  $region2: #{main_model_step.13} parent=0 // pred_check
    _
  $region3: #{main_model_step.13} parent=0 // pred_check_branch
    %9 = sbr.rel (0) target = $region5
  $region4: #{main_model_step.13} parent=0 // pred_region
    _
  $region5: #{main_model_step.13} parent=0 // pred_fallthru
    _
  // Predicated region
  $region6: #{main_model_step.13} parent=0 // pred_check
    _
  $region7: #{main_model_step.13} parent=0 // pred_check_branch
    %11 = sbr.rel (0) target = $region9
  $region8: #{main_model_step.13} parent=0 // pred_region
    _
  $region9: #{main_model_step.13} parent=0 // pred_fallthru
    _
  // Predicated region
  $region10: #{main_model_step.13} parent=0 // pred_check
    _
  $region11: #{main_model_step.13} parent=0 // pred_check_branch
    %13 = sbr.rel (0) target = $region13
  $region12: #{main_model_step.13} parent=0 // pred_region
    _
  $region13: #{main_model_step.13} parent=0 // pred_fallthru
    _
  %v14 = vld [vmem:[%s0] sm:$0xf]
  %v15 = vld [vmem:[%s0 + $0x4] sm:$0xf]
  %v16 = vld [vmem:[%s0 + $0x8] sm:$0xf]
  %v17 = vld [vmem:[%s0 + $0xc] sm:$0xf]
  %v18 = vld [vmem:[%s0 + $0x10] sm:$0xf]
  %v19 = vld [vmem:[%s0 + $0x14] sm:$0xf]
  %v20 = vld [vmem:[%s0 + $0x18] sm:$0xf]
  %v21 = vld [vmem:[%s0 + $0x1c] sm:$0xf]
  %v22 = vld [vmem:[%s0 + $0x20] sm:$0xf]
  %v23 = vld [vmem:[%s0 + $0x24] sm:$0xf]
  %v24 = vld [vmem:[%s0 + $0x28] sm:$0xf]
  %v25 = vld [vmem:[%s0 + $0x2c] sm:$0xf]
  %v26 = vld [vmem:[%s0 + $0x30] sm:$0xf]
  %v27 = vld [vmem:[%s0 + $0x34] sm:$0xf]
  %v28 = vld [vmem:[%s0 + $0x38] sm:$0xf]
  %v29 = vld [vmem:[%s0 + $0x3c] sm:$0xf]
  %v30 = vld [vmem:[%s0 + $0x40] sm:$0xf]
  %v31 = vld [vmem:[%s0 + $0x44] sm:$0xf]
  %v32 = vld [vmem:[%s0 + $0x48] sm:$0xf]
  %v33 = vld [vmem:[%s0 + $0x4c] sm:$0xf]
  %v34 = vld [vmem:[%s0 + $0x50] sm:$0xf]
  %v35 = vld [vmem:[%s0 + $0x54] sm:$0xf]
  %v36 = vld [vmem:[%s0 + $0x58] sm:$0xf]
  %v37 = vld [vmem:[%s0 + $0x5c] sm:$0xf]
  %v38 = vld [vmem:[%s0 + $0x60] sm:$0xf]
  %v39 = vld [vmem:[%s0 + $0x64] sm:$0xf]
  %v40 = vld [vmem:[%s0 + $0x68] sm:$0xf]
  %v41 = vld [vmem:[%s0 + $0x6c] sm:$0xf]
  %v42 = vld [vmem:[%s0 + $0x70] sm:$0xf]
  %v43 = vld [vmem:[%s0 + $0x74] sm:$0xf]
  %v44 = vld [vmem:[%s0 + $0x78] sm:$0xf]
  %v45 = vld [vmem:[%s0 + $0x7c] sm:$0xf]
  %v46 = vunpack.c.l.bf16 %v14
  %v47 = vunpack.c.l.bf16 %v15
  %v48 = vunpack.c.l.bf16 %v16
  %v49 = vunpack.c.l.bf16 %v17
  %v50 = vunpack.c.l.bf16 %v18
  %v51 = vunpack.c.l.bf16 %v19
  %v52 = vunpack.c.l.bf16 %v20
  %v53 = vunpack.c.l.bf16 %v21
  %v54 = vunpack.c.l.bf16 %v22
  %v55 = vunpack.c.l.bf16 %v23
  %v56 = vunpack.c.l.bf16 %v24
  %v57 = vunpack.c.l.bf16 %v25
  %v58 = vunpack.c.l.bf16 %v26
  %v59 = vunpack.c.l.bf16 %v27
  %v60 = vunpack.c.l.bf16 %v28
  %v61 = vunpack.c.l.bf16 %v29
  %v62 = vunpack.c.l.bf16 %v30
  %v63 = vunpack.c.l.bf16 %v31
  %v64 = vunpack.c.l.bf16 %v32
  %v65 = vunpack.c.l.bf16 %v33
  %v66 = vunpack.c.l.bf16 %v34
  %v67 = vunpack.c.l.bf16 %v35
  %v68 = vunpack.c.l.bf16 %v36
  %v69 = vunpack.c.l.bf16 %v37
  %v70 = vunpack.c.l.bf16 %v38
  %v71 = vunpack.c.l.bf16 %v39
  %v72 = vunpack.c.l.bf16 %v40
  %v73 = vunpack.c.l.bf16 %v41
  %v74 = vunpack.c.l.bf16 %v42
  %v75 = vunpack.c.l.bf16 %v43
  %v76 = vunpack.c.l.bf16 %v44
  %v77 = vunpack.c.l.bf16 %v45
  %v78 = vadd.f32 %v46, %v47
  %v79 = vadd.f32 %v78, %v48
  %v80 = vadd.f32 %v79, %v49
  %v81 = vadd.f32 %v80, %v50
  %v82 = vadd.f32 %v81, %v51
  %v83 = vadd.f32 %v82, %v52
  %v84 = vadd.f32 %v83, %v53
  %v85 = vadd.f32 %v84, %v54
  %v86 = vadd.f32 %v85, %v55
  %v87 = vadd.f32 %v86, %v56
  %v88 = vadd.f32 %v87, %v57
  %v89 = vadd.f32 %v88, %v58
  %v90 = vadd.f32 %v89, %v59
  %v91 = vadd.f32 %v90, %v60
  %v92 = vadd.f32 %v91, %v61
  %v93 = vadd.f32 %v92, %v62
  %v94 = vadd.f32 %v93, %v63
  %v95 = vadd.f32 %v94, %v64
  %v96 = vadd.f32 %v95, %v65
  %v97 = vadd.f32 %v96, %v66
  %v98 = vadd.f32 %v97, %v67
  %v99 = vadd.f32 %v98, %v68
  %v100 = vadd.f32 %v99, %v69
  %v101 = vadd.f32 %v100, %v70
  %v102 = vadd.f32 %v101, %v71
  %v103 = vadd.f32 %v102, %v72
  %v104 = vadd.f32 %v103, %v73
  %v105 = vadd.f32 %v104, %v74
  %v106 = vadd.f32 %v105, %v75
  %v107 = vadd.f32 %v106, %v76
  %v108 = vadd.f32 %v107, %v77
  %v109 = vrot.slane %v108, 4
  %v110 = vadd.f32 %v108, %v109
  %v111 = vrot.slane %v110, 2
  %v112 = vadd.f32 %v110, %v111
  %v113 = vrot.slane %v112, 1
  %v114 = vadd.f32 %v112, %v113
  %v115 = vmul.f32 %v46, %v46
  %v116 = vmul.f32 %v47, %v47
  %v117 = vmul.f32 %v48, %v48
  %v118 = vmul.f32 %v49, %v49
  %v119 = vmul.f32 %v50, %v50
  %v120 = vmul.f32 %v51, %v51
  %v121 = vmul.f32 %v52, %v52
  %v122 = vmul.f32 %v53, %v53
  %v123 = vmul.f32 %v54, %v54
  %v124 = vmul.f32 %v55, %v55
  %v125 = vmul.f32 %v56, %v56
  %v126 = vmul.f32 %v57, %v57
  %v127 = vmul.f32 %v58, %v58
  %v128 = vmul.f32 %v59, %v59
  %v129 = vmul.f32 %v60, %v60
  %v130 = vmul.f32 %v61, %v61
  %v131 = vmul.f32 %v62, %v62
  %v132 = vmul.f32 %v63, %v63
  %v133 = vmul.f32 %v64, %v64
  %v134 = vmul.f32 %v65, %v65
  %v135 = vmul.f32 %v66, %v66
  %v136 = vmul.f32 %v67, %v67
  %v137 = vmul.f32 %v68, %v68
  %v138 = vmul.f32 %v69, %v69
  %v139 = vmul.f32 %v70, %v70
  %v140 = vmul.f32 %v71, %v71
  %v141 = vmul.f32 %v72, %v72
  %v142 = vmul.f32 %v73, %v73
  %v143 = vmul.f32 %v74, %v74
  %v144 = vmul.f32 %v75, %v75
  %v145 = vmul.f32 %v76, %v76
  %v146 = vmul.f32 %v77, %v77
  %v147 = vadd.f32 %v115, %v116
  %v148 = vadd.f32 %v147, %v117
  %v149 = vadd.f32 %v148, %v118
  %v150 = vadd.f32 %v149, %v119
  %v151 = vadd.f32 %v150, %v120
  %v152 = vadd.f32 %v151, %v121
  %v153 = vadd.f32 %v152, %v122
  %v154 = vadd.f32 %v153, %v123
  %v155 = vadd.f32 %v154, %v124
  %v156 = vadd.f32 %v155, %v125
  %v157 = vadd.f32 %v156, %v126
  %v158 = vadd.f32 %v157, %v127
  %v159 = vadd.f32 %v158, %v128
  %v160 = vadd.f32 %v159, %v129
  %v161 = vadd.f32 %v160, %v130
  %v162 = vadd.f32 %v161, %v131
  %v163 = vadd.f32 %v162, %v132
  %v164 = vadd.f32 %v163, %v133
  %v165 = vadd.f32 %v164, %v134
  %v166 = vadd.f32 %v165, %v135
  %v167 = vadd.f32 %v166, %v136
  %v168 = vadd.f32 %v167, %v137
  %v169 = vadd.f32 %v168, %v138
  %v170 = vadd.f32 %v169, %v139
  %v171 = vadd.f32 %v170, %v140
  %v172 = vadd.f32 %v171, %v141
  %v173 = vadd.f32 %v172, %v142
  %v174 = vadd.f32 %v173, %v143
  %v175 = vadd.f32 %v174, %v144
  %v176 = vadd.f32 %v175, %v145
  %v177 = vadd.f32 %v176, %v146
  %v178 = vrot.slane %v177, 4
  %v179 = vadd.f32 %v177, %v178
  %v180 = vrot.slane %v179, 2
  %v181 = vadd.f32 %v179, %v180
  %v182 = vrot.slane %v181, 1
  %v183 = vadd.f32 %v181, %v182
  %v184 = vmul.f32 %v114, 0.00390625
  %v185 = vmul.f32 %v183, 0.00390625
  %v186 = vmul.f32 %v184, %v184
  %v187 = vsub.f32 %v185, %v186
  %v188 = vsub.f32 %v46, %v184
  %v189 = vsub.f32 %v47, %v184
  %v190 = vsub.f32 %v48, %v184
  %v191 = vsub.f32 %v49, %v184
  %v192 = vsub.f32 %v50, %v184
  %v193 = vsub.f32 %v51, %v184
  %v194 = vsub.f32 %v52, %v184
  %v195 = vsub.f32 %v53, %v184
  %v196 = vsub.f32 %v54, %v184
  %v197 = vsub.f32 %v55, %v184
  %v198 = vsub.f32 %v56, %v184
  %v199 = vsub.f32 %v57, %v184
  %v200 = vsub.f32 %v58, %v184
  %v201 = vsub.f32 %v59, %v184
  %v202 = vsub.f32 %v60, %v184
  %v203 = vsub.f32 %v61, %v184
  %v204 = vsub.f32 %v62, %v184
  %v205 = vsub.f32 %v63, %v184
  %v206 = vsub.f32 %v64, %v184
  %v207 = vsub.f32 %v65, %v184
  %v208 = vsub.f32 %v66, %v184
  %v209 = vsub.f32 %v67, %v184
  %v210 = vsub.f32 %v68, %v184
  %v211 = vsub.f32 %v69, %v184
  %v212 = vsub.f32 %v70, %v184
  %v213 = vsub.f32 %v71, %v184
  %v214 = vsub.f32 %v72, %v184
  %v215 = vsub.f32 %v73, %v184
  %v216 = vsub.f32 %v74, %v184
  %v217 = vsub.f32 %v75, %v184
  %v218 = vsub.f32 %v76, %v184
  %v219 = vsub.f32 %v77, %v184
  %v220 = vadd.f32 %v187, 1e-05
  %v221 = vrsqrt.pop %v220
  %v222 = vmul.f32 %v188, %v221
  %v223 = vmul.f32 %v189, %v221
  %v224 = vmul.f32 %v190, %v221
  %v225 = vmul.f32 %v191, %v221
  %v226 = vmul.f32 %v192, %v221
  %v227 = vmul.f32 %v193, %v221
  %v228 = vmul.f32 %v194, %v221
  %v229 = vmul.f32 %v195, %v221
  %v230 = vmul.f32 %v196, %v221
  %v231 = vmul.f32 %v197, %v221
  %v232 = vmul.f32 %v198, %v221
  %v233 = vmul.f32 %v199, %v221
  %v234 = vmul.f32 %v200, %v221
  %v235 = vmul.f32 %v201, %v221
  %v236 = vmul.f32 %v202, %v221
  %v237 = vmul.f32 %v203, %v221
  %v238 = vmul.f32 %v204, %v221
  %v239 = vmul.f32 %v205, %v221
  %v240 = vmul.f32 %v206, %v221
  %v241 = vmul.f32 %v207, %v221
  %v242 = vmul.f32 %v208, %v221
  %v243 = vmul.f32 %v209, %v221
  %v244 = vmul.f32 %v210, %v221
  %v245 = vmul.f32 %v211, %v221
  %v246 = vmul.f32 %v212, %v221
  %v247 = vmul.f32 %v213, %v221
  %v248 = vmul.f32 %v214, %v221
  %v249 = vmul.f32 %v215, %v221
  %v250 = vmul.f32 %v216, %v221
  %v251 = vmul.f32 %v217, %v221
  %v252 = vmul.f32 %v218, %v221
  %v253 = vmul.f32 %v219, %v221
  %v254 = vld [vmem:[%s1] sm:$0x1]
  %v256 = vlaneseq
  %v257 = vshrl.u32 %v256, 7
  %v258 = vsub.s32 0, %v257
  %v259 = vrot.slane %v254, %v258
  %v261 = vmul.f32 %v222, %v259
  %v262 = vmul.f32 %v223, %v259
  %v263 = vmul.f32 %v224, %v259
  %v264 = vmul.f32 %v225, %v259
  %v265 = vmul.f32 %v226, %v259
  %v266 = vmul.f32 %v227, %v259
  %v267 = vmul.f32 %v228, %v259
  %v268 = vmul.f32 %v229, %v259
  %v269 = vmul.f32 %v230, %v259
  %v270 = vmul.f32 %v231, %v259
  %v271 = vmul.f32 %v232, %v259
  %v272 = vmul.f32 %v233, %v259
  %v273 = vmul.f32 %v234, %v259
  %v274 = vmul.f32 %v235, %v259
  %v275 = vmul.f32 %v236, %v259
  %v276 = vmul.f32 %v237, %v259
  %v277 = vmul.f32 %v238, %v259
  %v278 = vmul.f32 %v239, %v259
  %v279 = vmul.f32 %v240, %v259
  %v280 = vmul.f32 %v241, %v259
  %v281 = vmul.f32 %v242, %v259
  %v282 = vmul.f32 %v243, %v259
  %v283 = vmul.f32 %v244, %v259
  %v284 = vmul.f32 %v245, %v259
  %v285 = vmul.f32 %v246, %v259
  %v286 = vmul.f32 %v247, %v259
  %v287 = vmul.f32 %v248, %v259
  %v288 = vmul.f32 %v249, %v259
  %v289 = vmul.f32 %v250, %v259
  %v290 = vmul.f32 %v251, %v259
  %v291 = vmul.f32 %v252, %v259
  %v292 = vmul.f32 %v253, %v259
  %v293 = vld [vmem:[%s2] sm:$0x1]
  %v295 = vlaneseq
  %v296 = vshrl.u32 %v295, 7
  %v297 = vsub.s32 0, %v296
  %v298 = vrot.slane %v293, %v297
  %v300 = vadd.f32 %v261, %v298
  %v301 = vadd.f32 %v262, %v298
  %v302 = vadd.f32 %v263, %v298
  %v303 = vadd.f32 %v264, %v298
  %v304 = vadd.f32 %v265, %v298
  %v305 = vadd.f32 %v266, %v298
  %v306 = vadd.f32 %v267, %v298
  %v307 = vadd.f32 %v268, %v298
  %v308 = vadd.f32 %v269, %v298
  %v309 = vadd.f32 %v270, %v298
  %v310 = vadd.f32 %v271, %v298
  %v311 = vadd.f32 %v272, %v298
  %v312 = vadd.f32 %v273, %v298
  %v313 = vadd.f32 %v274, %v298
  %v314 = vadd.f32 %v275, %v298
  %v315 = vadd.f32 %v276, %v298
  %v316 = vadd.f32 %v277, %v298
  %v317 = vadd.f32 %v278, %v298
  %v318 = vadd.f32 %v279, %v298
  %v319 = vadd.f32 %v280, %v298
  %v320 = vadd.f32 %v281, %v298
  %v321 = vadd.f32 %v282, %v298
  %v322 = vadd.f32 %v283, %v298
  %v323 = vadd.f32 %v284, %v298
  %v324 = vadd.f32 %v285, %v298
  %v325 = vadd.f32 %v286, %v298
  %v326 = vadd.f32 %v287, %v298
  %v327 = vadd.f32 %v288, %v298
  %v328 = vadd.f32 %v289, %v298
  %v329 = vadd.f32 %v290, %v298
  %v330 = vadd.f32 %v291, %v298
  %v331 = vadd.f32 %v292, %v298
  %vm332 = vcmp.ge.f32.partialorder %v300, 0.0
  %vm333 = vcmp.ge.f32.partialorder %v301, 0.0
  %vm334 = vcmp.ge.f32.partialorder %v302, 0.0
  %vm335 = vcmp.ge.f32.partialorder %v303, 0.0
  %vm336 = vcmp.ge.f32.partialorder %v304, 0.0
  %vm337 = vcmp.ge.f32.partialorder %v305, 0.0
  %vm338 = vcmp.ge.f32.partialorder %v306, 0.0
  %vm339 = vcmp.ge.f32.partialorder %v307, 0.0
  %vm340 = vcmp.ge.f32.partialorder %v308, 0.0
  %vm341 = vcmp.ge.f32.partialorder %v309, 0.0
  %vm342 = vcmp.ge.f32.partialorder %v310, 0.0
  %vm343 = vcmp.ge.f32.partialorder %v311, 0.0
  %vm344 = vcmp.ge.f32.partialorder %v312, 0.0
  %vm345 = vcmp.ge.f32.partialorder %v313, 0.0
  %vm346 = vcmp.ge.f32.partialorder %v314, 0.0
  %vm347 = vcmp.ge.f32.partialorder %v315, 0.0
  %vm348 = vcmp.ge.f32.partialorder %v316, 0.0
  %vm349 = vcmp.ge.f32.partialorder %v317, 0.0
  %vm350 = vcmp.ge.f32.partialorder %v318, 0.0
  %vm351 = vcmp.ge.f32.partialorder %v319, 0.0
  %vm352 = vcmp.ge.f32.partialorder %v320, 0.0
  %vm353 = vcmp.ge.f32.partialorder %v321, 0.0
  %vm354 = vcmp.ge.f32.partialorder %v322, 0.0
  %vm355 = vcmp.ge.f32.partialorder %v323, 0.0
  %vm356 = vcmp.ge.f32.partialorder %v324, 0.0
  %vm357 = vcmp.ge.f32.partialorder %v325, 0.0
  %vm358 = vcmp.ge.f32.partialorder %v326, 0.0
  %vm359 = vcmp.ge.f32.partialorder %v327, 0.0
  %vm360 = vcmp.ge.f32.partialorder %v328, 0.0
  %vm361 = vcmp.ge.f32.partialorder %v329, 0.0
  %vm362 = vcmp.ge.f32.partialorder %v330, 0.0
  %vm363 = vcmp.ge.f32.partialorder %v331, 0.0
  %v364 = vmul.f32 %v300, 0.2
  %v365 = vmul.f32 %v301, 0.2
  %v366 = vmul.f32 %v302, 0.2
  %v367 = vmul.f32 %v303, 0.2
  %v368 = vmul.f32 %v304, 0.2
  %v369 = vmul.f32 %v305, 0.2
  %v370 = vmul.f32 %v306, 0.2
  %v371 = vmul.f32 %v307, 0.2
  %v372 = vmul.f32 %v308, 0.2
  %v373 = vmul.f32 %v309, 0.2
  %v374 = vmul.f32 %v310, 0.2
  %v375 = vmul.f32 %v311, 0.2
  %v376 = vmul.f32 %v312, 0.2
  %v377 = vmul.f32 %v313, 0.2
  %v378 = vmul.f32 %v314, 0.2
  %v379 = vmul.f32 %v315, 0.2
  %v380 = vmul.f32 %v316, 0.2
  %v381 = vmul.f32 %v317, 0.2
  %v382 = vmul.f32 %v318, 0.2
  %v383 = vmul.f32 %v319, 0.2
  %v384 = vmul.f32 %v320, 0.2
  %v385 = vmul.f32 %v321, 0.2
  %v386 = vmul.f32 %v322, 0.2
  %v387 = vmul.f32 %v323, 0.2
  %v388 = vmul.f32 %v324, 0.2
  %v389 = vmul.f32 %v325, 0.2
  %v390 = vmul.f32 %v326, 0.2
  %v391 = vmul.f32 %v327, 0.2
  %v392 = vmul.f32 %v328, 0.2
  %v393 = vmul.f32 %v329, 0.2
  %v394 = vmul.f32 %v330, 0.2
  %v395 = vmul.f32 %v331, 0.2
  %v396 = vsel %vm332, %v300, %v364
  %v397 = vsel %vm333, %v301, %v365
  %v398 = vsel %vm334, %v302, %v366
  %v399 = vsel %vm335, %v303, %v367
  %v400 = vsel %vm336, %v304, %v368
  %v401 = vsel %vm337, %v305, %v369
  %v402 = vsel %vm338, %v306, %v370
  %v403 = vsel %vm339, %v307, %v371
  %v404 = vsel %vm340, %v308, %v372
  %v405 = vsel %vm341, %v309, %v373
  %v406 = vsel %vm342, %v310, %v374
  %v407 = vsel %vm343, %v311, %v375
  %v408 = vsel %vm344, %v312, %v376
  %v409 = vsel %vm345, %v313, %v377
  %v410 = vsel %vm346, %v314, %v378
  %v411 = vsel %vm347, %v315, %v379
  %v412 = vsel %vm348, %v316, %v380
  %v413 = vsel %vm349, %v317, %v381
  %v414 = vsel %vm350, %v318, %v382
  %v415 = vsel %vm351, %v319, %v383
  %v416 = vsel %vm352, %v320, %v384
  %v417 = vsel %vm353, %v321, %v385
  %v418 = vsel %vm354, %v322, %v386
  %v419 = vsel %vm355, %v323, %v387
  %v420 = vsel %vm356, %v324, %v388
  %v421 = vsel %vm357, %v325, %v389
  %v422 = vsel %vm358, %v326, %v390
  %v423 = vsel %vm359, %v327, %v391
  %v424 = vsel %vm360, %v328, %v392
  %v425 = vsel %vm361, %v329, %v393
  %v426 = vsel %vm362, %v330, %v394
  %v427 = vsel %vm363, %v331, %v395
  %v428 = vpack.c.bf16 %v397, %v396
  %v429 = vpack.c.bf16 %v399, %v398
  %v430 = vpack.c.bf16 %v401, %v400
  %v431 = vpack.c.bf16 %v403, %v402
  %v432 = vpack.c.bf16 %v405, %v404
  %v433 = vpack.c.bf16 %v407, %v406
  %v434 = vpack.c.bf16 %v409, %v408
  %v435 = vpack.c.bf16 %v411, %v410
  %v436 = vpack.c.bf16 %v413, %v412
  %v437 = vpack.c.bf16 %v415, %v414
  %v438 = vpack.c.bf16 %v417, %v416
  %v439 = vpack.c.bf16 %v419, %v418
  %v440 = vpack.c.bf16 %v421, %v420
  %v441 = vpack.c.bf16 %v423, %v422
  %v442 = vpack.c.bf16 %v425, %v424
  %v443 = vpack.c.bf16 %v427, %v426
  %v460 = vunpack.c.l.b16 %v428
  %v461 = vunpack.c.h.b16 %v428
  %v462 = vunpack.c.l.b16 %v429
  %v463 = vunpack.c.h.b16 %v429
  %v464 = vunpack.c.l.b16 %v430
  %v465 = vunpack.c.h.b16 %v430
  %v466 = vunpack.c.l.b16 %v431
  %v467 = vunpack.c.h.b16 %v431
  %v468 = vunpack.c.l.b16 %v432
  %v469 = vunpack.c.h.b16 %v432
  %v470 = vunpack.c.l.b16 %v433
  %v471 = vunpack.c.h.b16 %v433
  %v472 = vunpack.c.l.b16 %v434
  %v473 = vunpack.c.h.b16 %v434
  %v474 = vunpack.c.l.b16 %v435
  %v475 = vunpack.c.h.b16 %v435
  %v476 = vunpack.c.l.b16 %v436
  %v477 = vunpack.c.h.b16 %v436
  %v478 = vunpack.c.l.b16 %v437
  %v479 = vunpack.c.h.b16 %v437
  %v480 = vunpack.c.l.b16 %v438
  %v481 = vunpack.c.h.b16 %v438
  %v482 = vunpack.c.l.b16 %v439
  %v483 = vunpack.c.h.b16 %v439
  %v484 = vunpack.c.l.b16 %v440
  %v485 = vunpack.c.h.b16 %v440
  %v486 = vunpack.c.l.b16 %v441
  %v487 = vunpack.c.h.b16 %v441
  %v488 = vunpack.c.l.b16 %v442
  %v489 = vunpack.c.h.b16 %v442
  %v490 = vunpack.c.l.b16 %v443
  %v491 = vunpack.c.h.b16 %v443
  %v492 = vpack.c.b16 %v460, %v460
  %v493 = vpack.c.b16 %v461, %v461
  %v494 = vpack.c.b16 %v462, %v462
  %v495 = vpack.c.b16 %v463, %v463
  %v496 = vpack.c.b16 %v464, %v464
  %v497 = vpack.c.b16 %v465, %v465
  %v498 = vpack.c.b16 %v466, %v466
  %v499 = vpack.c.b16 %v467, %v467
  %v500 = vpack.c.b16 %v468, %v468
  %v501 = vpack.c.b16 %v469, %v469
  %v502 = vpack.c.b16 %v470, %v470
  %v503 = vpack.c.b16 %v471, %v471
  %v504 = vpack.c.b16 %v472, %v472
  %v505 = vpack.c.b16 %v473, %v473
  %v506 = vpack.c.b16 %v474, %v474
  %v507 = vpack.c.b16 %v475, %v475
  %v508 = vpack.c.b16 %v476, %v476
  %v509 = vpack.c.b16 %v477, %v477
  %v510 = vpack.c.b16 %v478, %v478
  %v511 = vpack.c.b16 %v479, %v479
  %v512 = vpack.c.b16 %v480, %v480
  %v513 = vpack.c.b16 %v481, %v481
  %v514 = vpack.c.b16 %v482, %v482
  %v515 = vpack.c.b16 %v483, %v483
  %v516 = vpack.c.b16 %v484, %v484
  %v517 = vpack.c.b16 %v485, %v485
  %v518 = vpack.c.b16 %v486, %v486
  %v519 = vpack.c.b16 %v487, %v487
  %v520 = vpack.c.b16 %v488, %v488
  %v521 = vpack.c.b16 %v489, %v489
  %v522 = vpack.c.b16 %v490, %v490
  %v523 = vpack.c.b16 %v491, %v491
  %556 = vst [vmem:[%s3] sm:$0xf] %v492
  %557 = vst [vmem:[%s3 + $0x4] sm:$0xf] %v493
  %558 = vst [vmem:[%s3 + $0x8] sm:$0xf] %v494
  %559 = vst [vmem:[%s3 + $0xc] sm:$0xf] %v495
  %560 = vst [vmem:[%s3 + $0x10] sm:$0xf] %v496
  %561 = vst [vmem:[%s3 + $0x14] sm:$0xf] %v497
  %562 = vst [vmem:[%s3 + $0x18] sm:$0xf] %v498
  %563 = vst [vmem:[%s3 + $0x1c] sm:$0xf] %v499
  %564 = vst [vmem:[%s3 + $0x20] sm:$0xf] %v500
  %565 = vst [vmem:[%s3 + $0x24] sm:$0xf] %v501
  %566 = vst [vmem:[%s3 + $0x28] sm:$0xf] %v502
  %567 = vst [vmem:[%s3 + $0x2c] sm:$0xf] %v503
  %568 = vst [vmem:[%s3 + $0x30] sm:$0xf] %v504
  %569 = vst [vmem:[%s3 + $0x34] sm:$0xf] %v505
  %570 = vst [vmem:[%s3 + $0x38] sm:$0xf] %v506
  %571 = vst [vmem:[%s3 + $0x3c] sm:$0xf] %v507
  %572 = vst [vmem:[%s3 + $0x40] sm:$0xf] %v508
  %573 = vst [vmem:[%s3 + $0x44] sm:$0xf] %v509
  %574 = vst [vmem:[%s3 + $0x48] sm:$0xf] %v510
  %575 = vst [vmem:[%s3 + $0x4c] sm:$0xf] %v511
  %576 = vst [vmem:[%s3 + $0x50] sm:$0xf] %v512
  %577 = vst [vmem:[%s3 + $0x54] sm:$0xf] %v513
  %578 = vst [vmem:[%s3 + $0x58] sm:$0xf] %v514
  %579 = vst [vmem:[%s3 + $0x5c] sm:$0xf] %v515
  %580 = vst [vmem:[%s3 + $0x60] sm:$0xf] %v516
  %581 = vst [vmem:[%s3 + $0x64] sm:$0xf] %v517
  %582 = vst [vmem:[%s3 + $0x68] sm:$0xf] %v518
  %583 = vst [vmem:[%s3 + $0x6c] sm:$0xf] %v519
  %584 = vst [vmem:[%s3 + $0x70] sm:$0xf] %v520
  %585 = vst [vmem:[%s3 + $0x74] sm:$0xf] %v521
  %586 = vst [vmem:[%s3 + $0x78] sm:$0xf] %v522
  %587 = vst [vmem:[%s3 + $0x7c] sm:$0xf] %v523
  // Predicated region
  $region14: #{main_model_step.13} parent=0 // pred_check
    _
  $region15: #{main_model_step.13} parent=0 // pred_check_branch
    %589 = sbr.rel (0) target = $region17
  $region16: #{main_model_step.13} parent=0 // pred_region
    _
  $region17: #{main_model_step.13} parent=0 // pred_fallthru
    _
  // Predicated region
  $region18: #{main_model_step.13} parent=0 // pred_check
    _
  $region19: #{main_model_step.13} parent=0 // pred_check_branch
    %591 = sbr.rel (0) target = $region21
  $region20: #{main_model_step.13} parent=0 // pred_region
    _
  $region21: #{main_model_step.13} parent=0 // pred_fallthru
    _

// kernel: main_model_step.12
$region0: #{main_model_step.12}
  #allocation0 [shape = 'u32[]', space=smem, size = 0x4, offset = 0x4, fixed_abs, tag = 'smem constant byte address 0x4 - core index']
  #allocation1 [shape = 'u32[144,128]{1,0:T(1,128)}', space=vmem, size = 0x12000, scoped, tag = 'internal scratch']
  #allocation2 [shape = 'f32[256,128]{1,0:T(8,128)}', space=vmem, size = 0x20000, scoped, tag = 'scratch operand']
  %s0 = inlined_call_operand.vmem [shape: bf16[256,1024], index: 0, kind: input, shape index: {}]
  %s1 = inlined_call_operand.vmem [shape: bf16[1024,128], index: 1, kind: input, shape index: {}]
  %s2 = inlined_call_operand.vmem [shape: f32[1,128], index: 2, kind: input, shape index: {}]
  %s3 = inlined_call_operand.vmem [shape: bf16[256,128], index: 3, kind: output, shape index: {}]
  %s4 = sld [smem:[#allocation0]]
  $region76: #{main_model_step.12} parent=0
    _
  %s6 = ssub.s32 1, %s4
  %s7 = scalar_select 0, %s6, %s4
  $region1: #{main_model_step.12} parent=0
    #allocation3 [shape = 'u8[524288]{0}', space=vmem, size = 0x80000, scoped, tag = 'input window, operand 0']
    loop: start=0, step=1, limit=4
    $region2: #{main_model_step.12} parent=1 // loop_pre_header
      _
    $region3: #{main_model_step.12} parent=1 // loop_header
      %s9 = sphi 0, %s13
      %p10 = scmp.ge.s32.totalorder %s9, 4
      %s16 = sphi 0, %s35
      %s17 = sphi 0, %s31
      %s18 = sphi 0, %s27
      %s19 = sphi 0, %s16
      %s20 = sphi 0, %s17
      %s21 = sphi 0, %s18
      %s22 = sphi 0, %s19
      %s23 = sphi 0, %s20
      %s24 = sphi 0, %s21
      %s40 = sphi 0, %s42
      %s43 = sphi 0, %s40
      %s44 = sphi 0, %s43
      %s60 = sphi 0, %s44
      %s68 = sphi 0, %s70
      %s71 = sphi 0, %s68
      %s72 = sphi 0, %s71
      %s88 = sphi 0, %s72
      %s94 = sphi 0, %s96
      %s97 = sphi 0, %s94
      %s98 = sphi 0, %s97
      %s114 = sphi 0, %s98
      %s122 = sphi 0, %s124
      %s125 = sphi 0, %s122
      %s126 = sphi 0, %s125
      %s142 = sphi 0, %s126
    $region4: #{main_model_step.12} parent=1 // loop_header_branch
      %12 = sbr.rel (%p10) target = $region8
    $region5: #{main_model_step.12} parent=1 // loop_body
      %s14 = ssub.s32 %s9, 1
      %s15 = ssub.s32 %s9, 2
      %s25 = sadd.s32 1, %s18
      %p26 = scmp.ge.s32.totalorder %s25, 2
      %s27 = scalar_select %p26, 0, %s25
      %s28 = sadd.s32 1, %s17
      %s29 = scalar_select %p26, %s28, %s17
      %p30 = scmp.ge.s32.totalorder %s29, 1
      %s31 = scalar_select %p30, 0, %s29
      %s32 = sadd.s32 1, %s16
      %s33 = scalar_select %p30, %s32, %s16
      %p34 = scmp.ge.s32.totalorder %s33, 1
      %s35 = scalar_select %p34, 0, %s33
      %s36 = ssub.s32 %s16, %s35
      %s37 = ssub.s32 %s18, %s27
      %s38 = sor.u32 %s36, %s37
      %p39 = scmp.eq.s32.totalorder %s38, 0
      %s41 = sadd.s32 %s40, 1
      %s42 = scalar_select %p39, %s40, %s41
      %p45 = pneg %p39
      %p46 = scmp.eq.s32.totalorder %s9, 1
      %p47 = por %p45, %p46
      %p48 = scmp.ne.s32.totalorder %s40, %s43
      %p49 = scmp.eq.s32.totalorder %s9, 0
      %p50 = por %p48, %p49
      %p51 = scmp.ne.s32.totalorder %s40, %s43
      %p52 = scmp.eq.s32.totalorder %s14, 1
      %p53 = por %p51, %p52
      %p54 = scmp.ne.s32.totalorder %s43, %s44
      %p55 = scmp.eq.s32.totalorder %s14, 0
      %p56 = por %p54, %p55
      %p57 = scmp.ne.s32.totalorder %s43, %s44
      %p58 = scmp.eq.s32.totalorder %s15, 1
      %p59 = por %p57, %p58
      %p61 = scmp.ne.s32.totalorder %s44, %s60
      %p62 = scmp.eq.s32.totalorder %s15, 0
      %p63 = por %p61, %p62
      %s64 = ssub.s32 %s18, %s27
      %s65 = ssub.s32 %s17, %s31
      %s66 = sor.u32 %s64, %s65
      %p67 = scmp.eq.s32.totalorder %s66, 0
      %s69 = sadd.s32 %s68, 1
      %s70 = scalar_select %p67, %s68, %s69
      %p73 = pneg %p67
      %p74 = scmp.eq.s32.totalorder %s9, 1
      %p75 = por %p73, %p74
      %p76 = scmp.ne.s32.totalorder %s68, %s71
      %p77 = scmp.eq.s32.totalorder %s9, 0
      %p78 = por %p76, %p77
      %p79 = scmp.ne.s32.totalorder %s68, %s71
      %p80 = scmp.eq.s32.totalorder %s14, 1
      %p81 = por %p79, %p80
      %p82 = scmp.ne.s32.totalorder %s71, %s72
      %p83 = scmp.eq.s32.totalorder %s14, 0
      %p84 = por %p82, %p83
      %p85 = scmp.ne.s32.totalorder %s71, %s72
      %p86 = scmp.eq.s32.totalorder %s15, 1
      %p87 = por %p85, %p86
      %p89 = scmp.ne.s32.totalorder %s72, %s88
      %p90 = scmp.eq.s32.totalorder %s15, 0
      %p91 = por %p89, %p90
      %s92 = ssub.s32 %s17, %s31
      %p93 = scmp.eq.s32.totalorder %s92, 0
      %s95 = sadd.s32 %s94, 1
      %s96 = scalar_select %p93, %s94, %s95
      %p99 = pneg %p93
      %p100 = scmp.eq.s32.totalorder %s9, 1
      %p101 = por %p99, %p100
      %p102 = scmp.ne.s32.totalorder %s94, %s97
      %p103 = scmp.eq.s32.totalorder %s9, 0
      %p104 = por %p102, %p103
      %p105 = scmp.ne.s32.totalorder %s94, %s97
      %p106 = scmp.eq.s32.totalorder %s14, 1
      %p107 = por %p105, %p106
      %p108 = scmp.ne.s32.totalorder %s97, %s98
      %p109 = scmp.eq.s32.totalorder %s14, 0
      %p110 = por %p108, %p109
      %p111 = scmp.ne.s32.totalorder %s97, %s98
      %p112 = scmp.eq.s32.totalorder %s15, 1
      %p113 = por %p111, %p112
      %p115 = scmp.ne.s32.totalorder %s98, %s114
      %p116 = scmp.eq.s32.totalorder %s15, 0
      %p117 = por %p115, %p116
      %s118 = ssub.s32 %s16, %s35
      %s119 = ssub.s32 %s17, %s31
      %s120 = sor.u32 %s118, %s119
      %p121 = scmp.eq.s32.totalorder %s120, 0
      %s123 = sadd.s32 %s122, 1
      %s124 = scalar_select %p121, %s122, %s123
      %p127 = pneg %p121
      %p128 = scmp.eq.s32.totalorder %s9, 1
      %p129 = por %p127, %p128
      %p130 = scmp.ne.s32.totalorder %s122, %s125
      %p131 = scmp.eq.s32.totalorder %s9, 0
      %p132 = por %p130, %p131
      %p133 = scmp.ne.s32.totalorder %s122, %s125
      %p134 = scmp.eq.s32.totalorder %s14, 1
      %p135 = por %p133, %p134
      %p136 = scmp.ne.s32.totalorder %s125, %s126
      %p137 = scmp.eq.s32.totalorder %s14, 0
      %p138 = por %p136, %p137
      %p139 = scmp.ne.s32.totalorder %s125, %s126
      %p140 = scmp.eq.s32.totalorder %s15, 1
      %p141 = por %p139, %p140
      %p143 = scmp.ne.s32.totalorder %s126, %s142
      %p144 = scmp.eq.s32.totalorder %s15, 0
      %p145 = por %p143, %p144
      %p146 = scmp.le.s32.totalorder 1, %s9
      %p147 = scmp.lt.s32.totalorder %s9, 3
      %p148 = pnand %p146, %p147
      %p149 = pneg %p148
      // Predicated region
      $region9: #{main_model_step.12} parent=5 // pred_check
        _
      $region10: #{main_model_step.12} parent=5 // pred_check_branch
        %151 = sbr.rel (%p148) target = $region12
      $region11: #{main_model_step.12} parent=5 // pred_region
        %s152 = ssub.s32 %s9, 1
        // Predicated region
        $region13: #{main_model_step.12} parent=11 // pred_check
          %p153 = pneg %p110
        $region14: #{main_model_step.12} parent=11 // pred_check_branch
          %155 = sbr.rel (%p153) target = $region16
        $region15: #{main_model_step.12} parent=11 // pred_region
          %p156 = scmp.lt.s32.totalorder %s20, 0
          %s157 = scalar_select %p156, %s20, 0
          %s158 = scalar_lea.vmem %s2, %s157
        $region16: #{main_model_step.12} parent=11 // pred_fallthru
          _
      $region12: #{main_model_step.12} parent=5 // pred_fallthru
        _
      %p159 = scmp.lt.s32.totalorder %s9, 2
      // Predicated region
      $region17: #{main_model_step.12} parent=5 // pred_check
        %p160 = pneg %p159
      $region18: #{main_model_step.12} parent=5 // pred_check_branch
        %162 = sbr.rel (%p160) target = $region20
      $region19: #{main_model_step.12} parent=5 // pred_region
        // Predicated region
        $region21: #{main_model_step.12} parent=19 // pred_check
          %p163 = pneg %p50
        $region22: #{main_model_step.12} parent=19 // pred_check_branch
          %165 = sbr.rel (%p163) target = $region24
        $region23: #{main_model_step.12} parent=19 // pred_region
          %s166 = sand.u32 %s40, 1
          %s167 = sand.u32 %s40, 1
          %s168 = smul.addr %s167, 512
          %s169 = scalar_lea.vmem [#allocation3], %s168
          %s170 = smul.u32 32, %s16
          %s171 = smul.u32 4, %s18
          %s172 = smul.addr %s170, 8
          %s173 = sadd.s32 %s171, %s172
          %s174 = smul.addr %s173, 4
          %s175 = scalar_lea.vmem %s0, %s174
          // Predicated region
          $region25: #{main_model_step.12} parent=23 // pred_check
            _
          $region26: #{main_model_step.12} parent=23 // pred_check_branch
            %177 = sbr.rel (0) target = $region28
          $region27: #{main_model_step.12} parent=23 // pred_region
            // Predicated region
            $region29: #{main_model_step.12} parent=27 // pred_check
              _
            $region30: #{main_model_step.12} parent=27 // pred_check_branch
              %179 = sbr.rel (0) target = $region32
            $region31: #{main_model_step.12} parent=27 // pred_region
              loop: start=0, step=1, limit=1
              $region33: #{main_model_step.12} parent=31 // loop_pre_header
                _
              $region34: #{main_model_step.12} parent=31 // loop_header
                %s181 = sphi 0, %s185
                %p182 = scmp.ge.s32.totalorder %s181, 1
                %s186 = sphi %s175, %s175
                %s187 = sphi %s169, %s169
              $region35: #{main_model_step.12} parent=31 // loop_header_branch
                %184 = sbr.rel (%p182) target = $region39
              $region36: #{main_model_step.12} parent=31 // loop_body
                %v188 = vld [vmem:[%s186] sm:$0xff]
                %189 = vst [vmem:[%s187] sm:$0xff] %v188
                %v190 = vld [vmem:[%s186 + $0x8] sm:$0xff]
                %191 = vst [vmem:[%s187 + $0x8] sm:$0xff] %v190
                %v192 = vld [vmem:[%s186 + $0x20] sm:$0xff]
                %193 = vst [vmem:[%s187 + $0x10] sm:$0xff] %v192
                %v194 = vld [vmem:[%s186 + $0x28] sm:$0xff]
                %195 = vst [vmem:[%s187 + $0x18] sm:$0xff] %v194
                %v196 = vld [vmem:[%s186 + $0x40] sm:$0xff]
                %197 = vst [vmem:[%s187 + $0x20] sm:$0xff] %v196
                %v198 = vld [vmem:[%s186 + $0x48] sm:$0xff]
                %199 = vst [vmem:[%s187 + $0x28] sm:$0xff] %v198
                %v200 = vld [vmem:[%s186 + $0x60] sm:$0xff]
                %201 = vst [vmem:[%s187 + $0x30] sm:$0xff] %v200
                %v202 = vld [vmem:[%s186 + $0x68] sm:$0xff]
                %203 = vst [vmem:[%s187 + $0x38] sm:$0xff] %v202
                %v204 = vld [vmem:[%s186 + $0x80] sm:$0xff]
                %205 = vst [vmem:[%s187 + $0x40] sm:$0xff] %v204
                %v206 = vld [vmem:[%s186 + $0x88] sm:$0xff]
                %207 = vst [vmem:[%s187 + $0x48] sm:$0xff] %v206
                %v208 = vld [vmem:[%s186 + $0xa0] sm:$0xff]
                %209 = vst [vmem:[%s187 + $0x50] sm:$0xff] %v208
                %v210 = vld [vmem:[%s186 + $0xa8] sm:$0xff]
                %211 = vst [vmem:[%s187 + $0x58] sm:$0xff] %v210
                %v212 = vld [vmem:[%s186 + $0xc0] sm:$0xff]
                %213 = vst [vmem:[%s187 + $0x60] sm:$0xff] %v212
                %v214 = vld [vmem:[%s186 + $0xc8] sm:$0xff]
                %215 = vst [vmem:[%s187 + $0x68] sm:$0xff] %v214
                %v216 = vld [vmem:[%s186 + $0xe0] sm:$0xff]
                %217 = vst [vmem:[%s187 + $0x70] sm:$0xff] %v216
                %v218 = vld [vmem:[%s186 + $0xe8] sm:$0xff]
                %219 = vst [vmem:[%s187 + $0x78] sm:$0xff] %v218
                %v220 = vld [vmem:[%s186 + $0x100] sm:$0xff]
                %221 = vst [vmem:[%s187 + $0x80] sm:$0xff] %v220
                %v222 = vld [vmem:[%s186 + $0x108] sm:$0xff]
                %223 = vst [vmem:[%s187 + $0x88] sm:$0xff] %v222
                %v224 = vld [vmem:[%s186 + $0x120] sm:$0xff]
                %225 = vst [vmem:[%s187 + $0x90] sm:$0xff] %v224
                %v226 = vld [vmem:[%s186 + $0x128] sm:$0xff]
                %227 = vst [vmem:[%s187 + $0x98] sm:$0xff] %v226
                %v228 = vld [vmem:[%s186 + $0x140] sm:$0xff]
                %229 = vst [vmem:[%s187 + $0xa0] sm:$0xff] %v228
                %v230 = vld [vmem:[%s186 + $0x148] sm:$0xff]
                %231 = vst [vmem:[%s187 + $0xa8] sm:$0xff] %v230
                %v232 = vld [vmem:[%s186 + $0x160] sm:$0xff]
                %233 = vst [vmem:[%s187 + $0xb0] sm:$0xff] %v232
                %v234 = vld [vmem:[%s186 + $0x168] sm:$0xff]
                %235 = vst [vmem:[%s187 + $0xb8] sm:$0xff] %v234
                %v236 = vld [vmem:[%s186 + $0x180] sm:$0xff]
                %237 = vst [vmem:[%s187 + $0xc0] sm:$0xff] %v236
                %v238 = vld [vmem:[%s186 + $0x188] sm:$0xff]
                %239 = vst [vmem:[%s187 + $0xc8] sm:$0xff] %v238
                %v240 = vld [vmem:[%s186 + $0x1a0] sm:$0xff]
                %241 = vst [vmem:[%s187 + $0xd0] sm:$0xff] %v240
                %v242 = vld [vmem:[%s186 + $0x1a8] sm:$0xff]
                %243 = vst [vmem:[%s187 + $0xd8] sm:$0xff] %v242
                %v244 = vld [vmem:[%s186 + $0x1c0] sm:$0xff]
                %245 = vst [vmem:[%s187 + $0xe0] sm:$0xff] %v244
                %v246 = vld [vmem:[%s186 + $0x1c8] sm:$0xff]
                %247 = vst [vmem:[%s187 + $0xe8] sm:$0xff] %v246
                %v248 = vld [vmem:[%s186 + $0x1e0] sm:$0xff]
                %249 = vst [vmem:[%s187 + $0xf0] sm:$0xff] %v248
                %v250 = vld [vmem:[%s186 + $0x1e8] sm:$0xff]
                %251 = vst [vmem:[%s187 + $0xf8] sm:$0xff] %v250
                %v252 = vld [vmem:[%s186 + $0x200] sm:$0xff]
                %253 = vst [vmem:[%s187 + $0x100] sm:$0xff] %v252
                %v254 = vld [vmem:[%s186 + $0x208] sm:$0xff]
                %255 = vst [vmem:[%s187 + $0x108] sm:$0xff] %v254
                %v256 = vld [vmem:[%s186 + $0x220] sm:$0xff]
                %257 = vst [vmem:[%s187 + $0x110] sm:$0xff] %v256
                %v258 = vld [vmem:[%s186 + $0x228] sm:$0xff]
                %259 = vst [vmem:[%s187 + $0x118] sm:$0xff] %v258
                %v260 = vld [vmem:[%s186 + $0x240] sm:$0xff]
                %261 = vst [vmem:[%s187 + $0x120] sm:$0xff] %v260
                %v262 = vld [vmem:[%s186 + $0x248] sm:$0xff]
                %263 = vst [vmem:[%s187 + $0x128] sm:$0xff] %v262
                %v264 = vld [vmem:[%s186 + $0x260] sm:$0xff]
                %265 = vst [vmem:[%s187 + $0x130] sm:$0xff] %v264
                %v266 = vld [vmem:[%s186 + $0x268] sm:$0xff]
                %267 = vst [vmem:[%s187 + $0x138] sm:$0xff] %v266
                %v268 = vld [vmem:[%s186 + $0x280] sm:$0xff]
                %269 = vst [vmem:[%s187 + $0x140] sm:$0xff] %v268
                %v270 = vld [vmem:[%s186 + $0x288] sm:$0xff]
                %271 = vst [vmem:[%s187 + $0x148] sm:$0xff] %v270
                %v272 = vld [vmem:[%s186 + $0x2a0] sm:$0xff]
                %273 = vst [vmem:[%s187 + $0x150] sm:$0xff] %v272
                %v274 = vld [vmem:[%s186 + $0x2a8] sm:$0xff]
                %275 = vst [vmem:[%s187 + $0x158] sm:$0xff] %v274
                %v276 = vld [vmem:[%s186 + $0x2c0] sm:$0xff]
                %277 = vst [vmem:[%s187 + $0x160] sm:$0xff] %v276
                %v278 = vld [vmem:[%s186 + $0x2c8] sm:$0xff]
                %279 = vst [vmem:[%s187 + $0x168] sm:$0xff] %v278
                %v280 = vld [vmem:[%s186 + $0x2e0] sm:$0xff]
                %281 = vst [vmem:[%s187 + $0x170] sm:$0xff] %v280
                %v282 = vld [vmem:[%s186 + $0x2e8] sm:$0xff]
                %283 = vst [vmem:[%s187 + $0x178] sm:$0xff] %v282
                %v284 = vld [vmem:[%s186 + $0x300] sm:$0xff]
                %285 = vst [vmem:[%s187 + $0x180] sm:$0xff] %v284
                %v286 = vld [vmem:[%s186 + $0x308] sm:$0xff]
                %287 = vst [vmem:[%s187 + $0x188] sm:$0xff] %v286
                %v288 = vld [vmem:[%s186 + $0x320] sm:$0xff]
                %289 = vst [vmem:[%s187 + $0x190] sm:$0xff] %v288
                %v290 = vld [vmem:[%s186 + $0x328] sm:$0xff]
                %291 = vst [vmem:[%s187 + $0x198] sm:$0xff] %v290
                %v292 = vld [vmem:[%s186 + $0x340] sm:$0xff]
                %293 = vst [vmem:[%s187 + $0x1a0] sm:$0xff] %v292
                %v294 = vld [vmem:[%s186 + $0x348] sm:$0xff]
                %295 = vst [vmem:[%s187 + $0x1a8] sm:$0xff] %v294
                %v296 = vld [vmem:[%s186 + $0x360] sm:$0xff]
                %297 = vst [vmem:[%s187 + $0x1b0] sm:$0xff] %v296
                %v298 = vld [vmem:[%s186 + $0x368] sm:$0xff]
                %299 = vst [vmem:[%s187 + $0x1b8] sm:$0xff] %v298
                %v300 = vld [vmem:[%s186 + $0x380] sm:$0xff]
                %301 = vst [vmem:[%s187 + $0x1c0] sm:$0xff] %v300
                %v302 = vld [vmem:[%s186 + $0x388] sm:$0xff]
                %303 = vst [vmem:[%s187 + $0x1c8] sm:$0xff] %v302
                %v304 = vld [vmem:[%s186 + $0x3a0] sm:$0xff]
                %305 = vst [vmem:[%s187 + $0x1d0] sm:$0xff] %v304
                %v306 = vld [vmem:[%s186 + $0x3a8] sm:$0xff]
                %307 = vst [vmem:[%s187 + $0x1d8] sm:$0xff] %v306
                %v308 = vld [vmem:[%s186 + $0x3c0] sm:$0xff]
                %309 = vst [vmem:[%s187 + $0x1e0] sm:$0xff] %v308
                %v310 = vld [vmem:[%s186 + $0x3c8] sm:$0xff]
                %311 = vst [vmem:[%s187 + $0x1e8] sm:$0xff] %v310
                %v312 = vld [vmem:[%s186 + $0x3e0] sm:$0xff]
                %313 = vst [vmem:[%s187 + $0x1f0] sm:$0xff] %v312
                %v314 = vld [vmem:[%s186 + $0x3e8] sm:$0xff]
                %315 = vst [vmem:[%s187 + $0x1f8] sm:$0xff] %v314
              $region37: #{main_model_step.12} parent=31 // loop_footer
                %s185 = sadd.s32 1, %s181
              $region38: #{main_model_step.12} parent=31 // loop_footer_branch
                %180 = sbr.rel target = $region34
              $region39: #{main_model_step.12} parent=31 // loop_exit
                _
            $region32: #{main_model_step.12} parent=27 // pred_fallthru
              _
            // Predicated region
            $region40: #{main_model_step.12} parent=27 // pred_check
              _
            $region41: #{main_model_step.12} parent=27 // pred_check_branch
              %317 = sbr.rel target = $region43
            $region42: #{main_model_step.12} parent=27 // pred_region
              _
            $region43: #{main_model_step.12} parent=27 // pred_fallthru
              _
          $region28: #{main_model_step.12} parent=23 // pred_fallthru
            _
          %318 = vnop
        $region24: #{main_model_step.12} parent=19 // pred_fallthru
          _
        // Predicated region
        $region44: #{main_model_step.12} parent=19 // pred_check
          %p319 = pneg %p78
        $region45: #{main_model_step.12} parent=19 // pred_check_branch
          %321 = sbr.rel (%p319) target = $region47
        $region46: #{main_model_step.12} parent=19 // pred_region
          %s322 = smul.u32 64, %s18
          %p323 = scmp.lt.s32.totalorder %s322, 127
          %s324 = scalar_select %p323, %s322, 127
          %p325 = scmp.lt.s32.totalorder %s17, 0
          %s326 = scalar_select %p325, %s17, 0
          %s327 = sadd.s32 %s326, %s324
          %s328 = smul.addr %s327, 4
          %s329 = scalar_lea.vmem %s1, %s328
          %s330 = smul.u32 64, %s18
        $region47: #{main_model_step.12} parent=19 // pred_fallthru
          _
      $region20: #{main_model_step.12} parent=5 // pred_fallthru
        _
      %p331 = scmp.le.s32.totalorder 1, %s9
      %p332 = scmp.lt.s32.totalorder %s9, 3
      %p333 = pnand %p331, %p332
      %p334 = pneg %p333
      // Predicated region
      $region48: #{main_model_step.12} parent=5 // pred_check
        _
      $region49: #{main_model_step.12} parent=5 // pred_check_branch
        %336 = sbr.rel (%p333) target = $region51
      $region50: #{main_model_step.12} parent=5 // pred_region
        %s337 = ssub.s32 %s9, 1
        %s338 = sand.u32 %s43, 1
        %s339 = sand.u32 %s43, 1
        %s340 = smul.addr %s339, 512
        %s341 = scalar_lea.vmem [#allocation3], %s340
        // Predicated region
        $region52: #{main_model_step.12} parent=50 // pred_check
          %p342 = pneg %p56
        $region53: #{main_model_step.12} parent=50 // pred_check_branch
          %344 = sbr.rel (%p342) target = $region55
        $region54: #{main_model_step.12} parent=50 // pred_region
          _
        $region55: #{main_model_step.12} parent=50 // pred_fallthru
          _
        %s345 = sand.u32 %s43, 1
        %s346 = sand.u32 %s43, 1
        %s347 = smul.addr %s346, 512
        %s348 = scalar_lea.vmem [#allocation3], %s347
        %p349 = pneg %p56
        %p350 = pneg %p53
        %s351 = smul.u32 64, %s21
        %p352 = scmp.lt.s32.totalorder %s351, 127
        %s353 = scalar_select %p352, %s351, 127
        %p354 = scmp.lt.s32.totalorder %s20, 0
        %s355 = scalar_select %p354, %s20, 0
        %s356 = sadd.s32 %s355, %s353
        %s357 = smul.addr %s356, 4
        %s358 = scalar_lea.vmem %s1, %s357
        %p359 = pneg %p84
        %p360 = pneg %p81
        %p361 = scmp.lt.s32.totalorder %s20, 0
        %s362 = scalar_select %p361, %s20, 0
        %s363 = scalar_lea.vmem %s2, %s362
        %p364 = pneg %p110
        %p365 = pneg %p107
        %p366 = pneg %p138
        %p367 = pneg %p135
        %s368 = smul.u32 32, %s19
        %p369 = scmp.lt.s32.totalorder %s368, 31
        %s370 = scalar_select %p369, %s368, 31
        %p371 = scmp.lt.s32.totalorder %s20, 0
        %s372 = scalar_select %p371, %s20, 0
        %s373 = sadd.s32 %s372, %s370
        %s374 = smul.addr %s373, 4
        %s375 = scalar_lea.vmem %s3, %s374
        %s376 = smul.u32 32, %s19
        %s377 = smul.u32 4, %s21
        %s378 = smul.u32 64, %s21
        %p379 = scmp.lt.s32.totalorder %s378, 127
        %s380 = scalar_select %p379, %s378, 127
        %p381 = scmp.lt.s32.totalorder %s20, 0
        %s382 = scalar_select %p381, %s20, 0
        %s383 = sadd.s32 %s382, %s380
        %s384 = smul.addr %s383, 4
        %s385 = scalar_lea.vmem %s1, %s384
        %s386 = smul.u32 64, %s21
        %p387 = scmp.lt.s32.totalorder %s20, 0
        %s388 = scalar_select %p387, %s20, 0
        %s389 = scalar_lea.vmem %s2, %s388
        %s390 = smul.u32 32, %s19
        %p391 = scmp.lt.s32.totalorder %s390, 31
        %s392 = scalar_select %p391, %s390, 31
        %p393 = scmp.lt.s32.totalorder %s20, 0
        %s394 = scalar_select %p393, %s20, 0
        %s395 = sadd.s32 %s394, %s392
        %s396 = smul.addr %s395, 4
        %s397 = scalar_lea.vmem %s3, %s396
        %s398 = smul.u32 32, %s19
        %p400 = scmp.eq.s32.totalorder %s21, 0
        // Predicated region
        $region56: #{main_model_step.12} parent=50 // pred_check
          %p401 = pneg %p400
        $region57: #{main_model_step.12} parent=50 // pred_check_branch
          %403 = sbr.rel (%p401) target = $region59
        $region58: #{main_model_step.12} parent=50 // pred_region
          %404 = vst [vmem:[#allocation2] sm:$0xff] 0.0
          %405 = vst [vmem:[#allocation2 + $0x8] sm:$0xff] 0.0
          %406 = vst [vmem:[#allocation2 + $0x10] sm:$0xff] 0.0
          %407 = vst [vmem:[#allocation2 + $0x18] sm:$0xff] 0.0
          %408 = vst [vmem:[#allocation2 + $0x20] sm:$0xff] 0.0
          %409 = vst [vmem:[#allocation2 + $0x28] sm:$0xff] 0.0
          %410 = vst [vmem:[#allocation2 + $0x30] sm:$0xff] 0.0
          %411 = vst [vmem:[#allocation2 + $0x38] sm:$0xff] 0.0
          %412 = vst [vmem:[#allocation2 + $0x40] sm:$0xff] 0.0
          %413 = vst [vmem:[#allocation2 + $0x48] sm:$0xff] 0.0
          %414 = vst [vmem:[#allocation2 + $0x50] sm:$0xff] 0.0
          %415 = vst [vmem:[#allocation2 + $0x58] sm:$0xff] 0.0
          %416 = vst [vmem:[#allocation2 + $0x60] sm:$0xff] 0.0
          %417 = vst [vmem:[#allocation2 + $0x68] sm:$0xff] 0.0
          %418 = vst [vmem:[#allocation2 + $0x70] sm:$0xff] 0.0
          %419 = vst [vmem:[#allocation2 + $0x78] sm:$0xff] 0.0
          %420 = vst [vmem:[#allocation2 + $0x80] sm:$0xff] 0.0
          %421 = vst [vmem:[#allocation2 + $0x88] sm:$0xff] 0.0
          %422 = vst [vmem:[#allocation2 + $0x90] sm:$0xff] 0.0
          %423 = vst [vmem:[#allocation2 + $0x98] sm:$0xff] 0.0
          %424 = vst [vmem:[#allocation2 + $0xa0] sm:$0xff] 0.0
          %425 = vst [vmem:[#allocation2 + $0xa8] sm:$0xff] 0.0
          %426 = vst [vmem:[#allocation2 + $0xb0] sm:$0xff] 0.0
          %427 = vst [vmem:[#allocation2 + $0xb8] sm:$0xff] 0.0
          %428 = vst [vmem:[#allocation2 + $0xc0] sm:$0xff] 0.0
          %429 = vst [vmem:[#allocation2 + $0xc8] sm:$0xff] 0.0
          %430 = vst [vmem:[#allocation2 + $0xd0] sm:$0xff] 0.0
          %431 = vst [vmem:[#allocation2 + $0xd8] sm:$0xff] 0.0
          %432 = vst [vmem:[#allocation2 + $0xe0] sm:$0xff] 0.0
          %433 = vst [vmem:[#allocation2 + $0xe8] sm:$0xff] 0.0
          %434 = vst [vmem:[#allocation2 + $0xf0] sm:$0xff] 0.0
          %435 = vst [vmem:[#allocation2 + $0xf8] sm:$0xff] 0.0
        $region59: #{main_model_step.12} parent=50 // pred_fallthru
          _
        %v436 = vld [vmem:[#allocation2] sm:$0xff]
        %v437 = vld [vmem:[#allocation2 + $0x8] sm:$0xff]
        %v438 = vld [vmem:[#allocation2 + $0x10] sm:$0xff]
        %v439 = vld [vmem:[#allocation2 + $0x18] sm:$0xff]
        %v440 = vld [vmem:[#allocation2 + $0x20] sm:$0xff]
        %v441 = vld [vmem:[#allocation2 + $0x28] sm:$0xff]
        %v442 = vld [vmem:[#allocation2 + $0x30] sm:$0xff]
        %v443 = vld [vmem:[#allocation2 + $0x38] sm:$0xff]
        %v444 = vld [vmem:[#allocation2 + $0x40] sm:$0xff]
        %v445 = vld [vmem:[#allocation2 + $0x48] sm:$0xff]
        %v446 = vld [vmem:[#allocation2 + $0x50] sm:$0xff]
        %v447 = vld [vmem:[#allocation2 + $0x58] sm:$0xff]
        %v448 = vld [vmem:[#allocation2 + $0x60] sm:$0xff]
        %v449 = vld [vmem:[#allocation2 + $0x68] sm:$0xff]
        %v450 = vld [vmem:[#allocation2 + $0x70] sm:$0xff]
        %v451 = vld [vmem:[#allocation2 + $0x78] sm:$0xff]
        %v452 = vld [vmem:[#allocation2 + $0x80] sm:$0xff]
        %v453 = vld [vmem:[#allocation2 + $0x88] sm:$0xff]
        %v454 = vld [vmem:[#allocation2 + $0x90] sm:$0xff]
        %v455 = vld [vmem:[#allocation2 + $0x98] sm:$0xff]
        %v456 = vld [vmem:[#allocation2 + $0xa0] sm:$0xff]
        %v457 = vld [vmem:[#allocation2 + $0xa8] sm:$0xff]
        %v458 = vld [vmem:[#allocation2 + $0xb0] sm:$0xff]
        %v459 = vld [vmem:[#allocation2 + $0xb8] sm:$0xff]
        %v460 = vld [vmem:[#allocation2 + $0xc0] sm:$0xff]
        %v461 = vld [vmem:[#allocation2 + $0xc8] sm:$0xff]
        %v462 = vld [vmem:[#allocation2 + $0xd0] sm:$0xff]
        %v463 = vld [vmem:[#allocation2 + $0xd8] sm:$0xff]
        %v464 = vld [vmem:[#allocation2 + $0xe0] sm:$0xff]
        %v465 = vld [vmem:[#allocation2 + $0xe8] sm:$0xff]
        %v466 = vld [vmem:[#allocation2 + $0xf0] sm:$0xff]
        %v467 = vld [vmem:[#allocation2 + $0xf8] sm:$0xff]
        %v468 = vld [vmem:[%s341] sm:$0xff]
        %v469 = vld [vmem:[%s341 + $0x8] sm:$0xff]
        %v470 = vld [vmem:[%s341 + $0x10] sm:$0xff]
        %v471 = vld [vmem:[%s341 + $0x18] sm:$0xff]
        %v472 = vld [vmem:[%s341 + $0x20] sm:$0xff]
        %v473 = vld [vmem:[%s341 + $0x28] sm:$0xff]
        %v474 = vld [vmem:[%s341 + $0x30] sm:$0xff]
        %v475 = vld [vmem:[%s341 + $0x38] sm:$0xff]
        %v476 = vld [vmem:[%s341 + $0x40] sm:$0xff]
        %v477 = vld [vmem:[%s341 + $0x48] sm:$0xff]
        %v478 = vld [vmem:[%s341 + $0x50] sm:$0xff]
        %v479 = vld [vmem:[%s341 + $0x58] sm:$0xff]
        %v480 = vld [vmem:[%s341 + $0x60] sm:$0xff]
        %v481 = vld [vmem:[%s341 + $0x68] sm:$0xff]
        %v482 = vld [vmem:[%s341 + $0x70] sm:$0xff]
        %v483 = vld [vmem:[%s341 + $0x78] sm:$0xff]
        %v484 = vld [vmem:[%s341 + $0x80] sm:$0xff]
        %v485 = vld [vmem:[%s341 + $0x88] sm:$0xff]
        %v486 = vld [vmem:[%s341 + $0x90] sm:$0xff]
        %v487 = vld [vmem:[%s341 + $0x98] sm:$0xff]
        %v488 = vld [vmem:[%s341 + $0xa0] sm:$0xff]
        %v489 = vld [vmem:[%s341 + $0xa8] sm:$0xff]
        %v490 = vld [vmem:[%s341 + $0xb0] sm:$0xff]
        %v491 = vld [vmem:[%s341 + $0xb8] sm:$0xff]
        %v492 = vld [vmem:[%s341 + $0xc0] sm:$0xff]
        %v493 = vld [vmem:[%s341 + $0xc8] sm:$0xff]
        %v494 = vld [vmem:[%s341 + $0xd0] sm:$0xff]
        %v495 = vld [vmem:[%s341 + $0xd8] sm:$0xff]
        %v496 = vld [vmem:[%s341 + $0xe0] sm:$0xff]
        %v497 = vld [vmem:[%s341 + $0xe8] sm:$0xff]
        %v498 = vld [vmem:[%s341 + $0xf0] sm:$0xff]
        %v499 = vld [vmem:[%s341 + $0xf8] sm:$0xff]
        %v500 = vld [vmem:[%s341 + $0x100] sm:$0xff]
        %v501 = vld [vmem:[%s341 + $0x108] sm:$0xff]
        %v502 = vld [vmem:[%s341 + $0x110] sm:$0xff]
        %v503 = vld [vmem:[%s341 + $0x118] sm:$0xff]
        %v504 = vld [vmem:[%s341 + $0x120] sm:$0xff]
        %v505 = vld [vmem:[%s341 + $0x128] sm:$0xff]
        %v506 = vld [vmem:[%s341 + $0x130] sm:$0xff]
        %v507 = vld [vmem:[%s341 + $0x138] sm:$0xff]
        %v508 = vld [vmem:[%s341 + $0x140] sm:$0xff]
        %v509 = vld [vmem:[%s341 + $0x148] sm:$0xff]
        %v510 = vld [vmem:[%s341 + $0x150] sm:$0xff]
        %v511 = vld [vmem:[%s341 + $0x158] sm:$0xff]
        %v512 = vld [vmem:[%s341 + $0x160] sm:$0xff]
        %v513 = vld [vmem:[%s341 + $0x168] sm:$0xff]
        %v514 = vld [vmem:[%s341 + $0x170] sm:$0xff]
        %v515 = vld [vmem:[%s341 + $0x178] sm:$0xff]
        %v516 = vld [vmem:[%s341 + $0x180] sm:$0xff]
        %v517 = vld [vmem:[%s341 + $0x188] sm:$0xff]
        %v518 = vld [vmem:[%s341 + $0x190] sm:$0xff]
        %v519 = vld [vmem:[%s341 + $0x198] sm:$0xff]
        %v520 = vld [vmem:[%s341 + $0x1a0] sm:$0xff]
        %v521 = vld [vmem:[%s341 + $0x1a8] sm:$0xff]
        %v522 = vld [vmem:[%s341 + $0x1b0] sm:$0xff]
        %v523 = vld [vmem:[%s341 + $0x1b8] sm:$0xff]
        %v524 = vld [vmem:[%s341 + $0x1c0] sm:$0xff]
        %v525 = vld [vmem:[%s341 + $0x1c8] sm:$0xff]
        %v526 = vld [vmem:[%s341 + $0x1d0] sm:$0xff]
        %v527 = vld [vmem:[%s341 + $0x1d8] sm:$0xff]
        %v528 = vld [vmem:[%s341 + $0x1e0] sm:$0xff]
        %v529 = vld [vmem:[%s341 + $0x1e8] sm:$0xff]
        %v530 = vld [vmem:[%s341 + $0x1f0] sm:$0xff]
        %v531 = vld [vmem:[%s341 + $0x1f8] sm:$0xff]
        %v532 = vld [vmem:[%s385] sm:$0xf]
        %v533 = vld [vmem:[%s385 + $0x4] sm:$0xf]
        %v534 = vld [vmem:[%s385 + $0x8] sm:$0xf]
        %v535 = vld [vmem:[%s385 + $0xc] sm:$0xf]
        %v536 = vld [vmem:[%s385 + $0x10] sm:$0xf]
        %v537 = vld [vmem:[%s385 + $0x14] sm:$0xf]
        %v538 = vld [vmem:[%s385 + $0x18] sm:$0xf]
        %v539 = vld [vmem:[%s385 + $0x1c] sm:$0xf]
        %v540 = vld [vmem:[%s385 + $0x20] sm:$0xf]
        %v541 = vld [vmem:[%s385 + $0x24] sm:$0xf]
        %v542 = vld [vmem:[%s385 + $0x28] sm:$0xf]
        %v543 = vld [vmem:[%s385 + $0x2c] sm:$0xf]
        %v544 = vld [vmem:[%s385 + $0x30] sm:$0xf]
        %v545 = vld [vmem:[%s385 + $0x34] sm:$0xf]
        %v546 = vld [vmem:[%s385 + $0x38] sm:$0xf]
        %v547 = vld [vmem:[%s385 + $0x3c] sm:$0xf]
        %v548 = vld [vmem:[%s385 + $0x40] sm:$0xf]
        %v549 = vld [vmem:[%s385 + $0x44] sm:$0xf]
        %v550 = vld [vmem:[%s385 + $0x48] sm:$0xf]
        %v551 = vld [vmem:[%s385 + $0x4c] sm:$0xf]
        %v552 = vld [vmem:[%s385 + $0x50] sm:$0xf]
        %v553 = vld [vmem:[%s385 + $0x54] sm:$0xf]
        %v554 = vld [vmem:[%s385 + $0x58] sm:$0xf]
        %v555 = vld [vmem:[%s385 + $0x5c] sm:$0xf]
        %v556 = vld [vmem:[%s385 + $0x60] sm:$0xf]
        %v557 = vld [vmem:[%s385 + $0x64] sm:$0xf]
        %v558 = vld [vmem:[%s385 + $0x68] sm:$0xf]
        %v559 = vld [vmem:[%s385 + $0x6c] sm:$0xf]
        %v560 = vld [vmem:[%s385 + $0x70] sm:$0xf]
        %v561 = vld [vmem:[%s385 + $0x74] sm:$0xf]
        %v562 = vld [vmem:[%s385 + $0x78] sm:$0xf]
        %v563 = vld [vmem:[%s385 + $0x7c] sm:$0xf]
        %v564 = vld [vmem:[%s385 + $0x80] sm:$0xf]
        %v565 = vld [vmem:[%s385 + $0x84] sm:$0xf]
        %v566 = vld [vmem:[%s385 + $0x88] sm:$0xf]
        %v567 = vld [vmem:[%s385 + $0x8c] sm:$0xf]
        %v568 = vld [vmem:[%s385 + $0x90] sm:$0xf]
        %v569 = vld [vmem:[%s385 + $0x94] sm:$0xf]
        %v570 = vld [vmem:[%s385 + $0x98] sm:$0xf]
        %v571 = vld [vmem:[%s385 + $0x9c] sm:$0xf]
        %v572 = vld [vmem:[%s385 + $0xa0] sm:$0xf]
        %v573 = vld [vmem:[%s385 + $0xa4] sm:$0xf]
        %v574 = vld [vmem:[%s385 + $0xa8] sm:$0xf]
        %v575 = vld [vmem:[%s385 + $0xac] sm:$0xf]
        %v576 = vld [vmem:[%s385 + $0xb0] sm:$0xf]
        %v577 = vld [vmem:[%s385 + $0xb4] sm:$0xf]
        %v578 = vld [vmem:[%s385 + $0xb8] sm:$0xf]
        %v579 = vld [vmem:[%s385 + $0xbc] sm:$0xf]
        %v580 = vld [vmem:[%s385 + $0xc0] sm:$0xf]
        %v581 = vld [vmem:[%s385 + $0xc4] sm:$0xf]
        %v582 = vld [vmem:[%s385 + $0xc8] sm:$0xf]
        %v583 = vld [vmem:[%s385 + $0xcc] sm:$0xf]
        %v584 = vld [vmem:[%s385 + $0xd0] sm:$0xf]
        %v585 = vld [vmem:[%s385 + $0xd4] sm:$0xf]
        %v586 = vld [vmem:[%s385 + $0xd8] sm:$0xf]
        %v587 = vld [vmem:[%s385 + $0xdc] sm:$0xf]
        %v588 = vld [vmem:[%s385 + $0xe0] sm:$0xf]
        %v589 = vld [vmem:[%s385 + $0xe4] sm:$0xf]
        %v590 = vld [vmem:[%s385 + $0xe8] sm:$0xf]
        %v591 = vld [vmem:[%s385 + $0xec] sm:$0xf]
        %v592 = vld [vmem:[%s385 + $0xf0] sm:$0xf]
        %v593 = vld [vmem:[%s385 + $0xf4] sm:$0xf]
        %v594 = vld [vmem:[%s385 + $0xf8] sm:$0xf]
        %v595 = vld [vmem:[%s385 + $0xfc] sm:$0xf]
        %v660 = vunpack.c.l.b16 %v468
        %v661 = vunpack.c.h.b16 %v468
        %v662 = vunpack.c.l.b16 %v469
        %v663 = vunpack.c.h.b16 %v469
        %v664 = vunpack.c.l.b16 %v470
        %v665 = vunpack.c.h.b16 %v470
        %v666 = vunpack.c.l.b16 %v471
        %v667 = vunpack.c.h.b16 %v471
        %v668 = vunpack.c.l.b16 %v472
        %v669 = vunpack.c.h.b16 %v472
        %v670 = vunpack.c.l.b16 %v473
        %v671 = vunpack.c.h.b16 %v473
        %v672 = vunpack.c.l.b16 %v474
        %v673 = vunpack.c.h.b16 %v474
        %v674 = vunpack.c.l.b16 %v475
        %v675 = vunpack.c.h.b16 %v475
        %v676 = vunpack.c.l.b16 %v476
        %v677 = vunpack.c.h.b16 %v476
        %v678 = vunpack.c.l.b16 %v477
        %v679 = vunpack.c.h.b16 %v477
        %v680 = vunpack.c.l.b16 %v478
        %v681 = vunpack.c.h.b16 %v478
        %v682 = vunpack.c.l.b16 %v479
        %v683 = vunpack.c.h.b16 %v479
        %v684 = vunpack.c.l.b16 %v480
        %v685 = vunpack.c.h.b16 %v480
        %v686 = vunpack.c.l.b16 %v481
        %v687 = vunpack.c.h.b16 %v481
        %v688 = vunpack.c.l.b16 %v482
        %v689 = vunpack.c.h.b16 %v482
        %v690 = vunpack.c.l.b16 %v483
        %v691 = vunpack.c.h.b16 %v483
        %v692 = vunpack.c.l.b16 %v484
        %v693 = vunpack.c.h.b16 %v484
        %v694 = vunpack.c.l.b16 %v485
        %v695 = vunpack.c.h.b16 %v485
        %v696 = vunpack.c.l.b16 %v486
        %v697 = vunpack.c.h.b16 %v486
        %v698 = vunpack.c.l.b16 %v487
        %v699 = vunpack.c.h.b16 %v487
        %v700 = vunpack.c.l.b16 %v488
        %v701 = vunpack.c.h.b16 %v488
        %v702 = vunpack.c.l.b16 %v489
        %v703 = vunpack.c.h.b16 %v489
        %v704 = vunpack.c.l.b16 %v490
        %v705 = vunpack.c.h.b16 %v490
        %v706 = vunpack.c.l.b16 %v491
        %v707 = vunpack.c.h.b16 %v491
        %v708 = vunpack.c.l.b16 %v492
        %v709 = vunpack.c.h.b16 %v492
        %v710 = vunpack.c.l.b16 %v493
        %v711 = vunpack.c.h.b16 %v493
        %v712 = vunpack.c.l.b16 %v494
        %v713 = vunpack.c.h.b16 %v494
        %v714 = vunpack.c.l.b16 %v495
        %v715 = vunpack.c.h.b16 %v495
        %v716 = vunpack.c.l.b16 %v496
        %v717 = vunpack.c.h.b16 %v496
        %v718 = vunpack.c.l.b16 %v497
        %v719 = vunpack.c.h.b16 %v497
        %v720 = vunpack.c.l.b16 %v498
        %v721 = vunpack.c.h.b16 %v498
        %v722 = vunpack.c.l.b16 %v499
        %v723 = vunpack.c.h.b16 %v499
        %v724 = vunpack.c.l.b16 %v500
        %v725 = vunpack.c.h.b16 %v500
        %v726 = vunpack.c.l.b16 %v501
        %v727 = vunpack.c.h.b16 %v501
        %v728 = vunpack.c.l.b16 %v502
        %v729 = vunpack.c.h.b16 %v502
        %v730 = vunpack.c.l.b16 %v503
        %v731 = vunpack.c.h.b16 %v503
        %v732 = vunpack.c.l.b16 %v504
        %v733 = vunpack.c.h.b16 %v504
        %v734 = vunpack.c.l.b16 %v505
        %v735 = vunpack.c.h.b16 %v505
        %v736 = vunpack.c.l.b16 %v506
        %v737 = vunpack.c.h.b16 %v506
        %v738 = vunpack.c.l.b16 %v507
        %v739 = vunpack.c.h.b16 %v507
        %v740 = vunpack.c.l.b16 %v508
        %v741 = vunpack.c.h.b16 %v508
        %v742 = vunpack.c.l.b16 %v509
        %v743 = vunpack.c.h.b16 %v509
        %v744 = vunpack.c.l.b16 %v510
        %v745 = vunpack.c.h.b16 %v510
        %v746 = vunpack.c.l.b16 %v511
        %v747 = vunpack.c.h.b16 %v511
        %v748 = vunpack.c.l.b16 %v512
        %v749 = vunpack.c.h.b16 %v512
        %v750 = vunpack.c.l.b16 %v513
        %v751 = vunpack.c.h.b16 %v513
        %v752 = vunpack.c.l.b16 %v514
        %v753 = vunpack.c.h.b16 %v514
        %v754 = vunpack.c.l.b16 %v515
        %v755 = vunpack.c.h.b16 %v515
        %v756 = vunpack.c.l.b16 %v516
        %v757 = vunpack.c.h.b16 %v516
        %v758 = vunpack.c.l.b16 %v517
        %v759 = vunpack.c.h.b16 %v517
        %v760 = vunpack.c.l.b16 %v518
        %v761 = vunpack.c.h.b16 %v518
        %v762 = vunpack.c.l.b16 %v519
        %v763 = vunpack.c.h.b16 %v519
        %v764 = vunpack.c.l.b16 %v520
        %v765 = vunpack.c.h.b16 %v520
        %v766 = vunpack.c.l.b16 %v521
        %v767 = vunpack.c.h.b16 %v521
        %v768 = vunpack.c.l.b16 %v522
        %v769 = vunpack.c.h.b16 %v522
        %v770 = vunpack.c.l.b16 %v523
        %v771 = vunpack.c.h.b16 %v523
        %v772 = vunpack.c.l.b16 %v524
        %v773 = vunpack.c.h.b16 %v524
        %v774 = vunpack.c.l.b16 %v525
        %v775 = vunpack.c.h.b16 %v525
        %v776 = vunpack.c.l.b16 %v526
        %v777 = vunpack.c.h.b16 %v526
        %v778 = vunpack.c.l.b16 %v527
        %v779 = vunpack.c.h.b16 %v527
        %v780 = vunpack.c.l.b16 %v528
        %v781 = vunpack.c.h.b16 %v528
        %v782 = vunpack.c.l.b16 %v529
        %v783 = vunpack.c.h.b16 %v529
        %v784 = vunpack.c.l.b16 %v530
        %v785 = vunpack.c.h.b16 %v530
        %v786 = vunpack.c.l.b16 %v531
        %v787 = vunpack.c.h.b16 %v531
        %v788 = vpack.c.b16 %v664, %v660
        %v789 = vpack.c.b16 %v665, %v661
        %v790 = vpack.c.b16 %v666, %v662
        %v791 = vpack.c.b16 %v667, %v663
        %v792 = vpack.c.b16 %v672, %v668
        %v793 = vpack.c.b16 %v673, %v669
        %v794 = vpack.c.b16 %v674, %v670
        %v795 = vpack.c.b16 %v675, %v671
        %v796 = vpack.c.b16 %v680, %v676
        %v797 = vpack.c.b16 %v681, %v677
        %v798 = vpack.c.b16 %v682, %v678
        %v799 = vpack.c.b16 %v683, %v679
        %v800 = vpack.c.b16 %v688, %v684
        %v801 = vpack.c.b16 %v689, %v685
        %v802 = vpack.c.b16 %v690, %v686
        %v803 = vpack.c.b16 %v691, %v687
        %v804 = vpack.c.b16 %v696, %v692
        %v805 = vpack.c.b16 %v697, %v693
        %v806 = vpack.c.b16 %v698, %v694
        %v807 = vpack.c.b16 %v699, %v695
        %v808 = vpack.c.b16 %v704, %v700
        %v809 = vpack.c.b16 %v705, %v701
        %v810 = vpack.c.b16 %v706, %v702
        %v811 = vpack.c.b16 %v707, %v703
        %v812 = vpack.c.b16 %v712, %v708
        %v813 = vpack.c.b16 %v713, %v709
        %v814 = vpack.c.b16 %v714, %v710
        %v815 = vpack.c.b16 %v715, %v711
        %v816 = vpack.c.b16 %v720, %v716
        %v817 = vpack.c.b16 %v721, %v717
        %v818 = vpack.c.b16 %v722, %v718
        %v819 = vpack.c.b16 %v723, %v719
        %v820 = vpack.c.b16 %v728, %v724
        %v821 = vpack.c.b16 %v729, %v725
        %v822 = vpack.c.b16 %v730, %v726
        %v823 = vpack.c.b16 %v731, %v727
        %v824 = vpack.c.b16 %v736, %v732
        %v825 = vpack.c.b16 %v737, %v733
        %v826 = vpack.c.b16 %v738, %v734
        %v827 = vpack.c.b16 %v739, %v735
        %v828 = vpack.c.b16 %v744, %v740
        %v829 = vpack.c.b16 %v745, %v741
        %v830 = vpack.c.b16 %v746, %v742
        %v831 = vpack.c.b16 %v747, %v743
        %v832 = vpack.c.b16 %v752, %v748
        %v833 = vpack.c.b16 %v753, %v749
        %v834 = vpack.c.b16 %v754, %v750
        %v835 = vpack.c.b16 %v755, %v751
        %v836 = vpack.c.b16 %v760, %v756
        %v837 = vpack.c.b16 %v761, %v757
        %v838 = vpack.c.b16 %v762, %v758
        %v839 = vpack.c.b16 %v763, %v759
        %v840 = vpack.c.b16 %v768, %v764
        %v841 = vpack.c.b16 %v769, %v765
        %v842 = vpack.c.b16 %v770, %v766
        %v843 = vpack.c.b16 %v771, %v767
        %v844 = vpack.c.b16 %v776, %v772
        %v845 = vpack.c.b16 %v777, %v773
        %v846 = vpack.c.b16 %v778, %v774
        %v847 = vpack.c.b16 %v779, %v775
        %v848 = vpack.c.b16 %v784, %v780
        %v849 = vpack.c.b16 %v785, %v781
        %v850 = vpack.c.b16 %v786, %v782
        %v851 = vpack.c.b16 %v787, %v783
        %v980 = vunpack.c.l.b16 %v532
        %v981 = vunpack.c.l.b16 %v533
        %v982 = vunpack.c.l.b16 %v534
        %v983 = vunpack.c.l.b16 %v535
        %v984 = vunpack.c.l.b16 %v536
        %v985 = vunpack.c.l.b16 %v537
        %v986 = vunpack.c.l.b16 %v538
        %v987 = vunpack.c.l.b16 %v539
        %v988 = vunpack.c.l.b16 %v540
        %v989 = vunpack.c.l.b16 %v541
        %v990 = vunpack.c.l.b16 %v542
        %v991 = vunpack.c.l.b16 %v543
        %v992 = vunpack.c.l.b16 %v544
        %v993 = vunpack.c.l.b16 %v545
        %v994 = vunpack.c.l.b16 %v546
        %v995 = vunpack.c.l.b16 %v547
        %v996 = vunpack.c.l.b16 %v548
        %v997 = vunpack.c.l.b16 %v549
        %v998 = vunpack.c.l.b16 %v550
        %v999 = vunpack.c.l.b16 %v551
        %v1000 = vunpack.c.l.b16 %v552
        %v1001 = vunpack.c.l.b16 %v553
        %v1002 = vunpack.c.l.b16 %v554
        %v1003 = vunpack.c.l.b16 %v555
        %v1004 = vunpack.c.l.b16 %v556
        %v1005 = vunpack.c.l.b16 %v557
        %v1006 = vunpack.c.l.b16 %v558
        %v1007 = vunpack.c.l.b16 %v559
        %v1008 = vunpack.c.l.b16 %v560
        %v1009 = vunpack.c.l.b16 %v561
        %v1010 = vunpack.c.l.b16 %v562
        %v1011 = vunpack.c.l.b16 %v563
        %v1012 = vunpack.c.l.b16 %v564
        %v1013 = vunpack.c.l.b16 %v565
        %v1014 = vunpack.c.l.b16 %v566
        %v1015 = vunpack.c.l.b16 %v567
        %v1016 = vunpack.c.l.b16 %v568
        %v1017 = vunpack.c.l.b16 %v569
        %v1018 = vunpack.c.l.b16 %v570
        %v1019 = vunpack.c.l.b16 %v571
        %v1020 = vunpack.c.l.b16 %v572
        %v1021 = vunpack.c.l.b16 %v573
        %v1022 = vunpack.c.l.b16 %v574
        %v1023 = vunpack.c.l.b16 %v575
        %v1024 = vunpack.c.l.b16 %v576
        %v1025 = vunpack.c.l.b16 %v577
        %v1026 = vunpack.c.l.b16 %v578
        %v1027 = vunpack.c.l.b16 %v579
        %v1028 = vunpack.c.l.b16 %v580
        %v1029 = vunpack.c.l.b16 %v581
        %v1030 = vunpack.c.l.b16 %v582
        %v1031 = vunpack.c.l.b16 %v583
        %v1032 = vunpack.c.l.b16 %v584
        %v1033 = vunpack.c.l.b16 %v585
        %v1034 = vunpack.c.l.b16 %v586
        %v1035 = vunpack.c.l.b16 %v587
        %v1036 = vunpack.c.l.b16 %v588
        %v1037 = vunpack.c.l.b16 %v589
        %v1038 = vunpack.c.l.b16 %v590
        %v1039 = vunpack.c.l.b16 %v591
        %v1040 = vunpack.c.l.b16 %v592
        %v1041 = vunpack.c.l.b16 %v593
        %v1042 = vunpack.c.l.b16 %v594
        %v1043 = vunpack.c.l.b16 %v595
        %v1044 = vpack.c.b16 %v981, %v980
        %v1045 = vpack.c.b16 %v983, %v982
        %v1046 = vpack.c.b16 %v985, %v984
        %v1047 = vpack.c.b16 %v987, %v986
        %v1048 = vpack.c.b16 %v989, %v988
        %v1049 = vpack.c.b16 %v991, %v990
        %v1050 = vpack.c.b16 %v993, %v992
        %v1051 = vpack.c.b16 %v995, %v994
        %v1052 = vpack.c.b16 %v997, %v996
        %v1053 = vpack.c.b16 %v999, %v998
        %v1054 = vpack.c.b16 %v1001, %v1000
        %v1055 = vpack.c.b16 %v1003, %v1002
        %v1056 = vpack.c.b16 %v1005, %v1004
        %v1057 = vpack.c.b16 %v1007, %v1006
        %v1058 = vpack.c.b16 %v1009, %v1008
        %v1059 = vpack.c.b16 %v1011, %v1010
        %v1060 = vpack.c.b16 %v1013, %v1012
        %v1061 = vpack.c.b16 %v1015, %v1014
        %v1062 = vpack.c.b16 %v1017, %v1016
        %v1063 = vpack.c.b16 %v1019, %v1018
        %v1064 = vpack.c.b16 %v1021, %v1020
        %v1065 = vpack.c.b16 %v1023, %v1022
        %v1066 = vpack.c.b16 %v1025, %v1024
        %v1067 = vpack.c.b16 %v1027, %v1026
        %v1068 = vpack.c.b16 %v1029, %v1028
        %v1069 = vpack.c.b16 %v1031, %v1030
        %v1070 = vpack.c.b16 %v1033, %v1032
        %v1071 = vpack.c.b16 %v1035, %v1034
        %v1072 = vpack.c.b16 %v1037, %v1036
        %v1073 = vpack.c.b16 %v1039, %v1038
        %v1074 = vpack.c.b16 %v1041, %v1040
        %v1075 = vpack.c.b16 %v1043, %v1042
        %1108 = vmatprep.subr.bf16.mxu0 0
        %1109 = vmatpush1.bf16.msra.mxu0 %v1044
        %1110 = vmatprep.subr.bf16.mxu0 0
        %1111 = vmatpush1.bf16.msra.mxu0 %v1045
        %1112 = vmatprep.subr.bf16.mxu0 0
        %1113 = vmatpush1.bf16.msra.mxu0 %v1046
        %1114 = vmatprep.subr.bf16.mxu0 0
        %1115 = vmatpush1.bf16.msra.mxu0 %v1047
        %1116 = vmatprep.subr.bf16.mxu0 0
        %1117 = vmatpush1.bf16.msra.mxu0 %v1048
        %1118 = vmatprep.subr.bf16.mxu0 0
        %1119 = vmatpush1.bf16.msra.mxu0 %v1049
        %1120 = vmatprep.subr.bf16.mxu0 0
        %1121 = vmatpush1.bf16.msra.mxu0 %v1050
        %1122 = vmatprep.subr.bf16.mxu0 0
        %1123 = vmatpush1.bf16.msra.mxu0 %v1051
        %1124 = vmatprep.subr.bf16.mxu0 0
        %1125 = vmatpush1.bf16.msra.mxu0 %v1052
        %1126 = vmatprep.subr.bf16.mxu0 0
        %1127 = vmatpush1.bf16.msra.mxu0 %v1053
        %1128 = vmatprep.subr.bf16.mxu0 0
        %1129 = vmatpush1.bf16.msra.mxu0 %v1054
        %1130 = vmatprep.subr.bf16.mxu0 0
        %1131 = vmatpush1.bf16.msra.mxu0 %v1055
        %1132 = vmatprep.subr.bf16.mxu0 0
        %1133 = vmatpush1.bf16.msra.mxu0 %v1056
        %1134 = vmatprep.subr.bf16.mxu0 0
        %1135 = vmatpush1.bf16.msra.mxu0 %v1057
        %1136 = vmatprep.subr.bf16.mxu0 0
        %1137 = vmatpush1.bf16.msra.mxu0 %v1058
        %1138 = vmatprep.subr.bf16.mxu0 0
        %1139 = vmatpush1.bf16.msra.mxu0 %v1059
        %1140 = vmatprep.mubr.bf16.mxu0 %v789
        %1141 = vmatmul.mubr.bf16.gmra.mrb[0].mxu0 %v788
        %v1142 = vpop.f32.mrb[0].mxu0
        %v1143 = vadd.f32 0.0, %v1142
        %v1144 = vpop.f32.mrb[0].mxu0
        %v1145 = vpop.f32.mrb[0].mxu0
        %v1146 = vadd.f32 0.0, %v1145
        %v1147 = vpop.f32.mrb[0].mxu0
        %1148 = vmatprep.mubr.bf16.mxu0 %v793
        %1149 = vmatmul.mubr.bf16.gmra.mrb[0].mxu0 %v792
        %v1150 = vpop.f32.mrb[0].mxu0
        %v1151 = vadd.f32 0.0, %v1150
        %v1152 = vpop.f32.mrb[0].mxu0
        %v1153 = vpop.f32.mrb[0].mxu0
        %v1154 = vadd.f32 0.0, %v1153
        %v1155 = vpop.f32.mrb[0].mxu0
        %1156 = vmatprep.mubr.bf16.mxu0 %v797
        %1157 = vmatmul.mubr.bf16.gmra.mrb[0].mxu0 %v796
        %v1158 = vpop.f32.mrb[0].mxu0
        %v1159 = vadd.f32 0.0, %v1158
        %v1160 = vpop.f32.mrb[0].mxu0
        %v1161 = vpop.f32.mrb[0].mxu0
        %v1162 = vadd.f32 0.0, %v1161
        %v1163 = vpop.f32.mrb[0].mxu0
        %1164 = vmatprep.mubr.bf16.mxu0 %v801
        %1165 = vmatmul.mubr.bf16.gmra.mrb[0].mxu0 %v800
        %v1166 = vpop.f32.mrb[0].mxu0
        %v1167 = vadd.f32 0.0, %v1166
        %v1168 = vpop.f32.mrb[0].mxu0
        %v1169 = vpop.f32.mrb[0].mxu0
        %v1170 = vadd.f32 0.0, %v1169
        %v1171 = vpop.f32.mrb[0].mxu0
        %1172 = vmatprep.mubr.bf16.mxu0 %v805
        %1173 = vmatmul.mubr.bf16.gmra.mrb[0].mxu0 %v804
        %v1174 = vpop.f32.mrb[0].mxu0
        %v1175 = vadd.f32 0.0, %v1174
        %v1176 = vpop.f32.mrb[0].mxu0
        %v1177 = vpop.f32.mrb[0].mxu0
        %v1178 = vadd.f32 0.0, %v1177
        %v1179 = vpop.f32.mrb[0].mxu0
        %1180 = vmatprep.mubr.bf16.mxu0 %v809
        %1181 = vmatmul.mubr.bf16.gmra.mrb[0].mxu0 %v808
        %v1182 = vpop.f32.mrb[0].mxu0
        %v1183 = vadd.f32 0.0, %v1182
        %v1184 = vpop.f32.mrb[0].mxu0
        %v1185 = vpop.f32.mrb[0].mxu0
        %v1186 = vadd.f32 0.0, %v1185
        %v1187 = vpop.f32.mrb[0].mxu0
        %1188 = vmatprep.mubr.bf16.mxu0 %v813
        %1189 = vmatmul.mubr.bf16.gmra.mrb[0].mxu0 %v812
        %v1190 = vpop.f32.mrb[0].mxu0
        %v1191 = vadd.f32 0.0, %v1190
        %v1192 = vpop.f32.mrb[0].mxu0
        %v1193 = vpop.f32.mrb[0].mxu0
        %v1194 = vadd.f32 0.0, %v1193
        %v1195 = vpop.f32.mrb[0].mxu0
        %1196 = vmatprep.mubr.bf16.mxu0 %v817
        %1197 = vmatmul.mubr.bf16.gmra.mrb[0].mxu0 %v816
        %v1198 = vpop.f32.mrb[0].mxu0
        %v1199 = vadd.f32 0.0, %v1198
        %v1200 = vpop.f32.mrb[0].mxu0
        %v1201 = vpop.f32.mrb[0].mxu0
        %v1202 = vadd.f32 0.0, %v1201
        %v1203 = vpop.f32.mrb[0].mxu0
        %1204 = vmatprep.mubr.bf16.mxu0 %v821
        %1205 = vmatmul.mubr.bf16.gmra.mrb[0].mxu0 %v820
        %v1206 = vpop.f32.mrb[0].mxu0
        %v1207 = vadd.f32 0.0, %v1206
        %v1208 = vpop.f32.mrb[0].mxu0
        %v1209 = vpop.f32.mrb[0].mxu0
        %v1210 = vadd.f32 0.0, %v1209
        %v1211 = vpop.f32.mrb[0].mxu0
        %1212 = vmatprep.mubr.bf16.mxu0 %v825
        %1213 = vmatmul.mubr.bf16.gmra.mrb[0].mxu0 %v824
        %v1214 = vpop.f32.mrb[0].mxu0
        %v1215 = vadd.f32 0.0, %v1214
        %v1216 = vpop.f32.mrb[0].mxu0
        %v1217 = vpop.f32.mrb[0].mxu0
        %v1218 = vadd.f32 0.0, %v1217
        %v1219 = vpop.f32.mrb[0].mxu0
        %1220 = vmatprep.mubr.bf16.mxu0 %v829
        %1221 = vmatmul.mubr.bf16.gmra.mrb[0].mxu0 %v828
        %v1222 = vpop.f32.mrb[0].mxu0
        %v1223 = vadd.f32 0.0, %v1222
        %v1224 = vpop.f32.mrb[0].mxu0
        %v1225 = vpop.f32.mrb[0].mxu0
        %v1226 = vadd.f32 0.0, %v1225
        %v1227 = vpop.f32.mrb[0].mxu0
        %1228 = vmatprep.mubr.bf16.mxu0 %v833
        %1229 = vmatmul.mubr.bf16.gmra.mrb[0].mxu0 %v832
        %v1230 = vpop.f32.mrb[0].mxu0
        %v1231 = vadd.f32 0.0, %v1230
        %v1232 = vpop.f32.mrb[0].mxu0
        %v1233 = vpop.f32.mrb[0].mxu0
        %v1234 = vadd.f32 0.0, %v1233
        %v1235 = vpop.f32.mrb[0].mxu0
        %1236 = vmatprep.mubr.bf16.mxu0 %v837
        %1237 = vmatmul.mubr.bf16.gmra.mrb[0].mxu0 %v836
        %v1238 = vpop.f32.mrb[0].mxu0
        %v1239 = vadd.f32 0.0, %v1238
        %v1240 = vpop.f32.mrb[0].mxu0
        %v1241 = vpop.f32.mrb[0].mxu0
        %v1242 = vadd.f32 0.0, %v1241
        %v1243 = vpop.f32.mrb[0].mxu0
        %1244 = vmatprep.mubr.bf16.mxu0 %v841
        %1245 = vmatmul.mubr.bf16.gmra.mrb[0].mxu0 %v840
        %v1246 = vpop.f32.mrb[0].mxu0
        %v1247 = vadd.f32 0.0, %v1246
        %v1248 = vpop.f32.mrb[0].mxu0
        %v1249 = vpop.f32.mrb[0].mxu0
        %v1250 = vadd.f32 0.0, %v1249
        %v1251 = vpop.f32.mrb[0].mxu0
        %1252 = vmatprep.mubr.bf16.mxu0 %v845
        %1253 = vmatmul.mubr.bf16.gmra.mrb[0].mxu0 %v844
        %v1254 = vpop.f32.mrb[0].mxu0
        %v1255 = vadd.f32 0.0, %v1254
        %v1256 = vpop.f32.mrb[0].mxu0
        %v1257 = vpop.f32.mrb[0].mxu0
        %v1258 = vadd.f32 0.0, %v1257
        %v1259 = vpop.f32.mrb[0].mxu0
        %1260 = vmatprep.mubr.bf16.mxu0 %v849
        %1261 = vmatmul.mubr.bf16.gmra.mrb[0].mxu0 %v848
        %v1262 = vpop.f32.mrb[0].mxu0
        %v1263 = vadd.f32 0.0, %v1262
        %v1264 = vpop.f32.mrb[0].mxu0
        %v1265 = vpop.f32.mrb[0].mxu0
        %v1266 = vadd.f32 0.0, %v1265
        %v1267 = vpop.f32.mrb[0].mxu0
        %1268 = vdwg.mxu0
        %1269 = vmatprep.subr.bf16.mxu0 0
        %1270 = vmatpush1.bf16.msra.mxu0 %v1060
        %1271 = vmatprep.subr.bf16.mxu0 0
        %1272 = vmatpush1.bf16.msra.mxu0 %v1061
        %1273 = vmatprep.subr.bf16.mxu0 0
        %1274 = vmatpush1.bf16.msra.mxu0 %v1062
        %1275 = vmatprep.subr.bf16.mxu0 0
        %1276 = vmatpush1.bf16.msra.mxu0 %v1063
        %1277 = vmatprep.subr.bf16.mxu0 0
        %1278 = vmatpush1.bf16.msra.mxu0 %v1064
        %1279 = vmatprep.subr.bf16.mxu0 0
        %1280 = vmatpush1.bf16.msra.mxu0 %v1065
        %1281 = vmatprep.subr.bf16.mxu0 0
        %1282 = vmatpush1.bf16.msra.mxu0 %v1066
        %1283 = vmatprep.subr.bf16.mxu0 0
        %1284 = vmatpush1.bf16.msra.mxu0 %v1067
        %1285 = vmatprep.subr.bf16.mxu0 0
        %1286 = vmatpush1.bf16.msra.mxu0 %v1068
        %1287 = vmatprep.subr.bf16.mxu0 0
        %1288 = vmatpush1.bf16.msra.mxu0 %v1069
        %1289 = vmatprep.subr.bf16.mxu0 0
        %1290 = vmatpush1.bf16.msra.mxu0 %v1070
        %1291 = vmatprep.subr.bf16.mxu0 0
        %1292 = vmatpush1.bf16.msra.mxu0 %v1071
        %1293 = vmatprep.subr.bf16.mxu0 0
        %1294 = vmatpush1.bf16.msra.mxu0 %v1072
        %1295 = vmatprep.subr.bf16.mxu0 0
        %1296 = vmatpush1.bf16.msra.mxu0 %v1073
        %1297 = vmatprep.subr.bf16.mxu0 0
        %1298 = vmatpush1.bf16.msra.mxu0 %v1074
        %1299 = vmatprep.subr.bf16.mxu0 0
        %1300 = vmatpush1.bf16.msra.mxu0 %v1075
        %1301 = vmatprep.mubr.bf16.mxu0 %v791
        %1302 = vmatmul.mubr.bf16.gmra.mrb[0].mxu0 %v790
        %v1303 = vpop.f32.mrb[0].mxu0
        %v1304 = vadd.f32 %v1143, %v1303
        %v1305 = vpop.f32.mrb[0].mxu0
        %v1306 = vpop.f32.mrb[0].mxu0
        %v1307 = vadd.f32 %v1146, %v1306
        %v1308 = vpop.f32.mrb[0].mxu0
        %1309 = vmatprep.mubr.bf16.mxu0 %v795
        %1310 = vmatmul.mubr.bf16.gmra.mrb[0].mxu0 %v794
        %v1311 = vpop.f32.mrb[0].mxu0
        %v1312 = vadd.f32 %v1151, %v1311
        %v1313 = vpop.f32.mrb[0].mxu0
        %v1314 = vpop.f32.mrb[0].mxu0
        %v1315 = vadd.f32 %v1154, %v1314
        %v1316 = vpop.f32.mrb[0].mxu0
        %1317 = vmatprep.mubr.bf16.mxu0 %v799
        %1318 = vmatmul.mubr.bf16.gmra.mrb[0].mxu0 %v798
        %v1319 = vpop.f32.mrb[0].mxu0
        %v1320 = vadd.f32 %v1159, %v1319
        %v1321 = vpop.f32.mrb[0].mxu0
        %v1322 = vpop.f32.mrb[0].mxu0
        %v1323 = vadd.f32 %v1162, %v1322
        %v1324 = vpop.f32.mrb[0].mxu0
        %1325 = vmatprep.mubr.bf16.mxu0 %v803
        %1326 = vmatmul.mubr.bf16.gmra.mrb[0].mxu0 %v802
        %v1327 = vpop.f32.mrb[0].mxu0
        %v1328 = vadd.f32 %v1167, %v1327
        %v1329 = vpop.f32.mrb[0].mxu0
        %v1330 = vpop.f32.mrb[0].mxu0
        %v1331 = vadd.f32 %v1170, %v1330
        %v1332 = vpop.f32.mrb[0].mxu0
        %1333 = vmatprep.mubr.bf16.mxu0 %v807
        %1334 = vmatmul.mubr.bf16.gmra.mrb[0].mxu0 %v806
        %v1335 = vpop.f32.mrb[0].mxu0
        %v1336 = vadd.f32 %v1175, %v1335
        %v1337 = vpop.f32.mrb[0].mxu0
        %v1338 = vpop.f32.mrb[0].mxu0
        %v1339 = vadd.f32 %v1178, %v1338
        %v1340 = vpop.f32.mrb[0].mxu0
        %1341 = vmatprep.mubr.bf16.mxu0 %v811
        %1342 = vmatmul.mubr.bf16.gmra.mrb[0].mxu0 %v810
        %v1343 = vpop.f32.mrb[0].mxu0
        %v1344 = vadd.f32 %v1183, %v1343
        %v1345 = vpop.f32.mrb[0].mxu0
        %v1346 = vpop.f32.mrb[0].mxu0
        %v1347 = vadd.f32 %v1186, %v1346
        %v1348 = vpop.f32.mrb[0].mxu0
        %1349 = vmatprep.mubr.bf16.mxu0 %v815
        %1350 = vmatmul.mubr.bf16.gmra.mrb[0].mxu0 %v814
        %v1351 = vpop.f32.mrb[0].mxu0
        %v1352 = vadd.f32 %v1191, %v1351
        %v1353 = vpop.f32.mrb[0].mxu0
        %v1354 = vpop.f32.mrb[0].mxu0
        %v1355 = vadd.f32 %v1194, %v1354
        %v1356 = vpop.f32.mrb[0].mxu0
        %1357 = vmatprep.mubr.bf16.mxu0 %v819
        %1358 = vmatmul.mubr.bf16.gmra.mrb[0].mxu0 %v818
        %v1359 = vpop.f32.mrb[0].mxu0
        %v1360 = vadd.f32 %v1199, %v1359
        %v1361 = vpop.f32.mrb[0].mxu0
        %v1362 = vpop.f32.mrb[0].mxu0
        %v1363 = vadd.f32 %v1202, %v1362
        %v1364 = vpop.f32.mrb[0].mxu0
        %1365 = vmatprep.mubr.bf16.mxu0 %v823
        %1366 = vmatmul.mubr.bf16.gmra.mrb[0].mxu0 %v822
        %v1367 = vpop.f32.mrb[0].mxu0
        %v1368 = vadd.f32 %v1207, %v1367
        %v1369 = vpop.f32.mrb[0].mxu0
        %v1370 = vpop.f32.mrb[0].mxu0
        %v1371 = vadd.f32 %v1210, %v1370
        %v1372 = vpop.f32.mrb[0].mxu0
        %1373 = vmatprep.mubr.bf16.mxu0 %v827
        %1374 = vmatmul.mubr.bf16.gmra.mrb[0].mxu0 %v826
        %v1375 = vpop.f32.mrb[0].mxu0
        %v1376 = vadd.f32 %v1215, %v1375
        %v1377 = vpop.f32.mrb[0].mxu0
        %v1378 = vpop.f32.mrb[0].mxu0
        %v1379 = vadd.f32 %v1218, %v1378
        %v1380 = vpop.f32.mrb[0].mxu0
        %1381 = vmatprep.mubr.bf16.mxu0 %v831
        %1382 = vmatmul.mubr.bf16.gmra.mrb[0].mxu0 %v830
        %v1383 = vpop.f32.mrb[0].mxu0
        %v1384 = vadd.f32 %v1223, %v1383
        %v1385 = vpop.f32.mrb[0].mxu0
        %v1386 = vpop.f32.mrb[0].mxu0
        %v1387 = vadd.f32 %v1226, %v1386
        %v1388 = vpop.f32.mrb[0].mxu0
        %1389 = vmatprep.mubr.bf16.mxu0 %v835
        %1390 = vmatmul.mubr.bf16.gmra.mrb[0].mxu0 %v834
        %v1391 = vpop.f32.mrb[0].mxu0
        %v1392 = vadd.f32 %v1231, %v1391
        %v1393 = vpop.f32.mrb[0].mxu0
        %v1394 = vpop.f32.mrb[0].mxu0
        %v1395 = vadd.f32 %v1234, %v1394
        %v1396 = vpop.f32.mrb[0].mxu0
        %1397 = vmatprep.mubr.bf16.mxu0 %v839
        %1398 = vmatmul.mubr.bf16.gmra.mrb[0].mxu0 %v838
        %v1399 = vpop.f32.mrb[0].mxu0
        %v1400 = vadd.f32 %v1239, %v1399
        %v1401 = vpop.f32.mrb[0].mxu0
        %v1402 = vpop.f32.mrb[0].mxu0
        %v1403 = vadd.f32 %v1242, %v1402
        %v1404 = vpop.f32.mrb[0].mxu0
        %1405 = vmatprep.mubr.bf16.mxu0 %v843
        %1406 = vmatmul.mubr.bf16.gmra.mrb[0].mxu0 %v842
        %v1407 = vpop.f32.mrb[0].mxu0
        %v1408 = vadd.f32 %v1247, %v1407
        %v1409 = vpop.f32.mrb[0].mxu0
        %v1410 = vpop.f32.mrb[0].mxu0
        %v1411 = vadd.f32 %v1250, %v1410
        %v1412 = vpop.f32.mrb[0].mxu0
        %1413 = vmatprep.mubr.bf16.mxu0 %v847
        %1414 = vmatmul.mubr.bf16.gmra.mrb[0].mxu0 %v846
        %v1415 = vpop.f32.mrb[0].mxu0
        %v1416 = vadd.f32 %v1255, %v1415
        %v1417 = vpop.f32.mrb[0].mxu0
        %v1418 = vpop.f32.mrb[0].mxu0
        %v1419 = vadd.f32 %v1258, %v1418
        %v1420 = vpop.f32.mrb[0].mxu0
        %1421 = vmatprep.mubr.bf16.mxu0 %v851
        %1422 = vmatmul.mubr.bf16.gmra.mrb[0].mxu0 %v850
        %v1423 = vpop.f32.mrb[0].mxu0
        %v1424 = vadd.f32 %v1263, %v1423
        %v1425 = vpop.f32.mrb[0].mxu0
        %v1426 = vpop.f32.mrb[0].mxu0
        %v1427 = vadd.f32 %v1266, %v1426
        %v1428 = vpop.f32.mrb[0].mxu0
        %1429 = vdwg.mxu0
        %v1430 = vadd.f32 %v436, %v1304
        %v1431 = vadd.f32 %v437, %v1307
        %v1432 = vadd.f32 %v438, %v1312
        %v1433 = vadd.f32 %v439, %v1315
        %v1434 = vadd.f32 %v440, %v1320
        %v1435 = vadd.f32 %v441, %v1323
        %v1436 = vadd.f32 %v442, %v1328
        %v1437 = vadd.f32 %v443, %v1331
        %v1438 = vadd.f32 %v444, %v1336
        %v1439 = vadd.f32 %v445, %v1339
        %v1440 = vadd.f32 %v446, %v1344
        %v1441 = vadd.f32 %v447, %v1347
        %v1442 = vadd.f32 %v448, %v1352
        %v1443 = vadd.f32 %v449, %v1355
        %v1444 = vadd.f32 %v450, %v1360
        %v1445 = vadd.f32 %v451, %v1363
        %v1446 = vadd.f32 %v452, %v1368
        %v1447 = vadd.f32 %v453, %v1371
        %v1448 = vadd.f32 %v454, %v1376
        %v1449 = vadd.f32 %v455, %v1379
        %v1450 = vadd.f32 %v456, %v1384
        %v1451 = vadd.f32 %v457, %v1387
        %v1452 = vadd.f32 %v458, %v1392
        %v1453 = vadd.f32 %v459, %v1395
        %v1454 = vadd.f32 %v460, %v1400
        %v1455 = vadd.f32 %v461, %v1403
        %v1456 = vadd.f32 %v462, %v1408
        %v1457 = vadd.f32 %v463, %v1411
        %v1458 = vadd.f32 %v464, %v1416
        %v1459 = vadd.f32 %v465, %v1419
        %v1460 = vadd.f32 %v466, %v1424
        %v1461 = vadd.f32 %v467, %v1427
        %1462 = vst [vmem:[#allocation2] sm:$0xff] %v1430
        %1463 = vst [vmem:[#allocation2 + $0x8] sm:$0xff] %v1431
        %1464 = vst [vmem:[#allocation2 + $0x10] sm:$0xff] %v1432
        %1465 = vst [vmem:[#allocation2 + $0x18] sm:$0xff] %v1433
        %1466 = vst [vmem:[#allocation2 + $0x20] sm:$0xff] %v1434
        %1467 = vst [vmem:[#allocation2 + $0x28] sm:$0xff] %v1435
        %1468 = vst [vmem:[#allocation2 + $0x30] sm:$0xff] %v1436
        %1469 = vst [vmem:[#allocation2 + $0x38] sm:$0xff] %v1437
        %1470 = vst [vmem:[#allocation2 + $0x40] sm:$0xff] %v1438
        %1471 = vst [vmem:[#allocation2 + $0x48] sm:$0xff] %v1439
        %1472 = vst [vmem:[#allocation2 + $0x50] sm:$0xff] %v1440
        %1473 = vst [vmem:[#allocation2 + $0x58] sm:$0xff] %v1441
        %1474 = vst [vmem:[#allocation2 + $0x60] sm:$0xff] %v1442
        %1475 = vst [vmem:[#allocation2 + $0x68] sm:$0xff] %v1443
        %1476 = vst [vmem:[#allocation2 + $0x70] sm:$0xff] %v1444
        %1477 = vst [vmem:[#allocation2 + $0x78] sm:$0xff] %v1445
        %1478 = vst [vmem:[#allocation2 + $0x80] sm:$0xff] %v1446
        %1479 = vst [vmem:[#allocation2 + $0x88] sm:$0xff] %v1447
        %1480 = vst [vmem:[#allocation2 + $0x90] sm:$0xff] %v1448
        %1481 = vst [vmem:[#allocation2 + $0x98] sm:$0xff] %v1449
        %1482 = vst [vmem:[#allocation2 + $0xa0] sm:$0xff] %v1450
        %1483 = vst [vmem:[#allocation2 + $0xa8] sm:$0xff] %v1451
        %1484 = vst [vmem:[#allocation2 + $0xb0] sm:$0xff] %v1452
        %1485 = vst [vmem:[#allocation2 + $0xb8] sm:$0xff] %v1453
        %1486 = vst [vmem:[#allocation2 + $0xc0] sm:$0xff] %v1454
        %1487 = vst [vmem:[#allocation2 + $0xc8] sm:$0xff] %v1455
        %1488 = vst [vmem:[#allocation2 + $0xd0] sm:$0xff] %v1456
        %1489 = vst [vmem:[#allocation2 + $0xd8] sm:$0xff] %v1457
        %1490 = vst [vmem:[#allocation2 + $0xe0] sm:$0xff] %v1458
        %1491 = vst [vmem:[#allocation2 + $0xe8] sm:$0xff] %v1459
        %1492 = vst [vmem:[#allocation2 + $0xf0] sm:$0xff] %v1460
        %1493 = vst [vmem:[#allocation2 + $0xf8] sm:$0xff] %v1461
        %p1494 = scmp.eq.s32.totalorder %s21, 1
        // Predicated region
        $region60: #{main_model_step.12} parent=50 // pred_check
          %p1495 = pneg %p1494
        $region61: #{main_model_step.12} parent=50 // pred_check_branch
          %1497 = sbr.rel (%p1495) target = $region63
        $region62: #{main_model_step.12} parent=50 // pred_region
          %v1498 = vld [vmem:[#allocation2] sm:$0xff]
          %v1499 = vld [vmem:[#allocation2 + $0x8] sm:$0xff]
          %v1500 = vld [vmem:[#allocation2 + $0x10] sm:$0xff]
          %v1501 = vld [vmem:[#allocation2 + $0x18] sm:$0xff]
          %v1502 = vld [vmem:[#allocation2 + $0x20] sm:$0xff]
          %v1503 = vld [vmem:[#allocation2 + $0x28] sm:$0xff]
          %v1504 = vld [vmem:[#allocation2 + $0x30] sm:$0xff]
          %v1505 = vld [vmem:[#allocation2 + $0x38] sm:$0xff]
          %v1506 = vld [vmem:[#allocation2 + $0x40] sm:$0xff]
          %v1507 = vld [vmem:[#allocation2 + $0x48] sm:$0xff]
          %v1508 = vld [vmem:[#allocation2 + $0x50] sm:$0xff]
          %v1509 = vld [vmem:[#allocation2 + $0x58] sm:$0xff]
          %v1510 = vld [vmem:[#allocation2 + $0x60] sm:$0xff]
          %v1511 = vld [vmem:[#allocation2 + $0x68] sm:$0xff]
          %v1512 = vld [vmem:[#allocation2 + $0x70] sm:$0xff]
          %v1513 = vld [vmem:[#allocation2 + $0x78] sm:$0xff]
          %v1514 = vld [vmem:[#allocation2 + $0x80] sm:$0xff]
          %v1515 = vld [vmem:[#allocation2 + $0x88] sm:$0xff]
          %v1516 = vld [vmem:[#allocation2 + $0x90] sm:$0xff]
          %v1517 = vld [vmem:[#allocation2 + $0x98] sm:$0xff]
          %v1518 = vld [vmem:[#allocation2 + $0xa0] sm:$0xff]
          %v1519 = vld [vmem:[#allocation2 + $0xa8] sm:$0xff]
          %v1520 = vld [vmem:[#allocation2 + $0xb0] sm:$0xff]
          %v1521 = vld [vmem:[#allocation2 + $0xb8] sm:$0xff]
          %v1522 = vld [vmem:[#allocation2 + $0xc0] sm:$0xff]
          %v1523 = vld [vmem:[#allocation2 + $0xc8] sm:$0xff]
          %v1524 = vld [vmem:[#allocation2 + $0xd0] sm:$0xff]
          %v1525 = vld [vmem:[#allocation2 + $0xd8] sm:$0xff]
          %v1526 = vld [vmem:[#allocation2 + $0xe0] sm:$0xff]
          %v1527 = vld [vmem:[#allocation2 + $0xe8] sm:$0xff]
          %v1528 = vld [vmem:[#allocation2 + $0xf0] sm:$0xff]
          %v1529 = vld [vmem:[#allocation2 + $0xf8] sm:$0xff]
          %v1530 = vld [vmem:[%s389] sm:$0x1]
          %v1532 = vlaneseq
          %v1533 = vshrl.u32 %v1532, 7
          %v1534 = vsub.s32 0, %v1533
          %v1535 = vrot.slane %v1530, %v1534
          %v1537 = vadd.f32 %v1498, %v1535
          %v1538 = vadd.f32 %v1499, %v1535
          %v1539 = vadd.f32 %v1500, %v1535
          %v1540 = vadd.f32 %v1501, %v1535
          %v1541 = vadd.f32 %v1502, %v1535
          %v1542 = vadd.f32 %v1503, %v1535
          %v1543 = vadd.f32 %v1504, %v1535
          %v1544 = vadd.f32 %v1505, %v1535
          %v1545 = vadd.f32 %v1506, %v1535
          %v1546 = vadd.f32 %v1507, %v1535
          %v1547 = vadd.f32 %v1508, %v1535
          %v1548 = vadd.f32 %v1509, %v1535
          %v1549 = vadd.f32 %v1510, %v1535
          %v1550 = vadd.f32 %v1511, %v1535
          %v1551 = vadd.f32 %v1512, %v1535
          %v1552 = vadd.f32 %v1513, %v1535
          %v1553 = vadd.f32 %v1514, %v1535
          %v1554 = vadd.f32 %v1515, %v1535
          %v1555 = vadd.f32 %v1516, %v1535
          %v1556 = vadd.f32 %v1517, %v1535
          %v1557 = vadd.f32 %v1518, %v1535
          %v1558 = vadd.f32 %v1519, %v1535
          %v1559 = vadd.f32 %v1520, %v1535
          %v1560 = vadd.f32 %v1521, %v1535
          %v1561 = vadd.f32 %v1522, %v1535
          %v1562 = vadd.f32 %v1523, %v1535
          %v1563 = vadd.f32 %v1524, %v1535
          %v1564 = vadd.f32 %v1525, %v1535
          %v1565 = vadd.f32 %v1526, %v1535
          %v1566 = vadd.f32 %v1527, %v1535
          %v1567 = vadd.f32 %v1528, %v1535
          %v1568 = vadd.f32 %v1529, %v1535
          %v1569 = vpack.c.bf16 %v1538, %v1537
          %v1570 = vpack.c.bf16 %v1540, %v1539
          %v1571 = vpack.c.bf16 %v1542, %v1541
          %v1572 = vpack.c.bf16 %v1544, %v1543
          %v1573 = vpack.c.bf16 %v1546, %v1545
          %v1574 = vpack.c.bf16 %v1548, %v1547
          %v1575 = vpack.c.bf16 %v1550, %v1549
          %v1576 = vpack.c.bf16 %v1552, %v1551
          %v1577 = vpack.c.bf16 %v1554, %v1553
          %v1578 = vpack.c.bf16 %v1556, %v1555
          %v1579 = vpack.c.bf16 %v1558, %v1557
          %v1580 = vpack.c.bf16 %v1560, %v1559
          %v1581 = vpack.c.bf16 %v1562, %v1561
          %v1582 = vpack.c.bf16 %v1564, %v1563
          %v1583 = vpack.c.bf16 %v1566, %v1565
          %v1584 = vpack.c.bf16 %v1568, %v1567
          %v1601 = vunpack.c.l.b16 %v1569
          %v1602 = vunpack.c.h.b16 %v1569
          %v1603 = vunpack.c.l.b16 %v1570
          %v1604 = vunpack.c.h.b16 %v1570
          %v1605 = vunpack.c.l.b16 %v1571
          %v1606 = vunpack.c.h.b16 %v1571
          %v1607 = vunpack.c.l.b16 %v1572
          %v1608 = vunpack.c.h.b16 %v1572
          %v1609 = vunpack.c.l.b16 %v1573
          %v1610 = vunpack.c.h.b16 %v1573
          %v1611 = vunpack.c.l.b16 %v1574
          %v1612 = vunpack.c.h.b16 %v1574
          %v1613 = vunpack.c.l.b16 %v1575
          %v1614 = vunpack.c.h.b16 %v1575
          %v1615 = vunpack.c.l.b16 %v1576
          %v1616 = vunpack.c.h.b16 %v1576
          %v1617 = vunpack.c.l.b16 %v1577
          %v1618 = vunpack.c.h.b16 %v1577
          %v1619 = vunpack.c.l.b16 %v1578
          %v1620 = vunpack.c.h.b16 %v1578
          %v1621 = vunpack.c.l.b16 %v1579
          %v1622 = vunpack.c.h.b16 %v1579
          %v1623 = vunpack.c.l.b16 %v1580
          %v1624 = vunpack.c.h.b16 %v1580
          %v1625 = vunpack.c.l.b16 %v1581
          %v1626 = vunpack.c.h.b16 %v1581
          %v1627 = vunpack.c.l.b16 %v1582
          %v1628 = vunpack.c.h.b16 %v1582
          %v1629 = vunpack.c.l.b16 %v1583
          %v1630 = vunpack.c.h.b16 %v1583
          %v1631 = vunpack.c.l.b16 %v1584
          %v1632 = vunpack.c.h.b16 %v1584
          %v1633 = vpack.c.b16 %v1601, %v1601
          %v1634 = vpack.c.b16 %v1602, %v1602
          %v1635 = vpack.c.b16 %v1603, %v1603
          %v1636 = vpack.c.b16 %v1604, %v1604
          %v1637 = vpack.c.b16 %v1605, %v1605
          %v1638 = vpack.c.b16 %v1606, %v1606
          %v1639 = vpack.c.b16 %v1607, %v1607
          %v1640 = vpack.c.b16 %v1608, %v1608
          %v1641 = vpack.c.b16 %v1609, %v1609
          %v1642 = vpack.c.b16 %v1610, %v1610
          %v1643 = vpack.c.b16 %v1611, %v1611
          %v1644 = vpack.c.b16 %v1612, %v1612
          %v1645 = vpack.c.b16 %v1613, %v1613
          %v1646 = vpack.c.b16 %v1614, %v1614
          %v1647 = vpack.c.b16 %v1615, %v1615
          %v1648 = vpack.c.b16 %v1616, %v1616
          %v1649 = vpack.c.b16 %v1617, %v1617
          %v1650 = vpack.c.b16 %v1618, %v1618
          %v1651 = vpack.c.b16 %v1619, %v1619
          %v1652 = vpack.c.b16 %v1620, %v1620
          %v1653 = vpack.c.b16 %v1621, %v1621
          %v1654 = vpack.c.b16 %v1622, %v1622
          %v1655 = vpack.c.b16 %v1623, %v1623
          %v1656 = vpack.c.b16 %v1624, %v1624
          %v1657 = vpack.c.b16 %v1625, %v1625
          %v1658 = vpack.c.b16 %v1626, %v1626
          %v1659 = vpack.c.b16 %v1627, %v1627
          %v1660 = vpack.c.b16 %v1628, %v1628
          %v1661 = vpack.c.b16 %v1629, %v1629
          %v1662 = vpack.c.b16 %v1630, %v1630
          %v1663 = vpack.c.b16 %v1631, %v1631
          %v1664 = vpack.c.b16 %v1632, %v1632
          %1697 = vst [vmem:[%s397] sm:$0xf] %v1633
          %1698 = vst [vmem:[%s397 + $0x4] sm:$0xf] %v1634
          %1699 = vst [vmem:[%s397 + $0x8] sm:$0xf] %v1635
          %1700 = vst [vmem:[%s397 + $0xc] sm:$0xf] %v1636
          %1701 = vst [vmem:[%s397 + $0x10] sm:$0xf] %v1637
          %1702 = vst [vmem:[%s397 + $0x14] sm:$0xf] %v1638
          %1703 = vst [vmem:[%s397 + $0x18] sm:$0xf] %v1639
          %1704 = vst [vmem:[%s397 + $0x1c] sm:$0xf] %v1640
          %1705 = vst [vmem:[%s397 + $0x20] sm:$0xf] %v1641
          %1706 = vst [vmem:[%s397 + $0x24] sm:$0xf] %v1642
          %1707 = vst [vmem:[%s397 + $0x28] sm:$0xf] %v1643
          %1708 = vst [vmem:[%s397 + $0x2c] sm:$0xf] %v1644
          %1709 = vst [vmem:[%s397 + $0x30] sm:$0xf] %v1645
          %1710 = vst [vmem:[%s397 + $0x34] sm:$0xf] %v1646
          %1711 = vst [vmem:[%s397 + $0x38] sm:$0xf] %v1647
          %1712 = vst [vmem:[%s397 + $0x3c] sm:$0xf] %v1648
          %1713 = vst [vmem:[%s397 + $0x40] sm:$0xf] %v1649
          %1714 = vst [vmem:[%s397 + $0x44] sm:$0xf] %v1650
          %1715 = vst [vmem:[%s397 + $0x48] sm:$0xf] %v1651
          %1716 = vst [vmem:[%s397 + $0x4c] sm:$0xf] %v1652
          %1717 = vst [vmem:[%s397 + $0x50] sm:$0xf] %v1653
          %1718 = vst [vmem:[%s397 + $0x54] sm:$0xf] %v1654
          %1719 = vst [vmem:[%s397 + $0x58] sm:$0xf] %v1655
          %1720 = vst [vmem:[%s397 + $0x5c] sm:$0xf] %v1656
          %1721 = vst [vmem:[%s397 + $0x60] sm:$0xf] %v1657
          %1722 = vst [vmem:[%s397 + $0x64] sm:$0xf] %v1658
          %1723 = vst [vmem:[%s397 + $0x68] sm:$0xf] %v1659
          %1724 = vst [vmem:[%s397 + $0x6c] sm:$0xf] %v1660
          %1725 = vst [vmem:[%s397 + $0x70] sm:$0xf] %v1661
          %1726 = vst [vmem:[%s397 + $0x74] sm:$0xf] %v1662
          %1727 = vst [vmem:[%s397 + $0x78] sm:$0xf] %v1663
          %1728 = vst [vmem:[%s397 + $0x7c] sm:$0xf] %v1664
        $region63: #{main_model_step.12} parent=50 // pred_fallthru
          _
        %s1729 = smul.u32 32, %s19
        %p1730 = scmp.lt.s32.totalorder %s1729, 31
        %s1731 = scalar_select %p1730, %s1729, 31
        %p1732 = scmp.lt.s32.totalorder %s20, 0
        %s1733 = scalar_select %p1732, %s20, 0
        %s1734 = sadd.s32 %s1733, %s1731
        %s1735 = smul.addr %s1734, 4
        %s1736 = scalar_lea.vmem %s3, %s1735
        // Predicated region
        $region64: #{main_model_step.12} parent=50 // pred_check
          %p1737 = pneg %p135
        $region65: #{main_model_step.12} parent=50 // pred_check_branch
          %1739 = sbr.rel (%p1737) target = $region67
        $region66: #{main_model_step.12} parent=50 // pred_region
          %s1740 = smul.u32 32, %s19
        $region67: #{main_model_step.12} parent=50 // pred_fallthru
          _
        // Predicated region
        $region68: #{main_model_step.12} parent=50 // pred_check
          %p1741 = pneg %p135
        $region69: #{main_model_step.12} parent=50 // pred_check_branch
          %1743 = sbr.rel (%p1741) target = $region71
        $region70: #{main_model_step.12} parent=50 // pred_region
          %s1744 = smul.u32 32, %s19
          %p1745 = scmp.lt.s32.totalorder %s1744, 31
          %s1746 = scalar_select %p1745, %s1744, 31
          %p1747 = scmp.lt.s32.totalorder %s20, 0
          %s1748 = scalar_select %p1747, %s20, 0
          %s1749 = sadd.s32 %s1748, %s1746
          %s1750 = smul.addr %s1749, 4
          %s1751 = scalar_lea.vmem %s3, %s1750
        $region71: #{main_model_step.12} parent=50 // pred_fallthru
          _
      $region51: #{main_model_step.12} parent=5 // pred_fallthru
        _
      %p1752 = scmp.le.s32.totalorder 2, %s9
      // Predicated region
      $region72: #{main_model_step.12} parent=5 // pred_check
        %p1753 = pneg %p1752
      $region73: #{main_model_step.12} parent=5 // pred_check_branch
        %1755 = sbr.rel (%p1753) target = $region75
      $region74: #{main_model_step.12} parent=5 // pred_region
        %s1756 = ssub.s32 %s9, 2
      $region75: #{main_model_step.12} parent=5 // pred_fallthru
        _
    $region6: #{main_model_step.12} parent=1 // loop_footer
      %s13 = sadd.s32 1, %s9
    $region7: #{main_model_step.12} parent=1 // loop_footer_branch
      %8 = sbr.rel target = $region3
    $region8: #{main_model_step.12} parent=1 // loop_exit
      _

// kernel: main_model_step.15
$region0: #{main_model_step.15}
  #allocation0 [shape = 'u32[]', space=smem, size = 0x4, offset = 0x4, fixed_abs, tag = 'smem constant byte address 0x4 - core index']
  #allocation1 [shape = 'u32[144,128]{1,0:T(1,128)}', space=vmem, size = 0x12000, scoped, tag = 'internal scratch']
  %s0 = inlined_call_operand.vmem [shape: bf16[64,256], index: 0, kind: input, shape index: {}]
  %s1 = inlined_call_operand.vmem [shape: f32[1,256], index: 1, kind: input, shape index: {}]
  %s2 = inlined_call_operand.vmem [shape: f32[1,256], index: 2, kind: input, shape index: {}]
  %s3 = inlined_call_operand.vmem [shape: bf16[64,256], index: 3, kind: output, shape index: {}]
  %s4 = sld [smem:[#allocation0]]
  $region22: #{main_model_step.15} parent=0
    _
  %s6 = ssub.s32 1, %s4
  %s7 = scalar_select 0, %s6, %s4
  // Predicated region
  $region2: #{main_model_step.15} parent=0 // pred_check
    _
  $region3: #{main_model_step.15} parent=0 // pred_check_branch
    %9 = sbr.rel (0) target = $region5
  $region4: #{main_model_step.15} parent=0 // pred_region
    _
  $region5: #{main_model_step.15} parent=0 // pred_fallthru
    _
  // Predicated region
  $region6: #{main_model_step.15} parent=0 // pred_check
    _
  $region7: #{main_model_step.15} parent=0 // pred_check_branch
    %11 = sbr.rel (0) target = $region9
  $region8: #{main_model_step.15} parent=0 // pred_region
    _
  $region9: #{main_model_step.15} parent=0 // pred_fallthru
    _
  // Predicated region
  $region10: #{main_model_step.15} parent=0 // pred_check
    _
  $region11: #{main_model_step.15} parent=0 // pred_check_branch
    %13 = sbr.rel (0) target = $region13
  $region12: #{main_model_step.15} parent=0 // pred_region
    _
  $region13: #{main_model_step.15} parent=0 // pred_fallthru
    _
  %v14 = vld [vmem:[%s0] sm:$0xff]
  %v15 = vld [vmem:[%s0 + $0x8] sm:$0xff]
  %v16 = vld [vmem:[%s0 + $0x10] sm:$0xff]
  %v17 = vld [vmem:[%s0 + $0x18] sm:$0xff]
  %v18 = vld [vmem:[%s0 + $0x20] sm:$0xff]
  %v19 = vld [vmem:[%s0 + $0x28] sm:$0xff]
  %v20 = vld [vmem:[%s0 + $0x30] sm:$0xff]
  %v21 = vld [vmem:[%s0 + $0x38] sm:$0xff]
  %v22 = vunpack.c.l.bf16 %v14
  %v23 = vunpack.c.h.bf16 %v14
  %v24 = vunpack.c.l.bf16 %v15
  %v25 = vunpack.c.h.bf16 %v15
  %v26 = vunpack.c.l.bf16 %v16
  %v27 = vunpack.c.h.bf16 %v16
  %v28 = vunpack.c.l.bf16 %v17
  %v29 = vunpack.c.h.bf16 %v17
  %v30 = vunpack.c.l.bf16 %v18
  %v31 = vunpack.c.h.bf16 %v18
  %v32 = vunpack.c.l.bf16 %v19
  %v33 = vunpack.c.h.bf16 %v19
  %v34 = vunpack.c.l.bf16 %v20
  %v35 = vunpack.c.h.bf16 %v20
  %v36 = vunpack.c.l.bf16 %v21
  %v37 = vunpack.c.h.bf16 %v21
  %v38 = vadd.f32 %v22, %v24
  %v39 = vadd.f32 %v38, %v26
  %v40 = vadd.f32 %v39, %v28
  %v41 = vadd.f32 %v40, %v30
  %v42 = vadd.f32 %v41, %v32
  %v43 = vadd.f32 %v42, %v34
  %v44 = vadd.f32 %v43, %v36
  %v45 = vrot.slane %v44, 4
  %v46 = vadd.f32 %v44, %v45
  %v47 = vrot.slane %v46, 2
  %v48 = vadd.f32 %v46, %v47
  %v49 = vrot.slane %v48, 1
  %v50 = vadd.f32 %v48, %v49
  %v51 = vadd.f32 %v23, %v25
  %v52 = vadd.f32 %v51, %v27
  %v53 = vadd.f32 %v52, %v29
  %v54 = vadd.f32 %v53, %v31
  %v55 = vadd.f32 %v54, %v33
  %v56 = vadd.f32 %v55, %v35
  %v57 = vadd.f32 %v56, %v37
  %v58 = vrot.slane %v57, 4
  %v59 = vadd.f32 %v57, %v58
  %v60 = vrot.slane %v59, 2
  %v61 = vadd.f32 %v59, %v60
  %v62 = vrot.slane %v61, 1
  %v63 = vadd.f32 %v61, %v62
  %v64 = vmul.f32 %v22, %v22
  %v65 = vmul.f32 %v23, %v23
  %v66 = vmul.f32 %v24, %v24
  %v67 = vmul.f32 %v25, %v25
  %v68 = vmul.f32 %v26, %v26
  %v69 = vmul.f32 %v27, %v27
  %v70 = vmul.f32 %v28, %v28
  %v71 = vmul.f32 %v29, %v29
  %v72 = vmul.f32 %v30, %v30
  %v73 = vmul.f32 %v31, %v31
  %v74 = vmul.f32 %v32, %v32
  %v75 = vmul.f32 %v33, %v33
  %v76 = vmul.f32 %v34, %v34
  %v77 = vmul.f32 %v35, %v35
  %v78 = vmul.f32 %v36, %v36
  %v79 = vmul.f32 %v37, %v37
  %v80 = vadd.f32 %v64, %v66
  %v81 = vadd.f32 %v80, %v68
  %v82 = vadd.f32 %v81, %v70
  %v83 = vadd.f32 %v82, %v72
  %v84 = vadd.f32 %v83, %v74
  %v85 = vadd.f32 %v84, %v76
  %v86 = vadd.f32 %v85, %v78
  %v87 = vrot.slane %v86, 4
  %v88 = vadd.f32 %v86, %v87
  %v89 = vrot.slane %v88, 2
  %v90 = vadd.f32 %v88, %v89
  %v91 = vrot.slane %v90, 1
  %v92 = vadd.f32 %v90, %v91
  %v93 = vadd.f32 %v65, %v67
  %v94 = vadd.f32 %v93, %v69
  %v95 = vadd.f32 %v94, %v71
  %v96 = vadd.f32 %v95, %v73
  %v97 = vadd.f32 %v96, %v75
  %v98 = vadd.f32 %v97, %v77
  %v99 = vadd.f32 %v98, %v79
  %v100 = vrot.slane %v99, 4
  %v101 = vadd.f32 %v99, %v100
  %v102 = vrot.slane %v101, 2
  %v103 = vadd.f32 %v101, %v102
  %v104 = vrot.slane %v103, 1
  %v105 = vadd.f32 %v103, %v104
  %v106 = vmul.f32 %v50, 0.015625
  %v107 = vmul.f32 %v63, 0.015625
  %v108 = vmul.f32 %v92, 0.015625
  %v109 = vmul.f32 %v105, 0.015625
  %v110 = vmul.f32 %v106, %v106
  %v111 = vmul.f32 %v107, %v107
  %v112 = vsub.f32 %v108, %v110
  %v113 = vsub.f32 %v109, %v111
  %v114 = vsub.f32 %v22, %v106
  %v115 = vsub.f32 %v23, %v107
  %v116 = vsub.f32 %v24, %v106
  %v117 = vsub.f32 %v25, %v107
  %v118 = vsub.f32 %v26, %v106
  %v119 = vsub.f32 %v27, %v107
  %v120 = vsub.f32 %v28, %v106
  %v121 = vsub.f32 %v29, %v107
  %v122 = vsub.f32 %v30, %v106
  %v123 = vsub.f32 %v31, %v107
  %v124 = vsub.f32 %v32, %v106
  %v125 = vsub.f32 %v33, %v107
  %v126 = vsub.f32 %v34, %v106
  %v127 = vsub.f32 %v35, %v107
  %v128 = vsub.f32 %v36, %v106
  %v129 = vsub.f32 %v37, %v107
  %v130 = vadd.f32 %v112, 1e-05
  %v131 = vadd.f32 %v113, 1e-05
  %v132 = vrsqrt.pop %v130
  %v133 = vrsqrt.pop %v131
  %v134 = vmul.f32 %v114, %v132
  %v135 = vmul.f32 %v115, %v133
  %v136 = vmul.f32 %v116, %v132
  %v137 = vmul.f32 %v117, %v133
  %v138 = vmul.f32 %v118, %v132
  %v139 = vmul.f32 %v119, %v133
  %v140 = vmul.f32 %v120, %v132
  %v141 = vmul.f32 %v121, %v133
  %v142 = vmul.f32 %v122, %v132
  %v143 = vmul.f32 %v123, %v133
  %v144 = vmul.f32 %v124, %v132
  %v145 = vmul.f32 %v125, %v133
  %v146 = vmul.f32 %v126, %v132
  %v147 = vmul.f32 %v127, %v133
  %v148 = vmul.f32 %v128, %v132
  %v149 = vmul.f32 %v129, %v133
  %v150 = vld [vmem:[%s1] sm:$0x3]
  %v152 = vlaneseq
  %v153 = vshrl.u32 %v152, 7
  %v154 = vsub.s32 0, %v153
  %v155 = vrot.slane %v150, %v154
  %v156 = vlaneseq
  %v157 = vshrl.u32 %v156, 7
  %v158 = vsub.s32 1, %v157
  %v159 = vrot.slane %v150, %v158
  %v162 = vmul.f32 %v134, %v155
  %v163 = vmul.f32 %v135, %v159
  %v164 = vmul.f32 %v136, %v155
  %v165 = vmul.f32 %v137, %v159
  %v166 = vmul.f32 %v138, %v155
  %v167 = vmul.f32 %v139, %v159
  %v168 = vmul.f32 %v140, %v155
  %v169 = vmul.f32 %v141, %v159
  %v170 = vmul.f32 %v142, %v155
  %v171 = vmul.f32 %v143, %v159
  %v172 = vmul.f32 %v144, %v155
  %v173 = vmul.f32 %v145, %v159
  %v174 = vmul.f32 %v146, %v155
  %v175 = vmul.f32 %v147, %v159
  %v176 = vmul.f32 %v148, %v155
  %v177 = vmul.f32 %v149, %v159
  %v178 = vld [vmem:[%s2] sm:$0x3]
  %v180 = vlaneseq
  %v181 = vshrl.u32 %v180, 7
  %v182 = vsub.s32 0, %v181
  %v183 = vrot.slane %v178, %v182
  %v184 = vlaneseq
  %v185 = vshrl.u32 %v184, 7
  %v186 = vsub.s32 1, %v185
  %v187 = vrot.slane %v178, %v186
  %v190 = vadd.f32 %v162, %v183
  %v191 = vadd.f32 %v163, %v187
  %v192 = vadd.f32 %v164, %v183
  %v193 = vadd.f32 %v165, %v187
  %v194 = vadd.f32 %v166, %v183
  %v195 = vadd.f32 %v167, %v187
  %v196 = vadd.f32 %v168, %v183
  %v197 = vadd.f32 %v169, %v187
  %v198 = vadd.f32 %v170, %v183
  %v199 = vadd.f32 %v171, %v187
  %v200 = vadd.f32 %v172, %v183
  %v201 = vadd.f32 %v173, %v187
  %v202 = vadd.f32 %v174, %v183
  %v203 = vadd.f32 %v175, %v187
  %v204 = vadd.f32 %v176, %v183
  %v205 = vadd.f32 %v177, %v187
  %vm206 = vcmp.ge.f32.partialorder %v190, 0.0
  %vm207 = vcmp.ge.f32.partialorder %v191, 0.0
  %vm208 = vcmp.ge.f32.partialorder %v192, 0.0
  %vm209 = vcmp.ge.f32.partialorder %v193, 0.0
  %vm210 = vcmp.ge.f32.partialorder %v194, 0.0
  %vm211 = vcmp.ge.f32.partialorder %v195, 0.0
  %vm212 = vcmp.ge.f32.partialorder %v196, 0.0
  %vm213 = vcmp.ge.f32.partialorder %v197, 0.0
  %vm214 = vcmp.ge.f32.partialorder %v198, 0.0
  %vm215 = vcmp.ge.f32.partialorder %v199, 0.0
  %vm216 = vcmp.ge.f32.partialorder %v200, 0.0
  %vm217 = vcmp.ge.f32.partialorder %v201, 0.0
  %vm218 = vcmp.ge.f32.partialorder %v202, 0.0
  %vm219 = vcmp.ge.f32.partialorder %v203, 0.0
  %vm220 = vcmp.ge.f32.partialorder %v204, 0.0
  %vm221 = vcmp.ge.f32.partialorder %v205, 0.0
  %v222 = vmul.f32 %v190, 0.2
  %v223 = vmul.f32 %v191, 0.2
  %v224 = vmul.f32 %v192, 0.2
  %v225 = vmul.f32 %v193, 0.2
  %v226 = vmul.f32 %v194, 0.2
  %v227 = vmul.f32 %v195, 0.2
  %v228 = vmul.f32 %v196, 0.2
  %v229 = vmul.f32 %v197, 0.2
  %v230 = vmul.f32 %v198, 0.2
  %v231 = vmul.f32 %v199, 0.2
  %v232 = vmul.f32 %v200, 0.2
  %v233 = vmul.f32 %v201, 0.2
  %v234 = vmul.f32 %v202, 0.2
  %v235 = vmul.f32 %v203, 0.2
  %v236 = vmul.f32 %v204, 0.2
  %v237 = vmul.f32 %v205, 0.2
  %v238 = vsel %vm206, %v190, %v222
  %v239 = vsel %vm207, %v191, %v223
  %v240 = vsel %vm208, %v192, %v224
  %v241 = vsel %vm209, %v193, %v225
  %v242 = vsel %vm210, %v194, %v226
  %v243 = vsel %vm211, %v195, %v227
  %v244 = vsel %vm212, %v196, %v228
  %v245 = vsel %vm213, %v197, %v229
  %v246 = vsel %vm214, %v198, %v230
  %v247 = vsel %vm215, %v199, %v231
  %v248 = vsel %vm216, %v200, %v232
  %v249 = vsel %vm217, %v201, %v233
  %v250 = vsel %vm218, %v202, %v234
  %v251 = vsel %vm219, %v203, %v235
  %v252 = vsel %vm220, %v204, %v236
  %v253 = vsel %vm221, %v205, %v237
  %v254 = vpack.c.bf16 %v240, %v238
  %v255 = vpack.c.bf16 %v241, %v239
  %v256 = vpack.c.bf16 %v244, %v242
  %v257 = vpack.c.bf16 %v245, %v243
  %v258 = vpack.c.bf16 %v248, %v246
  %v259 = vpack.c.bf16 %v249, %v247
  %v260 = vpack.c.bf16 %v252, %v250
  %v261 = vpack.c.bf16 %v253, %v251
  %v270 = vunpack.c.l.b16 %v254
  %v271 = vunpack.c.l.b16 %v255
  %v272 = vunpack.c.h.b16 %v254
  %v273 = vunpack.c.h.b16 %v255
  %v274 = vunpack.c.l.b16 %v256
  %v275 = vunpack.c.l.b16 %v257
  %v276 = vunpack.c.h.b16 %v256
  %v277 = vunpack.c.h.b16 %v257
  %v278 = vunpack.c.l.b16 %v258
  %v279 = vunpack.c.l.b16 %v259
  %v280 = vunpack.c.h.b16 %v258
  %v281 = vunpack.c.h.b16 %v259
  %v282 = vunpack.c.l.b16 %v260
  %v283 = vunpack.c.l.b16 %v261
  %v284 = vunpack.c.h.b16 %v260
  %v285 = vunpack.c.h.b16 %v261
  %v286 = vpack.c.b16 %v271, %v270
  %v287 = vpack.c.b16 %v273, %v272
  %v288 = vpack.c.b16 %v275, %v274
  %v289 = vpack.c.b16 %v277, %v276
  %v290 = vpack.c.b16 %v279, %v278
  %v291 = vpack.c.b16 %v281, %v280
  %v292 = vpack.c.b16 %v283, %v282
  %v293 = vpack.c.b16 %v285, %v284
  %302 = vst [vmem:[%s3] sm:$0xff] %v286
  %303 = vst [vmem:[%s3 + $0x8] sm:$0xff] %v287
  %304 = vst [vmem:[%s3 + $0x10] sm:$0xff] %v288
  %305 = vst [vmem:[%s3 + $0x18] sm:$0xff] %v289
  %306 = vst [vmem:[%s3 + $0x20] sm:$0xff] %v290
  %307 = vst [vmem:[%s3 + $0x28] sm:$0xff] %v291
  %308 = vst [vmem:[%s3 + $0x30] sm:$0xff] %v292
  %309 = vst [vmem:[%s3 + $0x38] sm:$0xff] %v293
  // Predicated region
  $region14: #{main_model_step.15} parent=0 // pred_check
    _
  $region15: #{main_model_step.15} parent=0 // pred_check_branch
    %311 = sbr.rel (0) target = $region17
  $region16: #{main_model_step.15} parent=0 // pred_region
    _
  $region17: #{main_model_step.15} parent=0 // pred_fallthru
    _
  // Predicated region
  $region18: #{main_model_step.15} parent=0 // pred_check
    _
  $region19: #{main_model_step.15} parent=0 // pred_check_branch
    %313 = sbr.rel (0) target = $region21
  $region20: #{main_model_step.15} parent=0 // pred_region
    _
  $region21: #{main_model_step.15} parent=0 // pred_fallthru
    _

// kernel: main_model_step.14
$region0: #{main_model_step.14}
  #allocation0 [shape = 'u32[]', space=smem, size = 0x4, offset = 0x4, fixed_abs, tag = 'smem constant byte address 0x4 - core index']
  #allocation1 [shape = 'u32[144,128]{1,0:T(1,128)}', space=vmem, size = 0x12000, scoped, tag = 'internal scratch']
  #allocation2 [shape = 'f32[64,256]{1,0:T(8,128)}', space=vmem, size = 0x10000, scoped, tag = 'scratch operand']
  %s0 = inlined_call_operand.vmem [shape: bf16[64,2048], index: 0, kind: input, shape index: {}]
  %s1 = inlined_call_operand.vmem [shape: bf16[2048,256], index: 1, kind: input, shape index: {}]
  %s2 = inlined_call_operand.vmem [shape: f32[1,256], index: 2, kind: input, shape index: {}]
  %s3 = inlined_call_operand.vmem [shape: bf16[64,256], index: 3, kind: output, shape index: {}]
  %s4 = sld [smem:[#allocation0]]
  $region76: #{main_model_step.14} parent=0
    _
  %s6 = ssub.s32 1, %s4
  %s7 = scalar_select 0, %s6, %s4
  $region1: #{main_model_step.14} parent=0
    #allocation3 [shape = 'u8[131072]{0}', space=vmem, size = 0x20000, scoped, tag = 'input window, operand 0']
    loop: start=0, step=1, limit=6
    $region2: #{main_model_step.14} parent=1 // loop_pre_header
      _
    $region3: #{main_model_step.14} parent=1 // loop_header
      %s9 = sphi 0, %s13
      %p10 = scmp.ge.s32.totalorder %s9, 6
      %s16 = sphi 0, %s35
      %s17 = sphi 0, %s31
      %s18 = sphi 0, %s27
      %s19 = sphi 0, %s16
      %s20 = sphi 0, %s17
      %s21 = sphi 0, %s18
      %s22 = sphi 0, %s19
      %s23 = sphi 0, %s20
      %s24 = sphi 0, %s21
      %s40 = sphi 0, %s42
      %s43 = sphi 0, %s40
      %s44 = sphi 0, %s43
      %s60 = sphi 0, %s44
      %s68 = sphi 0, %s70
      %s71 = sphi 0, %s68
      %s72 = sphi 0, %s71
      %s88 = sphi 0, %s72
      %s94 = sphi 0, %s96
      %s97 = sphi 0, %s94
      %s98 = sphi 0, %s97
      %s114 = sphi 0, %s98
      %s122 = sphi 0, %s124
      %s125 = sphi 0, %s122
      %s126 = sphi 0, %s125
      %s142 = sphi 0, %s126
    $region4: #{main_model_step.14} parent=1 // loop_header_branch
      %12 = sbr.rel (%p10) target = $region8
    $region5: #{main_model_step.14} parent=1 // loop_body
      %s14 = ssub.s32 %s9, 1
      %s15 = ssub.s32 %s9, 2
      %s25 = sadd.s32 1, %s18
      %p26 = scmp.ge.s32.totalorder %s25, 4
      %s27 = scalar_select %p26, 0, %s25
      %s28 = sadd.s32 1, %s17
      %s29 = scalar_select %p26, %s28, %s17
      %p30 = scmp.ge.s32.totalorder %s29, 1
      %s31 = scalar_select %p30, 0, %s29
      %s32 = sadd.s32 1, %s16
      %s33 = scalar_select %p30, %s32, %s16
      %p34 = scmp.ge.s32.totalorder %s33, 1
      %s35 = scalar_select %p34, 0, %s33
      %s36 = ssub.s32 %s16, %s35
      %s37 = ssub.s32 %s18, %s27
      %s38 = sor.u32 %s36, %s37
      %p39 = scmp.eq.s32.totalorder %s38, 0
      %s41 = sadd.s32 %s40, 1
      %s42 = scalar_select %p39, %s40, %s41
      %p45 = pneg %p39
      %p46 = scmp.eq.s32.totalorder %s9, 3
      %p47 = por %p45, %p46
      %p48 = scmp.ne.s32.totalorder %s40, %s43
      %p49 = scmp.eq.s32.totalorder %s9, 0
      %p50 = por %p48, %p49
      %p51 = scmp.ne.s32.totalorder %s40, %s43
      %p52 = scmp.eq.s32.totalorder %s14, 3
      %p53 = por %p51, %p52
      %p54 = scmp.ne.s32.totalorder %s43, %s44
      %p55 = scmp.eq.s32.totalorder %s14, 0
      %p56 = por %p54, %p55
      %p57 = scmp.ne.s32.totalorder %s43, %s44
      %p58 = scmp.eq.s32.totalorder %s15, 3
      %p59 = por %p57, %p58
      %p61 = scmp.ne.s32.totalorder %s44, %s60
      %p62 = scmp.eq.s32.totalorder %s15, 0
      %p63 = por %p61, %p62
      %s64 = ssub.s32 %s18, %s27
      %s65 = ssub.s32 %s17, %s31
      %s66 = sor.u32 %s64, %s65
      %p67 = scmp.eq.s32.totalorder %s66, 0
      %s69 = sadd.s32 %s68, 1
      %s70 = scalar_select %p67, %s68, %s69
      %p73 = pneg %p67
      %p74 = scmp.eq.s32.totalorder %s9, 3
      %p75 = por %p73, %p74
      %p76 = scmp.ne.s32.totalorder %s68, %s71
      %p77 = scmp.eq.s32.totalorder %s9, 0
      %p78 = por %p76, %p77
      %p79 = scmp.ne.s32.totalorder %s68, %s71
      %p80 = scmp.eq.s32.totalorder %s14, 3
      %p81 = por %p79, %p80
      %p82 = scmp.ne.s32.totalorder %s71, %s72
      %p83 = scmp.eq.s32.totalorder %s14, 0
      %p84 = por %p82, %p83
      %p85 = scmp.ne.s32.totalorder %s71, %s72
      %p86 = scmp.eq.s32.totalorder %s15, 3
      %p87 = por %p85, %p86
      %p89 = scmp.ne.s32.totalorder %s72, %s88
      %p90 = scmp.eq.s32.totalorder %s15, 0
      %p91 = por %p89, %p90
      %s92 = ssub.s32 %s17, %s31
      %p93 = scmp.eq.s32.totalorder %s92, 0
      %s95 = sadd.s32 %s94, 1
      %s96 = scalar_select %p93, %s94, %s95
      %p99 = pneg %p93
      %p100 = scmp.eq.s32.totalorder %s9, 3
      %p101 = por %p99, %p100
      %p102 = scmp.ne.s32.totalorder %s94, %s97
      %p103 = scmp.eq.s32.totalorder %s9, 0
      %p104 = por %p102, %p103
      %p105 = scmp.ne.s32.totalorder %s94, %s97
      %p106 = scmp.eq.s32.totalorder %s14, 3
      %p107 = por %p105, %p106
      %p108 = scmp.ne.s32.totalorder %s97, %s98
      %p109 = scmp.eq.s32.totalorder %s14, 0
      %p110 = por %p108, %p109
      %p111 = scmp.ne.s32.totalorder %s97, %s98
      %p112 = scmp.eq.s32.totalorder %s15, 3
      %p113 = por %p111, %p112
      %p115 = scmp.ne.s32.totalorder %s98, %s114
      %p116 = scmp.eq.s32.totalorder %s15, 0
      %p117 = por %p115, %p116
      %s118 = ssub.s32 %s16, %s35
      %s119 = ssub.s32 %s17, %s31
      %s120 = sor.u32 %s118, %s119
      %p121 = scmp.eq.s32.totalorder %s120, 0
      %s123 = sadd.s32 %s122, 1
      %s124 = scalar_select %p121, %s122, %s123
      %p127 = pneg %p121
      %p128 = scmp.eq.s32.totalorder %s9, 3
      %p129 = por %p127, %p128
      %p130 = scmp.ne.s32.totalorder %s122, %s125
      %p131 = scmp.eq.s32.totalorder %s9, 0
      %p132 = por %p130, %p131
      %p133 = scmp.ne.s32.totalorder %s122, %s125
      %p134 = scmp.eq.s32.totalorder %s14, 3
      %p135 = por %p133, %p134
      %p136 = scmp.ne.s32.totalorder %s125, %s126
      %p137 = scmp.eq.s32.totalorder %s14, 0
      %p138 = por %p136, %p137
      %p139 = scmp.ne.s32.totalorder %s125, %s126
      %p140 = scmp.eq.s32.totalorder %s15, 3
      %p141 = por %p139, %p140
      %p143 = scmp.ne.s32.totalorder %s126, %s142
      %p144 = scmp.eq.s32.totalorder %s15, 0
      %p145 = por %p143, %p144
      %p146 = scmp.le.s32.totalorder 1, %s9
      %p147 = scmp.lt.s32.totalorder %s9, 5
      %p148 = pnand %p146, %p147
      %p149 = pneg %p148
      // Predicated region
      $region9: #{main_model_step.14} parent=5 // pred_check
        _
      $region10: #{main_model_step.14} parent=5 // pred_check_branch
        %151 = sbr.rel (%p148) target = $region12
      $region11: #{main_model_step.14} parent=5 // pred_region
        %s152 = ssub.s32 %s9, 1
        // Predicated region
        $region13: #{main_model_step.14} parent=11 // pred_check
          %p153 = pneg %p110
        $region14: #{main_model_step.14} parent=11 // pred_check_branch
          %155 = sbr.rel (%p153) target = $region16
        $region15: #{main_model_step.14} parent=11 // pred_region
          %s156 = smul.u32 2, %s20
          %p157 = scmp.lt.s32.totalorder %s156, 1
          %s158 = scalar_select %p157, %s156, 1
          %s159 = scalar_lea.vmem %s2, %s158
          %s160 = smul.u32 2, %s20
        $region16: #{main_model_step.14} parent=11 // pred_fallthru
          _
      $region12: #{main_model_step.14} parent=5 // pred_fallthru
        _
      %p161 = scmp.lt.s32.totalorder %s9, 4
      // Predicated region
      $region17: #{main_model_step.14} parent=5 // pred_check
        %p162 = pneg %p161
      $region18: #{main_model_step.14} parent=5 // pred_check_branch
        %164 = sbr.rel (%p162) target = $region20
      $region19: #{main_model_step.14} parent=5 // pred_region
        // Predicated region
        $region21: #{main_model_step.14} parent=19 // pred_check
          %p165 = pneg %p50
        $region22: #{main_model_step.14} parent=19 // pred_check_branch
          %167 = sbr.rel (%p165) target = $region24
        $region23: #{main_model_step.14} parent=19 // pred_region
          %s168 = sand.u32 %s40, 1
          %s169 = sand.u32 %s40, 1
          %s170 = smul.addr %s169, 128
          %s171 = scalar_lea.vmem [#allocation3], %s170
          %s172 = smul.u32 8, %s16
          %s173 = smul.u32 4, %s18
          %s174 = smul.addr %s172, 16
          %s175 = sadd.s32 %s173, %s174
          %s176 = smul.addr %s175, 4
          %s177 = scalar_lea.vmem %s0, %s176
          // Predicated region
          $region25: #{main_model_step.14} parent=23 // pred_check
            _
          $region26: #{main_model_step.14} parent=23 // pred_check_branch
            %179 = sbr.rel (0) target = $region28
          $region27: #{main_model_step.14} parent=23 // pred_region
            // Predicated region
            $region29: #{main_model_step.14} parent=27 // pred_check
              _
            $region30: #{main_model_step.14} parent=27 // pred_check_branch
              %181 = sbr.rel (0) target = $region32
            $region31: #{main_model_step.14} parent=27 // pred_region
              loop: start=0, step=1, limit=1
              $region33: #{main_model_step.14} parent=31 // loop_pre_header
                _
              $region34: #{main_model_step.14} parent=31 // loop_header
                %s183 = sphi 0, %s187
                %p184 = scmp.ge.s32.totalorder %s183, 1
                %s188 = sphi %s177, %s177
                %s189 = sphi %s171, %s171
              $region35: #{main_model_step.14} parent=31 // loop_header_branch
                %186 = sbr.rel (%p184) target = $region39
              $region36: #{main_model_step.14} parent=31 // loop_body
                %v190 = vld [vmem:[%s188] sm:$0xff]
                %191 = vst [vmem:[%s189] sm:$0xff] %v190
                %v192 = vld [vmem:[%s188 + $0x8] sm:$0xff]
                %193 = vst [vmem:[%s189 + $0x8] sm:$0xff] %v192
                %v194 = vld [vmem:[%s188 + $0x40] sm:$0xff]
                %195 = vst [vmem:[%s189 + $0x10] sm:$0xff] %v194
                %v196 = vld [vmem:[%s188 + $0x48] sm:$0xff]
                %197 = vst [vmem:[%s189 + $0x18] sm:$0xff] %v196
                %v198 = vld [vmem:[%s188 + $0x80] sm:$0xff]
                %199 = vst [vmem:[%s189 + $0x20] sm:$0xff] %v198
                %v200 = vld [vmem:[%s188 + $0x88] sm:$0xff]
                %201 = vst [vmem:[%s189 + $0x28] sm:$0xff] %v200
                %v202 = vld [vmem:[%s188 + $0xc0] sm:$0xff]
                %203 = vst [vmem:[%s189 + $0x30] sm:$0xff] %v202
                %v204 = vld [vmem:[%s188 + $0xc8] sm:$0xff]
                %205 = vst [vmem:[%s189 + $0x38] sm:$0xff] %v204
                %v206 = vld [vmem:[%s188 + $0x100] sm:$0xff]
                %207 = vst [vmem:[%s189 + $0x40] sm:$0xff] %v206
                %v208 = vld [vmem:[%s188 + $0x108] sm:$0xff]
                %209 = vst [vmem:[%s189 + $0x48] sm:$0xff] %v208
                %v210 = vld [vmem:[%s188 + $0x140] sm:$0xff]
                %211 = vst [vmem:[%s189 + $0x50] sm:$0xff] %v210
                %v212 = vld [vmem:[%s188 + $0x148] sm:$0xff]
                %213 = vst [vmem:[%s189 + $0x58] sm:$0xff] %v212
                %v214 = vld [vmem:[%s188 + $0x180] sm:$0xff]
                %215 = vst [vmem:[%s189 + $0x60] sm:$0xff] %v214
                %v216 = vld [vmem:[%s188 + $0x188] sm:$0xff]
                %217 = vst [vmem:[%s189 + $0x68] sm:$0xff] %v216
                %v218 = vld [vmem:[%s188 + $0x1c0] sm:$0xff]
                %219 = vst [vmem:[%s189 + $0x70] sm:$0xff] %v218
                %v220 = vld [vmem:[%s188 + $0x1c8] sm:$0xff]
                %221 = vst [vmem:[%s189 + $0x78] sm:$0xff] %v220
              $region37: #{main_model_step.14} parent=31 // loop_footer
                %s187 = sadd.s32 1, %s183
              $region38: #{main_model_step.14} parent=31 // loop_footer_branch
                %182 = sbr.rel target = $region34
              $region39: #{main_model_step.14} parent=31 // loop_exit
                _
            $region32: #{main_model_step.14} parent=27 // pred_fallthru
              _
            // Predicated region
            $region40: #{main_model_step.14} parent=27 // pred_check
              _
            $region41: #{main_model_step.14} parent=27 // pred_check_branch
              %223 = sbr.rel target = $region43
            $region42: #{main_model_step.14} parent=27 // pred_region
              _
            $region43: #{main_model_step.14} parent=27 // pred_fallthru
              _
          $region28: #{main_model_step.14} parent=23 // pred_fallthru
            _
          %224 = vnop
        $region24: #{main_model_step.14} parent=19 // pred_fallthru
          _
        // Predicated region
        $region44: #{main_model_step.14} parent=19 // pred_check
          %p225 = pneg %p78
        $region45: #{main_model_step.14} parent=19 // pred_check_branch
          %227 = sbr.rel (%p225) target = $region47
        $region46: #{main_model_step.14} parent=19 // pred_region
          %s228 = smul.u32 64, %s18
          %s229 = smul.u32 2, %s17
          %p230 = scmp.lt.s32.totalorder %s228, 255
          %s231 = scalar_select %p230, %s228, 255
          %p232 = scmp.lt.s32.totalorder %s229, 1
          %s233 = scalar_select %p232, %s229, 1
          %s234 = smul.addr %s231, 2
          %s235 = sadd.s32 %s233, %s234
          %s236 = smul.addr %s235, 4
          %s237 = scalar_lea.vmem %s1, %s236
          %s238 = smul.u32 64, %s18
          %s239 = smul.u32 2, %s17
        $region47: #{main_model_step.14} parent=19 // pred_fallthru
          _
      $region20: #{main_model_step.14} parent=5 // pred_fallthru
        _
      %p240 = scmp.le.s32.totalorder 1, %s9
      %p241 = scmp.lt.s32.totalorder %s9, 5
      %p242 = pnand %p240, %p241
      %p243 = pneg %p242
      // Predicated region
      $region48: #{main_model_step.14} parent=5 // pred_check
        _
      $region49: #{main_model_step.14} parent=5 // pred_check_branch
        %245 = sbr.rel (%p242) target = $region51
      $region50: #{main_model_step.14} parent=5 // pred_region
        %s246 = ssub.s32 %s9, 1
        %s247 = sand.u32 %s43, 1
        %s248 = sand.u32 %s43, 1
        %s249 = smul.addr %s248, 128
        %s250 = scalar_lea.vmem [#allocation3], %s249
        // Predicated region
        $region52: #{main_model_step.14} parent=50 // pred_check
          %p251 = pneg %p56
        $region53: #{main_model_step.14} parent=50 // pred_check_branch
          %253 = sbr.rel (%p251) target = $region55
        $region54: #{main_model_step.14} parent=50 // pred_region
          _
        $region55: #{main_model_step.14} parent=50 // pred_fallthru
          _
        %s254 = sand.u32 %s43, 1
        %s255 = sand.u32 %s43, 1
        %s256 = smul.addr %s255, 128
        %s257 = scalar_lea.vmem [#allocation3], %s256
        %p258 = pneg %p56
        %p259 = pneg %p53
        %s260 = smul.u32 64, %s21
        %s261 = smul.u32 2, %s20
        %p262 = scmp.lt.s32.totalorder %s260, 255
        %s263 = scalar_select %p262, %s260, 255
        %p264 = scmp.lt.s32.totalorder %s261, 1
        %s265 = scalar_select %p264, %s261, 1
        %s266 = smul.addr %s263, 2
        %s267 = sadd.s32 %s265, %s266
        %s268 = smul.addr %s267, 4
        %s269 = scalar_lea.vmem %s1, %s268
        %p270 = pneg %p84
        %p271 = pneg %p81
        %s272 = smul.u32 2, %s20
        %p273 = scmp.lt.s32.totalorder %s272, 1
        %s274 = scalar_select %p273, %s272, 1
        %s275 = scalar_lea.vmem %s2, %s274
        %p276 = pneg %p110
        %p277 = pneg %p107
        %p278 = pneg %p138
        %p279 = pneg %p135
        %s280 = smul.u32 8, %s19
        %s281 = smul.u32 2, %s20
        %p282 = scmp.lt.s32.totalorder %s280, 7
        %s283 = scalar_select %p282, %s280, 7
        %p284 = scmp.lt.s32.totalorder %s281, 1
        %s285 = scalar_select %p284, %s281, 1
        %s286 = smul.addr %s283, 2
        %s287 = sadd.s32 %s285, %s286
        %s288 = smul.addr %s287, 4
        %s289 = scalar_lea.vmem %s3, %s288
        %s290 = smul.u32 8, %s19
        %s291 = smul.u32 4, %s21
        %s292 = smul.u32 64, %s21
        %s293 = smul.u32 2, %s20
        %p294 = scmp.lt.s32.totalorder %s292, 255
        %s295 = scalar_select %p294, %s292, 255
        %p296 = scmp.lt.s32.totalorder %s293, 1
        %s297 = scalar_select %p296, %s293, 1
        %s298 = smul.addr %s295, 2
        %s299 = sadd.s32 %s297, %s298
        %s300 = smul.addr %s299, 4
        %s301 = scalar_lea.vmem %s1, %s300
        %s302 = smul.u32 64, %s21
        %s303 = smul.u32 2, %s20
        %s304 = smul.u32 2, %s20
        %p305 = scmp.lt.s32.totalorder %s304, 1
        %s306 = scalar_select %p305, %s304, 1
        %s307 = scalar_lea.vmem %s2, %s306
        %s308 = smul.u32 2, %s20
        %s309 = smul.u32 8, %s19
        %s310 = smul.u32 2, %s20
        %p311 = scmp.lt.s32.totalorder %s309, 7
        %s312 = scalar_select %p311, %s309, 7
        %p313 = scmp.lt.s32.totalorder %s310, 1
        %s314 = scalar_select %p313, %s310, 1
        %s315 = smul.addr %s312, 2
        %s316 = sadd.s32 %s314, %s315
        %s317 = smul.addr %s316, 4
        %s318 = scalar_lea.vmem %s3, %s317
        %s319 = smul.u32 8, %s19
        %s320 = smul.u32 2, %s20
        %p321 = scmp.eq.s32.totalorder %s21, 0
        // Predicated region
        $region56: #{main_model_step.14} parent=50 // pred_check
          %p322 = pneg %p321
        $region57: #{main_model_step.14} parent=50 // pred_check_branch
          %324 = sbr.rel (%p322) target = $region59
        $region58: #{main_model_step.14} parent=50 // pred_region
          %325 = vst [vmem:[#allocation2] sm:$0xff] 0.0
          %326 = vst [vmem:[#allocation2 + $0x8] sm:$0xff] 0.0
          %327 = vst [vmem:[#allocation2 + $0x10] sm:$0xff] 0.0
          %328 = vst [vmem:[#allocation2 + $0x18] sm:$0xff] 0.0
          %329 = vst [vmem:[#allocation2 + $0x20] sm:$0xff] 0.0
          %330 = vst [vmem:[#allocation2 + $0x28] sm:$0xff] 0.0
          %331 = vst [vmem:[#allocation2 + $0x30] sm:$0xff] 0.0
          %332 = vst [vmem:[#allocation2 + $0x38] sm:$0xff] 0.0
          %333 = vst [vmem:[#allocation2 + $0x40] sm:$0xff] 0.0
          %334 = vst [vmem:[#allocation2 + $0x48] sm:$0xff] 0.0
          %335 = vst [vmem:[#allocation2 + $0x50] sm:$0xff] 0.0
          %336 = vst [vmem:[#allocation2 + $0x58] sm:$0xff] 0.0
          %337 = vst [vmem:[#allocation2 + $0x60] sm:$0xff] 0.0
          %338 = vst [vmem:[#allocation2 + $0x68] sm:$0xff] 0.0
          %339 = vst [vmem:[#allocation2 + $0x70] sm:$0xff] 0.0
          %340 = vst [vmem:[#allocation2 + $0x78] sm:$0xff] 0.0
        $region59: #{main_model_step.14} parent=50 // pred_fallthru
          _
        %v341 = vld [vmem:[#allocation2] sm:$0xff]
        %v342 = vld [vmem:[#allocation2 + $0x8] sm:$0xff]
        %v343 = vld [vmem:[#allocation2 + $0x10] sm:$0xff]
        %v344 = vld [vmem:[#allocation2 + $0x18] sm:$0xff]
        %v345 = vld [vmem:[#allocation2 + $0x20] sm:$0xff]
        %v346 = vld [vmem:[#allocation2 + $0x28] sm:$0xff]
        %v347 = vld [vmem:[#allocation2 + $0x30] sm:$0xff]
        %v348 = vld [vmem:[#allocation2 + $0x38] sm:$0xff]
        %v349 = vld [vmem:[#allocation2 + $0x40] sm:$0xff]
        %v350 = vld [vmem:[#allocation2 + $0x48] sm:$0xff]
        %v351 = vld [vmem:[#allocation2 + $0x50] sm:$0xff]
        %v352 = vld [vmem:[#allocation2 + $0x58] sm:$0xff]
        %v353 = vld [vmem:[#allocation2 + $0x60] sm:$0xff]
        %v354 = vld [vmem:[#allocation2 + $0x68] sm:$0xff]
        %v355 = vld [vmem:[#allocation2 + $0x70] sm:$0xff]
        %v356 = vld [vmem:[#allocation2 + $0x78] sm:$0xff]
        %v357 = vld [vmem:[%s250] sm:$0xff]
        %v358 = vld [vmem:[%s250 + $0x8] sm:$0xff]
        %v359 = vld [vmem:[%s250 + $0x10] sm:$0xff]
        %v360 = vld [vmem:[%s250 + $0x18] sm:$0xff]
        %v361 = vld [vmem:[%s250 + $0x20] sm:$0xff]
        %v362 = vld [vmem:[%s250 + $0x28] sm:$0xff]
        %v363 = vld [vmem:[%s250 + $0x30] sm:$0xff]
        %v364 = vld [vmem:[%s250 + $0x38] sm:$0xff]
        %v365 = vld [vmem:[%s250 + $0x40] sm:$0xff]
        %v366 = vld [vmem:[%s250 + $0x48] sm:$0xff]
        %v367 = vld [vmem:[%s250 + $0x50] sm:$0xff]
        %v368 = vld [vmem:[%s250 + $0x58] sm:$0xff]
        %v369 = vld [vmem:[%s250 + $0x60] sm:$0xff]
        %v370 = vld [vmem:[%s250 + $0x68] sm:$0xff]
        %v371 = vld [vmem:[%s250 + $0x70] sm:$0xff]
        %v372 = vld [vmem:[%s250 + $0x78] sm:$0xff]
        %v373 = vld [vmem:[%s301] sm:$0xff]
        %v374 = vld [vmem:[%s301 + $0x8] sm:$0xff]
        %v375 = vld [vmem:[%s301 + $0x10] sm:$0xff]
        %v376 = vld [vmem:[%s301 + $0x18] sm:$0xff]
        %v377 = vld [vmem:[%s301 + $0x20] sm:$0xff]
        %v378 = vld [vmem:[%s301 + $0x28] sm:$0xff]
        %v379 = vld [vmem:[%s301 + $0x30] sm:$0xff]
        %v380 = vld [vmem:[%s301 + $0x38] sm:$0xff]
        %v381 = vld [vmem:[%s301 + $0x40] sm:$0xff]
        %v382 = vld [vmem:[%s301 + $0x48] sm:$0xff]
        %v383 = vld [vmem:[%s301 + $0x50] sm:$0xff]
        %v384 = vld [vmem:[%s301 + $0x58] sm:$0xff]
        %v385 = vld [vmem:[%s301 + $0x60] sm:$0xff]
        %v386 = vld [vmem:[%s301 + $0x68] sm:$0xff]
        %v387 = vld [vmem:[%s301 + $0x70] sm:$0xff]
        %v388 = vld [vmem:[%s301 + $0x78] sm:$0xff]
        %v389 = vld [vmem:[%s301 + $0x80] sm:$0xff]
        %v390 = vld [vmem:[%s301 + $0x88] sm:$0xff]
        %v391 = vld [vmem:[%s301 + $0x90] sm:$0xff]
        %v392 = vld [vmem:[%s301 + $0x98] sm:$0xff]
        %v393 = vld [vmem:[%s301 + $0xa0] sm:$0xff]
        %v394 = vld [vmem:[%s301 + $0xa8] sm:$0xff]
        %v395 = vld [vmem:[%s301 + $0xb0] sm:$0xff]
        %v396 = vld [vmem:[%s301 + $0xb8] sm:$0xff]
        %v397 = vld [vmem:[%s301 + $0xc0] sm:$0xff]
        %v398 = vld [vmem:[%s301 + $0xc8] sm:$0xff]
        %v399 = vld [vmem:[%s301 + $0xd0] sm:$0xff]
        %v400 = vld [vmem:[%s301 + $0xd8] sm:$0xff]
        %v401 = vld [vmem:[%s301 + $0xe0] sm:$0xff]
        %v402 = vld [vmem:[%s301 + $0xe8] sm:$0xff]
        %v403 = vld [vmem:[%s301 + $0xf0] sm:$0xff]
        %v404 = vld [vmem:[%s301 + $0xf8] sm:$0xff]
        %v405 = vld [vmem:[%s301 + $0x100] sm:$0xff]
        %v406 = vld [vmem:[%s301 + $0x108] sm:$0xff]
        %v407 = vld [vmem:[%s301 + $0x110] sm:$0xff]
        %v408 = vld [vmem:[%s301 + $0x118] sm:$0xff]
        %v409 = vld [vmem:[%s301 + $0x120] sm:$0xff]
        %v410 = vld [vmem:[%s301 + $0x128] sm:$0xff]
        %v411 = vld [vmem:[%s301 + $0x130] sm:$0xff]
        %v412 = vld [vmem:[%s301 + $0x138] sm:$0xff]
        %v413 = vld [vmem:[%s301 + $0x140] sm:$0xff]
        %v414 = vld [vmem:[%s301 + $0x148] sm:$0xff]
        %v415 = vld [vmem:[%s301 + $0x150] sm:$0xff]
        %v416 = vld [vmem:[%s301 + $0x158] sm:$0xff]
        %v417 = vld [vmem:[%s301 + $0x160] sm:$0xff]
        %v418 = vld [vmem:[%s301 + $0x168] sm:$0xff]
        %v419 = vld [vmem:[%s301 + $0x170] sm:$0xff]
        %v420 = vld [vmem:[%s301 + $0x178] sm:$0xff]
        %v421 = vld [vmem:[%s301 + $0x180] sm:$0xff]
        %v422 = vld [vmem:[%s301 + $0x188] sm:$0xff]
        %v423 = vld [vmem:[%s301 + $0x190] sm:$0xff]
        %v424 = vld [vmem:[%s301 + $0x198] sm:$0xff]
        %v425 = vld [vmem:[%s301 + $0x1a0] sm:$0xff]
        %v426 = vld [vmem:[%s301 + $0x1a8] sm:$0xff]
        %v427 = vld [vmem:[%s301 + $0x1b0] sm:$0xff]
        %v428 = vld [vmem:[%s301 + $0x1b8] sm:$0xff]
        %v429 = vld [vmem:[%s301 + $0x1c0] sm:$0xff]
        %v430 = vld [vmem:[%s301 + $0x1c8] sm:$0xff]
        %v431 = vld [vmem:[%s301 + $0x1d0] sm:$0xff]
        %v432 = vld [vmem:[%s301 + $0x1d8] sm:$0xff]
        %v433 = vld [vmem:[%s301 + $0x1e0] sm:$0xff]
        %v434 = vld [vmem:[%s301 + $0x1e8] sm:$0xff]
        %v435 = vld [vmem:[%s301 + $0x1f0] sm:$0xff]
        %v436 = vld [vmem:[%s301 + $0x1f8] sm:$0xff]
        %v453 = vunpack.c.l.b16 %v357
        %v454 = vunpack.c.h.b16 %v357
        %v455 = vunpack.c.l.b16 %v358
        %v456 = vunpack.c.h.b16 %v358
        %v457 = vunpack.c.l.b16 %v359
        %v458 = vunpack.c.h.b16 %v359
        %v459 = vunpack.c.l.b16 %v360
        %v460 = vunpack.c.h.b16 %v360
        %v461 = vunpack.c.l.b16 %v361
        %v462 = vunpack.c.h.b16 %v361
        %v463 = vunpack.c.l.b16 %v362
        %v464 = vunpack.c.h.b16 %v362
        %v465 = vunpack.c.l.b16 %v363
        %v466 = vunpack.c.h.b16 %v363
        %v467 = vunpack.c.l.b16 %v364
        %v468 = vunpack.c.h.b16 %v364
        %v469 = vunpack.c.l.b16 %v365
        %v470 = vunpack.c.h.b16 %v365
        %v471 = vunpack.c.l.b16 %v366
        %v472 = vunpack.c.h.b16 %v366
        %v473 = vunpack.c.l.b16 %v367
        %v474 = vunpack.c.h.b16 %v367
        %v475 = vunpack.c.l.b16 %v368
        %v476 = vunpack.c.h.b16 %v368
        %v477 = vunpack.c.l.b16 %v369
        %v478 = vunpack.c.h.b16 %v369
        %v479 = vunpack.c.l.b16 %v370
        %v480 = vunpack.c.h.b16 %v370
        %v481 = vunpack.c.l.b16 %v371
        %v482 = vunpack.c.h.b16 %v371
        %v483 = vunpack.c.l.b16 %v372
        %v484 = vunpack.c.h.b16 %v372
        %v485 = vpack.c.b16 %v457, %v453
        %v486 = vpack.c.b16 %v458, %v454
        %v487 = vpack.c.b16 %v459, %v455
        %v488 = vpack.c.b16 %v460, %v456
        %v489 = vpack.c.b16 %v465, %v461
        %v490 = vpack.c.b16 %v466, %v462
        %v491 = vpack.c.b16 %v467, %v463
        %v492 = vpack.c.b16 %v468, %v464
        %v493 = vpack.c.b16 %v473, %v469
        %v494 = vpack.c.b16 %v474, %v470
        %v495 = vpack.c.b16 %v475, %v471
        %v496 = vpack.c.b16 %v476, %v472
        %v497 = vpack.c.b16 %v481, %v477
        %v498 = vpack.c.b16 %v482, %v478
        %v499 = vpack.c.b16 %v483, %v479
        %v500 = vpack.c.b16 %v484, %v480
        %v581 = vunpack.c.l.b16 %v373
        %v582 = vunpack.c.h.b16 %v373
        %v583 = vunpack.c.l.b16 %v374
        %v584 = vunpack.c.h.b16 %v374
        %v585 = vunpack.c.l.b16 %v375
        %v586 = vunpack.c.h.b16 %v375
        %v587 = vunpack.c.l.b16 %v376
        %v588 = vunpack.c.h.b16 %v376
        %v589 = vunpack.c.l.b16 %v377
        %v590 = vunpack.c.h.b16 %v377
        %v591 = vunpack.c.l.b16 %v378
        %v592 = vunpack.c.h.b16 %v378
        %v593 = vunpack.c.l.b16 %v379
        %v594 = vunpack.c.h.b16 %v379
        %v595 = vunpack.c.l.b16 %v380
        %v596 = vunpack.c.h.b16 %v380
        %v597 = vunpack.c.l.b16 %v381
        %v598 = vunpack.c.h.b16 %v381
        %v599 = vunpack.c.l.b16 %v382
        %v600 = vunpack.c.h.b16 %v382
        %v601 = vunpack.c.l.b16 %v383
        %v602 = vunpack.c.h.b16 %v383
        %v603 = vunpack.c.l.b16 %v384
        %v604 = vunpack.c.h.b16 %v384
        %v605 = vunpack.c.l.b16 %v385
        %v606 = vunpack.c.h.b16 %v385
        %v607 = vunpack.c.l.b16 %v386
        %v608 = vunpack.c.h.b16 %v386
        %v609 = vunpack.c.l.b16 %v387
        %v610 = vunpack.c.h.b16 %v387
        %v611 = vunpack.c.l.b16 %v388
        %v612 = vunpack.c.h.b16 %v388
        %v613 = vunpack.c.l.b16 %v389
        %v614 = vunpack.c.h.b16 %v389
        %v615 = vunpack.c.l.b16 %v390
        %v616 = vunpack.c.h.b16 %v390
        %v617 = vunpack.c.l.b16 %v391
        %v618 = vunpack.c.h.b16 %v391
        %v619 = vunpack.c.l.b16 %v392
        %v620 = vunpack.c.h.b16 %v392
        %v621 = vunpack.c.l.b16 %v393
        %v622 = vunpack.c.h.b16 %v393
        %v623 = vunpack.c.l.b16 %v394
        %v624 = vunpack.c.h.b16 %v394
        %v625 = vunpack.c.l.b16 %v395
        %v626 = vunpack.c.h.b16 %v395
        %v627 = vunpack.c.l.b16 %v396
        %v628 = vunpack.c.h.b16 %v396
        %v629 = vunpack.c.l.b16 %v397
        %v630 = vunpack.c.h.b16 %v397
        %v631 = vunpack.c.l.b16 %v398
        %v632 = vunpack.c.h.b16 %v398
        %v633 = vunpack.c.l.b16 %v399
        %v634 = vunpack.c.h.b16 %v399
        %v635 = vunpack.c.l.b16 %v400
        %v636 = vunpack.c.h.b16 %v400
        %v637 = vunpack.c.l.b16 %v401
        %v638 = vunpack.c.h.b16 %v401
        %v639 = vunpack.c.l.b16 %v402
        %v640 = vunpack.c.h.b16 %v402
        %v641 = vunpack.c.l.b16 %v403
        %v642 = vunpack.c.h.b16 %v403
        %v643 = vunpack.c.l.b16 %v404
        %v644 = vunpack.c.h.b16 %v404
        %v645 = vunpack.c.l.b16 %v405
        %v646 = vunpack.c.h.b16 %v405
        %v647 = vunpack.c.l.b16 %v406
        %v648 = vunpack.c.h.b16 %v406
        %v649 = vunpack.c.l.b16 %v407
        %v650 = vunpack.c.h.b16 %v407
        %v651 = vunpack.c.l.b16 %v408
        %v652 = vunpack.c.h.b16 %v408
        %v653 = vunpack.c.l.b16 %v409
        %v654 = vunpack.c.h.b16 %v409
        %v655 = vunpack.c.l.b16 %v410
        %v656 = vunpack.c.h.b16 %v410
        %v657 = vunpack.c.l.b16 %v411
        %v658 = vunpack.c.h.b16 %v411
        %v659 = vunpack.c.l.b16 %v412
        %v660 = vunpack.c.h.b16 %v412
        %v661 = vunpack.c.l.b16 %v413
        %v662 = vunpack.c.h.b16 %v413
        %v663 = vunpack.c.l.b16 %v414
        %v664 = vunpack.c.h.b16 %v414
        %v665 = vunpack.c.l.b16 %v415
        %v666 = vunpack.c.h.b16 %v415
        %v667 = vunpack.c.l.b16 %v416
        %v668 = vunpack.c.h.b16 %v416
        %v669 = vunpack.c.l.b16 %v417
        %v670 = vunpack.c.h.b16 %v417
        %v671 = vunpack.c.l.b16 %v418
        %v672 = vunpack.c.h.b16 %v418
        %v673 = vunpack.c.l.b16 %v419
        %v674 = vunpack.c.h.b16 %v419
        %v675 = vunpack.c.l.b16 %v420
        %v676 = vunpack.c.h.b16 %v420
        %v677 = vunpack.c.l.b16 %v421
        %v678 = vunpack.c.h.b16 %v421
        %v679 = vunpack.c.l.b16 %v422
        %v680 = vunpack.c.h.b16 %v422
        %v681 = vunpack.c.l.b16 %v423
        %v682 = vunpack.c.h.b16 %v423
        %v683 = vunpack.c.l.b16 %v424
        %v684 = vunpack.c.h.b16 %v424
        %v685 = vunpack.c.l.b16 %v425
        %v686 = vunpack.c.h.b16 %v425
        %v687 = vunpack.c.l.b16 %v426
        %v688 = vunpack.c.h.b16 %v426
        %v689 = vunpack.c.l.b16 %v427
        %v690 = vunpack.c.h.b16 %v427
        %v691 = vunpack.c.l.b16 %v428
        %v692 = vunpack.c.h.b16 %v428
        %v693 = vunpack.c.l.b16 %v429
        %v694 = vunpack.c.h.b16 %v429
        %v695 = vunpack.c.l.b16 %v430
        %v696 = vunpack.c.h.b16 %v430
        %v697 = vunpack.c.l.b16 %v431
        %v698 = vunpack.c.h.b16 %v431
        %v699 = vunpack.c.l.b16 %v432
        %v700 = vunpack.c.h.b16 %v432
        %v701 = vunpack.c.l.b16 %v433
        %v702 = vunpack.c.h.b16 %v433
        %v703 = vunpack.c.l.b16 %v434
        %v704 = vunpack.c.h.b16 %v434
        %v705 = vunpack.c.l.b16 %v435
        %v706 = vunpack.c.h.b16 %v435
        %v707 = vunpack.c.l.b16 %v436
        %v708 = vunpack.c.h.b16 %v436
        %v709 = vpack.c.b16 %v583, %v581
        %v710 = vpack.c.b16 %v584, %v582
        %v711 = vpack.c.b16 %v587, %v585
        %v712 = vpack.c.b16 %v588, %v586
        %v713 = vpack.c.b16 %v591, %v589
        %v714 = vpack.c.b16 %v592, %v590
        %v715 = vpack.c.b16 %v595, %v593
        %v716 = vpack.c.b16 %v596, %v594
        %v717 = vpack.c.b16 %v599, %v597
        %v718 = vpack.c.b16 %v600, %v598
        %v719 = vpack.c.b16 %v603, %v601
        %v720 = vpack.c.b16 %v604, %v602
        %v721 = vpack.c.b16 %v607, %v605
        %v722 = vpack.c.b16 %v608, %v606
        %v723 = vpack.c.b16 %v611, %v609
        %v724 = vpack.c.b16 %v612, %v610
        %v725 = vpack.c.b16 %v615, %v613
        %v726 = vpack.c.b16 %v616, %v614
        %v727 = vpack.c.b16 %v619, %v617
        %v728 = vpack.c.b16 %v620, %v618
        %v729 = vpack.c.b16 %v623, %v621
        %v730 = vpack.c.b16 %v624, %v622
        %v731 = vpack.c.b16 %v627, %v625
        %v732 = vpack.c.b16 %v628, %v626
        %v733 = vpack.c.b16 %v631, %v629
        %v734 = vpack.c.b16 %v632, %v630
        %v735 = vpack.c.b16 %v635, %v633
        %v736 = vpack.c.b16 %v636, %v634
        %v737 = vpack.c.b16 %v639, %v637
        %v738 = vpack.c.b16 %v640, %v638
        %v739 = vpack.c.b16 %v643, %v641
        %v740 = vpack.c.b16 %v644, %v642
        %v741 = vpack.c.b16 %v647, %v645
        %v742 = vpack.c.b16 %v648, %v646
        %v743 = vpack.c.b16 %v651, %v649
        %v744 = vpack.c.b16 %v652, %v650
        %v745 = vpack.c.b16 %v655, %v653
        %v746 = vpack.c.b16 %v656, %v654
        %v747 = vpack.c.b16 %v659, %v657
        %v748 = vpack.c.b16 %v660, %v658
        %v749 = vpack.c.b16 %v663, %v661
        %v750 = vpack.c.b16 %v664, %v662
        %v751 = vpack.c.b16 %v667, %v665
        %v752 = vpack.c.b16 %v668, %v666
        %v753 = vpack.c.b16 %v671, %v669
        %v754 = vpack.c.b16 %v672, %v670
        %v755 = vpack.c.b16 %v675, %v673
        %v756 = vpack.c.b16 %v676, %v674
        %v757 = vpack.c.b16 %v679, %v677
        %v758 = vpack.c.b16 %v680, %v678
        %v759 = vpack.c.b16 %v683, %v681
        %v760 = vpack.c.b16 %v684, %v682
        %v761 = vpack.c.b16 %v687, %v685
        %v762 = vpack.c.b16 %v688, %v686
        %v763 = vpack.c.b16 %v691, %v689
        %v764 = vpack.c.b16 %v692, %v690
        %v765 = vpack.c.b16 %v695, %v693
        %v766 = vpack.c.b16 %v696, %v694
        %v767 = vpack.c.b16 %v699, %v697
        %v768 = vpack.c.b16 %v700, %v698
        %v769 = vpack.c.b16 %v703, %v701
        %v770 = vpack.c.b16 %v704, %v702
        %v771 = vpack.c.b16 %v707, %v705
        %v772 = vpack.c.b16 %v708, %v706
        %837 = vmatprep.subr.bf16.mxu0 %v710
        %838 = vmatpush1.bf16.msra.mxu0 %v709
        %839 = vmatprep.subr.bf16.mxu0 %v712
        %840 = vmatpush1.bf16.msra.mxu0 %v711
        %841 = vmatprep.subr.bf16.mxu0 %v714
        %842 = vmatpush1.bf16.msra.mxu0 %v713
        %843 = vmatprep.subr.bf16.mxu0 %v716
        %844 = vmatpush1.bf16.msra.mxu0 %v715
        %845 = vmatprep.subr.bf16.mxu0 %v718
        %846 = vmatpush1.bf16.msra.mxu0 %v717
        %847 = vmatprep.subr.bf16.mxu0 %v720
        %848 = vmatpush1.bf16.msra.mxu0 %v719
        %849 = vmatprep.subr.bf16.mxu0 %v722
        %850 = vmatpush1.bf16.msra.mxu0 %v721
        %851 = vmatprep.subr.bf16.mxu0 %v724
        %852 = vmatpush1.bf16.msra.mxu0 %v723
        %853 = vmatprep.subr.bf16.mxu0 %v726
        %854 = vmatpush1.bf16.msra.mxu0 %v725
        %855 = vmatprep.subr.bf16.mxu0 %v728
        %856 = vmatpush1.bf16.msra.mxu0 %v727
        %857 = vmatprep.subr.bf16.mxu0 %v730
        %858 = vmatpush1.bf16.msra.mxu0 %v729
        %859 = vmatprep.subr.bf16.mxu0 %v732
        %860 = vmatpush1.bf16.msra.mxu0 %v731
        %861 = vmatprep.subr.bf16.mxu0 %v734
        %862 = vmatpush1.bf16.msra.mxu0 %v733
        %863 = vmatprep.subr.bf16.mxu0 %v736
        %864 = vmatpush1.bf16.msra.mxu0 %v735
        %865 = vmatprep.subr.bf16.mxu0 %v738
        %866 = vmatpush1.bf16.msra.mxu0 %v737
        %867 = vmatprep.subr.bf16.mxu0 %v740
        %868 = vmatpush1.bf16.msra.mxu0 %v739
        %869 = vmatprep.mubr.bf16.mxu0 %v486
        %870 = vmatmul.mubr.bf16.gmra.mrb[0].mxu0 %v485
        %v871 = vpop.f32.mrb[0].mxu0
        %v872 = vadd.f32 0.0, %v871
        %v873 = vpop.f32.mrb[0].mxu0
        %v874 = vadd.f32 0.0, %v873
        %v875 = vpop.f32.mrb[0].mxu0
        %v876 = vadd.f32 0.0, %v875
        %v877 = vpop.f32.mrb[0].mxu0
        %v878 = vadd.f32 0.0, %v877
        %879 = vmatprep.mubr.bf16.mxu0 %v490
        %880 = vmatmul.mubr.bf16.gmra.mrb[0].mxu0 %v489
        %v881 = vpop.f32.mrb[0].mxu0
        %v882 = vadd.f32 0.0, %v881
        %v883 = vpop.f32.mrb[0].mxu0
        %v884 = vadd.f32 0.0, %v883
        %v885 = vpop.f32.mrb[0].mxu0
        %v886 = vadd.f32 0.0, %v885
        %v887 = vpop.f32.mrb[0].mxu0
        %v888 = vadd.f32 0.0, %v887
        %889 = vmatprep.mubr.bf16.mxu0 %v494
        %890 = vmatmul.mubr.bf16.gmra.mrb[0].mxu0 %v493
        %v891 = vpop.f32.mrb[0].mxu0
        %v892 = vadd.f32 0.0, %v891
        %v893 = vpop.f32.mrb[0].mxu0
        %v894 = vadd.f32 0.0, %v893
        %v895 = vpop.f32.mrb[0].mxu0
        %v896 = vadd.f32 0.0, %v895
        %v897 = vpop.f32.mrb[0].mxu0
        %v898 = vadd.f32 0.0, %v897
        %899 = vmatprep.mubr.bf16.mxu0 %v498
        %900 = vmatmul.mubr.bf16.gmra.mrb[0].mxu0 %v497
        %v901 = vpop.f32.mrb[0].mxu0
        %v902 = vadd.f32 0.0, %v901
        %v903 = vpop.f32.mrb[0].mxu0
        %v904 = vadd.f32 0.0, %v903
        %v905 = vpop.f32.mrb[0].mxu0
        %v906 = vadd.f32 0.0, %v905
        %v907 = vpop.f32.mrb[0].mxu0
        %v908 = vadd.f32 0.0, %v907
        %909 = vdwg.mxu0
        %910 = vmatprep.subr.bf16.mxu0 %v742
        %911 = vmatpush1.bf16.msra.mxu0 %v741
        %912 = vmatprep.subr.bf16.mxu0 %v744
        %913 = vmatpush1.bf16.msra.mxu0 %v743
        %914 = vmatprep.subr.bf16.mxu0 %v746
        %915 = vmatpush1.bf16.msra.mxu0 %v745
        %916 = vmatprep.subr.bf16.mxu0 %v748
        %917 = vmatpush1.bf16.msra.mxu0 %v747
        %918 = vmatprep.subr.bf16.mxu0 %v750
        %919 = vmatpush1.bf16.msra.mxu0 %v749
        %920 = vmatprep.subr.bf16.mxu0 %v752
        %921 = vmatpush1.bf16.msra.mxu0 %v751
        %922 = vmatprep.subr.bf16.mxu0 %v754
        %923 = vmatpush1.bf16.msra.mxu0 %v753
        %924 = vmatprep.subr.bf16.mxu0 %v756
        %925 = vmatpush1.bf16.msra.mxu0 %v755
        %926 = vmatprep.subr.bf16.mxu0 %v758
        %927 = vmatpush1.bf16.msra.mxu0 %v757
        %928 = vmatprep.subr.bf16.mxu0 %v760
        %929 = vmatpush1.bf16.msra.mxu0 %v759
        %930 = vmatprep.subr.bf16.mxu0 %v762
        %931 = vmatpush1.bf16.msra.mxu0 %v761
        %932 = vmatprep.subr.bf16.mxu0 %v764
        %933 = vmatpush1.bf16.msra.mxu0 %v763
        %934 = vmatprep.subr.bf16.mxu0 %v766
        %935 = vmatpush1.bf16.msra.mxu0 %v765
        %936 = vmatprep.subr.bf16.mxu0 %v768
        %937 = vmatpush1.bf16.msra.mxu0 %v767
        %938 = vmatprep.subr.bf16.mxu0 %v770
        %939 = vmatpush1.bf16.msra.mxu0 %v769
        %940 = vmatprep.subr.bf16.mxu0 %v772
        %941 = vmatpush1.bf16.msra.mxu0 %v771
        %942 = vmatprep.mubr.bf16.mxu0 %v488
        %943 = vmatmul.mubr.bf16.gmra.mrb[0].mxu0 %v487
        %v944 = vpop.f32.mrb[0].mxu0
        %v945 = vadd.f32 %v872, %v944
        %v946 = vpop.f32.mrb[0].mxu0
        %v947 = vadd.f32 %v874, %v946
        %v948 = vpop.f32.mrb[0].mxu0
        %v949 = vadd.f32 %v876, %v948
        %v950 = vpop.f32.mrb[0].mxu0
        %v951 = vadd.f32 %v878, %v950
        %952 = vmatprep.mubr.bf16.mxu0 %v492
        %953 = vmatmul.mubr.bf16.gmra.mrb[0].mxu0 %v491
        %v954 = vpop.f32.mrb[0].mxu0
        %v955 = vadd.f32 %v882, %v954
        %v956 = vpop.f32.mrb[0].mxu0
        %v957 = vadd.f32 %v884, %v956
        %v958 = vpop.f32.mrb[0].mxu0
        %v959 = vadd.f32 %v886, %v958
        %v960 = vpop.f32.mrb[0].mxu0
        %v961 = vadd.f32 %v888, %v960
        %962 = vmatprep.mubr.bf16.mxu0 %v496
        %963 = vmatmul.mubr.bf16.gmra.mrb[0].mxu0 %v495
        %v964 = vpop.f32.mrb[0].mxu0
        %v965 = vadd.f32 %v892, %v964
        %v966 = vpop.f32.mrb[0].mxu0
        %v967 = vadd.f32 %v894, %v966
        %v968 = vpop.f32.mrb[0].mxu0
        %v969 = vadd.f32 %v896, %v968
        %v970 = vpop.f32.mrb[0].mxu0
        %v971 = vadd.f32 %v898, %v970
        %972 = vmatprep.mubr.bf16.mxu0 %v500
        %973 = vmatmul.mubr.bf16.gmra.mrb[0].mxu0 %v499
        %v974 = vpop.f32.mrb[0].mxu0
        %v975 = vadd.f32 %v902, %v974
        %v976 = vpop.f32.mrb[0].mxu0
        %v977 = vadd.f32 %v904, %v976
        %v978 = vpop.f32.mrb[0].mxu0
        %v979 = vadd.f32 %v906, %v978
        %v980 = vpop.f32.mrb[0].mxu0
        %v981 = vadd.f32 %v908, %v980
        %982 = vdwg.mxu0
        %v983 = vadd.f32 %v341, %v945
        %v984 = vadd.f32 %v342, %v947
        %v985 = vadd.f32 %v343, %v949
        %v986 = vadd.f32 %v344, %v951
        %v987 = vadd.f32 %v345, %v955
        %v988 = vadd.f32 %v346, %v957
        %v989 = vadd.f32 %v347, %v959
        %v990 = vadd.f32 %v348, %v961
        %v991 = vadd.f32 %v349, %v965
        %v992 = vadd.f32 %v350, %v967
        %v993 = vadd.f32 %v351, %v969
        %v994 = vadd.f32 %v352, %v971
        %v995 = vadd.f32 %v353, %v975
        %v996 = vadd.f32 %v354, %v977
        %v997 = vadd.f32 %v355, %v979
        %v998 = vadd.f32 %v356, %v981
        %999 = vst [vmem:[#allocation2] sm:$0xff] %v983
        %1000 = vst [vmem:[#allocation2 + $0x8] sm:$0xff] %v984
        %1001 = vst [vmem:[#allocation2 + $0x10] sm:$0xff] %v985
        %1002 = vst [vmem:[#allocation2 + $0x18] sm:$0xff] %v986
        %1003 = vst [vmem:[#allocation2 + $0x20] sm:$0xff] %v987
        %1004 = vst [vmem:[#allocation2 + $0x28] sm:$0xff] %v988
        %1005 = vst [vmem:[#allocation2 + $0x30] sm:$0xff] %v989
        %1006 = vst [vmem:[#allocation2 + $0x38] sm:$0xff] %v990
        %1007 = vst [vmem:[#allocation2 + $0x40] sm:$0xff] %v991
        %1008 = vst [vmem:[#allocation2 + $0x48] sm:$0xff] %v992
        %1009 = vst [vmem:[#allocation2 + $0x50] sm:$0xff] %v993
        %1010 = vst [vmem:[#allocation2 + $0x58] sm:$0xff] %v994
        %1011 = vst [vmem:[#allocation2 + $0x60] sm:$0xff] %v995
        %1012 = vst [vmem:[#allocation2 + $0x68] sm:$0xff] %v996
        %1013 = vst [vmem:[#allocation2 + $0x70] sm:$0xff] %v997
        %1014 = vst [vmem:[#allocation2 + $0x78] sm:$0xff] %v998
        %p1015 = scmp.eq.s32.totalorder %s21, 3
        // Predicated region
        $region60: #{main_model_step.14} parent=50 // pred_check
          %p1016 = pneg %p1015
        $region61: #{main_model_step.14} parent=50 // pred_check_branch
          %1018 = sbr.rel (%p1016) target = $region63
        $region62: #{main_model_step.14} parent=50 // pred_region
          %v1019 = vld [vmem:[#allocation2] sm:$0xff]
          %v1020 = vld [vmem:[#allocation2 + $0x8] sm:$0xff]
          %v1021 = vld [vmem:[#allocation2 + $0x10] sm:$0xff]
          %v1022 = vld [vmem:[#allocation2 + $0x18] sm:$0xff]
          %v1023 = vld [vmem:[#allocation2 + $0x20] sm:$0xff]
          %v1024 = vld [vmem:[#allocation2 + $0x28] sm:$0xff]
          %v1025 = vld [vmem:[#allocation2 + $0x30] sm:$0xff]
          %v1026 = vld [vmem:[#allocation2 + $0x38] sm:$0xff]
          %v1027 = vld [vmem:[#allocation2 + $0x40] sm:$0xff]
          %v1028 = vld [vmem:[#allocation2 + $0x48] sm:$0xff]
          %v1029 = vld [vmem:[#allocation2 + $0x50] sm:$0xff]
          %v1030 = vld [vmem:[#allocation2 + $0x58] sm:$0xff]
          %v1031 = vld [vmem:[#allocation2 + $0x60] sm:$0xff]
          %v1032 = vld [vmem:[#allocation2 + $0x68] sm:$0xff]
          %v1033 = vld [vmem:[#allocation2 + $0x70] sm:$0xff]
          %v1034 = vld [vmem:[#allocation2 + $0x78] sm:$0xff]
          %v1035 = vld [vmem:[%s307] sm:$0x3]
          %v1037 = vlaneseq
          %v1038 = vshrl.u32 %v1037, 7
          %v1039 = vsub.s32 0, %v1038
          %v1040 = vrot.slane %v1035, %v1039
          %v1041 = vlaneseq
          %v1042 = vshrl.u32 %v1041, 7
          %v1043 = vsub.s32 1, %v1042
          %v1044 = vrot.slane %v1035, %v1043
          %v1047 = vadd.f32 %v1019, %v1040
          %v1048 = vadd.f32 %v1020, %v1044
          %v1049 = vadd.f32 %v1021, %v1040
          %v1050 = vadd.f32 %v1022, %v1044
          %v1051 = vadd.f32 %v1023, %v1040
          %v1052 = vadd.f32 %v1024, %v1044
          %v1053 = vadd.f32 %v1025, %v1040
          %v1054 = vadd.f32 %v1026, %v1044
          %v1055 = vadd.f32 %v1027, %v1040
          %v1056 = vadd.f32 %v1028, %v1044
          %v1057 = vadd.f32 %v1029, %v1040
          %v1058 = vadd.f32 %v1030, %v1044
          %v1059 = vadd.f32 %v1031, %v1040
          %v1060 = vadd.f32 %v1032, %v1044
          %v1061 = vadd.f32 %v1033, %v1040
          %v1062 = vadd.f32 %v1034, %v1044
          %v1063 = vpack.c.bf16 %v1049, %v1047
          %v1064 = vpack.c.bf16 %v1050, %v1048
          %v1065 = vpack.c.bf16 %v1053, %v1051
          %v1066 = vpack.c.bf16 %v1054, %v1052
          %v1067 = vpack.c.bf16 %v1057, %v1055
          %v1068 = vpack.c.bf16 %v1058, %v1056
          %v1069 = vpack.c.bf16 %v1061, %v1059
          %v1070 = vpack.c.bf16 %v1062, %v1060
          %v1079 = vunpack.c.l.b16 %v1063
          %v1080 = vunpack.c.l.b16 %v1064
          %v1081 = vunpack.c.h.b16 %v1063
          %v1082 = vunpack.c.h.b16 %v1064
          %v1083 = vunpack.c.l.b16 %v1065
          %v1084 = vunpack.c.l.b16 %v1066
          %v1085 = vunpack.c.h.b16 %v1065
          %v1086 = vunpack.c.h.b16 %v1066
          %v1087 = vunpack.c.l.b16 %v1067
          %v1088 = vunpack.c.l.b16 %v1068
          %v1089 = vunpack.c.h.b16 %v1067
          %v1090 = vunpack.c.h.b16 %v1068
          %v1091 = vunpack.c.l.b16 %v1069
          %v1092 = vunpack.c.l.b16 %v1070
          %v1093 = vunpack.c.h.b16 %v1069
          %v1094 = vunpack.c.h.b16 %v1070
          %v1095 = vpack.c.b16 %v1080, %v1079
          %v1096 = vpack.c.b16 %v1082, %v1081
          %v1097 = vpack.c.b16 %v1084, %v1083
          %v1098 = vpack.c.b16 %v1086, %v1085
          %v1099 = vpack.c.b16 %v1088, %v1087
          %v1100 = vpack.c.b16 %v1090, %v1089
          %v1101 = vpack.c.b16 %v1092, %v1091
          %v1102 = vpack.c.b16 %v1094, %v1093
          %1111 = vst [vmem:[%s318] sm:$0xff] %v1095
          %1112 = vst [vmem:[%s318 + $0x8] sm:$0xff] %v1096
          %1113 = vst [vmem:[%s318 + $0x10] sm:$0xff] %v1097
          %1114 = vst [vmem:[%s318 + $0x18] sm:$0xff] %v1098
          %1115 = vst [vmem:[%s318 + $0x20] sm:$0xff] %v1099
          %1116 = vst [vmem:[%s318 + $0x28] sm:$0xff] %v1100
          %1117 = vst [vmem:[%s318 + $0x30] sm:$0xff] %v1101
          %1118 = vst [vmem:[%s318 + $0x38] sm:$0xff] %v1102
        $region63: #{main_model_step.14} parent=50 // pred_fallthru
          _
        %s1119 = smul.u32 8, %s19
        %s1120 = smul.u32 2, %s20
        %p1121 = scmp.lt.s32.totalorder %s1119, 7
        %s1122 = scalar_select %p1121, %s1119, 7
        %p1123 = scmp.lt.s32.totalorder %s1120, 1
        %s1124 = scalar_select %p1123, %s1120, 1
        %s1125 = smul.addr %s1122, 2
        %s1126 = sadd.s32 %s1124, %s1125
        %s1127 = smul.addr %s1126, 4
        %s1128 = scalar_lea.vmem %s3, %s1127
        // Predicated region
        $region64: #{main_model_step.14} parent=50 // pred_check
          %p1129 = pneg %p135
        $region65: #{main_model_step.14} parent=50 // pred_check_branch
          %1131 = sbr.rel (%p1129) target = $region67
        $region66: #{main_model_step.14} parent=50 // pred_region
          %s1132 = smul.u32 8, %s19
          %s1133 = smul.u32 2, %s20
        $region67: #{main_model_step.14} parent=50 // pred_fallthru
          _
        // Predicated region
        $region68: #{main_model_step.14} parent=50 // pred_check
          %p1134 = pneg %p135
        $region69: #{main_model_step.14} parent=50 // pred_check_branch
          %1136 = sbr.rel (%p1134) target = $region71
        $region70: #{main_model_step.14} parent=50 // pred_region
          %s1137 = smul.u32 8, %s19
          %s1138 = smul.u32 2, %s20
          %p1139 = scmp.lt.s32.totalorder %s1137, 7
          %s1140 = scalar_select %p1139, %s1137, 7
          %p1141 = scmp.lt.s32.totalorder %s1138, 1
          %s1142 = scalar_select %p1141, %s1138, 1
          %s1143 = smul.addr %s1140, 2
          %s1144 = sadd.s32 %s1142, %s1143
          %s1145 = smul.addr %s1144, 4
          %s1146 = scalar_lea.vmem %s3, %s1145
        $region71: #{main_model_step.14} parent=50 // pred_fallthru
          _
      $region51: #{main_model_step.14} parent=5 // pred_fallthru
        _
      %p1147 = scmp.le.s32.totalorder 2, %s9
      // Predicated region
      $region72: #{main_model_step.14} parent=5 // pred_check
        %p1148 = pneg %p1147
      $region73: #{main_model_step.14} parent=5 // pred_check_branch
        %1150 = sbr.rel (%p1148) target = $region75
      $region74: #{main_model_step.14} parent=5 // pred_region
        %s1151 = ssub.s32 %s9, 2
      $region75: #{main_model_step.14} parent=5 // pred_fallthru
        _
    $region6: #{main_model_step.14} parent=1 // loop_footer
      %s13 = sadd.s32 1, %s9
    $region7: #{main_model_step.14} parent=1 // loop_footer_branch
      %8 = sbr.rel target = $region3
    $region8: #{main_model_step.14} parent=1 // loop_exit
      _

// kernel: main_model_step.16
$region0: #{main_model_step.16}
  #allocation0 [shape = 'u32[]', space=smem, size = 0x4, offset = 0x4, fixed_abs, tag = 'smem constant byte address 0x4 - core index']
  #allocation1 [shape = 'u32[144,128]{1,0:T(1,128)}', space=vmem, size = 0x12000, scoped, tag = 'internal scratch']
  #allocation2 [shape = 'f32[48,256]{1,0:T(8,128)}', space=vmem, size = 0xc000, scoped, tag = 'scratch operand']
  %s0 = inlined_call_operand.vmem [shape: bf16[48,4096], index: 0, kind: input, shape index: {}]
  %s1 = inlined_call_operand.vmem [shape: bf16[4096,512], index: 1, kind: input, shape index: {}]
  %s2 = inlined_call_operand.vmem [shape: f32[1,512], index: 2, kind: input, shape index: {}]
  %s3 = inlined_call_operand.vmem [shape: bf16[48,512], index: 3, kind: output, shape index: {}]
  %s4 = sld [smem:[#allocation0]]
  $region148: #{main_model_step.16} parent=0
    _
  %s6 = ssub.s32 1, %s4
  %s7 = scalar_select 0, %s6, %s4
  $region1: #{main_model_step.16} parent=0
    #allocation3 [shape = 'u8[98304]{0}', space=vmem, size = 0x18000, scoped, tag = 'input window, operand 0']
    #allocation4 [shape = 'u8[524288]{0}', space=vmem, size = 0x80000, scoped, tag = 'input window, operand 1']
    #allocation5 [shape = 'u8[49152]{0}', space=vmem, size = 0xc000, scoped, tag = 'output window, operand 0']
    loop: start=0, step=1, limit=18
    $region2: #{main_model_step.16} parent=1 // loop_pre_header
      _
    $region3: #{main_model_step.16} parent=1 // loop_header
      %s9 = sphi 0, %s13
      %p10 = scmp.ge.s32.totalorder %s9, 18
      %s16 = sphi 0, %s35
      %s17 = sphi 0, %s31
      %s18 = sphi 0, %s27
      %s19 = sphi 0, %s16
      %s20 = sphi 0, %s17
      %s21 = sphi 0, %s18
      %s22 = sphi 0, %s19
      %s23 = sphi 0, %s20
      %s24 = sphi 0, %s21
      %s40 = sphi 0, %s42
      %s43 = sphi 0, %s40
      %s44 = sphi 0, %s43
      %s60 = sphi 0, %s44
      %s68 = sphi 0, %s70
      %s71 = sphi 0, %s68
      %s72 = sphi 0, %s71
      %s88 = sphi 0, %s72
      %s94 = sphi 0, %s96
      %s97 = sphi 0, %s94
      %s98 = sphi 0, %s97
      %s114 = sphi 0, %s98
      %s122 = sphi 0, %s124
      %s125 = sphi 0, %s122
      %s126 = sphi 0, %s125
      %s142 = sphi 0, %s126
    $region4: #{main_model_step.16} parent=1 // loop_header_branch
      %12 = sbr.rel (%p10) target = $region8
    $region5: #{main_model_step.16} parent=1 // loop_body
      %s14 = ssub.s32 %s9, 1
      %s15 = ssub.s32 %s9, 2
      %s25 = sadd.s32 1, %s18
      %p26 = scmp.ge.s32.totalorder %s25, 8
      %s27 = scalar_select %p26, 0, %s25
      %s28 = sadd.s32 1, %s17
      %s29 = scalar_select %p26, %s28, %s17
      %p30 = scmp.ge.s32.totalorder %s29, 2
      %s31 = scalar_select %p30, 0, %s29
      %s32 = sadd.s32 1, %s16
      %s33 = scalar_select %p30, %s32, %s16
      %p34 = scmp.ge.s32.totalorder %s33, 1
      %s35 = scalar_select %p34, 0, %s33
      %s36 = ssub.s32 %s16, %s35
      %s37 = ssub.s32 %s18, %s27
      %s38 = sor.u32 %s36, %s37
      %p39 = scmp.eq.s32.totalorder %s38, 0
      %s41 = sadd.s32 %s40, 1
      %s42 = scalar_select %p39, %s40, %s41
      %p45 = pneg %p39
      %p46 = scmp.eq.s32.totalorder %s9, 15
      %p47 = por %p45, %p46
      %p48 = scmp.ne.s32.totalorder %s40, %s43
      %p49 = scmp.eq.s32.totalorder %s9, 0
      %p50 = por %p48, %p49
      %p51 = scmp.ne.s32.totalorder %s40, %s43
      %p52 = scmp.eq.s32.totalorder %s14, 15
      %p53 = por %p51, %p52
      %p54 = scmp.ne.s32.totalorder %s43, %s44
      %p55 = scmp.eq.s32.totalorder %s14, 0
      %p56 = por %p54, %p55
      %p57 = scmp.ne.s32.totalorder %s43, %s44
      %p58 = scmp.eq.s32.totalorder %s15, 15
      %p59 = por %p57, %p58
      %p61 = scmp.ne.s32.totalorder %s44, %s60
      %p62 = scmp.eq.s32.totalorder %s15, 0
      %p63 = por %p61, %p62
      %s64 = ssub.s32 %s18, %s27
      %s65 = ssub.s32 %s17, %s31
      %s66 = sor.u32 %s64, %s65
      %p67 = scmp.eq.s32.totalorder %s66, 0
      %s69 = sadd.s32 %s68, 1
      %s70 = scalar_select %p67, %s68, %s69
      %p73 = pneg %p67
      %p74 = scmp.eq.s32.totalorder %s9, 15
      %p75 = por %p73, %p74
      %p76 = scmp.ne.s32.totalorder %s68, %s71
      %p77 = scmp.eq.s32.totalorder %s9, 0
      %p78 = por %p76, %p77
      %p79 = scmp.ne.s32.totalorder %s68, %s71
      %p80 = scmp.eq.s32.totalorder %s14, 15
      %p81 = por %p79, %p80
      %p82 = scmp.ne.s32.totalorder %s71, %s72
      %p83 = scmp.eq.s32.totalorder %s14, 0
      %p84 = por %p82, %p83
      %p85 = scmp.ne.s32.totalorder %s71, %s72
      %p86 = scmp.eq.s32.totalorder %s15, 15
      %p87 = por %p85, %p86
      %p89 = scmp.ne.s32.totalorder %s72, %s88
      %p90 = scmp.eq.s32.totalorder %s15, 0
      %p91 = por %p89, %p90
      %s92 = ssub.s32 %s17, %s31
      %p93 = scmp.eq.s32.totalorder %s92, 0
      %s95 = sadd.s32 %s94, 1
      %s96 = scalar_select %p93, %s94, %s95
      %p99 = pneg %p93
      %p100 = scmp.eq.s32.totalorder %s9, 15
      %p101 = por %p99, %p100
      %p102 = scmp.ne.s32.totalorder %s94, %s97
      %p103 = scmp.eq.s32.totalorder %s9, 0
      %p104 = por %p102, %p103
      %p105 = scmp.ne.s32.totalorder %s94, %s97
      %p106 = scmp.eq.s32.totalorder %s14, 15
      %p107 = por %p105, %p106
      %p108 = scmp.ne.s32.totalorder %s97, %s98
      %p109 = scmp.eq.s32.totalorder %s14, 0
      %p110 = por %p108, %p109
      %p111 = scmp.ne.s32.totalorder %s97, %s98
      %p112 = scmp.eq.s32.totalorder %s15, 15
      %p113 = por %p111, %p112
      %p115 = scmp.ne.s32.totalorder %s98, %s114
      %p116 = scmp.eq.s32.totalorder %s15, 0
      %p117 = por %p115, %p116
      %s118 = ssub.s32 %s16, %s35
      %s119 = ssub.s32 %s17, %s31
      %s120 = sor.u32 %s118, %s119
      %p121 = scmp.eq.s32.totalorder %s120, 0
      %s123 = sadd.s32 %s122, 1
      %s124 = scalar_select %p121, %s122, %s123
      %p127 = pneg %p121
      %p128 = scmp.eq.s32.totalorder %s9, 15
      %p129 = por %p127, %p128
      %p130 = scmp.ne.s32.totalorder %s122, %s125
      %p131 = scmp.eq.s32.totalorder %s9, 0
      %p132 = por %p130, %p131
      %p133 = scmp.ne.s32.totalorder %s122, %s125
      %p134 = scmp.eq.s32.totalorder %s14, 15
      %p135 = por %p133, %p134
      %p136 = scmp.ne.s32.totalorder %s125, %s126
      %p137 = scmp.eq.s32.totalorder %s14, 0
      %p138 = por %p136, %p137
      %p139 = scmp.ne.s32.totalorder %s125, %s126
      %p140 = scmp.eq.s32.totalorder %s15, 15
      %p141 = por %p139, %p140
      %p143 = scmp.ne.s32.totalorder %s126, %s142
      %p144 = scmp.eq.s32.totalorder %s15, 0
      %p145 = por %p143, %p144
      %p146 = scmp.le.s32.totalorder 1, %s9
      %p147 = scmp.lt.s32.totalorder %s9, 17
      %p148 = pnand %p146, %p147
      %p149 = pneg %p148
      // Predicated region
      $region9: #{main_model_step.16} parent=5 // pred_check
        _
      $region10: #{main_model_step.16} parent=5 // pred_check_branch
        %151 = sbr.rel (%p148) target = $region12
      $region11: #{main_model_step.16} parent=5 // pred_region
        %s152 = ssub.s32 %s9, 1
      $region12: #{main_model_step.16} parent=5 // pred_fallthru
        _
      %p153 = scmp.lt.s32.totalorder %s9, 16
      // Predicated region
      $region13: #{main_model_step.16} parent=5 // pred_check
        %p154 = pneg %p153
      $region14: #{main_model_step.16} parent=5 // pred_check_branch
        %156 = sbr.rel (%p154) target = $region16
      $region15: #{main_model_step.16} parent=5 // pred_region
        // Predicated region
        $region17: #{main_model_step.16} parent=15 // pred_check
          %p157 = pneg %p50
        $region18: #{main_model_step.16} parent=15 // pred_check_branch
          %159 = sbr.rel (%p157) target = $region20
        $region19: #{main_model_step.16} parent=15 // pred_region
          %s160 = sand.u32 %s40, 1
          %s161 = sand.u32 %s40, 1
          %s162 = smul.addr %s161, 96
          %s163 = scalar_lea.vmem [#allocation3], %s162
          %s164 = smul.u32 6, %s16
          %s165 = smul.u32 4, %s18
          %s166 = smul.addr %s164, 32
          %s167 = sadd.s32 %s165, %s166
          %s168 = smul.addr %s167, 4
          %s169 = scalar_lea.vmem %s0, %s168
          // Predicated region
          $region21: #{main_model_step.16} parent=19 // pred_check
            _
          $region22: #{main_model_step.16} parent=19 // pred_check_branch
            %171 = sbr.rel (0) target = $region24
          $region23: #{main_model_step.16} parent=19 // pred_region
            // Predicated region
            $region25: #{main_model_step.16} parent=23 // pred_check
              _
            $region26: #{main_model_step.16} parent=23 // pred_check_branch
              %173 = sbr.rel (0) target = $region28
            $region27: #{main_model_step.16} parent=23 // pred_region
              loop: start=0, step=1, limit=1
              $region29: #{main_model_step.16} parent=27 // loop_pre_header
                _
              $region30: #{main_model_step.16} parent=27 // loop_header
                %s175 = sphi 0, %s179
                %p176 = scmp.ge.s32.totalorder %s175, 1
                %s180 = sphi %s169, %s169
                %s181 = sphi %s163, %s163
              $region31: #{main_model_step.16} parent=27 // loop_header_branch
                %178 = sbr.rel (%p176) target = $region35
              $region32: #{main_model_step.16} parent=27 // loop_body
                %v182 = vld [vmem:[%s180] sm:$0xff]
                %183 = vst [vmem:[%s181] sm:$0xff] %v182
                %v184 = vld [vmem:[%s180 + $0x8] sm:$0xff]
                %185 = vst [vmem:[%s181 + $0x8] sm:$0xff] %v184
                %v186 = vld [vmem:[%s180 + $0x80] sm:$0xff]
                %187 = vst [vmem:[%s181 + $0x10] sm:$0xff] %v186
                %v188 = vld [vmem:[%s180 + $0x88] sm:$0xff]
                %189 = vst [vmem:[%s181 + $0x18] sm:$0xff] %v188
                %v190 = vld [vmem:[%s180 + $0x100] sm:$0xff]
                %191 = vst [vmem:[%s181 + $0x20] sm:$0xff] %v190
                %v192 = vld [vmem:[%s180 + $0x108] sm:$0xff]
                %193 = vst [vmem:[%s181 + $0x28] sm:$0xff] %v192
                %v194 = vld [vmem:[%s180 + $0x180] sm:$0xff]
                %195 = vst [vmem:[%s181 + $0x30] sm:$0xff] %v194
                %v196 = vld [vmem:[%s180 + $0x188] sm:$0xff]
                %197 = vst [vmem:[%s181 + $0x38] sm:$0xff] %v196
                %v198 = vld [vmem:[%s180 + $0x200] sm:$0xff]
                %199 = vst [vmem:[%s181 + $0x40] sm:$0xff] %v198
                %v200 = vld [vmem:[%s180 + $0x208] sm:$0xff]
                %201 = vst [vmem:[%s181 + $0x48] sm:$0xff] %v200
                %v202 = vld [vmem:[%s180 + $0x280] sm:$0xff]
                %203 = vst [vmem:[%s181 + $0x50] sm:$0xff] %v202
                %v204 = vld [vmem:[%s180 + $0x288] sm:$0xff]
                %205 = vst [vmem:[%s181 + $0x58] sm:$0xff] %v204
              $region33: #{main_model_step.16} parent=27 // loop_footer
                %s179 = sadd.s32 1, %s175
              $region34: #{main_model_step.16} parent=27 // loop_footer_branch
                %174 = sbr.rel target = $region30
              $region35: #{main_model_step.16} parent=27 // loop_exit
                _
            $region28: #{main_model_step.16} parent=23 // pred_fallthru
              _
            // Predicated region
            $region36: #{main_model_step.16} parent=23 // pred_check
              _
            $region37: #{main_model_step.16} parent=23 // pred_check_branch
              %207 = sbr.rel target = $region39
            $region38: #{main_model_step.16} parent=23 // pred_region
              _
            $region39: #{main_model_step.16} parent=23 // pred_fallthru
              _
          $region24: #{main_model_step.16} parent=19 // pred_fallthru
            _
          %208 = vnop
        $region20: #{main_model_step.16} parent=15 // pred_fallthru
          _
        // Predicated region
        $region40: #{main_model_step.16} parent=15 // pred_check
          %p209 = pneg %p78
        $region41: #{main_model_step.16} parent=15 // pred_check_branch
          %211 = sbr.rel (%p209) target = $region43
        $region42: #{main_model_step.16} parent=15 // pred_region
          %s212 = sand.u32 %s68, 1
          %s213 = sand.u32 %s68, 1
          %s214 = smul.addr %s213, 512
          %s215 = scalar_lea.vmem [#allocation4], %s214
          %s216 = smul.u32 64, %s18
          %s217 = smul.u32 2, %s17
          %s218 = smul.addr %s216, 4
          %s219 = sadd.s32 %s217, %s218
          %s220 = smul.addr %s219, 4
          %s221 = scalar_lea.vmem %s1, %s220
          // Predicated region
          $region44: #{main_model_step.16} parent=42 // pred_check
            _
          $region45: #{main_model_step.16} parent=42 // pred_check_branch
            %223 = sbr.rel (0) target = $region47
          $region46: #{main_model_step.16} parent=42 // pred_region
            // Predicated region
            $region48: #{main_model_step.16} parent=46 // pred_check
              _
            $region49: #{main_model_step.16} parent=46 // pred_check_branch
              %225 = sbr.rel (0) target = $region51
            $region50: #{main_model_step.16} parent=46 // pred_region
              // Predicated region
              $region63: #{main_model_step.16} parent=50 // pred_check
                _
              $region64: #{main_model_step.16} parent=50 // pred_check_branch
                %366 = sbr.rel (0) target = $region66
              $region65: #{main_model_step.16} parent=50 // pred_region
                loop: start=0, step=1, limit=1
                $region67: #{main_model_step.16} parent=65 // loop_pre_header
                  _
                $region68: #{main_model_step.16} parent=65 // loop_header
                  %s368 = sphi 0, %s372
                  %p369 = scmp.ge.s32.totalorder %s368, 1
                  %s373 = sphi %s221, %s221
                  %s374 = sphi %s215, %s215
                $region69: #{main_model_step.16} parent=65 // loop_header_branch
                  %371 = sbr.rel (%p369) target = $region73
                $region70: #{main_model_step.16} parent=65 // loop_body
                  %v375 = vld [vmem:[%s373] sm:$0xff]
                  %376 = vst [vmem:[%s374] sm:$0xff] %v375
                  %v377 = vld [vmem:[%s373 + $0x10] sm:$0xff]
                  %378 = vst [vmem:[%s374 + $0x8] sm:$0xff] %v377
                  %v379 = vld [vmem:[%s373 + $0x20] sm:$0xff]
                  %380 = vst [vmem:[%s374 + $0x10] sm:$0xff] %v379
                  %v381 = vld [vmem:[%s373 + $0x30] sm:$0xff]
                  %382 = vst [vmem:[%s374 + $0x18] sm:$0xff] %v381
                  %v383 = vld [vmem:[%s373 + $0x40] sm:$0xff]
                  %384 = vst [vmem:[%s374 + $0x20] sm:$0xff] %v383
                  %v385 = vld [vmem:[%s373 + $0x50] sm:$0xff]
                  %386 = vst [vmem:[%s374 + $0x28] sm:$0xff] %v385
                  %v387 = vld [vmem:[%s373 + $0x60] sm:$0xff]
                  %388 = vst [vmem:[%s374 + $0x30] sm:$0xff] %v387
                  %v389 = vld [vmem:[%s373 + $0x70] sm:$0xff]
                  %390 = vst [vmem:[%s374 + $0x38] sm:$0xff] %v389
                  %v391 = vld [vmem:[%s373 + $0x80] sm:$0xff]
                  %392 = vst [vmem:[%s374 + $0x40] sm:$0xff] %v391
                  %v393 = vld [vmem:[%s373 + $0x90] sm:$0xff]
                  %394 = vst [vmem:[%s374 + $0x48] sm:$0xff] %v393
                  %v395 = vld [vmem:[%s373 + $0xa0] sm:$0xff]
                  %396 = vst [vmem:[%s374 + $0x50] sm:$0xff] %v395
                  %v397 = vld [vmem:[%s373 + $0xb0] sm:$0xff]
                  %398 = vst [vmem:[%s374 + $0x58] sm:$0xff] %v397
                  %v399 = vld [vmem:[%s373 + $0xc0] sm:$0xff]
                  %400 = vst [vmem:[%s374 + $0x60] sm:$0xff] %v399
                  %v401 = vld [vmem:[%s373 + $0xd0] sm:$0xff]
                  %402 = vst [vmem:[%s374 + $0x68] sm:$0xff] %v401
                  %v403 = vld [vmem:[%s373 + $0xe0] sm:$0xff]
                  %404 = vst [vmem:[%s374 + $0x70] sm:$0xff] %v403
                  %v405 = vld [vmem:[%s373 + $0xf0] sm:$0xff]
                  %406 = vst [vmem:[%s374 + $0x78] sm:$0xff] %v405
                  %v407 = vld [vmem:[%s373 + $0x100] sm:$0xff]
                  %408 = vst [vmem:[%s374 + $0x80] sm:$0xff] %v407
                  %v409 = vld [vmem:[%s373 + $0x110] sm:$0xff]
                  %410 = vst [vmem:[%s374 + $0x88] sm:$0xff] %v409
                  %v411 = vld [vmem:[%s373 + $0x120] sm:$0xff]
                  %412 = vst [vmem:[%s374 + $0x90] sm:$0xff] %v411
                  %v413 = vld [vmem:[%s373 + $0x130] sm:$0xff]
                  %414 = vst [vmem:[%s374 + $0x98] sm:$0xff] %v413
                  %v415 = vld [vmem:[%s373 + $0x140] sm:$0xff]
                  %416 = vst [vmem:[%s374 + $0xa0] sm:$0xff] %v415
                  %v417 = vld [vmem:[%s373 + $0x150] sm:$0xff]
                  %418 = vst [vmem:[%s374 + $0xa8] sm:$0xff] %v417
                  %v419 = vld [vmem:[%s373 + $0x160] sm:$0xff]
                  %420 = vst [vmem:[%s374 + $0xb0] sm:$0xff] %v419
                  %v421 = vld [vmem:[%s373 + $0x170] sm:$0xff]
                  %422 = vst [vmem:[%s374 + $0xb8] sm:$0xff] %v421
                  %v423 = vld [vmem:[%s373 + $0x180] sm:$0xff]
                  %424 = vst [vmem:[%s374 + $0xc0] sm:$0xff] %v423
                  %v425 = vld [vmem:[%s373 + $0x190] sm:$0xff]
                  %426 = vst [vmem:[%s374 + $0xc8] sm:$0xff] %v425
                  %v427 = vld [vmem:[%s373 + $0x1a0] sm:$0xff]
                  %428 = vst [vmem:[%s374 + $0xd0] sm:$0xff] %v427
                  %v429 = vld [vmem:[%s373 + $0x1b0] sm:$0xff]
                  %430 = vst [vmem:[%s374 + $0xd8] sm:$0xff] %v429
                  %v431 = vld [vmem:[%s373 + $0x1c0] sm:$0xff]
                  %432 = vst [vmem:[%s374 + $0xe0] sm:$0xff] %v431
                  %v433 = vld [vmem:[%s373 + $0x1d0] sm:$0xff]
                  %434 = vst [vmem:[%s374 + $0xe8] sm:$0xff] %v433
                  %v435 = vld [vmem:[%s373 + $0x1e0] sm:$0xff]
                  %436 = vst [vmem:[%s374 + $0xf0] sm:$0xff] %v435
                  %v437 = vld [vmem:[%s373 + $0x1f0] sm:$0xff]
                  %438 = vst [vmem:[%s374 + $0xf8] sm:$0xff] %v437
                  %v439 = vld [vmem:[%s373 + $0x200] sm:$0xff]
                  %440 = vst [vmem:[%s374 + $0x100] sm:$0xff] %v439
                  %v441 = vld [vmem:[%s373 + $0x210] sm:$0xff]
                  %442 = vst [vmem:[%s374 + $0x108] sm:$0xff] %v441
                  %v443 = vld [vmem:[%s373 + $0x220] sm:$0xff]
                  %444 = vst [vmem:[%s374 + $0x110] sm:$0xff] %v443
                  %v445 = vld [vmem:[%s373 + $0x230] sm:$0xff]
                  %446 = vst [vmem:[%s374 + $0x118] sm:$0xff] %v445
                  %v447 = vld [vmem:[%s373 + $0x240] sm:$0xff]
                  %448 = vst [vmem:[%s374 + $0x120] sm:$0xff] %v447
                  %v449 = vld [vmem:[%s373 + $0x250] sm:$0xff]
                  %450 = vst [vmem:[%s374 + $0x128] sm:$0xff] %v449
                  %v451 = vld [vmem:[%s373 + $0x260] sm:$0xff]
                  %452 = vst [vmem:[%s374 + $0x130] sm:$0xff] %v451
                  %v453 = vld [vmem:[%s373 + $0x270] sm:$0xff]
                  %454 = vst [vmem:[%s374 + $0x138] sm:$0xff] %v453
                  %v455 = vld [vmem:[%s373 + $0x280] sm:$0xff]
                  %456 = vst [vmem:[%s374 + $0x140] sm:$0xff] %v455
                  %v457 = vld [vmem:[%s373 + $0x290] sm:$0xff]
                  %458 = vst [vmem:[%s374 + $0x148] sm:$0xff] %v457
                  %v459 = vld [vmem:[%s373 + $0x2a0] sm:$0xff]
                  %460 = vst [vmem:[%s374 + $0x150] sm:$0xff] %v459
                  %v461 = vld [vmem:[%s373 + $0x2b0] sm:$0xff]
                  %462 = vst [vmem:[%s374 + $0x158] sm:$0xff] %v461
                  %v463 = vld [vmem:[%s373 + $0x2c0] sm:$0xff]
                  %464 = vst [vmem:[%s374 + $0x160] sm:$0xff] %v463
                  %v465 = vld [vmem:[%s373 + $0x2d0] sm:$0xff]
                  %466 = vst [vmem:[%s374 + $0x168] sm:$0xff] %v465
                  %v467 = vld [vmem:[%s373 + $0x2e0] sm:$0xff]
                  %468 = vst [vmem:[%s374 + $0x170] sm:$0xff] %v467
                  %v469 = vld [vmem:[%s373 + $0x2f0] sm:$0xff]
                  %470 = vst [vmem:[%s374 + $0x178] sm:$0xff] %v469
                  %v471 = vld [vmem:[%s373 + $0x300] sm:$0xff]
                  %472 = vst [vmem:[%s374 + $0x180] sm:$0xff] %v471
                  %v473 = vld [vmem:[%s373 + $0x310] sm:$0xff]
                  %474 = vst [vmem:[%s374 + $0x188] sm:$0xff] %v473
                  %v475 = vld [vmem:[%s373 + $0x320] sm:$0xff]
                  %476 = vst [vmem:[%s374 + $0x190] sm:$0xff] %v475
                  %v477 = vld [vmem:[%s373 + $0x330] sm:$0xff]
                  %478 = vst [vmem:[%s374 + $0x198] sm:$0xff] %v477
                  %v479 = vld [vmem:[%s373 + $0x340] sm:$0xff]
                  %480 = vst [vmem:[%s374 + $0x1a0] sm:$0xff] %v479
                  %v481 = vld [vmem:[%s373 + $0x350] sm:$0xff]
                  %482 = vst [vmem:[%s374 + $0x1a8] sm:$0xff] %v481
                  %v483 = vld [vmem:[%s373 + $0x360] sm:$0xff]
                  %484 = vst [vmem:[%s374 + $0x1b0] sm:$0xff] %v483
                  %v485 = vld [vmem:[%s373 + $0x370] sm:$0xff]
                  %486 = vst [vmem:[%s374 + $0x1b8] sm:$0xff] %v485
                  %v487 = vld [vmem:[%s373 + $0x380] sm:$0xff]
                  %488 = vst [vmem:[%s374 + $0x1c0] sm:$0xff] %v487
                  %v489 = vld [vmem:[%s373 + $0x390] sm:$0xff]
                  %490 = vst [vmem:[%s374 + $0x1c8] sm:$0xff] %v489
                  %v491 = vld [vmem:[%s373 + $0x3a0] sm:$0xff]
                  %492 = vst [vmem:[%s374 + $0x1d0] sm:$0xff] %v491
                  %v493 = vld [vmem:[%s373 + $0x3b0] sm:$0xff]
                  %494 = vst [vmem:[%s374 + $0x1d8] sm:$0xff] %v493
                  %v495 = vld [vmem:[%s373 + $0x3c0] sm:$0xff]
                  %496 = vst [vmem:[%s374 + $0x1e0] sm:$0xff] %v495
                  %v497 = vld [vmem:[%s373 + $0x3d0] sm:$0xff]
                  %498 = vst [vmem:[%s374 + $0x1e8] sm:$0xff] %v497
                  %v499 = vld [vmem:[%s373 + $0x3e0] sm:$0xff]
                  %500 = vst [vmem:[%s374 + $0x1f0] sm:$0xff] %v499
                  %v501 = vld [vmem:[%s373 + $0x3f0] sm:$0xff]
                  %502 = vst [vmem:[%s374 + $0x1f8] sm:$0xff] %v501
                $region71: #{main_model_step.16} parent=65 // loop_footer
                  %s372 = sadd.s32 1, %s368
                $region72: #{main_model_step.16} parent=65 // loop_footer_branch
                  %367 = sbr.rel target = $region68
                $region73: #{main_model_step.16} parent=65 // loop_exit
                  _
              $region66: #{main_model_step.16} parent=50 // pred_fallthru
                _
              // Predicated region
              $region74: #{main_model_step.16} parent=50 // pred_check
                _
              $region75: #{main_model_step.16} parent=50 // pred_check_branch
                %504 = sbr.rel target = $region77
              $region76: #{main_model_step.16} parent=50 // pred_region
                _
              $region77: #{main_model_step.16} parent=50 // pred_fallthru
                _
            $region51: #{main_model_step.16} parent=46 // pred_fallthru
              _
            // Predicated region
            $region52: #{main_model_step.16} parent=46 // pred_check
              _
            $region53: #{main_model_step.16} parent=46 // pred_check_branch
              %227 = sbr.rel target = $region55
            $region54: #{main_model_step.16} parent=46 // pred_region
              loop: start=0, step=1, limit=1
              $region56: #{main_model_step.16} parent=54 // loop_pre_header
                _
              $region57: #{main_model_step.16} parent=54 // loop_header
                %s230 = sphi 0, %s234
                %p231 = scmp.ge.s32.totalorder %s230, 1
                %s235 = sphi %s221, %s221
                %s236 = sphi %s215, %s215
              $region58: #{main_model_step.16} parent=54 // loop_header_branch
                %233 = sbr.rel (%p231) target = $region62
              $region59: #{main_model_step.16} parent=54 // loop_body
                %v237 = vld [vmem:[%s235] sm:$0xff]
                %238 = vst [vmem:[%s236] sm:$0xff] %v237
                %v239 = vld [vmem:[%s235 + $0x10] sm:$0xff]
                %240 = vst [vmem:[%s236 + $0x8] sm:$0xff] %v239
                %v241 = vld [vmem:[%s235 + $0x20] sm:$0xff]
                %242 = vst [vmem:[%s236 + $0x10] sm:$0xff] %v241
                %v243 = vld [vmem:[%s235 + $0x30] sm:$0xff]
                %244 = vst [vmem:[%s236 + $0x18] sm:$0xff] %v243
                %v245 = vld [vmem:[%s235 + $0x40] sm:$0xff]
                %246 = vst [vmem:[%s236 + $0x20] sm:$0xff] %v245
                %v247 = vld [vmem:[%s235 + $0x50] sm:$0xff]
                %248 = vst [vmem:[%s236 + $0x28] sm:$0xff] %v247
                %v249 = vld [vmem:[%s235 + $0x60] sm:$0xff]
                %250 = vst [vmem:[%s236 + $0x30] sm:$0xff] %v249
                %v251 = vld [vmem:[%s235 + $0x70] sm:$0xff]
                %252 = vst [vmem:[%s236 + $0x38] sm:$0xff] %v251
                %v253 = vld [vmem:[%s235 + $0x80] sm:$0xff]
                %254 = vst [vmem:[%s236 + $0x40] sm:$0xff] %v253
                %v255 = vld [vmem:[%s235 + $0x90] sm:$0xff]
                %256 = vst [vmem:[%s236 + $0x48] sm:$0xff] %v255
                %v257 = vld [vmem:[%s235 + $0xa0] sm:$0xff]
                %258 = vst [vmem:[%s236 + $0x50] sm:$0xff] %v257
                %v259 = vld [vmem:[%s235 + $0xb0] sm:$0xff]
                %260 = vst [vmem:[%s236 + $0x58] sm:$0xff] %v259
                %v261 = vld [vmem:[%s235 + $0xc0] sm:$0xff]
                %262 = vst [vmem:[%s236 + $0x60] sm:$0xff] %v261
                %v263 = vld [vmem:[%s235 + $0xd0] sm:$0xff]
                %264 = vst [vmem:[%s236 + $0x68] sm:$0xff] %v263
                %v265 = vld [vmem:[%s235 + $0xe0] sm:$0xff]
                %266 = vst [vmem:[%s236 + $0x70] sm:$0xff] %v265
                %v267 = vld [vmem:[%s235 + $0xf0] sm:$0xff]
                %268 = vst [vmem:[%s236 + $0x78] sm:$0xff] %v267
                %v269 = vld [vmem:[%s235 + $0x100] sm:$0xff]
                %270 = vst [vmem:[%s236 + $0x80] sm:$0xff] %v269
                %v271 = vld [vmem:[%s235 + $0x110] sm:$0xff]
                %272 = vst [vmem:[%s236 + $0x88] sm:$0xff] %v271
                %v273 = vld [vmem:[%s235 + $0x120] sm:$0xff]
                %274 = vst [vmem:[%s236 + $0x90] sm:$0xff] %v273
                %v275 = vld [vmem:[%s235 + $0x130] sm:$0xff]
                %276 = vst [vmem:[%s236 + $0x98] sm:$0xff] %v275
                %v277 = vld [vmem:[%s235 + $0x140] sm:$0xff]
                %278 = vst [vmem:[%s236 + $0xa0] sm:$0xff] %v277
                %v279 = vld [vmem:[%s235 + $0x150] sm:$0xff]
                %280 = vst [vmem:[%s236 + $0xa8] sm:$0xff] %v279
                %v281 = vld [vmem:[%s235 + $0x160] sm:$0xff]
                %282 = vst [vmem:[%s236 + $0xb0] sm:$0xff] %v281
                %v283 = vld [vmem:[%s235 + $0x170] sm:$0xff]
                %284 = vst [vmem:[%s236 + $0xb8] sm:$0xff] %v283
                %v285 = vld [vmem:[%s235 + $0x180] sm:$0xff]
                %286 = vst [vmem:[%s236 + $0xc0] sm:$0xff] %v285
                %v287 = vld [vmem:[%s235 + $0x190] sm:$0xff]
                %288 = vst [vmem:[%s236 + $0xc8] sm:$0xff] %v287
                %v289 = vld [vmem:[%s235 + $0x1a0] sm:$0xff]
                %290 = vst [vmem:[%s236 + $0xd0] sm:$0xff] %v289
                %v291 = vld [vmem:[%s235 + $0x1b0] sm:$0xff]
                %292 = vst [vmem:[%s236 + $0xd8] sm:$0xff] %v291
                %v293 = vld [vmem:[%s235 + $0x1c0] sm:$0xff]
                %294 = vst [vmem:[%s236 + $0xe0] sm:$0xff] %v293
                %v295 = vld [vmem:[%s235 + $0x1d0] sm:$0xff]
                %296 = vst [vmem:[%s236 + $0xe8] sm:$0xff] %v295
                %v297 = vld [vmem:[%s235 + $0x1e0] sm:$0xff]
                %298 = vst [vmem:[%s236 + $0xf0] sm:$0xff] %v297
                %v299 = vld [vmem:[%s235 + $0x1f0] sm:$0xff]
                %300 = vst [vmem:[%s236 + $0xf8] sm:$0xff] %v299
                %v301 = vld [vmem:[%s235 + $0x200] sm:$0xff]
                %302 = vst [vmem:[%s236 + $0x100] sm:$0xff] %v301
                %v303 = vld [vmem:[%s235 + $0x210] sm:$0xff]
                %304 = vst [vmem:[%s236 + $0x108] sm:$0xff] %v303
                %v305 = vld [vmem:[%s235 + $0x220] sm:$0xff]
                %306 = vst [vmem:[%s236 + $0x110] sm:$0xff] %v305
                %v307 = vld [vmem:[%s235 + $0x230] sm:$0xff]
                %308 = vst [vmem:[%s236 + $0x118] sm:$0xff] %v307
                %v309 = vld [vmem:[%s235 + $0x240] sm:$0xff]
                %310 = vst [vmem:[%s236 + $0x120] sm:$0xff] %v309
                %v311 = vld [vmem:[%s235 + $0x250] sm:$0xff]
                %312 = vst [vmem:[%s236 + $0x128] sm:$0xff] %v311
                %v313 = vld [vmem:[%s235 + $0x260] sm:$0xff]
                %314 = vst [vmem:[%s236 + $0x130] sm:$0xff] %v313
                %v315 = vld [vmem:[%s235 + $0x270] sm:$0xff]
                %316 = vst [vmem:[%s236 + $0x138] sm:$0xff] %v315
                %v317 = vld [vmem:[%s235 + $0x280] sm:$0xff]
                %318 = vst [vmem:[%s236 + $0x140] sm:$0xff] %v317
                %v319 = vld [vmem:[%s235 + $0x290] sm:$0xff]
                %320 = vst [vmem:[%s236 + $0x148] sm:$0xff] %v319
                %v321 = vld [vmem:[%s235 + $0x2a0] sm:$0xff]
                %322 = vst [vmem:[%s236 + $0x150] sm:$0xff] %v321
                %v323 = vld [vmem:[%s235 + $0x2b0] sm:$0xff]
                %324 = vst [vmem:[%s236 + $0x158] sm:$0xff] %v323
                %v325 = vld [vmem:[%s235 + $0x2c0] sm:$0xff]
                %326 = vst [vmem:[%s236 + $0x160] sm:$0xff] %v325
                %v327 = vld [vmem:[%s235 + $0x2d0] sm:$0xff]
                %328 = vst [vmem:[%s236 + $0x168] sm:$0xff] %v327
                %v329 = vld [vmem:[%s235 + $0x2e0] sm:$0xff]
                %330 = vst [vmem:[%s236 + $0x170] sm:$0xff] %v329
                %v331 = vld [vmem:[%s235 + $0x2f0] sm:$0xff]
                %332 = vst [vmem:[%s236 + $0x178] sm:$0xff] %v331
                %v333 = vld [vmem:[%s235 + $0x300] sm:$0xff]
                %334 = vst [vmem:[%s236 + $0x180] sm:$0xff] %v333
                %v335 = vld [vmem:[%s235 + $0x310] sm:$0xff]
                %336 = vst [vmem:[%s236 + $0x188] sm:$0xff] %v335
                %v337 = vld [vmem:[%s235 + $0x320] sm:$0xff]
                %338 = vst [vmem:[%s236 + $0x190] sm:$0xff] %v337
                %v339 = vld [vmem:[%s235 + $0x330] sm:$0xff]
                %340 = vst [vmem:[%s236 + $0x198] sm:$0xff] %v339
                %v341 = vld [vmem:[%s235 + $0x340] sm:$0xff]
                %342 = vst [vmem:[%s236 + $0x1a0] sm:$0xff] %v341
                %v343 = vld [vmem:[%s235 + $0x350] sm:$0xff]
                %344 = vst [vmem:[%s236 + $0x1a8] sm:$0xff] %v343
                %v345 = vld [vmem:[%s235 + $0x360] sm:$0xff]
                %346 = vst [vmem:[%s236 + $0x1b0] sm:$0xff] %v345
                %v347 = vld [vmem:[%s235 + $0x370] sm:$0xff]
                %348 = vst [vmem:[%s236 + $0x1b8] sm:$0xff] %v347
                %v349 = vld [vmem:[%s235 + $0x380] sm:$0xff]
                %350 = vst [vmem:[%s236 + $0x1c0] sm:$0xff] %v349
                %v351 = vld [vmem:[%s235 + $0x390] sm:$0xff]
                %352 = vst [vmem:[%s236 + $0x1c8] sm:$0xff] %v351
                %v353 = vld [vmem:[%s235 + $0x3a0] sm:$0xff]
                %354 = vst [vmem:[%s236 + $0x1d0] sm:$0xff] %v353
                %v355 = vld [vmem:[%s235 + $0x3b0] sm:$0xff]
                %356 = vst [vmem:[%s236 + $0x1d8] sm:$0xff] %v355
                %v357 = vld [vmem:[%s235 + $0x3c0] sm:$0xff]
                %358 = vst [vmem:[%s236 + $0x1e0] sm:$0xff] %v357
                %v359 = vld [vmem:[%s235 + $0x3d0] sm:$0xff]
                %360 = vst [vmem:[%s236 + $0x1e8] sm:$0xff] %v359
                %v361 = vld [vmem:[%s235 + $0x3e0] sm:$0xff]
                %362 = vst [vmem:[%s236 + $0x1f0] sm:$0xff] %v361
                %v363 = vld [vmem:[%s235 + $0x3f0] sm:$0xff]
                %364 = vst [vmem:[%s236 + $0x1f8] sm:$0xff] %v363
              $region60: #{main_model_step.16} parent=54 // loop_footer
                %s234 = sadd.s32 1, %s230
              $region61: #{main_model_step.16} parent=54 // loop_footer_branch
                %229 = sbr.rel target = $region57
              $region62: #{main_model_step.16} parent=54 // loop_exit
                _
            $region55: #{main_model_step.16} parent=46 // pred_fallthru
              _
          $region47: #{main_model_step.16} parent=42 // pred_fallthru
            _
          %505 = vnop
        $region43: #{main_model_step.16} parent=15 // pred_fallthru
          _
        // Predicated region
        $region78: #{main_model_step.16} parent=15 // pred_check
          %p506 = pneg %p104
        $region79: #{main_model_step.16} parent=15 // pred_check_branch
          %508 = sbr.rel (%p506) target = $region81
        $region80: #{main_model_step.16} parent=15 // pred_region
          %s509 = smul.u32 2, %s17
          %p510 = scmp.lt.s32.totalorder %s509, 3
          %s511 = scalar_select %p510, %s509, 3
          %s512 = scalar_lea.vmem %s2, %s511
          %s513 = smul.u32 2, %s17
        $region81: #{main_model_step.16} parent=15 // pred_fallthru
          _
      $region16: #{main_model_step.16} parent=5 // pred_fallthru
        _
      %p514 = scmp.le.s32.totalorder 1, %s9
      %p515 = scmp.lt.s32.totalorder %s9, 17
      %p516 = pnand %p514, %p515
      %p517 = pneg %p516
      // Predicated region
      $region82: #{main_model_step.16} parent=5 // pred_check
        _
      $region83: #{main_model_step.16} parent=5 // pred_check_branch
        %519 = sbr.rel (%p516) target = $region85
      $region84: #{main_model_step.16} parent=5 // pred_region
        %s520 = ssub.s32 %s9, 1
        %s521 = sand.u32 %s43, 1
        %s522 = sand.u32 %s43, 1
        %s523 = smul.addr %s522, 96
        %s524 = scalar_lea.vmem [#allocation3], %s523
        // Predicated region
        $region86: #{main_model_step.16} parent=84 // pred_check
          %p525 = pneg %p56
        $region87: #{main_model_step.16} parent=84 // pred_check_branch
          %527 = sbr.rel (%p525) target = $region89
        $region88: #{main_model_step.16} parent=84 // pred_region
          _
        $region89: #{main_model_step.16} parent=84 // pred_fallthru
          _
        %s528 = sand.u32 %s71, 1
        %s529 = sand.u32 %s71, 1
        %s530 = smul.addr %s529, 512
        %s531 = scalar_lea.vmem [#allocation4], %s530
        // Predicated region
        $region90: #{main_model_step.16} parent=84 // pred_check
          %p532 = pneg %p84
        $region91: #{main_model_step.16} parent=84 // pred_check_branch
          %534 = sbr.rel (%p532) target = $region93
        $region92: #{main_model_step.16} parent=84 // pred_region
          _
        $region93: #{main_model_step.16} parent=84 // pred_fallthru
          _
        %s535 = sand.u32 %s43, 1
        %s536 = sand.u32 %s43, 1
        %s537 = smul.addr %s536, 96
        %s538 = scalar_lea.vmem [#allocation3], %s537
        %p539 = pneg %p56
        %p540 = pneg %p53
        %s541 = sand.u32 %s71, 1
        %s542 = sand.u32 %s71, 1
        %s543 = smul.addr %s542, 512
        %s544 = scalar_lea.vmem [#allocation4], %s543
        %p545 = pneg %p84
        %p546 = pneg %p81
        %s547 = smul.u32 2, %s20
        %p548 = scmp.lt.s32.totalorder %s547, 3
        %s549 = scalar_select %p548, %s547, 3
        %s550 = scalar_lea.vmem %s2, %s549
        %p551 = pneg %p110
        %p552 = pneg %p107
        %p553 = pneg %p138
        %p554 = pneg %p135
        %s555 = sand.u32 %s125, 1
        %s556 = sand.u32 %s125, 1
        %s557 = smul.addr %s556, 48
        %s558 = scalar_lea.vmem [#allocation5], %s557
        %s559 = smul.u32 6, %s19
        %s560 = smul.u32 4, %s21
        %s561 = smul.u32 64, %s21
        %s562 = smul.u32 2, %s20
        %s563 = smul.u32 2, %s20
        %p564 = scmp.lt.s32.totalorder %s563, 3
        %s565 = scalar_select %p564, %s563, 3
        %s566 = scalar_lea.vmem %s2, %s565
        %s567 = smul.u32 2, %s20
        %s568 = smul.u32 6, %s19
        %s569 = smul.u32 2, %s20
        %p570 = scmp.eq.s32.totalorder %s21, 0
        // Predicated region
        $region94: #{main_model_step.16} parent=84 // pred_check
          %p571 = pneg %p570
        $region95: #{main_model_step.16} parent=84 // pred_check_branch
          %573 = sbr.rel (%p571) target = $region97
        $region96: #{main_model_step.16} parent=84 // pred_region
          %574 = vst [vmem:[#allocation2] sm:$0xff] 0.0
          %575 = vst [vmem:[#allocation2 + $0x8] sm:$0xff] 0.0
          %576 = vst [vmem:[#allocation2 + $0x10] sm:$0xff] 0.0
          %577 = vst [vmem:[#allocation2 + $0x18] sm:$0xff] 0.0
          %578 = vst [vmem:[#allocation2 + $0x20] sm:$0xff] 0.0
          %579 = vst [vmem:[#allocation2 + $0x28] sm:$0xff] 0.0
          %580 = vst [vmem:[#allocation2 + $0x30] sm:$0xff] 0.0
          %581 = vst [vmem:[#allocation2 + $0x38] sm:$0xff] 0.0
          %582 = vst [vmem:[#allocation2 + $0x40] sm:$0xff] 0.0
          %583 = vst [vmem:[#allocation2 + $0x48] sm:$0xff] 0.0
          %584 = vst [vmem:[#allocation2 + $0x50] sm:$0xff] 0.0
          %585 = vst [vmem:[#allocation2 + $0x58] sm:$0xff] 0.0
        $region97: #{main_model_step.16} parent=84 // pred_fallthru
          _
        %v586 = vld [vmem:[#allocation2] sm:$0xff]
        %v587 = vld [vmem:[#allocation2 + $0x8] sm:$0xff]
        %v588 = vld [vmem:[#allocation2 + $0x10] sm:$0xff]
        %v589 = vld [vmem:[#allocation2 + $0x18] sm:$0xff]
        %v590 = vld [vmem:[#allocation2 + $0x20] sm:$0xff]
        %v591 = vld [vmem:[#allocation2 + $0x28] sm:$0xff]
        %v592 = vld [vmem:[#allocation2 + $0x30] sm:$0xff]
        %v593 = vld [vmem:[#allocation2 + $0x38] sm:$0xff]
        %v594 = vld [vmem:[#allocation2 + $0x40] sm:$0xff]
        %v595 = vld [vmem:[#allocation2 + $0x48] sm:$0xff]
        %v596 = vld [vmem:[#allocation2 + $0x50] sm:$0xff]
        %v597 = vld [vmem:[#allocation2 + $0x58] sm:$0xff]
        %v598 = vld [vmem:[%s524] sm:$0xff]
        %v599 = vld [vmem:[%s524 + $0x8] sm:$0xff]
        %v600 = vld [vmem:[%s524 + $0x10] sm:$0xff]
        %v601 = vld [vmem:[%s524 + $0x18] sm:$0xff]
        %v602 = vld [vmem:[%s524 + $0x20] sm:$0xff]
        %v603 = vld [vmem:[%s524 + $0x28] sm:$0xff]
        %v604 = vld [vmem:[%s524 + $0x30] sm:$0xff]
        %v605 = vld [vmem:[%s524 + $0x38] sm:$0xff]
        %v606 = vld [vmem:[%s524 + $0x40] sm:$0xff]
        %v607 = vld [vmem:[%s524 + $0x48] sm:$0xff]
        %v608 = vld [vmem:[%s524 + $0x50] sm:$0xff]
        %v609 = vld [vmem:[%s524 + $0x58] sm:$0xff]
        %v610 = vld [vmem:[%s531] sm:$0xff]
        %v611 = vld [vmem:[%s531 + $0x8] sm:$0xff]
        %v612 = vld [vmem:[%s531 + $0x10] sm:$0xff]
        %v613 = vld [vmem:[%s531 + $0x18] sm:$0xff]
        %v614 = vld [vmem:[%s531 + $0x20] sm:$0xff]
        %v615 = vld [vmem:[%s531 + $0x28] sm:$0xff]
        %v616 = vld [vmem:[%s531 + $0x30] sm:$0xff]
        %v617 = vld [vmem:[%s531 + $0x38] sm:$0xff]
        %v618 = vld [vmem:[%s531 + $0x40] sm:$0xff]
        %v619 = vld [vmem:[%s531 + $0x48] sm:$0xff]
        %v620 = vld [vmem:[%s531 + $0x50] sm:$0xff]
        %v621 = vld [vmem:[%s531 + $0x58] sm:$0xff]
        %v622 = vld [vmem:[%s531 + $0x60] sm:$0xff]
        %v623 = vld [vmem:[%s531 + $0x68] sm:$0xff]
        %v624 = vld [vmem:[%s531 + $0x70] sm:$0xff]
        %v625 = vld [vmem:[%s531 + $0x78] sm:$0xff]
        %v626 = vld [vmem:[%s531 + $0x80] sm:$0xff]
        %v627 = vld [vmem:[%s531 + $0x88] sm:$0xff]
        %v628 = vld [vmem:[%s531 + $0x90] sm:$0xff]
        %v629 = vld [vmem:[%s531 + $0x98] sm:$0xff]
        %v630 = vld [vmem:[%s531 + $0xa0] sm:$0xff]
        %v631 = vld [vmem:[%s531 + $0xa8] sm:$0xff]
        %v632 = vld [vmem:[%s531 + $0xb0] sm:$0xff]
        %v633 = vld [vmem:[%s531 + $0xb8] sm:$0xff]
        %v634 = vld [vmem:[%s531 + $0xc0] sm:$0xff]
        %v635 = vld [vmem:[%s531 + $0xc8] sm:$0xff]
        %v636 = vld [vmem:[%s531 + $0xd0] sm:$0xff]
        %v637 = vld [vmem:[%s531 + $0xd8] sm:$0xff]
        %v638 = vld [vmem:[%s531 + $0xe0] sm:$0xff]
        %v639 = vld [vmem:[%s531 + $0xe8] sm:$0xff]
        %v640 = vld [vmem:[%s531 + $0xf0] sm:$0xff]
        %v641 = vld [vmem:[%s531 + $0xf8] sm:$0xff]
        %v642 = vld [vmem:[%s531 + $0x100] sm:$0xff]
        %v643 = vld [vmem:[%s531 + $0x108] sm:$0xff]
        %v644 = vld [vmem:[%s531 + $0x110] sm:$0xff]
        %v645 = vld [vmem:[%s531 + $0x118] sm:$0xff]
        %v646 = vld [vmem:[%s531 + $0x120] sm:$0xff]
        %v647 = vld [vmem:[%s531 + $0x128] sm:$0xff]
        %v648 = vld [vmem:[%s531 + $0x130] sm:$0xff]
        %v649 = vld [vmem:[%s531 + $0x138] sm:$0xff]
        %v650 = vld [vmem:[%s531 + $0x140] sm:$0xff]
        %v651 = vld [vmem:[%s531 + $0x148] sm:$0xff]
        %v652 = vld [vmem:[%s531 + $0x150] sm:$0xff]
        %v653 = vld [vmem:[%s531 + $0x158] sm:$0xff]
        %v654 = vld [vmem:[%s531 + $0x160] sm:$0xff]
        %v655 = vld [vmem:[%s531 + $0x168] sm:$0xff]
        %v656 = vld [vmem:[%s531 + $0x170] sm:$0xff]
        %v657 = vld [vmem:[%s531 + $0x178] sm:$0xff]
        %v658 = vld [vmem:[%s531 + $0x180] sm:$0xff]
        %v659 = vld [vmem:[%s531 + $0x188] sm:$0xff]
        %v660 = vld [vmem:[%s531 + $0x190] sm:$0xff]
        %v661 = vld [vmem:[%s531 + $0x198] sm:$0xff]
        %v662 = vld [vmem:[%s531 + $0x1a0] sm:$0xff]
        %v663 = vld [vmem:[%s531 + $0x1a8] sm:$0xff]
        %v664 = vld [vmem:[%s531 + $0x1b0] sm:$0xff]
        %v665 = vld [vmem:[%s531 + $0x1b8] sm:$0xff]
        %v666 = vld [vmem:[%s531 + $0x1c0] sm:$0xff]
        %v667 = vld [vmem:[%s531 + $0x1c8] sm:$0xff]
        %v668 = vld [vmem:[%s531 + $0x1d0] sm:$0xff]
        %v669 = vld [vmem:[%s531 + $0x1d8] sm:$0xff]
        %v670 = vld [vmem:[%s531 + $0x1e0] sm:$0xff]
        %v671 = vld [vmem:[%s531 + $0x1e8] sm:$0xff]
        %v672 = vld [vmem:[%s531 + $0x1f0] sm:$0xff]
        %v673 = vld [vmem:[%s531 + $0x1f8] sm:$0xff]
        %v686 = vunpack.c.l.b16 %v598
        %v687 = vunpack.c.h.b16 %v598
        %v688 = vunpack.c.l.b16 %v599
        %v689 = vunpack.c.h.b16 %v599
        %v690 = vunpack.c.l.b16 %v600
        %v691 = vunpack.c.h.b16 %v600
        %v692 = vunpack.c.l.b16 %v601
        %v693 = vunpack.c.h.b16 %v601
        %v694 = vunpack.c.l.b16 %v602
        %v695 = vunpack.c.h.b16 %v602
        %v696 = vunpack.c.l.b16 %v603
        %v697 = vunpack.c.h.b16 %v603
        %v698 = vunpack.c.l.b16 %v604
        %v699 = vunpack.c.h.b16 %v604
        %v700 = vunpack.c.l.b16 %v605
        %v701 = vunpack.c.h.b16 %v605
        %v702 = vunpack.c.l.b16 %v606
        %v703 = vunpack.c.h.b16 %v606
        %v704 = vunpack.c.l.b16 %v607
        %v705 = vunpack.c.h.b16 %v607
        %v706 = vunpack.c.l.b16 %v608
        %v707 = vunpack.c.h.b16 %v608
        %v708 = vunpack.c.l.b16 %v609
        %v709 = vunpack.c.h.b16 %v609
        %v710 = vpack.c.b16 %v690, %v686
        %v711 = vpack.c.b16 %v691, %v687
        %v712 = vpack.c.b16 %v692, %v688
        %v713 = vpack.c.b16 %v693, %v689
        %v714 = vpack.c.b16 %v698, %v694
        %v715 = vpack.c.b16 %v699, %v695
        %v716 = vpack.c.b16 %v700, %v696
        %v717 = vpack.c.b16 %v701, %v697
        %v718 = vpack.c.b16 %v706, %v702
        %v719 = vpack.c.b16 %v707, %v703
        %v720 = vpack.c.b16 %v708, %v704
        %v721 = vpack.c.b16 %v709, %v705
        %v798 = vunpack.c.l.b16 %v610
        %v799 = vunpack.c.h.b16 %v610
        %v800 = vunpack.c.l.b16 %v611
        %v801 = vunpack.c.h.b16 %v611
        %v802 = vunpack.c.l.b16 %v612
        %v803 = vunpack.c.h.b16 %v612
        %v804 = vunpack.c.l.b16 %v613
        %v805 = vunpack.c.h.b16 %v613
        %v806 = vunpack.c.l.b16 %v614
        %v807 = vunpack.c.h.b16 %v614
        %v808 = vunpack.c.l.b16 %v615
        %v809 = vunpack.c.h.b16 %v615
        %v810 = vunpack.c.l.b16 %v616
        %v811 = vunpack.c.h.b16 %v616
        %v812 = vunpack.c.l.b16 %v617
        %v813 = vunpack.c.h.b16 %v617
        %v814 = vunpack.c.l.b16 %v618
        %v815 = vunpack.c.h.b16 %v618
        %v816 = vunpack.c.l.b16 %v619
        %v817 = vunpack.c.h.b16 %v619
        %v818 = vunpack.c.l.b16 %v620
        %v819 = vunpack.c.h.b16 %v620
        %v820 = vunpack.c.l.b16 %v621
        %v821 = vunpack.c.h.b16 %v621
        %v822 = vunpack.c.l.b16 %v622
        %v823 = vunpack.c.h.b16 %v622
        %v824 = vunpack.c.l.b16 %v623
        %v825 = vunpack.c.h.b16 %v623
        %v826 = vunpack.c.l.b16 %v624
        %v827 = vunpack.c.h.b16 %v624
        %v828 = vunpack.c.l.b16 %v625
        %v829 = vunpack.c.h.b16 %v625
        %v830 = vunpack.c.l.b16 %v626
        %v831 = vunpack.c.h.b16 %v626
        %v832 = vunpack.c.l.b16 %v627
        %v833 = vunpack.c.h.b16 %v627
        %v834 = vunpack.c.l.b16 %v628
        %v835 = vunpack.c.h.b16 %v628
        %v836 = vunpack.c.l.b16 %v629
        %v837 = vunpack.c.h.b16 %v629
        %v838 = vunpack.c.l.b16 %v630
        %v839 = vunpack.c.h.b16 %v630
        %v840 = vunpack.c.l.b16 %v631
        %v841 = vunpack.c.h.b16 %v631
        %v842 = vunpack.c.l.b16 %v632
        %v843 = vunpack.c.h.b16 %v632
        %v844 = vunpack.c.l.b16 %v633
        %v845 = vunpack.c.h.b16 %v633
        %v846 = vunpack.c.l.b16 %v634
        %v847 = vunpack.c.h.b16 %v634
        %v848 = vunpack.c.l.b16 %v635
        %v849 = vunpack.c.h.b16 %v635
        %v850 = vunpack.c.l.b16 %v636
        %v851 = vunpack.c.h.b16 %v636
        %v852 = vunpack.c.l.b16 %v637
        %v853 = vunpack.c.h.b16 %v637
        %v854 = vunpack.c.l.b16 %v638
        %v855 = vunpack.c.h.b16 %v638
        %v856 = vunpack.c.l.b16 %v639
        %v857 = vunpack.c.h.b16 %v639
        %v858 = vunpack.c.l.b16 %v640
        %v859 = vunpack.c.h.b16 %v640
        %v860 = vunpack.c.l.b16 %v641
        %v861 = vunpack.c.h.b16 %v641
        %v862 = vunpack.c.l.b16 %v642
        %v863 = vunpack.c.h.b16 %v642
        %v864 = vunpack.c.l.b16 %v643
        %v865 = vunpack.c.h.b16 %v643
        %v866 = vunpack.c.l.b16 %v644
        %v867 = vunpack.c.h.b16 %v644
        %v868 = vunpack.c.l.b16 %v645
        %v869 = vunpack.c.h.b16 %v645
        %v870 = vunpack.c.l.b16 %v646
        %v871 = vunpack.c.h.b16 %v646
        %v872 = vunpack.c.l.b16 %v647
        %v873 = vunpack.c.h.b16 %v647
        %v874 = vunpack.c.l.b16 %v648
        %v875 = vunpack.c.h.b16 %v648
        %v876 = vunpack.c.l.b16 %v649
        %v877 = vunpack.c.h.b16 %v649
        %v878 = vunpack.c.l.b16 %v650
        %v879 = vunpack.c.h.b16 %v650
        %v880 = vunpack.c.l.b16 %v651
        %v881 = vunpack.c.h.b16 %v651
        %v882 = vunpack.c.l.b16 %v652
        %v883 = vunpack.c.h.b16 %v652
        %v884 = vunpack.c.l.b16 %v653
        %v885 = vunpack.c.h.b16 %v653
        %v886 = vunpack.c.l.b16 %v654
        %v887 = vunpack.c.h.b16 %v654
        %v888 = vunpack.c.l.b16 %v655
        %v889 = vunpack.c.h.b16 %v655
        %v890 = vunpack.c.l.b16 %v656
        %v891 = vunpack.c.h.b16 %v656
        %v892 = vunpack.c.l.b16 %v657
        %v893 = vunpack.c.h.b16 %v657
        %v894 = vunpack.c.l.b16 %v658
        %v895 = vunpack.c.h.b16 %v658
        %v896 = vunpack.c.l.b16 %v659
        %v897 = vunpack.c.h.b16 %v659
        %v898 = vunpack.c.l.b16 %v660
        %v899 = vunpack.c.h.b16 %v660
        %v900 = vunpack.c.l.b16 %v661
        %v901 = vunpack.c.h.b16 %v661
        %v902 = vunpack.c.l.b16 %v662
        %v903 = vunpack.c.h.b16 %v662
        %v904 = vunpack.c.l.b16 %v663
        %v905 = vunpack.c.h.b16 %v663
        %v906 = vunpack.c.l.b16 %v664
        %v907 = vunpack.c.h.b16 %v664
        %v908 = vunpack.c.l.b16 %v665
        %v909 = vunpack.c.h.b16 %v665
        %v910 = vunpack.c.l.b16 %v666
        %v911 = vunpack.c.h.b16 %v666
        %v912 = vunpack.c.l.b16 %v667
        %v913 = vunpack.c.h.b16 %v667
        %v914 = vunpack.c.l.b16 %v668
        %v915 = vunpack.c.h.b16 %v668
        %v916 = vunpack.c.l.b16 %v669
        %v917 = vunpack.c.h.b16 %v669
        %v918 = vunpack.c.l.b16 %v670
        %v919 = vunpack.c.h.b16 %v670
        %v920 = vunpack.c.l.b16 %v671
        %v921 = vunpack.c.h.b16 %v671
        %v922 = vunpack.c.l.b16 %v672
        %v923 = vunpack.c.h.b16 %v672
        %v924 = vunpack.c.l.b16 %v673
        %v925 = vunpack.c.h.b16 %v673
        %v926 = vpack.c.b16 %v800, %v798
        %v927 = vpack.c.b16 %v801, %v799
        %v928 = vpack.c.b16 %v804, %v802
        %v929 = vpack.c.b16 %v805, %v803
        %v930 = vpack.c.b16 %v808, %v806
        %v931 = vpack.c.b16 %v809, %v807
        %v932 = vpack.c.b16 %v812, %v810
        %v933 = vpack.c.b16 %v813, %v811
        %v934 = vpack.c.b16 %v816, %v814
        %v935 = vpack.c.b16 %v817, %v815
        %v936 = vpack.c.b16 %v820, %v818
        %v937 = vpack.c.b16 %v821, %v819
        %v938 = vpack.c.b16 %v824, %v822
        %v939 = vpack.c.b16 %v825, %v823
        %v940 = vpack.c.b16 %v828, %v826
        %v941 = vpack.c.b16 %v829, %v827
        %v942 = vpack.c.b16 %v832, %v830
        %v943 = vpack.c.b16 %v833, %v831
        %v944 = vpack.c.b16 %v836, %v834
        %v945 = vpack.c.b16 %v837, %v835
        %v946 = vpack.c.b16 %v840, %v838
        %v947 = vpack.c.b16 %v841, %v839
        %v948 = vpack.c.b16 %v844, %v842
        %v949 = vpack.c.b16 %v845, %v843
        %v950 = vpack.c.b16 %v848, %v846
        %v951 = vpack.c.b16 %v849, %v847
        %v952 = vpack.c.b16 %v852, %v850
        %v953 = vpack.c.b16 %v853, %v851
        %v954 = vpack.c.b16 %v856, %v854
        %v955 = vpack.c.b16 %v857, %v855
        %v956 = vpack.c.b16 %v860, %v858
        %v957 = vpack.c.b16 %v861, %v859
        %v958 = vpack.c.b16 %v864, %v862
        %v959 = vpack.c.b16 %v865, %v863
        %v960 = vpack.c.b16 %v868, %v866
        %v961 = vpack.c.b16 %v869, %v867
        %v962 = vpack.c.b16 %v872, %v870
        %v963 = vpack.c.b16 %v873, %v871
        %v964 = vpack.c.b16 %v876, %v874
        %v965 = vpack.c.b16 %v877, %v875
        %v966 = vpack.c.b16 %v880, %v878
        %v967 = vpack.c.b16 %v881, %v879
        %v968 = vpack.c.b16 %v884, %v882
        %v969 = vpack.c.b16 %v885, %v883
        %v970 = vpack.c.b16 %v888, %v886
        %v971 = vpack.c.b16 %v889, %v887
        %v972 = vpack.c.b16 %v892, %v890
        %v973 = vpack.c.b16 %v893, %v891
        %v974 = vpack.c.b16 %v896, %v894
        %v975 = vpack.c.b16 %v897, %v895
        %v976 = vpack.c.b16 %v900, %v898
        %v977 = vpack.c.b16 %v901, %v899
        %v978 = vpack.c.b16 %v904, %v902
        %v979 = vpack.c.b16 %v905, %v903
        %v980 = vpack.c.b16 %v908, %v906
        %v981 = vpack.c.b16 %v909, %v907
        %v982 = vpack.c.b16 %v912, %v910
        %v983 = vpack.c.b16 %v913, %v911
        %v984 = vpack.c.b16 %v916, %v914
        %v985 = vpack.c.b16 %v917, %v915
        %v986 = vpack.c.b16 %v920, %v918
        %v987 = vpack.c.b16 %v921, %v919
        %v988 = vpack.c.b16 %v924, %v922
        %v989 = vpack.c.b16 %v925, %v923
        %1054 = vmatprep.subr.bf16.mxu0 %v927
        %1055 = vmatpush1.bf16.msra.mxu0 %v926
        %1056 = vmatprep.subr.bf16.mxu0 %v929
        %1057 = vmatpush1.bf16.msra.mxu0 %v928
        %1058 = vmatprep.subr.bf16.mxu0 %v931
        %1059 = vmatpush1.bf16.msra.mxu0 %v930
        %1060 = vmatprep.subr.bf16.mxu0 %v933
        %1061 = vmatpush1.bf16.msra.mxu0 %v932
        %1062 = vmatprep.subr.bf16.mxu0 %v935
        %1063 = vmatpush1.bf16.msra.mxu0 %v934
        %1064 = vmatprep.subr.bf16.mxu0 %v937
        %1065 = vmatpush1.bf16.msra.mxu0 %v936
        %1066 = vmatprep.subr.bf16.mxu0 %v939
        %1067 = vmatpush1.bf16.msra.mxu0 %v938
        %1068 = vmatprep.subr.bf16.mxu0 %v941
        %1069 = vmatpush1.bf16.msra.mxu0 %v940
        %1070 = vmatprep.subr.bf16.mxu0 %v943
        %1071 = vmatpush1.bf16.msra.mxu0 %v942
        %1072 = vmatprep.subr.bf16.mxu0 %v945
        %1073 = vmatpush1.bf16.msra.mxu0 %v944
        %1074 = vmatprep.subr.bf16.mxu0 %v947
        %1075 = vmatpush1.bf16.msra.mxu0 %v946
        %1076 = vmatprep.subr.bf16.mxu0 %v949
        %1077 = vmatpush1.bf16.msra.mxu0 %v948
        %1078 = vmatprep.subr.bf16.mxu0 %v951
        %1079 = vmatpush1.bf16.msra.mxu0 %v950
        %1080 = vmatprep.subr.bf16.mxu0 %v953
        %1081 = vmatpush1.bf16.msra.mxu0 %v952
        %1082 = vmatprep.subr.bf16.mxu0 %v955
        %1083 = vmatpush1.bf16.msra.mxu0 %v954
        %1084 = vmatprep.subr.bf16.mxu0 %v957
        %1085 = vmatpush1.bf16.msra.mxu0 %v956
        %1086 = vmatprep.mubr.bf16.mxu0 %v711
        %1087 = vmatmul.mubr.bf16.gmra.mrb[0].mxu0 %v710
        %v1088 = vpop.f32.mrb[0].mxu0
        %v1089 = vadd.f32 0.0, %v1088
        %v1090 = vpop.f32.mrb[0].mxu0
        %v1091 = vadd.f32 0.0, %v1090
        %v1092 = vpop.f32.mrb[0].mxu0
        %v1093 = vadd.f32 0.0, %v1092
        %v1094 = vpop.f32.mrb[0].mxu0
        %v1095 = vadd.f32 0.0, %v1094
        %1096 = vmatprep.mubr.bf16.mxu0 %v715
        %1097 = vmatmul.mubr.bf16.gmra.mrb[0].mxu0 %v714
        %v1098 = vpop.f32.mrb[0].mxu0
        %v1099 = vadd.f32 0.0, %v1098
        %v1100 = vpop.f32.mrb[0].mxu0
        %v1101 = vadd.f32 0.0, %v1100
        %v1102 = vpop.f32.mrb[0].mxu0
        %v1103 = vadd.f32 0.0, %v1102
        %v1104 = vpop.f32.mrb[0].mxu0
        %v1105 = vadd.f32 0.0, %v1104
        %1106 = vmatprep.mubr.bf16.mxu0 %v719
        %1107 = vmatmul.mubr.bf16.gmra.mrb[0].mxu0 %v718
        %v1108 = vpop.f32.mrb[0].mxu0
        %v1109 = vadd.f32 0.0, %v1108
        %v1110 = vpop.f32.mrb[0].mxu0
        %v1111 = vadd.f32 0.0, %v1110
        %v1112 = vpop.f32.mrb[0].mxu0
        %v1113 = vadd.f32 0.0, %v1112
        %v1114 = vpop.f32.mrb[0].mxu0
        %v1115 = vadd.f32 0.0, %v1114
        %1116 = vdwg.mxu0
        %1117 = vmatprep.subr.bf16.mxu0 %v959
        %1118 = vmatpush1.bf16.msra.mxu0 %v958
        %1119 = vmatprep.subr.bf16.mxu0 %v961
        %1120 = vmatpush1.bf16.msra.mxu0 %v960
        %1121 = vmatprep.subr.bf16.mxu0 %v963
        %1122 = vmatpush1.bf16.msra.mxu0 %v962
        %1123 = vmatprep.subr.bf16.mxu0 %v965
        %1124 = vmatpush1.bf16.msra.mxu0 %v964
        %1125 = vmatprep.subr.bf16.mxu0 %v967
        %1126 = vmatpush1.bf16.msra.mxu0 %v966
        %1127 = vmatprep.subr.bf16.mxu0 %v969
        %1128 = vmatpush1.bf16.msra.mxu0 %v968
        %1129 = vmatprep.subr.bf16.mxu0 %v971
        %1130 = vmatpush1.bf16.msra.mxu0 %v970
        %1131 = vmatprep.subr.bf16.mxu0 %v973
        %1132 = vmatpush1.bf16.msra.mxu0 %v972
        %1133 = vmatprep.subr.bf16.mxu0 %v975
        %1134 = vmatpush1.bf16.msra.mxu0 %v974
        %1135 = vmatprep.subr.bf16.mxu0 %v977
        %1136 = vmatpush1.bf16.msra.mxu0 %v976
        %1137 = vmatprep.subr.bf16.mxu0 %v979
        %1138 = vmatpush1.bf16.msra.mxu0 %v978
        %1139 = vmatprep.subr.bf16.mxu0 %v981
        %1140 = vmatpush1.bf16.msra.mxu0 %v980
        %1141 = vmatprep.subr.bf16.mxu0 %v983
        %1142 = vmatpush1.bf16.msra.mxu0 %v982
        %1143 = vmatprep.subr.bf16.mxu0 %v985
        %1144 = vmatpush1.bf16.msra.mxu0 %v984
        %1145 = vmatprep.subr.bf16.mxu0 %v987
        %1146 = vmatpush1.bf16.msra.mxu0 %v986
        %1147 = vmatprep.subr.bf16.mxu0 %v989
        %1148 = vmatpush1.bf16.msra.mxu0 %v988
        %1149 = vmatprep.mubr.bf16.mxu0 %v713
        %1150 = vmatmul.mubr.bf16.gmra.mrb[0].mxu0 %v712
        %v1151 = vpop.f32.mrb[0].mxu0
        %v1152 = vadd.f32 %v1089, %v1151
        %v1153 = vpop.f32.mrb[0].mxu0
        %v1154 = vadd.f32 %v1091, %v1153
        %v1155 = vpop.f32.mrb[0].mxu0
        %v1156 = vadd.f32 %v1093, %v1155
        %v1157 = vpop.f32.mrb[0].mxu0
        %v1158 = vadd.f32 %v1095, %v1157
        %1159 = vmatprep.mubr.bf16.mxu0 %v717
        %1160 = vmatmul.mubr.bf16.gmra.mrb[0].mxu0 %v716
        %v1161 = vpop.f32.mrb[0].mxu0
        %v1162 = vadd.f32 %v1099, %v1161
        %v1163 = vpop.f32.mrb[0].mxu0
        %v1164 = vadd.f32 %v1101, %v1163
        %v1165 = vpop.f32.mrb[0].mxu0
        %v1166 = vadd.f32 %v1103, %v1165
        %v1167 = vpop.f32.mrb[0].mxu0
        %v1168 = vadd.f32 %v1105, %v1167
        %1169 = vmatprep.mubr.bf16.mxu0 %v721
        %1170 = vmatmul.mubr.bf16.gmra.mrb[0].mxu0 %v720
        %v1171 = vpop.f32.mrb[0].mxu0
        %v1172 = vadd.f32 %v1109, %v1171
        %v1173 = vpop.f32.mrb[0].mxu0
        %v1174 = vadd.f32 %v1111, %v1173
        %v1175 = vpop.f32.mrb[0].mxu0
        %v1176 = vadd.f32 %v1113, %v1175
        %v1177 = vpop.f32.mrb[0].mxu0
        %v1178 = vadd.f32 %v1115, %v1177
        %1179 = vdwg.mxu0
        %v1180 = vadd.f32 %v586, %v1152
        %v1181 = vadd.f32 %v587, %v1154
        %v1182 = vadd.f32 %v588, %v1156
        %v1183 = vadd.f32 %v589, %v1158
        %v1184 = vadd.f32 %v590, %v1162
        %v1185 = vadd.f32 %v591, %v1164
        %v1186 = vadd.f32 %v592, %v1166
        %v1187 = vadd.f32 %v593, %v1168
        %v1188 = vadd.f32 %v594, %v1172
        %v1189 = vadd.f32 %v595, %v1174
        %v1190 = vadd.f32 %v596, %v1176
        %v1191 = vadd.f32 %v597, %v1178
        %1192 = vst [vmem:[#allocation2] sm:$0xff] %v1180
        %1193 = vst [vmem:[#allocation2 + $0x8] sm:$0xff] %v1181
        %1194 = vst [vmem:[#allocation2 + $0x10] sm:$0xff] %v1182
        %1195 = vst [vmem:[#allocation2 + $0x18] sm:$0xff] %v1183
        %1196 = vst [vmem:[#allocation2 + $0x20] sm:$0xff] %v1184
        %1197 = vst [vmem:[#allocation2 + $0x28] sm:$0xff] %v1185
        %1198 = vst [vmem:[#allocation2 + $0x30] sm:$0xff] %v1186
        %1199 = vst [vmem:[#allocation2 + $0x38] sm:$0xff] %v1187
        %1200 = vst [vmem:[#allocation2 + $0x40] sm:$0xff] %v1188
        %1201 = vst [vmem:[#allocation2 + $0x48] sm:$0xff] %v1189
        %1202 = vst [vmem:[#allocation2 + $0x50] sm:$0xff] %v1190
        %1203 = vst [vmem:[#allocation2 + $0x58] sm:$0xff] %v1191
        %p1204 = scmp.eq.s32.totalorder %s21, 7
        // Predicated region
        $region98: #{main_model_step.16} parent=84 // pred_check
          %p1205 = pneg %p1204
        $region99: #{main_model_step.16} parent=84 // pred_check_branch
          %1207 = sbr.rel (%p1205) target = $region101
        $region100: #{main_model_step.16} parent=84 // pred_region
          %v1208 = vld [vmem:[#allocation2] sm:$0xff]
          %v1209 = vld [vmem:[#allocation2 + $0x8] sm:$0xff]
          %v1210 = vld [vmem:[#allocation2 + $0x10] sm:$0xff]
          %v1211 = vld [vmem:[#allocation2 + $0x18] sm:$0xff]
          %v1212 = vld [vmem:[#allocation2 + $0x20] sm:$0xff]
          %v1213 = vld [vmem:[#allocation2 + $0x28] sm:$0xff]
          %v1214 = vld [vmem:[#allocation2 + $0x30] sm:$0xff]
          %v1215 = vld [vmem:[#allocation2 + $0x38] sm:$0xff]
          %v1216 = vld [vmem:[#allocation2 + $0x40] sm:$0xff]
          %v1217 = vld [vmem:[#allocation2 + $0x48] sm:$0xff]
          %v1218 = vld [vmem:[#allocation2 + $0x50] sm:$0xff]
          %v1219 = vld [vmem:[#allocation2 + $0x58] sm:$0xff]
          %v1220 = vld [vmem:[%s566] sm:$0x3]
          %v1222 = vlaneseq
          %v1223 = vshrl.u32 %v1222, 7
          %v1224 = vsub.s32 0, %v1223
          %v1225 = vrot.slane %v1220, %v1224
          %v1226 = vlaneseq
          %v1227 = vshrl.u32 %v1226, 7
          %v1228 = vsub.s32 1, %v1227
          %v1229 = vrot.slane %v1220, %v1228
          %v1232 = vadd.f32 %v1208, %v1225
          %v1233 = vadd.f32 %v1209, %v1229
          %v1234 = vadd.f32 %v1210, %v1225
          %v1235 = vadd.f32 %v1211, %v1229
          %v1236 = vadd.f32 %v1212, %v1225
          %v1237 = vadd.f32 %v1213, %v1229
          %v1238 = vadd.f32 %v1214, %v1225
          %v1239 = vadd.f32 %v1215, %v1229
          %v1240 = vadd.f32 %v1216, %v1225
          %v1241 = vadd.f32 %v1217, %v1229
          %v1242 = vadd.f32 %v1218, %v1225
          %v1243 = vadd.f32 %v1219, %v1229
          %v1244 = vpack.c.bf16 %v1234, %v1232
          %v1245 = vpack.c.bf16 %v1235, %v1233
          %v1246 = vpack.c.bf16 %v1238, %v1236
          %v1247 = vpack.c.bf16 %v1239, %v1237
          %v1248 = vpack.c.bf16 %v1242, %v1240
          %v1249 = vpack.c.bf16 %v1243, %v1241
          %v1256 = vunpack.c.l.b16 %v1244
          %v1257 = vunpack.c.l.b16 %v1245
          %v1258 = vunpack.c.h.b16 %v1244
          %v1259 = vunpack.c.h.b16 %v1245
          %v1260 = vunpack.c.l.b16 %v1246
          %v1261 = vunpack.c.l.b16 %v1247
          %v1262 = vunpack.c.h.b16 %v1246
          %v1263 = vunpack.c.h.b16 %v1247
          %v1264 = vunpack.c.l.b16 %v1248
          %v1265 = vunpack.c.l.b16 %v1249
          %v1266 = vunpack.c.h.b16 %v1248
          %v1267 = vunpack.c.h.b16 %v1249
          %v1268 = vpack.c.b16 %v1257, %v1256
          %v1269 = vpack.c.b16 %v1259, %v1258
          %v1270 = vpack.c.b16 %v1261, %v1260
          %v1271 = vpack.c.b16 %v1263, %v1262
          %v1272 = vpack.c.b16 %v1265, %v1264
          %v1273 = vpack.c.b16 %v1267, %v1266
          %1280 = vst [vmem:[%s558] sm:$0xff] %v1268
          %1281 = vst [vmem:[%s558 + $0x8] sm:$0xff] %v1269
          %1282 = vst [vmem:[%s558 + $0x10] sm:$0xff] %v1270
          %1283 = vst [vmem:[%s558 + $0x18] sm:$0xff] %v1271
          %1284 = vst [vmem:[%s558 + $0x20] sm:$0xff] %v1272
          %1285 = vst [vmem:[%s558 + $0x28] sm:$0xff] %v1273
        $region101: #{main_model_step.16} parent=84 // pred_fallthru
          _
        %s1286 = sand.u32 %s125, 1
        %s1287 = sand.u32 %s125, 1
        %s1288 = smul.addr %s1287, 48
        %s1289 = scalar_lea.vmem [#allocation5], %s1288
        // Predicated region
        $region102: #{main_model_step.16} parent=84 // pred_check
          %p1290 = pneg %p135
        $region103: #{main_model_step.16} parent=84 // pred_check_branch
          %1292 = sbr.rel (%p1290) target = $region105
        $region104: #{main_model_step.16} parent=84 // pred_region
          %s1293 = smul.u32 6, %s19
          %s1294 = smul.u32 2, %s20
          %s1295 = smul.addr %s1293, 4
          %s1296 = sadd.s32 %s1294, %s1295
          %s1297 = smul.addr %s1296, 4
          %s1298 = scalar_lea.vmem %s3, %s1297
          // Predicated region
          $region106: #{main_model_step.16} parent=104 // pred_check
            _
          $region107: #{main_model_step.16} parent=104 // pred_check_branch
            %1300 = sbr.rel (0) target = $region109
          $region108: #{main_model_step.16} parent=104 // pred_region
            // Predicated region
            $region110: #{main_model_step.16} parent=108 // pred_check
              _
            $region111: #{main_model_step.16} parent=108 // pred_check_branch
              %1302 = sbr.rel (0) target = $region113
            $region112: #{main_model_step.16} parent=108 // pred_region
              // Predicated region
              $region125: #{main_model_step.16} parent=112 // pred_check
                _
              $region126: #{main_model_step.16} parent=112 // pred_check_branch
                %1327 = sbr.rel (0) target = $region128
              $region127: #{main_model_step.16} parent=112 // pred_region
                loop: start=0, step=1, limit=1
                $region129: #{main_model_step.16} parent=127 // loop_pre_header
                  _
                $region130: #{main_model_step.16} parent=127 // loop_header
                  %s1329 = sphi 0, %s1333
                  %p1330 = scmp.ge.s32.totalorder %s1329, 1
                  %s1334 = sphi %s1289, %s1289
                  %s1335 = sphi %s1298, %s1298
                $region131: #{main_model_step.16} parent=127 // loop_header_branch
                  %1332 = sbr.rel (%p1330) target = $region135
                $region132: #{main_model_step.16} parent=127 // loop_body
                  %v1336 = vld [vmem:[%s1334] sm:$0xff]
                  %1337 = vst [vmem:[%s1335] sm:$0xff] %v1336
                  %v1338 = vld [vmem:[%s1334 + $0x8] sm:$0xff]
                  %1339 = vst [vmem:[%s1335 + $0x10] sm:$0xff] %v1338
                  %v1340 = vld [vmem:[%s1334 + $0x10] sm:$0xff]
                  %1341 = vst [vmem:[%s1335 + $0x20] sm:$0xff] %v1340
                  %v1342 = vld [vmem:[%s1334 + $0x18] sm:$0xff]
                  %1343 = vst [vmem:[%s1335 + $0x30] sm:$0xff] %v1342
                  %v1344 = vld [vmem:[%s1334 + $0x20] sm:$0xff]
                  %1345 = vst [vmem:[%s1335 + $0x40] sm:$0xff] %v1344
                  %v1346 = vld [vmem:[%s1334 + $0x28] sm:$0xff]
                  %1347 = vst [vmem:[%s1335 + $0x50] sm:$0xff] %v1346
                $region133: #{main_model_step.16} parent=127 // loop_footer
                  %s1333 = sadd.s32 1, %s1329
                $region134: #{main_model_step.16} parent=127 // loop_footer_branch
                  %1328 = sbr.rel target = $region130
                $region135: #{main_model_step.16} parent=127 // loop_exit
                  _
              $region128: #{main_model_step.16} parent=112 // pred_fallthru
                _
              // Predicated region
              $region136: #{main_model_step.16} parent=112 // pred_check
                _
              $region137: #{main_model_step.16} parent=112 // pred_check_branch
                %1349 = sbr.rel target = $region139
              $region138: #{main_model_step.16} parent=112 // pred_region
                _
              $region139: #{main_model_step.16} parent=112 // pred_fallthru
                _
            $region113: #{main_model_step.16} parent=108 // pred_fallthru
              _
            // Predicated region
            $region114: #{main_model_step.16} parent=108 // pred_check
              _
            $region115: #{main_model_step.16} parent=108 // pred_check_branch
              %1304 = sbr.rel target = $region117
            $region116: #{main_model_step.16} parent=108 // pred_region
              loop: start=0, step=1, limit=1
              $region118: #{main_model_step.16} parent=116 // loop_pre_header
                _
              $region119: #{main_model_step.16} parent=116 // loop_header
                %s1307 = sphi 0, %s1311
                %p1308 = scmp.ge.s32.totalorder %s1307, 1
                %s1312 = sphi %s1289, %s1289
                %s1313 = sphi %s1298, %s1298
              $region120: #{main_model_step.16} parent=116 // loop_header_branch
                %1310 = sbr.rel (%p1308) target = $region124
              $region121: #{main_model_step.16} parent=116 // loop_body
                %v1314 = vld [vmem:[%s1312] sm:$0xff]
                %1315 = vst [vmem:[%s1313] sm:$0xff] %v1314
                %v1316 = vld [vmem:[%s1312 + $0x8] sm:$0xff]
                %1317 = vst [vmem:[%s1313 + $0x10] sm:$0xff] %v1316
                %v1318 = vld [vmem:[%s1312 + $0x10] sm:$0xff]
                %1319 = vst [vmem:[%s1313 + $0x20] sm:$0xff] %v1318
                %v1320 = vld [vmem:[%s1312 + $0x18] sm:$0xff]
                %1321 = vst [vmem:[%s1313 + $0x30] sm:$0xff] %v1320
                %v1322 = vld [vmem:[%s1312 + $0x20] sm:$0xff]
                %1323 = vst [vmem:[%s1313 + $0x40] sm:$0xff] %v1322
                %v1324 = vld [vmem:[%s1312 + $0x28] sm:$0xff]
                %1325 = vst [vmem:[%s1313 + $0x50] sm:$0xff] %v1324
              $region122: #{main_model_step.16} parent=116 // loop_footer
                %s1311 = sadd.s32 1, %s1307
              $region123: #{main_model_step.16} parent=116 // loop_footer_branch
                %1306 = sbr.rel target = $region119
              $region124: #{main_model_step.16} parent=116 // loop_exit
                _
            $region117: #{main_model_step.16} parent=108 // pred_fallthru
              _
          $region109: #{main_model_step.16} parent=104 // pred_fallthru
            _
          %1350 = vnop
        $region105: #{main_model_step.16} parent=84 // pred_fallthru
          _
      $region85: #{main_model_step.16} parent=5 // pred_fallthru
        _
      %p1351 = scmp.le.s32.totalorder 2, %s9
      // Predicated region
      $region140: #{main_model_step.16} parent=5 // pred_check
        %p1352 = pneg %p1351
      $region141: #{main_model_step.16} parent=5 // pred_check_branch
        %1354 = sbr.rel (%p1352) target = $region143
      $region142: #{main_model_step.16} parent=5 // pred_region
        %s1355 = ssub.s32 %s9, 2
        // Predicated region
        $region144: #{main_model_step.16} parent=142 // pred_check
          %p1356 = pneg %p141
        $region145: #{main_model_step.16} parent=142 // pred_check_branch
          %1358 = sbr.rel (%p1356) target = $region147
        $region146: #{main_model_step.16} parent=142 // pred_region
          %s1359 = sand.u32 %s126, 1
          %s1360 = sand.u32 %s126, 1
          %s1361 = smul.addr %s1360, 48
          %s1362 = scalar_lea.vmem [#allocation5], %s1361
        $region147: #{main_model_step.16} parent=142 // pred_fallthru
          _
      $region143: #{main_model_step.16} parent=5 // pred_fallthru
        _
    $region6: #{main_model_step.16} parent=1 // loop_footer
      %s13 = sadd.s32 1, %s9
    $region7: #{main_model_step.16} parent=1 // loop_footer_branch
      %8 = sbr.rel target = $region3
    $region8: #{main_model_step.16} parent=1 // loop_exit
      _

// kernel: main_model_step.17
$region0: #{main_model_step.17}
  #allocation0 [shape = 'u32[]', space=smem, size = 0x4, offset = 0x4, fixed_abs, tag = 'smem constant byte address 0x4 - core index']
  #allocation1 [shape = 'u32[144,128]{1,0:T(1,128)}', space=vmem, size = 0x12000, scoped, tag = 'internal scratch']
  %s0 = inlined_call_operand.vmem [shape: bf16[36,512], index: 0, kind: input, shape index: {}]
  %s1 = inlined_call_operand.vmem [shape: f32[1,512], index: 1, kind: input, shape index: {}]
  %s2 = inlined_call_operand.vmem [shape: f32[1,512], index: 2, kind: input, shape index: {}]
  %s3 = inlined_call_operand.vmem [shape: bf16[36,512], index: 3, kind: output, shape index: {}]
  %s4 = sld [smem:[#allocation0]]
  $region22: #{main_model_step.17} parent=0
    _
  %s6 = ssub.s32 1, %s4
  %s7 = scalar_select 0, %s6, %s4
  // Predicated region
  $region2: #{main_model_step.17} parent=0 // pred_check
    _
  $region3: #{main_model_step.17} parent=0 // pred_check_branch
    %9 = sbr.rel (0) target = $region5
  $region4: #{main_model_step.17} parent=0 // pred_region
    _
  $region5: #{main_model_step.17} parent=0 // pred_fallthru
    _
  // Predicated region
  $region6: #{main_model_step.17} parent=0 // pred_check
    _
  $region7: #{main_model_step.17} parent=0 // pred_check_branch
    %11 = sbr.rel (0) target = $region9
  $region8: #{main_model_step.17} parent=0 // pred_region
    _
  $region9: #{main_model_step.17} parent=0 // pred_fallthru
    _
  // Predicated region
  $region10: #{main_model_step.17} parent=0 // pred_check
    _
  $region11: #{main_model_step.17} parent=0 // pred_check_branch
    %13 = sbr.rel (0) target = $region13
  $region12: #{main_model_step.17} parent=0 // pred_region
    _
  $region13: #{main_model_step.17} parent=0 // pred_fallthru
    _
  %v14 = vld [vmem:[%s0] sm:$0xff]
  %v15 = vld [vmem:[%s0 + $0x8] sm:$0xff]
  %v16 = vld [vmem:[%s0 + $0x10] sm:$0xff]
  %v17 = vld [vmem:[%s0 + $0x18] sm:$0xff]
  %v18 = vld [vmem:[%s0 + $0x20] sm:$0xff]
  %v19 = vld [vmem:[%s0 + $0x28] sm:$0xff]
  %v20 = vld [vmem:[%s0 + $0x30] sm:$0xff]
  %v21 = vld [vmem:[%s0 + $0x38] sm:$0xff]
  %v22 = vld [vmem:[%s0 + $0x40] sm:$0x33]
  %v23 = vld [vmem:[%s0 + $0x48] sm:$0x33]
  %v24 = vunpack.c.l.bf16 %v14
  %v25 = vunpack.c.h.bf16 %v14
  %v26 = vunpack.c.l.bf16 %v15
  %v27 = vunpack.c.h.bf16 %v15
  %v28 = vunpack.c.l.bf16 %v16
  %v29 = vunpack.c.h.bf16 %v16
  %v30 = vunpack.c.l.bf16 %v17
  %v31 = vunpack.c.h.bf16 %v17
  %v32 = vunpack.c.l.bf16 %v18
  %v33 = vunpack.c.h.bf16 %v18
  %v34 = vunpack.c.l.bf16 %v19
  %v35 = vunpack.c.h.bf16 %v19
  %v36 = vunpack.c.l.bf16 %v20
  %v37 = vunpack.c.h.bf16 %v20
  %v38 = vunpack.c.l.bf16 %v21
  %v39 = vunpack.c.h.bf16 %v21
  %v40 = vunpack.c.l.bf16 %v22
  %v41 = vunpack.c.h.bf16 %v22
  %v42 = vunpack.c.l.bf16 %v23
  %v43 = vunpack.c.h.bf16 %v23
  %v44 = vadd.f32 %v24, %v28
  %v45 = vadd.f32 %v44, %v32
  %v46 = vadd.f32 %v45, %v36
  %vm47 = vcmask 1043456
  %v48 = vsel %vm47, %v40, 0.0
  %v49 = vadd.f32 %v46, %v48
  %v50 = vrot.slane %v49, 4
  %v51 = vadd.f32 %v49, %v50
  %v52 = vrot.slane %v51, 2
  %v53 = vadd.f32 %v51, %v52
  %v54 = vrot.slane %v53, 1
  %v55 = vadd.f32 %v53, %v54
  %v56 = vadd.f32 %v25, %v29
  %v57 = vadd.f32 %v56, %v33
  %v58 = vadd.f32 %v57, %v37
  %v59 = vsel %vm47, %v41, 0.0
  %v60 = vadd.f32 %v58, %v59
  %v61 = vrot.slane %v60, 4
  %v62 = vadd.f32 %v60, %v61
  %v63 = vrot.slane %v62, 2
  %v64 = vadd.f32 %v62, %v63
  %v65 = vrot.slane %v64, 1
  %v66 = vadd.f32 %v64, %v65
  %v67 = vadd.f32 %v26, %v30
  %v68 = vadd.f32 %v67, %v34
  %v69 = vadd.f32 %v68, %v38
  %v70 = vsel %vm47, %v42, 0.0
  %v71 = vadd.f32 %v69, %v70
  %v72 = vrot.slane %v71, 4
  %v73 = vadd.f32 %v71, %v72
  %v74 = vrot.slane %v73, 2
  %v75 = vadd.f32 %v73, %v74
  %v76 = vrot.slane %v75, 1
  %v77 = vadd.f32 %v75, %v76
  %v78 = vadd.f32 %v27, %v31
  %v79 = vadd.f32 %v78, %v35
  %v80 = vadd.f32 %v79, %v39
  %v81 = vsel %vm47, %v43, 0.0
  %v82 = vadd.f32 %v80, %v81
  %v83 = vrot.slane %v82, 4
  %v84 = vadd.f32 %v82, %v83
  %v85 = vrot.slane %v84, 2
  %v86 = vadd.f32 %v84, %v85
  %v87 = vrot.slane %v86, 1
  %v88 = vadd.f32 %v86, %v87
  %v89 = vmul.f32 %v24, %v24
  %v90 = vmul.f32 %v25, %v25
  %v91 = vmul.f32 %v26, %v26
  %v92 = vmul.f32 %v27, %v27
  %v93 = vmul.f32 %v28, %v28
  %v94 = vmul.f32 %v29, %v29
  %v95 = vmul.f32 %v30, %v30
  %v96 = vmul.f32 %v31, %v31
  %v97 = vmul.f32 %v32, %v32
  %v98 = vmul.f32 %v33, %v33
  %v99 = vmul.f32 %v34, %v34
  %v100 = vmul.f32 %v35, %v35
  %v101 = vmul.f32 %v36, %v36
  %v102 = vmul.f32 %v37, %v37
  %v103 = vmul.f32 %v38, %v38
  %v104 = vmul.f32 %v39, %v39
  %v105 = vmul.f32 %v40, %v40
  %v106 = vmul.f32 %v41, %v41
  %v107 = vmul.f32 %v42, %v42
  %v108 = vmul.f32 %v43, %v43
  %v109 = vadd.f32 %v89, %v93
  %v110 = vadd.f32 %v109, %v97
  %v111 = vadd.f32 %v110, %v101
  %v112 = vsel %vm47, %v105, 0.0
  %v113 = vadd.f32 %v111, %v112
  %v114 = vrot.slane %v113, 4
  %v115 = vadd.f32 %v113, %v114
  %v116 = vrot.slane %v115, 2
  %v117 = vadd.f32 %v115, %v116
  %v118 = vrot.slane %v117, 1
  %v119 = vadd.f32 %v117, %v118
  %v120 = vadd.f32 %v90, %v94
  %v121 = vadd.f32 %v120, %v98
  %v122 = vadd.f32 %v121, %v102
  %v123 = vsel %vm47, %v106, 0.0
  %v124 = vadd.f32 %v122, %v123
  %v125 = vrot.slane %v124, 4
  %v126 = vadd.f32 %v124, %v125
  %v127 = vrot.slane %v126, 2
  %v128 = vadd.f32 %v126, %v127
  %v129 = vrot.slane %v128, 1
  %v130 = vadd.f32 %v128, %v129
  %v131 = vadd.f32 %v91, %v95
  %v132 = vadd.f32 %v131, %v99
  %v133 = vadd.f32 %v132, %v103
  %v134 = vsel %vm47, %v107, 0.0
  %v135 = vadd.f32 %v133, %v134
  %v136 = vrot.slane %v135, 4
  %v137 = vadd.f32 %v135, %v136
  %v138 = vrot.slane %v137, 2
  %v139 = vadd.f32 %v137, %v138
  %v140 = vrot.slane %v139, 1
  %v141 = vadd.f32 %v139, %v140
  %v142 = vadd.f32 %v92, %v96
  %v143 = vadd.f32 %v142, %v100
  %v144 = vadd.f32 %v143, %v104
  %v145 = vsel %vm47, %v108, 0.0
  %v146 = vadd.f32 %v144, %v145
  %v147 = vrot.slane %v146, 4
  %v148 = vadd.f32 %v146, %v147
  %v149 = vrot.slane %v148, 2
  %v150 = vadd.f32 %v148, %v149
  %v151 = vrot.slane %v150, 1
  %v152 = vadd.f32 %v150, %v151
  %v153 = vmul.f32 %v55, 0.027777778
  %v154 = vmul.f32 %v66, 0.027777778
  %v155 = vmul.f32 %v77, 0.027777778
  %v156 = vmul.f32 %v88, 0.027777778
  %v157 = vmul.f32 %v119, 0.027777778
  %v158 = vmul.f32 %v130, 0.027777778
  %v159 = vmul.f32 %v141, 0.027777778
  %v160 = vmul.f32 %v152, 0.027777778
  %v161 = vmul.f32 %v153, %v153
  %v162 = vmul.f32 %v154, %v154
  %v163 = vmul.f32 %v155, %v155
  %v164 = vmul.f32 %v156, %v156
  %v165 = vsub.f32 %v157, %v161
  %v166 = vsub.f32 %v158, %v162
  %v167 = vsub.f32 %v159, %v163
  %v168 = vsub.f32 %v160, %v164
  %v169 = vsub.f32 %v24, %v153
  %v170 = vsub.f32 %v25, %v154
  %v171 = vsub.f32 %v26, %v155
  %v172 = vsub.f32 %v27, %v156
  %v173 = vsub.f32 %v28, %v153
  %v174 = vsub.f32 %v29, %v154
  %v175 = vsub.f32 %v30, %v155
  %v176 = vsub.f32 %v31, %v156
  %v177 = vsub.f32 %v32, %v153
  %v178 = vsub.f32 %v33, %v154
  %v179 = vsub.f32 %v34, %v155
  %v180 = vsub.f32 %v35, %v156
  %v181 = vsub.f32 %v36, %v153
  %v182 = vsub.f32 %v37, %v154
  %v183 = vsub.f32 %v38, %v155
  %v184 = vsub.f32 %v39, %v156
  %v185 = vsub.f32 %v40, %v153
  %v186 = vsub.f32 %v41, %v154
  %v187 = vsub.f32 %v42, %v155
  %v188 = vsub.f32 %v43, %v156
  %v189 = vadd.f32 %v165, 1e-05
  %v190 = vadd.f32 %v166, 1e-05
  %v191 = vadd.f32 %v167, 1e-05
  %v192 = vadd.f32 %v168, 1e-05
  %v193 = vrsqrt.pop %v189
  %v194 = vrsqrt.pop %v190
  %v195 = vrsqrt.pop %v191
  %v196 = vrsqrt.pop %v192
  %v197 = vmul.f32 %v169, %v193
  %v198 = vmul.f32 %v170, %v194
  %v199 = vmul.f32 %v171, %v195
  %v200 = vmul.f32 %v172, %v196
  %v201 = vmul.f32 %v173, %v193
  %v202 = vmul.f32 %v174, %v194
  %v203 = vmul.f32 %v175, %v195
  %v204 = vmul.f32 %v176, %v196
  %v205 = vmul.f32 %v177, %v193
  %v206 = vmul.f32 %v178, %v194
  %v207 = vmul.f32 %v179, %v195
  %v208 = vmul.f32 %v180, %v196
  %v209 = vmul.f32 %v181, %v193
  %v210 = vmul.f32 %v182, %v194
  %v211 = vmul.f32 %v183, %v195
  %v212 = vmul.f32 %v184, %v196
  %v213 = vmul.f32 %v185, %v193
  %v214 = vmul.f32 %v186, %v194
  %v215 = vmul.f32 %v187, %v195
  %v216 = vmul.f32 %v188, %v196
  %v217 = vld [vmem:[%s1] sm:$0xf]
  %v219 = vlaneseq
  %v220 = vshrl.u32 %v219, 7
  %v221 = vsub.s32 0, %v220
  %v222 = vrot.slane %v217, %v221
  %v223 = vlaneseq
  %v224 = vshrl.u32 %v223, 7
  %v225 = vsub.s32 1, %v224
  %v226 = vrot.slane %v217, %v225
  %v227 = vlaneseq
  %v228 = vshrl.u32 %v227, 7
  %v229 = vsub.s32 2, %v228
  %v230 = vrot.slane %v217, %v229
  %v231 = vlaneseq
  %v232 = vshrl.u32 %v231, 7
  %v233 = vsub.s32 3, %v232
  %v234 = vrot.slane %v217, %v233
  %v239 = vmul.f32 %v197, %v222
  %v240 = vmul.f32 %v198, %v226
  %v241 = vmul.f32 %v199, %v230
  %v242 = vmul.f32 %v200, %v234
  %v243 = vmul.f32 %v201, %v222
  %v244 = vmul.f32 %v202, %v226
  %v245 = vmul.f32 %v203, %v230
  %v246 = vmul.f32 %v204, %v234
  %v247 = vmul.f32 %v205, %v222
  %v248 = vmul.f32 %v206, %v226
  %v249 = vmul.f32 %v207, %v230
  %v250 = vmul.f32 %v208, %v234
  %v251 = vmul.f32 %v209, %v222
  %v252 = vmul.f32 %v210, %v226
  %v253 = vmul.f32 %v211, %v230
  %v254 = vmul.f32 %v212, %v234
  %v255 = vmul.f32 %v213, %v222
  %v256 = vmul.f32 %v214, %v226
  %v257 = vmul.f32 %v215, %v230
  %v258 = vmul.f32 %v216, %v234
  %v259 = vld [vmem:[%s2] sm:$0xf]
  %v261 = vlaneseq
  %v262 = vshrl.u32 %v261, 7
  %v263 = vsub.s32 0, %v262
  %v264 = vrot.slane %v259, %v263
  %v265 = vlaneseq
  %v266 = vshrl.u32 %v265, 7
  %v267 = vsub.s32 1, %v266
  %v268 = vrot.slane %v259, %v267
  %v269 = vlaneseq
  %v270 = vshrl.u32 %v269, 7
  %v271 = vsub.s32 2, %v270
  %v272 = vrot.slane %v259, %v271
  %v273 = vlaneseq
  %v274 = vshrl.u32 %v273, 7
  %v275 = vsub.s32 3, %v274
  %v276 = vrot.slane %v259, %v275
  %v281 = vadd.f32 %v239, %v264
  %v282 = vadd.f32 %v240, %v268
  %v283 = vadd.f32 %v241, %v272
  %v284 = vadd.f32 %v242, %v276
  %v285 = vadd.f32 %v243, %v264
  %v286 = vadd.f32 %v244, %v268
  %v287 = vadd.f32 %v245, %v272
  %v288 = vadd.f32 %v246, %v276
  %v289 = vadd.f32 %v247, %v264
  %v290 = vadd.f32 %v248, %v268
  %v291 = vadd.f32 %v249, %v272
  %v292 = vadd.f32 %v250, %v276
  %v293 = vadd.f32 %v251, %v264
  %v294 = vadd.f32 %v252, %v268
  %v295 = vadd.f32 %v253, %v272
  %v296 = vadd.f32 %v254, %v276
  %v297 = vadd.f32 %v255, %v264
  %v298 = vadd.f32 %v256, %v268
  %v299 = vadd.f32 %v257, %v272
  %v300 = vadd.f32 %v258, %v276
  %vm301 = vcmp.ge.f32.partialorder %v281, 0.0
  %vm302 = vcmp.ge.f32.partialorder %v282, 0.0
  %vm303 = vcmp.ge.f32.partialorder %v283, 0.0
  %vm304 = vcmp.ge.f32.partialorder %v284, 0.0
  %vm305 = vcmp.ge.f32.partialorder %v285, 0.0
  %vm306 = vcmp.ge.f32.partialorder %v286, 0.0
  %vm307 = vcmp.ge.f32.partialorder %v287, 0.0
  %vm308 = vcmp.ge.f32.partialorder %v288, 0.0
  %vm309 = vcmp.ge.f32.partialorder %v289, 0.0
  %vm310 = vcmp.ge.f32.partialorder %v290, 0.0
  %vm311 = vcmp.ge.f32.partialorder %v291, 0.0
  %vm312 = vcmp.ge.f32.partialorder %v292, 0.0
  %vm313 = vcmp.ge.f32.partialorder %v293, 0.0
  %vm314 = vcmp.ge.f32.partialorder %v294, 0.0
  %vm315 = vcmp.ge.f32.partialorder %v295, 0.0
  %vm316 = vcmp.ge.f32.partialorder %v296, 0.0
  %vm317 = vcmp.ge.f32.partialorder %v297, 0.0
  %vm318 = vcmp.ge.f32.partialorder %v298, 0.0
  %vm319 = vcmp.ge.f32.partialorder %v299, 0.0
  %vm320 = vcmp.ge.f32.partialorder %v300, 0.0
  %v321 = vmul.f32 %v281, 0.2
  %v322 = vmul.f32 %v282, 0.2
  %v323 = vmul.f32 %v283, 0.2
  %v324 = vmul.f32 %v284, 0.2
  %v325 = vmul.f32 %v285, 0.2
  %v326 = vmul.f32 %v286, 0.2
  %v327 = vmul.f32 %v287, 0.2
  %v328 = vmul.f32 %v288, 0.2
  %v329 = vmul.f32 %v289, 0.2
  %v330 = vmul.f32 %v290, 0.2
  %v331 = vmul.f32 %v291, 0.2
  %v332 = vmul.f32 %v292, 0.2
  %v333 = vmul.f32 %v293, 0.2
  %v334 = vmul.f32 %v294, 0.2
  %v335 = vmul.f32 %v295, 0.2
  %v336 = vmul.f32 %v296, 0.2
  %v337 = vmul.f32 %v297, 0.2
  %v338 = vmul.f32 %v298, 0.2
  %v339 = vmul.f32 %v299, 0.2
  %v340 = vmul.f32 %v300, 0.2
  %v341 = vsel %vm301, %v281, %v321
  %v342 = vsel %vm302, %v282, %v322
  %v343 = vsel %vm303, %v283, %v323
  %v344 = vsel %vm304, %v284, %v324
  %v345 = vsel %vm305, %v285, %v325
  %v346 = vsel %vm306, %v286, %v326
  %v347 = vsel %vm307, %v287, %v327
  %v348 = vsel %vm308, %v288, %v328
  %v349 = vsel %vm309, %v289, %v329
  %v350 = vsel %vm310, %v290, %v330
  %v351 = vsel %vm311, %v291, %v331
  %v352 = vsel %vm312, %v292, %v332
  %v353 = vsel %vm313, %v293, %v333
  %v354 = vsel %vm314, %v294, %v334
  %v355 = vsel %vm315, %v295, %v335
  %v356 = vsel %vm316, %v296, %v336
  %v357 = vsel %vm317, %v297, %v337
  %v358 = vsel %vm318, %v298, %v338
  %v359 = vsel %vm319, %v299, %v339
  %v360 = vsel %vm320, %v300, %v340
  %v361 = vpack.c.bf16 %v345, %v341
  %v362 = vpack.c.bf16 %v346, %v342
  %v363 = vpack.c.bf16 %v347, %v343
  %v364 = vpack.c.bf16 %v348, %v344
  %v365 = vpack.c.bf16 %v353, %v349
  %v366 = vpack.c.bf16 %v354, %v350
  %v367 = vpack.c.bf16 %v355, %v351
  %v368 = vpack.c.bf16 %v356, %v352
  %v369 = vpack.c.bf16 %v357, %v357
  %v370 = vpack.c.bf16 %v358, %v358
  %v371 = vpack.c.bf16 %v359, %v359
  %v372 = vpack.c.bf16 %v360, %v360
  %v385 = vunpack.c.l.b16 %v361
  %v386 = vunpack.c.l.b16 %v362
  %v387 = vunpack.c.l.b16 %v363
  %v388 = vunpack.c.l.b16 %v364
  %v389 = vunpack.c.h.b16 %v361
  %v390 = vunpack.c.h.b16 %v362
  %v391 = vunpack.c.h.b16 %v363
  %v392 = vunpack.c.h.b16 %v364
  %v393 = vunpack.c.l.b16 %v365
  %v394 = vunpack.c.l.b16 %v366
  %v395 = vunpack.c.l.b16 %v367
  %v396 = vunpack.c.l.b16 %v368
  %v397 = vunpack.c.h.b16 %v365
  %v398 = vunpack.c.h.b16 %v366
  %v399 = vunpack.c.h.b16 %v367
  %v400 = vunpack.c.h.b16 %v368
  %v401 = vunpack.c.l.b16 %v369
  %v402 = vunpack.c.l.b16 %v370
  %v403 = vunpack.c.l.b16 %v371
  %v404 = vunpack.c.l.b16 %v372
  %v405 = vpack.c.b16 %v386, %v385
  %v406 = vpack.c.b16 %v388, %v387
  %v407 = vpack.c.b16 %v390, %v389
  %v408 = vpack.c.b16 %v392, %v391
  %v409 = vpack.c.b16 %v394, %v393
  %v410 = vpack.c.b16 %v396, %v395
  %v411 = vpack.c.b16 %v398, %v397
  %v412 = vpack.c.b16 %v400, %v399
  %v413 = vpack.c.b16 %v402, %v401
  %v414 = vpack.c.b16 %v404, %v403
  %425 = vst [vmem:[%s3] sm:$0xff] %v405
  %426 = vst [vmem:[%s3 + $0x8] sm:$0xff] %v406
  %427 = vst [vmem:[%s3 + $0x10] sm:$0xff] %v407
  %428 = vst [vmem:[%s3 + $0x18] sm:$0xff] %v408
  %429 = vst [vmem:[%s3 + $0x20] sm:$0xff] %v409
  %430 = vst [vmem:[%s3 + $0x28] sm:$0xff] %v410
  %431 = vst [vmem:[%s3 + $0x30] sm:$0xff] %v411
  %432 = vst [vmem:[%s3 + $0x38] sm:$0xff] %v412
  %433 = vst [vmem:[%s3 + $0x40] sm:$0x33] %v413
  %434 = vst [vmem:[%s3 + $0x48] sm:$0x33] %v414
  // Predicated region
  $region14: #{main_model_step.17} parent=0 // pred_check
    _
  $region15: #{main_model_step.17} parent=0 // pred_check_branch
    %436 = sbr.rel (0) target = $region17
  $region16: #{main_model_step.17} parent=0 // pred_region
    _
  $region17: #{main_model_step.17} parent=0 // pred_fallthru
    _
  // Predicated region
  $region18: #{main_model_step.17} parent=0 // pred_check
    _
  $region19: #{main_model_step.17} parent=0 // pred_check_branch
    %438 = sbr.rel (0) target = $region21
  $region20: #{main_model_step.17} parent=0 // pred_region
    _
  $region21: #{main_model_step.17} parent=0 // pred_fallthru
    _

// kernel: main_model_step.18
$region0: #{main_model_step.18}
  #allocation0 [shape = 'u32[]', space=smem, size = 0x4, offset = 0x4, fixed_abs, tag = 'smem constant byte address 0x4 - core index']
  #allocation1 [shape = 'u32[144,128]{1,0:T(1,128)}', space=vmem, size = 0x12000, scoped, tag = 'internal scratch']
  #allocation2 [shape = 'f32[16,128]{1,0:T(8,128)}', space=vmem, size = 0x2000, scoped, tag = 'scratch operand']
  %s0 = inlined_call_operand.vmem [shape: bf16[16,8192], index: 0, kind: input, shape index: {}]
  %s1 = inlined_call_operand.vmem [shape: bf16[8192,128], index: 1, kind: input, shape index: {}]
  %s2 = inlined_call_operand.vmem [shape: f32[1,128], index: 2, kind: input, shape index: {}]
  %s3 = inlined_call_operand.vmem [shape: f32[16,128], index: 3, kind: output, shape index: {}]
  %s4 = sld [smem:[#allocation0]]
  $region76: #{main_model_step.18} parent=0
    _
  %s6 = ssub.s32 1, %s4
  %s7 = scalar_select 0, %s6, %s4
  $region1: #{main_model_step.18} parent=0
    #allocation3 [shape = 'u8[32768]{0}', space=vmem, size = 0x8000, scoped, tag = 'input window, operand 0']
    loop: start=0, step=1, limit=18
    $region2: #{main_model_step.18} parent=1 // loop_pre_header
      _
    $region3: #{main_model_step.18} parent=1 // loop_header
      %s9 = sphi 0, %s13
      %p10 = scmp.ge.s32.totalorder %s9, 18
      %s16 = sphi 0, %s35
      %s17 = sphi 0, %s31
      %s18 = sphi 0, %s27
      %s19 = sphi 0, %s16
      %s20 = sphi 0, %s17
      %s21 = sphi 0, %s18
      %s22 = sphi 0, %s19
      %s23 = sphi 0, %s20
      %s24 = sphi 0, %s21
      %s40 = sphi 0, %s42
      %s43 = sphi 0, %s40
      %s44 = sphi 0, %s43
      %s60 = sphi 0, %s44
      %s68 = sphi 0, %s70
      %s71 = sphi 0, %s68
      %s72 = sphi 0, %s71
      %s88 = sphi 0, %s72
      %s94 = sphi 0, %s96
      %s97 = sphi 0, %s94
      %s98 = sphi 0, %s97
      %s114 = sphi 0, %s98
      %s122 = sphi 0, %s124
      %s125 = sphi 0, %s122
      %s126 = sphi 0, %s125
      %s142 = sphi 0, %s126
    $region4: #{main_model_step.18} parent=1 // loop_header_branch
      %12 = sbr.rel (%p10) target = $region8
    $region5: #{main_model_step.18} parent=1 // loop_body
      %s14 = ssub.s32 %s9, 1
      %s15 = ssub.s32 %s9, 2
      %s25 = sadd.s32 1, %s18
      %p26 = scmp.ge.s32.totalorder %s25, 16
      %s27 = scalar_select %p26, 0, %s25
      %s28 = sadd.s32 1, %s17
      %s29 = scalar_select %p26, %s28, %s17
      %p30 = scmp.ge.s32.totalorder %s29, 1
      %s31 = scalar_select %p30, 0, %s29
      %s32 = sadd.s32 1, %s16
      %s33 = scalar_select %p30, %s32, %s16
      %p34 = scmp.ge.s32.totalorder %s33, 1
      %s35 = scalar_select %p34, 0, %s33
      %s36 = ssub.s32 %s16, %s35
      %s37 = ssub.s32 %s18, %s27
      %s38 = sor.u32 %s36, %s37
      %p39 = scmp.eq.s32.totalorder %s38, 0
      %s41 = sadd.s32 %s40, 1
      %s42 = scalar_select %p39, %s40, %s41
      %p45 = pneg %p39
      %p46 = scmp.eq.s32.totalorder %s9, 15
      %p47 = por %p45, %p46
      %p48 = scmp.ne.s32.totalorder %s40, %s43
      %p49 = scmp.eq.s32.totalorder %s9, 0
      %p50 = por %p48, %p49
      %p51 = scmp.ne.s32.totalorder %s40, %s43
      %p52 = scmp.eq.s32.totalorder %s14, 15
      %p53 = por %p51, %p52
      %p54 = scmp.ne.s32.totalorder %s43, %s44
      %p55 = scmp.eq.s32.totalorder %s14, 0
      %p56 = por %p54, %p55
      %p57 = scmp.ne.s32.totalorder %s43, %s44
      %p58 = scmp.eq.s32.totalorder %s15, 15
      %p59 = por %p57, %p58
      %p61 = scmp.ne.s32.totalorder %s44, %s60
      %p62 = scmp.eq.s32.totalorder %s15, 0
      %p63 = por %p61, %p62
      %s64 = ssub.s32 %s18, %s27
      %s65 = ssub.s32 %s17, %s31
      %s66 = sor.u32 %s64, %s65
      %p67 = scmp.eq.s32.totalorder %s66, 0
      %s69 = sadd.s32 %s68, 1
      %s70 = scalar_select %p67, %s68, %s69
      %p73 = pneg %p67
      %p74 = scmp.eq.s32.totalorder %s9, 15
      %p75 = por %p73, %p74
      %p76 = scmp.ne.s32.totalorder %s68, %s71
      %p77 = scmp.eq.s32.totalorder %s9, 0
      %p78 = por %p76, %p77
      %p79 = scmp.ne.s32.totalorder %s68, %s71
      %p80 = scmp.eq.s32.totalorder %s14, 15
      %p81 = por %p79, %p80
      %p82 = scmp.ne.s32.totalorder %s71, %s72
      %p83 = scmp.eq.s32.totalorder %s14, 0
      %p84 = por %p82, %p83
      %p85 = scmp.ne.s32.totalorder %s71, %s72
      %p86 = scmp.eq.s32.totalorder %s15, 15
      %p87 = por %p85, %p86
      %p89 = scmp.ne.s32.totalorder %s72, %s88
      %p90 = scmp.eq.s32.totalorder %s15, 0
      %p91 = por %p89, %p90
      %s92 = ssub.s32 %s17, %s31
      %p93 = scmp.eq.s32.totalorder %s92, 0
      %s95 = sadd.s32 %s94, 1
      %s96 = scalar_select %p93, %s94, %s95
      %p99 = pneg %p93
      %p100 = scmp.eq.s32.totalorder %s9, 15
      %p101 = por %p99, %p100
      %p102 = scmp.ne.s32.totalorder %s94, %s97
      %p103 = scmp.eq.s32.totalorder %s9, 0
      %p104 = por %p102, %p103
      %p105 = scmp.ne.s32.totalorder %s94, %s97
      %p106 = scmp.eq.s32.totalorder %s14, 15
      %p107 = por %p105, %p106
      %p108 = scmp.ne.s32.totalorder %s97, %s98
      %p109 = scmp.eq.s32.totalorder %s14, 0
      %p110 = por %p108, %p109
      %p111 = scmp.ne.s32.totalorder %s97, %s98
      %p112 = scmp.eq.s32.totalorder %s15, 15
      %p113 = por %p111, %p112
      %p115 = scmp.ne.s32.totalorder %s98, %s114
      %p116 = scmp.eq.s32.totalorder %s15, 0
      %p117 = por %p115, %p116
      %s118 = ssub.s32 %s16, %s35
      %s119 = ssub.s32 %s17, %s31
      %s120 = sor.u32 %s118, %s119
      %p121 = scmp.eq.s32.totalorder %s120, 0
      %s123 = sadd.s32 %s122, 1
      %s124 = scalar_select %p121, %s122, %s123
      %p127 = pneg %p121
      %p128 = scmp.eq.s32.totalorder %s9, 15
      %p129 = por %p127, %p128
      %p130 = scmp.ne.s32.totalorder %s122, %s125
      %p131 = scmp.eq.s32.totalorder %s9, 0
      %p132 = por %p130, %p131
      %p133 = scmp.ne.s32.totalorder %s122, %s125
      %p134 = scmp.eq.s32.totalorder %s14, 15
      %p135 = por %p133, %p134
      %p136 = scmp.ne.s32.totalorder %s125, %s126
      %p137 = scmp.eq.s32.totalorder %s14, 0
      %p138 = por %p136, %p137
      %p139 = scmp.ne.s32.totalorder %s125, %s126
      %p140 = scmp.eq.s32.totalorder %s15, 15
      %p141 = por %p139, %p140
      %p143 = scmp.ne.s32.totalorder %s126, %s142
      %p144 = scmp.eq.s32.totalorder %s15, 0
      %p145 = por %p143, %p144
      %p146 = scmp.le.s32.totalorder 1, %s9
      %p147 = scmp.lt.s32.totalorder %s9, 17
      %p148 = pnand %p146, %p147
      %p149 = pneg %p148
      // Predicated region
      $region9: #{main_model_step.18} parent=5 // pred_check
        _
      $region10: #{main_model_step.18} parent=5 // pred_check_branch
        %151 = sbr.rel (%p148) target = $region12
      $region11: #{main_model_step.18} parent=5 // pred_region
        %s152 = ssub.s32 %s9, 1
        // Predicated region
        $region13: #{main_model_step.18} parent=11 // pred_check
          %p153 = pneg %p110
        $region14: #{main_model_step.18} parent=11 // pred_check_branch
          %155 = sbr.rel (%p153) target = $region16
        $region15: #{main_model_step.18} parent=11 // pred_region
          %p156 = scmp.lt.s32.totalorder %s20, 0
          %s157 = scalar_select %p156, %s20, 0
          %s158 = scalar_lea.vmem %s2, %s157
        $region16: #{main_model_step.18} parent=11 // pred_fallthru
          _
      $region12: #{main_model_step.18} parent=5 // pred_fallthru
        _
      %p159 = scmp.lt.s32.totalorder %s9, 16
      // Predicated region
      $region17: #{main_model_step.18} parent=5 // pred_check
        %p160 = pneg %p159
      $region18: #{main_model_step.18} parent=5 // pred_check_branch
        %162 = sbr.rel (%p160) target = $region20
      $region19: #{main_model_step.18} parent=5 // pred_region
        // Predicated region
        $region21: #{main_model_step.18} parent=19 // pred_check
          %p163 = pneg %p50
        $region22: #{main_model_step.18} parent=19 // pred_check_branch
          %165 = sbr.rel (%p163) target = $region24
        $region23: #{main_model_step.18} parent=19 // pred_region
          %s166 = sand.u32 %s40, 1
          %s167 = sand.u32 %s40, 1
          %s168 = smul.addr %s167, 32
          %s169 = scalar_lea.vmem [#allocation3], %s168
          %s170 = smul.u32 2, %s16
          %s171 = smul.u32 4, %s18
          %s172 = smul.addr %s170, 64
          %s173 = sadd.s32 %s171, %s172
          %s174 = smul.addr %s173, 4
          %s175 = scalar_lea.vmem %s0, %s174
          // Predicated region
          $region25: #{main_model_step.18} parent=23 // pred_check
            _
          $region26: #{main_model_step.18} parent=23 // pred_check_branch
            %177 = sbr.rel (0) target = $region28
          $region27: #{main_model_step.18} parent=23 // pred_region
            // Predicated region
            $region29: #{main_model_step.18} parent=27 // pred_check
              _
            $region30: #{main_model_step.18} parent=27 // pred_check_branch
              %179 = sbr.rel (0) target = $region32
            $region31: #{main_model_step.18} parent=27 // pred_region
              loop: start=0, step=1, limit=1
              $region33: #{main_model_step.18} parent=31 // loop_pre_header
                _
              $region34: #{main_model_step.18} parent=31 // loop_header
                %s181 = sphi 0, %s185
                %p182 = scmp.ge.s32.totalorder %s181, 1
                %s186 = sphi %s175, %s175
                %s187 = sphi %s169, %s169
              $region35: #{main_model_step.18} parent=31 // loop_header_branch
                %184 = sbr.rel (%p182) target = $region39
              $region36: #{main_model_step.18} parent=31 // loop_body
                %v188 = vld [vmem:[%s186] sm:$0xff]
                %189 = vst [vmem:[%s187] sm:$0xff] %v188
                %v190 = vld [vmem:[%s186 + $0x8] sm:$0xff]
                %191 = vst [vmem:[%s187 + $0x8] sm:$0xff] %v190
                %v192 = vld [vmem:[%s186 + $0x100] sm:$0xff]
                %193 = vst [vmem:[%s187 + $0x10] sm:$0xff] %v192
                %v194 = vld [vmem:[%s186 + $0x108] sm:$0xff]
                %195 = vst [vmem:[%s187 + $0x18] sm:$0xff] %v194
              $region37: #{main_model_step.18} parent=31 // loop_footer
                %s185 = sadd.s32 1, %s181
              $region38: #{main_model_step.18} parent=31 // loop_footer_branch
                %180 = sbr.rel target = $region34
              $region39: #{main_model_step.18} parent=31 // loop_exit
                _
            $region32: #{main_model_step.18} parent=27 // pred_fallthru
              _
            // Predicated region
            $region40: #{main_model_step.18} parent=27 // pred_check
              _
            $region41: #{main_model_step.18} parent=27 // pred_check_branch
              %197 = sbr.rel target = $region43
            $region42: #{main_model_step.18} parent=27 // pred_region
              _
            $region43: #{main_model_step.18} parent=27 // pred_fallthru
              _
          $region28: #{main_model_step.18} parent=23 // pred_fallthru
            _
          %198 = vnop
        $region24: #{main_model_step.18} parent=19 // pred_fallthru
          _
        // Predicated region
        $region44: #{main_model_step.18} parent=19 // pred_check
          %p199 = pneg %p78
        $region45: #{main_model_step.18} parent=19 // pred_check_branch
          %201 = sbr.rel (%p199) target = $region47
        $region46: #{main_model_step.18} parent=19 // pred_region
          %s202 = smul.u32 64, %s18
          %p203 = scmp.lt.s32.totalorder %s202, 1023
          %s204 = scalar_select %p203, %s202, 1023
          %p205 = scmp.lt.s32.totalorder %s17, 0
          %s206 = scalar_select %p205, %s17, 0
          %s207 = sadd.s32 %s206, %s204
          %s208 = smul.addr %s207, 4
          %s209 = scalar_lea.vmem %s1, %s208
          %s210 = smul.u32 64, %s18
        $region47: #{main_model_step.18} parent=19 // pred_fallthru
          _
      $region20: #{main_model_step.18} parent=5 // pred_fallthru
        _
      %p211 = scmp.le.s32.totalorder 1, %s9
      %p212 = scmp.lt.s32.totalorder %s9, 17
      %p213 = pnand %p211, %p212
      %p214 = pneg %p213
      // Predicated region
      $region48: #{main_model_step.18} parent=5 // pred_check
        _
      $region49: #{main_model_step.18} parent=5 // pred_check_branch
        %216 = sbr.rel (%p213) target = $region51
      $region50: #{main_model_step.18} parent=5 // pred_region
        %s217 = ssub.s32 %s9, 1
        %s218 = sand.u32 %s43, 1
        %s219 = sand.u32 %s43, 1
        %s220 = smul.addr %s219, 32
        %s221 = scalar_lea.vmem [#allocation3], %s220
        // Predicated region
        $region52: #{main_model_step.18} parent=50 // pred_check
          %p222 = pneg %p56
        $region53: #{main_model_step.18} parent=50 // pred_check_branch
          %224 = sbr.rel (%p222) target = $region55
        $region54: #{main_model_step.18} parent=50 // pred_region
          _
        $region55: #{main_model_step.18} parent=50 // pred_fallthru
          _
        %s225 = sand.u32 %s43, 1
        %s226 = sand.u32 %s43, 1
        %s227 = smul.addr %s226, 32
        %s228 = scalar_lea.vmem [#allocation3], %s227
        %p229 = pneg %p56
        %p230 = pneg %p53
        %s231 = smul.u32 64, %s21
        %p232 = scmp.lt.s32.totalorder %s231, 1023
        %s233 = scalar_select %p232, %s231, 1023
        %p234 = scmp.lt.s32.totalorder %s20, 0
        %s235 = scalar_select %p234, %s20, 0
        %s236 = sadd.s32 %s235, %s233
        %s237 = smul.addr %s236, 4
        %s238 = scalar_lea.vmem %s1, %s237
        %p239 = pneg %p84
        %p240 = pneg %p81
        %p241 = scmp.lt.s32.totalorder %s20, 0
        %s242 = scalar_select %p241, %s20, 0
        %s243 = scalar_lea.vmem %s2, %s242
        %p244 = pneg %p110
        %p245 = pneg %p107
        %p246 = pneg %p138
        %p247 = pneg %p135
        %s248 = smul.u32 2, %s19
        %p249 = scmp.lt.s32.totalorder %s248, 1
        %s250 = scalar_select %p249, %s248, 1
        %p251 = scmp.lt.s32.totalorder %s20, 0
        %s252 = scalar_select %p251, %s20, 0
        %s253 = sadd.s32 %s252, %s250
        %s254 = smul.addr %s253, 8
        %s255 = scalar_lea.vmem %s3, %s254
        %s256 = smul.u32 2, %s19
        %s257 = smul.u32 4, %s21
        %s258 = smul.u32 64, %s21
        %p259 = scmp.lt.s32.totalorder %s258, 1023
        %s260 = scalar_select %p259, %s258, 1023
        %p261 = scmp.lt.s32.totalorder %s20, 0
        %s262 = scalar_select %p261, %s20, 0
        %s263 = sadd.s32 %s262, %s260
        %s264 = smul.addr %s263, 4
        %s265 = scalar_lea.vmem %s1, %s264
        %s266 = smul.u32 64, %s21
        %p267 = scmp.lt.s32.totalorder %s20, 0
        %s268 = scalar_select %p267, %s20, 0
        %s269 = scalar_lea.vmem %s2, %s268
        %s270 = smul.u32 2, %s19
        %p271 = scmp.lt.s32.totalorder %s270, 1
        %s272 = scalar_select %p271, %s270, 1
        %p273 = scmp.lt.s32.totalorder %s20, 0
        %s274 = scalar_select %p273, %s20, 0
        %s275 = sadd.s32 %s274, %s272
        %s276 = smul.addr %s275, 8
        %s277 = scalar_lea.vmem %s3, %s276
        %s278 = smul.u32 2, %s19
        %p280 = scmp.eq.s32.totalorder %s21, 0
        // Predicated region
        $region56: #{main_model_step.18} parent=50 // pred_check
          %p281 = pneg %p280
        $region57: #{main_model_step.18} parent=50 // pred_check_branch
          %283 = sbr.rel (%p281) target = $region59
        $region58: #{main_model_step.18} parent=50 // pred_region
          %284 = vst [vmem:[#allocation2] sm:$0xff] 0.0
          %285 = vst [vmem:[#allocation2 + $0x8] sm:$0xff] 0.0
        $region59: #{main_model_step.18} parent=50 // pred_fallthru
          _
        %v286 = vld [vmem:[#allocation2] sm:$0xff]
        %v287 = vld [vmem:[#allocation2 + $0x8] sm:$0xff]
        %v288 = vld [vmem:[%s221] sm:$0xff]
        %v289 = vld [vmem:[%s221 + $0x8] sm:$0xff]
        %v290 = vld [vmem:[%s221 + $0x10] sm:$0xff]
        %v291 = vld [vmem:[%s221 + $0x18] sm:$0xff]
        %v292 = vld [vmem:[%s265] sm:$0xf]
        %v293 = vld [vmem:[%s265 + $0x4] sm:$0xf]
        %v294 = vld [vmem:[%s265 + $0x8] sm:$0xf]
        %v295 = vld [vmem:[%s265 + $0xc] sm:$0xf]
        %v296 = vld [vmem:[%s265 + $0x10] sm:$0xf]
        %v297 = vld [vmem:[%s265 + $0x14] sm:$0xf]
        %v298 = vld [vmem:[%s265 + $0x18] sm:$0xf]
        %v299 = vld [vmem:[%s265 + $0x1c] sm:$0xf]
        %v300 = vld [vmem:[%s265 + $0x20] sm:$0xf]
        %v301 = vld [vmem:[%s265 + $0x24] sm:$0xf]
        %v302 = vld [vmem:[%s265 + $0x28] sm:$0xf]
        %v303 = vld [vmem:[%s265 + $0x2c] sm:$0xf]
        %v304 = vld [vmem:[%s265 + $0x30] sm:$0xf]
        %v305 = vld [vmem:[%s265 + $0x34] sm:$0xf]
        %v306 = vld [vmem:[%s265 + $0x38] sm:$0xf]
        %v307 = vld [vmem:[%s265 + $0x3c] sm:$0xf]
        %v308 = vld [vmem:[%s265 + $0x40] sm:$0xf]
        %v309 = vld [vmem:[%s265 + $0x44] sm:$0xf]
        %v310 = vld [vmem:[%s265 + $0x48] sm:$0xf]
        %v311 = vld [vmem:[%s265 + $0x4c] sm:$0xf]
        %v312 = vld [vmem:[%s265 + $0x50] sm:$0xf]
        %v313 = vld [vmem:[%s265 + $0x54] sm:$0xf]
        %v314 = vld [vmem:[%s265 + $0x58] sm:$0xf]
        %v315 = vld [vmem:[%s265 + $0x5c] sm:$0xf]
        %v316 = vld [vmem:[%s265 + $0x60] sm:$0xf]
        %v317 = vld [vmem:[%s265 + $0x64] sm:$0xf]
        %v318 = vld [vmem:[%s265 + $0x68] sm:$0xf]
        %v319 = vld [vmem:[%s265 + $0x6c] sm:$0xf]
        %v320 = vld [vmem:[%s265 + $0x70] sm:$0xf]
        %v321 = vld [vmem:[%s265 + $0x74] sm:$0xf]
        %v322 = vld [vmem:[%s265 + $0x78] sm:$0xf]
        %v323 = vld [vmem:[%s265 + $0x7c] sm:$0xf]
        %v324 = vld [vmem:[%s265 + $0x80] sm:$0xf]
        %v325 = vld [vmem:[%s265 + $0x84] sm:$0xf]
        %v326 = vld [vmem:[%s265 + $0x88] sm:$0xf]
        %v327 = vld [vmem:[%s265 + $0x8c] sm:$0xf]
        %v328 = vld [vmem:[%s265 + $0x90] sm:$0xf]
        %v329 = vld [vmem:[%s265 + $0x94] sm:$0xf]
        %v330 = vld [vmem:[%s265 + $0x98] sm:$0xf]
        %v331 = vld [vmem:[%s265 + $0x9c] sm:$0xf]
        %v332 = vld [vmem:[%s265 + $0xa0] sm:$0xf]
        %v333 = vld [vmem:[%s265 + $0xa4] sm:$0xf]
        %v334 = vld [vmem:[%s265 + $0xa8] sm:$0xf]
        %v335 = vld [vmem:[%s265 + $0xac] sm:$0xf]
        %v336 = vld [vmem:[%s265 + $0xb0] sm:$0xf]
        %v337 = vld [vmem:[%s265 + $0xb4] sm:$0xf]
        %v338 = vld [vmem:[%s265 + $0xb8] sm:$0xf]
        %v339 = vld [vmem:[%s265 + $0xbc] sm:$0xf]
        %v340 = vld [vmem:[%s265 + $0xc0] sm:$0xf]
        %v341 = vld [vmem:[%s265 + $0xc4] sm:$0xf]
        %v342 = vld [vmem:[%s265 + $0xc8] sm:$0xf]
        %v343 = vld [vmem:[%s265 + $0xcc] sm:$0xf]
        %v344 = vld [vmem:[%s265 + $0xd0] sm:$0xf]
        %v345 = vld [vmem:[%s265 + $0xd4] sm:$0xf]
        %v346 = vld [vmem:[%s265 + $0xd8] sm:$0xf]
        %v347 = vld [vmem:[%s265 + $0xdc] sm:$0xf]
        %v348 = vld [vmem:[%s265 + $0xe0] sm:$0xf]
        %v349 = vld [vmem:[%s265 + $0xe4] sm:$0xf]
        %v350 = vld [vmem:[%s265 + $0xe8] sm:$0xf]
        %v351 = vld [vmem:[%s265 + $0xec] sm:$0xf]
        %v352 = vld [vmem:[%s265 + $0xf0] sm:$0xf]
        %v353 = vld [vmem:[%s265 + $0xf4] sm:$0xf]
        %v354 = vld [vmem:[%s265 + $0xf8] sm:$0xf]
        %v355 = vld [vmem:[%s265 + $0xfc] sm:$0xf]
        %v360 = vunpack.c.l.b16 %v288
        %v361 = vunpack.c.h.b16 %v288
        %v362 = vunpack.c.l.b16 %v289
        %v363 = vunpack.c.h.b16 %v289
        %v364 = vunpack.c.l.b16 %v290
        %v365 = vunpack.c.h.b16 %v290
        %v366 = vunpack.c.l.b16 %v291
        %v367 = vunpack.c.h.b16 %v291
        %v368 = vpack.c.b16 %v364, %v360
        %v369 = vpack.c.b16 %v365, %v361
        %v370 = vpack.c.b16 %v366, %v362
        %v371 = vpack.c.b16 %v367, %v363
        %v440 = vunpack.c.l.b16 %v292
        %v441 = vunpack.c.l.b16 %v293
        %v442 = vunpack.c.l.b16 %v294
        %v443 = vunpack.c.l.b16 %v295
        %v444 = vunpack.c.l.b16 %v296
        %v445 = vunpack.c.l.b16 %v297
        %v446 = vunpack.c.l.b16 %v298
        %v447 = vunpack.c.l.b16 %v299
        %v448 = vunpack.c.l.b16 %v300
        %v449 = vunpack.c.l.b16 %v301
        %v450 = vunpack.c.l.b16 %v302
        %v451 = vunpack.c.l.b16 %v303
        %v452 = vunpack.c.l.b16 %v304
        %v453 = vunpack.c.l.b16 %v305
        %v454 = vunpack.c.l.b16 %v306
        %v455 = vunpack.c.l.b16 %v307
        %v456 = vunpack.c.l.b16 %v308
        %v457 = vunpack.c.l.b16 %v309
        %v458 = vunpack.c.l.b16 %v310
        %v459 = vunpack.c.l.b16 %v311
        %v460 = vunpack.c.l.b16 %v312
        %v461 = vunpack.c.l.b16 %v313
        %v462 = vunpack.c.l.b16 %v314
        %v463 = vunpack.c.l.b16 %v315
        %v464 = vunpack.c.l.b16 %v316
        %v465 = vunpack.c.l.b16 %v317
        %v466 = vunpack.c.l.b16 %v318
        %v467 = vunpack.c.l.b16 %v319
        %v468 = vunpack.c.l.b16 %v320
        %v469 = vunpack.c.l.b16 %v321
        %v470 = vunpack.c.l.b16 %v322
        %v471 = vunpack.c.l.b16 %v323
        %v472 = vunpack.c.l.b16 %v324
        %v473 = vunpack.c.l.b16 %v325
        %v474 = vunpack.c.l.b16 %v326
        %v475 = vunpack.c.l.b16 %v327
        %v476 = vunpack.c.l.b16 %v328
        %v477 = vunpack.c.l.b16 %v329
        %v478 = vunpack.c.l.b16 %v330
        %v479 = vunpack.c.l.b16 %v331
        %v480 = vunpack.c.l.b16 %v332
        %v481 = vunpack.c.l.b16 %v333
        %v482 = vunpack.c.l.b16 %v334
        %v483 = vunpack.c.l.b16 %v335
        %v484 = vunpack.c.l.b16 %v336
        %v485 = vunpack.c.l.b16 %v337
        %v486 = vunpack.c.l.b16 %v338
        %v487 = vunpack.c.l.b16 %v339
        %v488 = vunpack.c.l.b16 %v340
        %v489 = vunpack.c.l.b16 %v341
        %v490 = vunpack.c.l.b16 %v342
        %v491 = vunpack.c.l.b16 %v343
        %v492 = vunpack.c.l.b16 %v344
        %v493 = vunpack.c.l.b16 %v345
        %v494 = vunpack.c.l.b16 %v346
        %v495 = vunpack.c.l.b16 %v347
        %v496 = vunpack.c.l.b16 %v348
        %v497 = vunpack.c.l.b16 %v349
        %v498 = vunpack.c.l.b16 %v350
        %v499 = vunpack.c.l.b16 %v351
        %v500 = vunpack.c.l.b16 %v352
        %v501 = vunpack.c.l.b16 %v353
        %v502 = vunpack.c.l.b16 %v354
        %v503 = vunpack.c.l.b16 %v355
        %v504 = vpack.c.b16 %v441, %v440
        %v505 = vpack.c.b16 %v443, %v442
        %v506 = vpack.c.b16 %v445, %v444
        %v507 = vpack.c.b16 %v447, %v446
        %v508 = vpack.c.b16 %v449, %v448
        %v509 = vpack.c.b16 %v451, %v450
        %v510 = vpack.c.b16 %v453, %v452
        %v511 = vpack.c.b16 %v455, %v454
        %v512 = vpack.c.b16 %v457, %v456
        %v513 = vpack.c.b16 %v459, %v458
        %v514 = vpack.c.b16 %v461, %v460
        %v515 = vpack.c.b16 %v463, %v462
        %v516 = vpack.c.b16 %v465, %v464
        %v517 = vpack.c.b16 %v467, %v466
        %v518 = vpack.c.b16 %v469, %v468
        %v519 = vpack.c.b16 %v471, %v470
        %v520 = vpack.c.b16 %v473, %v472
        %v521 = vpack.c.b16 %v475, %v474
        %v522 = vpack.c.b16 %v477, %v476
        %v523 = vpack.c.b16 %v479, %v478
        %v524 = vpack.c.b16 %v481, %v480
        %v525 = vpack.c.b16 %v483, %v482
        %v526 = vpack.c.b16 %v485, %v484
        %v527 = vpack.c.b16 %v487, %v486
        %v528 = vpack.c.b16 %v489, %v488
        %v529 = vpack.c.b16 %v491, %v490
        %v530 = vpack.c.b16 %v493, %v492
        %v531 = vpack.c.b16 %v495, %v494
        %v532 = vpack.c.b16 %v497, %v496
        %v533 = vpack.c.b16 %v499, %v498
        %v534 = vpack.c.b16 %v501, %v500
        %v535 = vpack.c.b16 %v503, %v502
        %568 = vmatprep.subr.bf16.mxu0 0
        %569 = vmatpush1.bf16.msra.mxu0 %v504
        %570 = vmatprep.subr.bf16.mxu0 0
        %571 = vmatpush1.bf16.msra.mxu0 %v505
        %572 = vmatprep.subr.bf16.mxu0 0
        %573 = vmatpush1.bf16.msra.mxu0 %v506
        %574 = vmatprep.subr.bf16.mxu0 0
        %575 = vmatpush1.bf16.msra.mxu0 %v507
        %576 = vmatprep.subr.bf16.mxu0 0
        %577 = vmatpush1.bf16.msra.mxu0 %v508
        %578 = vmatprep.subr.bf16.mxu0 0
        %579 = vmatpush1.bf16.msra.mxu0 %v509
        %580 = vmatprep.subr.bf16.mxu0 0
        %581 = vmatpush1.bf16.msra.mxu0 %v510
        %582 = vmatprep.subr.bf16.mxu0 0
        %583 = vmatpush1.bf16.msra.mxu0 %v511
        %584 = vmatprep.subr.bf16.mxu0 0
        %585 = vmatpush1.bf16.msra.mxu0 %v512
        %586 = vmatprep.subr.bf16.mxu0 0
        %587 = vmatpush1.bf16.msra.mxu0 %v513
        %588 = vmatprep.subr.bf16.mxu0 0
        %589 = vmatpush1.bf16.msra.mxu0 %v514
        %590 = vmatprep.subr.bf16.mxu0 0
        %591 = vmatpush1.bf16.msra.mxu0 %v515
        %592 = vmatprep.subr.bf16.mxu0 0
        %593 = vmatpush1.bf16.msra.mxu0 %v516
        %594 = vmatprep.subr.bf16.mxu0 0
        %595 = vmatpush1.bf16.msra.mxu0 %v517
        %596 = vmatprep.subr.bf16.mxu0 0
        %597 = vmatpush1.bf16.msra.mxu0 %v518
        %598 = vmatprep.subr.bf16.mxu0 0
        %599 = vmatpush1.bf16.msra.mxu0 %v519
        %600 = vmatprep.mubr.bf16.mxu0 %v369
        %601 = vmatmul.mubr.bf16.gmra.mrb[0].mxu0 %v368
        %v602 = vpop.f32.mrb[0].mxu0
        %v603 = vadd.f32 0.0, %v602
        %v604 = vpop.f32.mrb[0].mxu0
        %v605 = vpop.f32.mrb[0].mxu0
        %v606 = vadd.f32 0.0, %v605
        %v607 = vpop.f32.mrb[0].mxu0
        %608 = vdwg.mxu0
        %609 = vmatprep.subr.bf16.mxu0 0
        %610 = vmatpush1.bf16.msra.mxu0 %v520
        %611 = vmatprep.subr.bf16.mxu0 0
        %612 = vmatpush1.bf16.msra.mxu0 %v521
        %613 = vmatprep.subr.bf16.mxu0 0
        %614 = vmatpush1.bf16.msra.mxu0 %v522
        %615 = vmatprep.subr.bf16.mxu0 0
        %616 = vmatpush1.bf16.msra.mxu0 %v523
        %617 = vmatprep.subr.bf16.mxu0 0
        %618 = vmatpush1.bf16.msra.mxu0 %v524
        %619 = vmatprep.subr.bf16.mxu0 0
        %620 = vmatpush1.bf16.msra.mxu0 %v525
        %621 = vmatprep.subr.bf16.mxu0 0
        %622 = vmatpush1.bf16.msra.mxu0 %v526
        %623 = vmatprep.subr.bf16.mxu0 0
        %624 = vmatpush1.bf16.msra.mxu0 %v527
        %625 = vmatprep.subr.bf16.mxu0 0
        %626 = vmatpush1.bf16.msra.mxu0 %v528
        %627 = vmatprep.subr.bf16.mxu0 0
        %628 = vmatpush1.bf16.msra.mxu0 %v529
        %629 = vmatprep.subr.bf16.mxu0 0
        %630 = vmatpush1.bf16.msra.mxu0 %v530
        %631 = vmatprep.subr.bf16.mxu0 0
        %632 = vmatpush1.bf16.msra.mxu0 %v531
        %633 = vmatprep.subr.bf16.mxu0 0
        %634 = vmatpush1.bf16.msra.mxu0 %v532
        %635 = vmatprep.subr.bf16.mxu0 0
        %636 = vmatpush1.bf16.msra.mxu0 %v533
        %637 = vmatprep.subr.bf16.mxu0 0
        %638 = vmatpush1.bf16.msra.mxu0 %v534
        %639 = vmatprep.subr.bf16.mxu0 0
        %640 = vmatpush1.bf16.msra.mxu0 %v535
        %641 = vmatprep.mubr.bf16.mxu0 %v371
        %642 = vmatmul.mubr.bf16.gmra.mrb[0].mxu0 %v370
        %v643 = vpop.f32.mrb[0].mxu0
        %v644 = vadd.f32 %v603, %v643
        %v645 = vpop.f32.mrb[0].mxu0
        %v646 = vpop.f32.mrb[0].mxu0
        %v647 = vadd.f32 %v606, %v646
        %v648 = vpop.f32.mrb[0].mxu0
        %649 = vdwg.mxu0
        %v650 = vadd.f32 %v286, %v644
        %v651 = vadd.f32 %v287, %v647
        %652 = vst [vmem:[#allocation2] sm:$0xff] %v650
        %653 = vst [vmem:[#allocation2 + $0x8] sm:$0xff] %v651
        %p654 = scmp.eq.s32.totalorder %s21, 15
        // Predicated region
        $region60: #{main_model_step.18} parent=50 // pred_check
          %p655 = pneg %p654
        $region61: #{main_model_step.18} parent=50 // pred_check_branch
          %657 = sbr.rel (%p655) target = $region63
        $region62: #{main_model_step.18} parent=50 // pred_region
          %v658 = vld [vmem:[#allocation2] sm:$0xff]
          %v659 = vld [vmem:[#allocation2 + $0x8] sm:$0xff]
          %v660 = vld [vmem:[%s269] sm:$0x1]
          %v662 = vlaneseq
          %v663 = vshrl.u32 %v662, 7
          %v664 = vsub.s32 0, %v663
          %v665 = vrot.slane %v660, %v664
          %v667 = vadd.f32 %v658, %v665
          %v668 = vadd.f32 %v659, %v665
          %669 = vst [vmem:[%s277] sm:$0xff] %v667
          %670 = vst [vmem:[%s277 + $0x8] sm:$0xff] %v668
        $region63: #{main_model_step.18} parent=50 // pred_fallthru
          _
        %s671 = smul.u32 2, %s19
        %p672 = scmp.lt.s32.totalorder %s671, 1
        %s673 = scalar_select %p672, %s671, 1
        %p674 = scmp.lt.s32.totalorder %s20, 0
        %s675 = scalar_select %p674, %s20, 0
        %s676 = sadd.s32 %s675, %s673
        %s677 = smul.addr %s676, 8
        %s678 = scalar_lea.vmem %s3, %s677
        // Predicated region
        $region64: #{main_model_step.18} parent=50 // pred_check
          %p679 = pneg %p135
        $region65: #{main_model_step.18} parent=50 // pred_check_branch
          %681 = sbr.rel (%p679) target = $region67
        $region66: #{main_model_step.18} parent=50 // pred_region
          %s682 = smul.u32 2, %s19
        $region67: #{main_model_step.18} parent=50 // pred_fallthru
          _
        // Predicated region
        $region68: #{main_model_step.18} parent=50 // pred_check
          %p683 = pneg %p135
        $region69: #{main_model_step.18} parent=50 // pred_check_branch
          %685 = sbr.rel (%p683) target = $region71
        $region70: #{main_model_step.18} parent=50 // pred_region
          %s686 = smul.u32 2, %s19
          %p687 = scmp.lt.s32.totalorder %s686, 1
          %s688 = scalar_select %p687, %s686, 1
          %p689 = scmp.lt.s32.totalorder %s20, 0
          %s690 = scalar_select %p689, %s20, 0
          %s691 = sadd.s32 %s690, %s688
          %s692 = smul.addr %s691, 8
          %s693 = scalar_lea.vmem %s3, %s692
        $region71: #{main_model_step.18} parent=50 // pred_fallthru
          _
      $region51: #{main_model_step.18} parent=5 // pred_fallthru
        _
      %p694 = scmp.le.s32.totalorder 2, %s9
      // Predicated region
      $region72: #{main_model_step.18} parent=5 // pred_check
        %p695 = pneg %p694
      $region73: #{main_model_step.18} parent=5 // pred_check_branch
        %697 = sbr.rel (%p695) target = $region75
      $region74: #{main_model_step.18} parent=5 // pred_region
        %s698 = ssub.s32 %s9, 2
      $region75: #{main_model_step.18} parent=5 // pred_fallthru
        _
    $region6: #{main_model_step.18} parent=1 // loop_footer
      %s13 = sadd.s32 1, %s9
    $region7: #{main_model_step.18} parent=1 // loop_footer_branch
      %8 = sbr.rel target = $region3
    $region8: #{main_model_step.18} parent=1 // loop_exit
      _

// kernel: main_model_step.19
$region0: #{main_model_step.19}
  #allocation0 [shape = 'u32[]', space=smem, size = 0x4, offset = 0x4, fixed_abs, tag = 'smem constant byte address 0x4 - core index']
  #allocation1 [shape = 'u32[144,128]{1,0:T(1,128)}', space=vmem, size = 0x12000, scoped, tag = 'internal scratch']
  %s0 = inlined_call_operand.vmem [shape: f32[1,8], index: 0, kind: input, shape index: {}]
  %s1 = inlined_call_operand.vmem [shape: f32[1,8], index: 1, kind: input, shape index: {}]
  %s2 = inlined_call_operand.vmem [shape: f32[32,128], index: 2, kind: input, shape index: {}]
  %s3 = inlined_call_operand.vmem [shape: f32[32,128], index: 3, kind: input, shape index: {}]
  %s4 = inlined_call_operand.hbm [shape: f32[1,1], index: 4, kind: output, shape index: {0}]
  %s5 = inlined_call_operand.hbm [shape: f32[1,1], index: 5, kind: output, shape index: {1}]
  %s6 = inlined_call_operand.hbm [shape: f32[1,1], index: 6, kind: output, shape index: {2}]
  %s7 = inlined_call_operand.hbm [shape: f32[1,1], index: 7, kind: output, shape index: {3}]
  %8 = xla_tuple %s4, %s5, %s6, %s7
  %s9 = sld [smem:[#allocation0]]
  $region50: #{main_model_step.19} parent=0
    _
  %s11 = ssub.s32 1, %s9
  %s12 = scalar_select 0, %s11, %s9
  $region1: #{main_model_step.19} parent=0
    #allocation2 [shape = 'u8[512]{0}', space=vmem, size = 0x400, scoped, tag = 'output window, operand 0, single buffered']
    #allocation3 [shape = 's32[1]{0}', space=sflag, size = 0x4, scoped, tag = 'scoped memory for main_model_step.19']
    #allocation4 [shape = 'u8[512]{0}', space=vmem, size = 0x400, scoped, tag = 'output window, operand 1, single buffered']
    #allocation5 [shape = 's32[1]{0}', space=sflag, size = 0x4, scoped, tag = 'scoped memory for main_model_step.19']
    #allocation6 [shape = 'u8[512]{0}', space=vmem, size = 0x400, scoped, tag = 'output window, operand 2, single buffered']
    #allocation7 [shape = 'u8[512]{0}', space=vmem, size = 0x400, scoped, tag = 'output window, operand 3, single buffered']
    #allocation8 [shape = 's32[1]{0}', space=sflag, size = 0x4, scoped, tag = 'scoped memory for main_model_step.19']
    %13 = vsyncpa [#allocation3], 0
    %14 = vsyncpa [#allocation5], 0
    %15 = vsyncpa [#allocation8], 0
    // Predicated region
    $region2: #{main_model_step.19} parent=1 // pred_check
      _
    $region3: #{main_model_step.19} parent=1 // pred_check_branch
      %17 = sbr.rel (0) target = $region5
    $region4: #{main_model_step.19} parent=1 // pred_region
      _
    $region5: #{main_model_step.19} parent=1 // pred_fallthru
      _
    // Predicated region
    $region6: #{main_model_step.19} parent=1 // pred_check
      _
    $region7: #{main_model_step.19} parent=1 // pred_check_branch
      %19 = sbr.rel (0) target = $region9
    $region8: #{main_model_step.19} parent=1 // pred_region
      _
    $region9: #{main_model_step.19} parent=1 // pred_fallthru
      _
    // Predicated region
    $region10: #{main_model_step.19} parent=1 // pred_check
      _
    $region11: #{main_model_step.19} parent=1 // pred_check_branch
      %21 = sbr.rel (0) target = $region13
    $region12: #{main_model_step.19} parent=1 // pred_region
      _
    $region13: #{main_model_step.19} parent=1 // pred_fallthru
      _
    // Predicated region
    $region14: #{main_model_step.19} parent=1 // pred_check
      _
    $region15: #{main_model_step.19} parent=1 // pred_check_branch
      %23 = sbr.rel (0) target = $region17
    $region16: #{main_model_step.19} parent=1 // pred_region
      _
    $region17: #{main_model_step.19} parent=1 // pred_fallthru
      _
    %v24 = vld [vmem:[%s0] sm:$0x1]
    %v25 = vld [vmem:[%s1] sm:$0x1]
    %v26 = vld [vmem:[%s2] sm:$0xff]
    %v27 = vld [vmem:[%s2 + $0x8] sm:$0xff]
    %v28 = vld [vmem:[%s2 + $0x10] sm:$0xff]
    %v29 = vld [vmem:[%s2 + $0x18] sm:$0xff]
    %v30 = vld [vmem:[%s3] sm:$0xff]
    %v31 = vld [vmem:[%s3 + $0x8] sm:$0xff]
    %v32 = vld [vmem:[%s3 + $0x10] sm:$0xff]
    %v33 = vld [vmem:[%s3 + $0x18] sm:$0xff]
    %v34 = vmul.f32 %v24, %v24
    %vm35 = vcmask 57344
    %v36 = vsel %vm35, %v34, 0.0
    %37 = vadd.xlane.f32.xlu0 %v36
    %v38 = vpop.xlane.xlu0 %37
    %v39 = vrot.slane %v38, 4
    %v40 = vadd.f32 %v38, %v39
    %v41 = vrot.slane %v40, 2
    %v42 = vadd.f32 %v40, %v41
    %v43 = vrot.slane %v42, 1
    %v44 = vadd.f32 %v42, %v43
    %s45 = vtos %v44
    %v46 = vstv %s45
    %v47 = vrcp.pop 8.0
    %v48 = vmul.f32 %v46, %v47
    %vm49 = vcmask 0
    %50 = vst.msk [vmem:[#allocation2] sm:$0x1] %vm49, %v48
    %v51 = vsub.f32 %v25, 1.0
    %v52 = vmul.f32 %v51, %v51
    %v53 = vsel %vm35, %v52, 0.0
    %54 = vadd.xlane.f32.xlu0 %v53
    %v55 = vpop.xlane.xlu0 %54
    %v56 = vrot.slane %v55, 4
    %v57 = vadd.f32 %v55, %v56
    %v58 = vrot.slane %v57, 2
    %v59 = vadd.f32 %v57, %v58
    %v60 = vrot.slane %v59, 1
    %v61 = vadd.f32 %v59, %v60
    %s62 = vtos %v61
    %v63 = vstv %s62
    %v64 = vmul.f32 %v63, %v47
    %65 = vst.msk [vmem:[#allocation4] sm:$0x1] %vm49, %v64
    %v66 = vsub.f32 %v24, 1.0
    %v67 = vmul.f32 %v66, %v66
    %v68 = vsel %vm35, %v67, 0.0
    %69 = vadd.xlane.f32.xlu0 %v68
    %v70 = vpop.xlane.xlu0 %69
    %v71 = vrot.slane %v70, 4
    %v72 = vadd.f32 %v70, %v71
    %v73 = vrot.slane %v72, 2
    %v74 = vadd.f32 %v72, %v73
    %v75 = vrot.slane %v74, 1
    %v76 = vadd.f32 %v74, %v75
    %s77 = vtos %v76
    %v78 = vstv %s77
    %v79 = vmul.f32 %v78, %v47
    %80 = vst.msk [vmem:[#allocation6] sm:$0x1] %vm49, %v79
    %v81 = vsub.f32 %v26, %v30
    %v82 = vsub.f32 %v27, %v31
    %v83 = vsub.f32 %v28, %v32
    %v84 = vsub.f32 %v29, %v33
    %v85 = vand.u32 2147483647, %v81
    %v86 = vand.u32 2147483647, %v82
    %v87 = vand.u32 2147483647, %v83
    %v88 = vand.u32 2147483647, %v84
    %v89 = vadd.f32 %v85, %v86
    %v90 = vadd.f32 %v89, %v87
    %v91 = vadd.f32 %v90, %v88
    %92 = vadd.xlane.f32.xlu0 %v91
    %v93 = vpop.xlane.xlu0 %92
    %v94 = vrot.slane %v93, 4
    %v95 = vadd.f32 %v93, %v94
    %v96 = vrot.slane %v95, 2
    %v97 = vadd.f32 %v95, %v96
    %v98 = vrot.slane %v97, 1
    %v99 = vadd.f32 %v97, %v98
    %s100 = vtos %v99
    %v101 = vstv %s100
    %v102 = vrcp.pop 4096.0
    %v103 = vmul.f32 %v101, %v102
    %104 = vst.msk [vmem:[#allocation7] sm:$0x1] %vm49, %v103
    // Predicated region
    $region18: #{main_model_step.19} parent=1 // pred_check
      _
    $region19: #{main_model_step.19} parent=1 // pred_check_branch
      %106 = sbr.rel (0) target = $region21
    $region20: #{main_model_step.19} parent=1 // pred_region
      %s108 = ssub.s32 16, 16
      %109 = vsyncadd [#allocation3], %s108
      %s111 = sshll.u32 [#allocation2], 4
      %s112 = int_to_ptr.vmem [resolvable:$true] %s111
      %114 = dma.vmem_to_hbm [thread:$0]  %s112, 16, %s4, [#allocation3]
    $region21: #{main_model_step.19} parent=1 // pred_fallthru
      _
    // Predicated region
    $region22: #{main_model_step.19} parent=1 // pred_check
      _
    $region23: #{main_model_step.19} parent=1 // pred_check_branch
      %116 = sbr.rel (0) target = $region25
    $region24: #{main_model_step.19} parent=1 // pred_region
      %s118 = ssub.s32 16, 16
      %119 = vsyncadd [#allocation5], %s118
      %s121 = sshll.u32 [#allocation4], 4
      %s122 = int_to_ptr.vmem [resolvable:$true] %s121
      %124 = dma.vmem_to_hbm [thread:$0]  %s122, 16, %s5, [#allocation5]
    $region25: #{main_model_step.19} parent=1 // pred_fallthru
      _
    // Predicated region
    $region26: #{main_model_step.19} parent=1 // pred_check
      _
    $region27: #{main_model_step.19} parent=1 // pred_check_branch
      %126 = sbr.rel (0) target = $region29
    $region28: #{main_model_step.19} parent=1 // pred_region
      %s128 = ssub.s32 16, 16
      %129 = vsyncadd [#allocation5], %s128
      %s131 = sshll.u32 [#allocation6], 4
      %s132 = int_to_ptr.vmem [resolvable:$true] %s131
      %134 = dma.vmem_to_hbm [thread:$0]  %s132, 16, %s6, [#allocation5]
    $region29: #{main_model_step.19} parent=1 // pred_fallthru
      _
    // Predicated region
    $region30: #{main_model_step.19} parent=1 // pred_check
      _
    $region31: #{main_model_step.19} parent=1 // pred_check_branch
      %136 = sbr.rel (0) target = $region33
    $region32: #{main_model_step.19} parent=1 // pred_region
      %s138 = ssub.s32 16, 16
      %139 = vsyncadd [#allocation8], %s138
      %s141 = sshll.u32 [#allocation7], 4
      %s142 = int_to_ptr.vmem [resolvable:$true] %s141
      %144 = dma.vmem_to_hbm [thread:$0]  %s142, 16, %s7, [#allocation8]
    $region33: #{main_model_step.19} parent=1 // pred_fallthru
      _
    // Predicated region
    $region34: #{main_model_step.19} parent=1 // pred_check
      _
    $region35: #{main_model_step.19} parent=1 // pred_check_branch
      %146 = sbr.rel (0) target = $region37
    $region36: #{main_model_step.19} parent=1 // pred_region
      %147 = dma.done [#allocation3], 16
    $region37: #{main_model_step.19} parent=1 // pred_fallthru
      _
    // Predicated region
    $region38: #{main_model_step.19} parent=1 // pred_check
      _
    $region39: #{main_model_step.19} parent=1 // pred_check_branch
      %149 = sbr.rel (0) target = $region41
    $region40: #{main_model_step.19} parent=1 // pred_region
      %150 = dma.done [#allocation5], 16
    $region41: #{main_model_step.19} parent=1 // pred_fallthru
      _
    // Predicated region
    $region42: #{main_model_step.19} parent=1 // pred_check
      _
    $region43: #{main_model_step.19} parent=1 // pred_check_branch
      %152 = sbr.rel (0) target = $region45
    $region44: #{main_model_step.19} parent=1 // pred_region
      %153 = dma.done [#allocation5], 16
    $region45: #{main_model_step.19} parent=1 // pred_fallthru
      _
    // Predicated region
    $region46: #{main_model_step.19} parent=1 // pred_check
      _
    $region47: #{main_model_step.19} parent=1 // pred_check_branch
      %155 = sbr.rel (0) target = $region49
    $region48: #{main_model_step.19} parent=1 // pred_region
      %156 = dma.done [#allocation8], 16
    $region49: #{main_model_step.19} parent=1 // pred_fallthru
      _
    %157 = vsyncpa [#allocation3], 1
    %158 = vsyncpa [#allocation5], 1
    %159 = vsyncpa [#allocation8], 1

</llo_original>
